<compile_context>
chip_gen: v7x
topology: tpu7x:2x2x1
jax: 0.10.0
libtpu: 0.0.40
codegen_flags: <defaults>
</compile_context>

<pallas_src>
import math
import functools

import jax
import jax.numpy as jnp
from jax.experimental import pallas as pl
from jax.experimental.pallas import tpu as pltpu

NEG_INF = -1e9
LN_EPS = 1e-5
NUM_HEADS = 8
NUM_LAYERS = 8

WEIGHT_KEYS = ("wq1", "wk1", "wv1", "wo1",
               "wq2", "wk2", "wv2", "wo2",
               "w1", "w2")


def _layer_norm(z):
    # LayerNorm over last dim, biased variance, affine = identity.
    mu = jnp.mean(z, axis=-1, keepdims=True)
    var = jnp.mean((z - mu) ** 2, axis=-1, keepdims=True)
    return (z - mu) * jax.lax.rsqrt(var + LN_EPS)


# ------------------------------ Pallas kernel ------------------------------- #

def decoder_layer_kernel(x_ref, en_ref, smask_ref, emask_ref,
                         wq1_ref, wk1_ref, wv1_ref, wo1_ref,
                         wq2_ref, wk2_ref, wv2_ref, wo2_ref,
                         w1_ref, w2_ref, o_ref,
                         *, num_heads, d_q, d_k, d_v):
    """One full DecoderLayer (3 sub-layers) for the whole batch, one layer per grid step."""
    x = x_ref[...]          # [B, T, E]  deInputs (same block every layer, per reference)
    en = en_ref[...]        # [B, S, E]  encoder outputs
    smask = smask_ref[...]  # [B, H, T, T]  nonzero => masked
    emask = emask_ref[...]  # [B, H, T, S]

    wq1 = wq1_ref[0]; wk1 = wk1_ref[0]; wv1 = wv1_ref[0]; wo1 = wo1_ref[0]
    wq2 = wq2_ref[0]; wk2 = wk2_ref[0]; wv2 = wv2_ref[0]; wo2 = wo2_ref[0]
    w1 = w1_ref[0]; w2 = w2_ref[0]

    scale = 1.0 / math.sqrt(d_k)
    bf16 = jnp.bfloat16
    batch = x.shape[0]

    def mha(xq, xkv, mask, wq, wk, wv, wo):
        # xq: [T, E] f32, xkv: [S, E] f32, mask: [H, T, S]; weights bf16.
        # Full-width projections (single MXU matmuls), per-head only for scores/ctx.
        q_all = jnp.dot(xq.astype(bf16), wq, preferred_element_type=jnp.float32)   # [T, H*dq]
        k_all = jnp.dot(xkv.astype(bf16), wk, preferred_element_type=jnp.float32)  # [S, H*dk]
        v_all = jnp.dot(xkv.astype(bf16), wv, preferred_element_type=jnp.float32)  # [S, H*dv]
        ctx = []
        for h in range(num_heads):
            q = q_all[:, h * d_q:(h + 1) * d_q]
            k = k_all[:, h * d_k:(h + 1) * d_k]
            v = v_all[:, h * d_v:(h + 1) * d_v]
            s = jnp.dot(q, k.T, preferred_element_type=jnp.float32) * scale
            s = jnp.where(mask[h] != 0, NEG_INF, s)               # masked_fill_
            s = s - jnp.max(s, axis=-1, keepdims=True)
            e = jnp.exp(s)
            p = e * pl.reciprocal(jnp.sum(e, axis=-1, keepdims=True), approx=True)
            ctx.append(jnp.dot(p, v, preferred_element_type=jnp.float32))
        ctx_all = jnp.concatenate(ctx, axis=-1)                   # [T, H*dv]
        return jnp.dot(ctx_all.astype(bf16), wo, preferred_element_type=jnp.float32)

    for b in range(batch):  # B is tiny; fully unrolled inside one grid step
        xb = x[b]
        # sub-layer 1: masked self-attention + AddNorm
        a1 = mha(xb, xb, smask[b], wq1, wk1, wv1, wo1)
        m1 = _layer_norm(xb + a1)
        # sub-layer 2: encoder-decoder attention + AddNorm
        a2 = mha(m1, en[b], emask[b], wq2, wk2, wv2, wo2)
        m2 = _layer_norm(m1 + a2)
        # sub-layer 3: FeedForward (Linear-ReLU-Linear) + AddNorm
        hid = jnp.maximum(
            jnp.dot(m2.astype(bf16), w1, preferred_element_type=jnp.float32), 0.0)
        ffn = jnp.dot(hid.astype(bf16), w2, preferred_element_type=jnp.float32)
        o_ref[b] = _layer_norm(m2 + ffn)


# ------------------------------ kernel wrapper ------------------------------ #

def decoder_stack(x, en, self_mask, ende_mask, w, num_heads=NUM_HEADS):
    """Runs all decoder layers in a single pallas_call (grid over layers)."""
    B, T, E = x.shape
    S = en.shape[1]
    L = w["wq1"].shape[0]
    d_q = w["wq1"].shape[2] // num_heads
    d_k = w["wk1"].shape[2] // num_heads
    d_v = w["wv1"].shape[2] // num_heads

    kernel = functools.partial(decoder_layer_kernel, num_heads=num_heads,
                               d_q=d_q, d_k=d_k, d_v=d_v)

    def act_spec(shape):
        n = len(shape)
        return pl.BlockSpec(tuple(shape), lambda l, _n=n: (0,) * _n)

    def w_spec(shape):
        return pl.BlockSpec((1,) + tuple(shape[1:]), lambda l: (l, 0, 0))

    return pl.pallas_call(
        kernel,
        out_shape=jax.ShapeDtypeStruct((B, T, E), jnp.float32),
        grid=(L,),
        in_specs=[
            act_spec((B, T, E)),
            act_spec((B, S, E)),
            act_spec(self_mask.shape),
            act_spec(ende_mask.shape),
        ] + [w_spec(w[k].shape) for k in WEIGHT_KEYS],
        # Same output block every layer => only the LAST layer's write survives,
        # exactly matching the reference `for layer: deOutputs = layer(deInputs,...)`.
        out_specs=act_spec((B, T, E)),
        compiler_params=pltpu.CompilerParams(dimension_semantics=("arbitrary",)),
    )(x, en, self_mask, ende_mask, *[w[k] for k in WEIGHT_KEYS])


# ------------------------------ model (glue) -------------------------------- #

def sinusoid_pe(max_len, emb):
    pos = jnp.arange(max_len, dtype=jnp.float32)[:, None]
    i = jnp.arange(0, emb, 2, dtype=jnp.float32)
    div = jnp.exp(-(jnp.log(10000.0)) * i / emb)
    pe = jnp.zeros((max_len, emb), jnp.float32)
    pe = pe.at[:, 0::2].set(jnp.sin(pos * div))
    pe = pe.at[:, 1::2].set(jnp.cos(pos * div))
    return pe


def init_decoder_params(key, de_vocab, emb, q, k, v, hidden,
                        num_heads=NUM_HEADS, num_layers=NUM_LAYERS):
    ks = jax.random.split(key, 12)
    s = 0.05
    H, L = num_heads, num_layers
    return {
        "emb": jax.random.normal(ks[0], (de_vocab, emb), jnp.float32),
        "pos_pe": sinusoid_pe(de_vocab, emb),
        # Per-layer weights stacked on a leading layer axis (bias=False everywhere).
        "wq1": s * jax.random.normal(ks[1], (L, emb, q * H), jnp.float32),
        "wk1": s * jax.random.normal(ks[2], (L, emb, k * H), jnp.float32),
        "wv1": s * jax.random.normal(ks[3], (L, emb, v * H), jnp.float32),
        "wo1": s * jax.random.normal(ks[4], (L, v * H, emb), jnp.float32),
        "wq2": s * jax.random.normal(ks[5], (L, emb, q * H), jnp.float32),
        "wk2": s * jax.random.normal(ks[6], (L, emb, k * H), jnp.float32),
        "wv2": s * jax.random.normal(ks[7], (L, emb, v * H), jnp.float32),
        "wo2": s * jax.random.normal(ks[8], (L, v * H, emb), jnp.float32),
        "w1": s * jax.random.normal(ks[9], (L, emb, hidden), jnp.float32),
        "w2": s * jax.random.normal(ks[10], (L, hidden, emb), jnp.float32),
    }


def decoder_forward(params, de_inputs, en_outputs, self_mask, ende_mask):
    # deEmb: [B, T] -> [B, T, E]
    x = jnp.take(params["emb"], de_inputs, axis=0)
    # dePos: sinusoidal positional encoding.
    # TODO(synk): nn.Dropout(p=0.1) from Position omitted (inference semantics).
    T = de_inputs.shape[1]
    x = x + params["pos_pe"][:T][None, :, :]
    # bf16 weights halve weight DMA bytes and hit the MXU's native dtype;
    # accumulation / softmax / LayerNorm remain f32 inside the kernel.
    w = {k: params[k].astype(jnp.bfloat16) for k in WEIGHT_KEYS}
    return decoder_stack(x, en_outputs, self_mask, ende_mask, w)


# ---------------------------------- main ------------------------------------ #

if __name__ == "__main__":
    B, TGT_LEN, SEQ_LEN = 2, 8, 8
    DE_VOCAB, EMB, QS, KS, VS, HIDDEN = 50, 32, 8, 8, 8, 64

    key = jax.random.PRNGKey(0)
    kp, k1, k2 = jax.random.split(key, 3)

    params = init_decoder_params(kp, DE_VOCAB, EMB, QS, KS, VS, HIDDEN)

    de_inputs = jax.random.randint(k1, (B, TGT_LEN), 0, DE_VOCAB, dtype=jnp.int32)
    en_outputs = jax.random.normal(k2, (B, SEQ_LEN, EMB), jnp.float32)

    # selfMask: causal (subsequent) mask, nonzero = masked; broadcast over batch & heads.
    causal = jnp.triu(jnp.ones((TGT_LEN, TGT_LEN), jnp.float32), k=1)
    self_mask = jnp.broadcast_to(causal, (B, NUM_HEADS, TGT_LEN, TGT_LEN)) + 0.0
    # enDeMask: no padding in this synthetic example.
    ende_mask = jnp.zeros((B, NUM_HEADS, TGT_LEN, SEQ_LEN), jnp.float32)

    out = decoder_forward(params, de_inputs, en_outputs, self_mask, ende_mask)
    out = jax.block_until_ready(out)
    assert out.shape == (B, TGT_LEN, EMB)
    assert bool(jnp.all(jnp.isfinite(out)))
    print("KERNEL_OK")
</pallas_src>

<mosaic_0001>
module attributes {stable_mosaic.version = 11 : i64} {
  func.func @decoder_layer_kernel(%arg0: i32, %arg1: memref<2x8x32xf32, #tpu.memory_space<vmem>>, %arg2: memref<2x8x32xf32, #tpu.memory_space<vmem>>, %arg3: memref<2x8x8x8xf32, #tpu.memory_space<vmem>>, %arg4: memref<2x8x8x8xf32, #tpu.memory_space<vmem>>, %arg5: memref<1x32x64xbf16, #tpu.memory_space<vmem>>, %arg6: memref<1x32x64xbf16, #tpu.memory_space<vmem>>, %arg7: memref<1x32x64xbf16, #tpu.memory_space<vmem>>, %arg8: memref<1x64x32xbf16, #tpu.memory_space<vmem>>, %arg9: memref<1x32x64xbf16, #tpu.memory_space<vmem>>, %arg10: memref<1x32x64xbf16, #tpu.memory_space<vmem>>, %arg11: memref<1x32x64xbf16, #tpu.memory_space<vmem>>, %arg12: memref<1x64x32xbf16, #tpu.memory_space<vmem>>, %arg13: memref<1x32x64xbf16, #tpu.memory_space<vmem>>, %arg14: memref<1x64x32xbf16, #tpu.memory_space<vmem>>, %arg15: memref<2x8x32xf32, #tpu.memory_space<vmem>>) attributes {dimension_semantics = [#tpu.dimension_semantics<arbitrary>], iteration_bounds = array<i64: 8>, scalar_prefetch = 0 : i64, scratch_operands = 0 : i64, tpu.core_type = #tpu.core_type<tc>, window_params = [{pipeline_mode = #tpu.pipeline_mode<synchronous>, transform_indices = @transform_0, window_bounds = array<i64: 2, 8, 32>}, {pipeline_mode = #tpu.pipeline_mode<synchronous>, transform_indices = @transform_1, window_bounds = array<i64: 2, 8, 32>}, {pipeline_mode = #tpu.pipeline_mode<synchronous>, transform_indices = @transform_2, window_bounds = array<i64: 2, 8, 8, 8>}, {pipeline_mode = #tpu.pipeline_mode<synchronous>, transform_indices = @transform_3, window_bounds = array<i64: 2, 8, 8, 8>}, {transform_indices = @transform_4, window_bounds = array<i64: 1, 32, 64>}, {transform_indices = @transform_5, window_bounds = array<i64: 1, 32, 64>}, {transform_indices = @transform_6, window_bounds = array<i64: 1, 32, 64>}, {transform_indices = @transform_7, window_bounds = array<i64: 1, 64, 32>}, {transform_indices = @transform_8, window_bounds = array<i64: 1, 32, 64>}, {transform_indices = @transform_9, window_bounds = array<i64: 1, 32, 64>}, {transform_indices = @transform_10, window_bounds = array<i64: 1, 32, 64>}, {transform_indices = @transform_11, window_bounds = array<i64: 1, 64, 32>}, {transform_indices = @transform_12, window_bounds = array<i64: 1, 32, 64>}, {transform_indices = @transform_13, window_bounds = array<i64: 1, 64, 32>}, {pipeline_mode = #tpu.pipeline_mode<synchronous>, transform_indices = @transform_14, window_bounds = array<i64: 2, 8, 32>}]} {
    %c0 = arith.constant 0 : index
    %c0_0 = arith.constant 0 : index
    %c0_1 = arith.constant 0 : index
    %0 = vector.load %arg1[%c0, %c0_0, %c0_1] : memref<2x8x32xf32, #tpu.memory_space<vmem>>, vector<2x8x32xf32>
    %c0_2 = arith.constant 0 : index
    %c0_3 = arith.constant 0 : index
    %c0_4 = arith.constant 0 : index
    %1 = vector.load %arg2[%c0_2, %c0_3, %c0_4] : memref<2x8x32xf32, #tpu.memory_space<vmem>>, vector<2x8x32xf32>
    %c0_5 = arith.constant 0 : index
    %c0_6 = arith.constant 0 : index
    %c0_7 = arith.constant 0 : index
    %c0_8 = arith.constant 0 : index
    %2 = vector.load %arg3[%c0_5, %c0_6, %c0_7, %c0_8] : memref<2x8x8x8xf32, #tpu.memory_space<vmem>>, vector<2x8x8x8xf32>
    %c0_9 = arith.constant 0 : index
    %c0_10 = arith.constant 0 : index
    %c0_11 = arith.constant 0 : index
    %c0_12 = arith.constant 0 : index
    %3 = vector.load %arg4[%c0_9, %c0_10, %c0_11, %c0_12] : memref<2x8x8x8xf32, #tpu.memory_space<vmem>>, vector<2x8x8x8xf32>
    %c0_13 = arith.constant 0 : index
    %c0_14 = arith.constant 0 : index
    %c0_15 = arith.constant 0 : index
    %4 = vector.load %arg5[%c0_13, %c0_14, %c0_15] : memref<1x32x64xbf16, #tpu.memory_space<vmem>>, vector<1x32x64xbf16>
    %5 = vector.shape_cast %4 : vector<1x32x64xbf16> to vector<32x64xbf16>
    %c0_16 = arith.constant 0 : index
    %c0_17 = arith.constant 0 : index
    %c0_18 = arith.constant 0 : index
    %6 = vector.load %arg6[%c0_16, %c0_17, %c0_18] : memref<1x32x64xbf16, #tpu.memory_space<vmem>>, vector<1x32x64xbf16>
    %7 = vector.shape_cast %6 : vector<1x32x64xbf16> to vector<32x64xbf16>
    %c0_19 = arith.constant 0 : index
    %c0_20 = arith.constant 0 : index
    %c0_21 = arith.constant 0 : index
    %8 = vector.load %arg7[%c0_19, %c0_20, %c0_21] : memref<1x32x64xbf16, #tpu.memory_space<vmem>>, vector<1x32x64xbf16>
    %9 = vector.shape_cast %8 : vector<1x32x64xbf16> to vector<32x64xbf16>
    %c0_22 = arith.constant 0 : index
    %c0_23 = arith.constant 0 : index
    %c0_24 = arith.constant 0 : index
    %10 = vector.load %arg8[%c0_22, %c0_23, %c0_24] : memref<1x64x32xbf16, #tpu.memory_space<vmem>>, vector<1x64x32xbf16>
    %11 = vector.shape_cast %10 : vector<1x64x32xbf16> to vector<64x32xbf16>
    %c0_25 = arith.constant 0 : index
    %c0_26 = arith.constant 0 : index
    %c0_27 = arith.constant 0 : index
    %12 = vector.load %arg9[%c0_25, %c0_26, %c0_27] : memref<1x32x64xbf16, #tpu.memory_space<vmem>>, vector<1x32x64xbf16>
    %13 = vector.shape_cast %12 : vector<1x32x64xbf16> to vector<32x64xbf16>
    %c0_28 = arith.constant 0 : index
    %c0_29 = arith.constant 0 : index
    %c0_30 = arith.constant 0 : index
    %14 = vector.load %arg10[%c0_28, %c0_29, %c0_30] : memref<1x32x64xbf16, #tpu.memory_space<vmem>>, vector<1x32x64xbf16>
    %15 = vector.shape_cast %14 : vector<1x32x64xbf16> to vector<32x64xbf16>
    %c0_31 = arith.constant 0 : index
    %c0_32 = arith.constant 0 : index
    %c0_33 = arith.constant 0 : index
    %16 = vector.load %arg11[%c0_31, %c0_32, %c0_33] : memref<1x32x64xbf16, #tpu.memory_space<vmem>>, vector<1x32x64xbf16>
    %17 = vector.shape_cast %16 : vector<1x32x64xbf16> to vector<32x64xbf16>
    %c0_34 = arith.constant 0 : index
    %c0_35 = arith.constant 0 : index
    %c0_36 = arith.constant 0 : index
    %18 = vector.load %arg12[%c0_34, %c0_35, %c0_36] : memref<1x64x32xbf16, #tpu.memory_space<vmem>>, vector<1x64x32xbf16>
    %19 = vector.shape_cast %18 : vector<1x64x32xbf16> to vector<64x32xbf16>
    %c0_37 = arith.constant 0 : index
    %c0_38 = arith.constant 0 : index
    %c0_39 = arith.constant 0 : index
    %20 = vector.load %arg13[%c0_37, %c0_38, %c0_39] : memref<1x32x64xbf16, #tpu.memory_space<vmem>>, vector<1x32x64xbf16>
    %21 = vector.shape_cast %20 : vector<1x32x64xbf16> to vector<32x64xbf16>
    %c0_40 = arith.constant 0 : index
    %c0_41 = arith.constant 0 : index
    %c0_42 = arith.constant 0 : index
    %22 = vector.load %arg14[%c0_40, %c0_41, %c0_42] : memref<1x64x32xbf16, #tpu.memory_space<vmem>>, vector<1x64x32xbf16>
    %23 = vector.shape_cast %22 : vector<1x64x32xbf16> to vector<64x32xbf16>
    %24 = vector.extract_strided_slice %0 {offsets = [0, 0, 0], sizes = [1, 8, 32], strides = [1, 1, 1]} : vector<2x8x32xf32> to vector<1x8x32xf32>
    %25 = vector.shape_cast %24 : vector<1x8x32xf32> to vector<8x32xf32>
    %26 = vector.extract_strided_slice %2 {offsets = [0, 0, 0, 0], sizes = [1, 8, 8, 8], strides = [1, 1, 1, 1]} : vector<2x8x8x8xf32> to vector<1x8x8x8xf32>
    %27 = vector.shape_cast %26 : vector<1x8x8x8xf32> to vector<8x8x8xf32>
    %28 = arith.truncf %25 : vector<8x32xf32> to vector<8x32xbf16>
    %cst = arith.constant dense<0.000000e+00> : vector<8x64xf32>
    %29 = tpu.matmul %28, %5, %cst {dimension_numbers = #tpu.dot_dimension_numbers<[1], [0], [0], [1], [0, 0, 1, 1], [], []>} : vector<8x32xbf16>, vector<32x64xbf16>, vector<8x64xf32> -> vector<8x64xf32>
    %30 = arith.truncf %25 : vector<8x32xf32> to vector<8x32xbf16>
    %cst_43 = arith.constant dense<0.000000e+00> : vector<8x64xf32>
    %31 = tpu.matmul %30, %7, %cst_43 {dimension_numbers = #tpu.dot_dimension_numbers<[1], [0], [0], [1], [0, 0, 1, 1], [], []>} : vector<8x32xbf16>, vector<32x64xbf16>, vector<8x64xf32> -> vector<8x64xf32>
    %32 = arith.truncf %25 : vector<8x32xf32> to vector<8x32xbf16>
    %cst_44 = arith.constant dense<0.000000e+00> : vector<8x64xf32>
    %33 = tpu.matmul %32, %9, %cst_44 {dimension_numbers = #tpu.dot_dimension_numbers<[1], [0], [0], [1], [0, 0, 1, 1], [], []>} : vector<8x32xbf16>, vector<32x64xbf16>, vector<8x64xf32> -> vector<8x64xf32>
    %34 = vector.extract_strided_slice %29 {offsets = [0, 0], sizes = [8, 8], strides = [1, 1]} : vector<8x64xf32> to vector<8x8xf32>
    %35 = vector.extract_strided_slice %31 {offsets = [0, 0], sizes = [8, 8], strides = [1, 1]} : vector<8x64xf32> to vector<8x8xf32>
    %36 = vector.extract_strided_slice %33 {offsets = [0, 0], sizes = [8, 8], strides = [1, 1]} : vector<8x64xf32> to vector<8x8xf32>
    %37 = tpu.transpose %35, [1, 0] : vector<8x8xf32> -> vector<8x8xf32>
    %cst_45 = arith.constant dense<0.000000e+00> : vector<8x8xf32>
    %38 = tpu.matmul %34, %37, %cst_45 {dimension_numbers = #tpu.dot_dimension_numbers<[1], [0], [0], [1], [0, 0, 1, 1], [], []>} : vector<8x8xf32>, vector<8x8xf32>, vector<8x8xf32> -> vector<8x8xf32>
    %cst_46 = arith.constant 0.353553385 : f32
    %39 = vector.broadcast %cst_46 : f32 to vector<8x8xf32>
    %40 = arith.mulf %38, %39 : vector<8x8xf32>
    %41 = vector.extract_strided_slice %27 {offsets = [0, 0, 0], sizes = [1, 8, 8], strides = [1, 1, 1]} : vector<8x8x8xf32> to vector<1x8x8xf32>
    %42 = vector.shape_cast %41 : vector<1x8x8xf32> to vector<8x8xf32>
    %cst_47 = arith.constant 0.000000e+00 : f32
    %43 = vector.broadcast %cst_47 : f32 to vector<8x8xf32>
    %44 = arith.cmpf one, %42, %43 : vector<8x8xf32>
    %cst_48 = arith.constant -1.000000e+09 : f32
    %45 = vector.broadcast %cst_48 : f32 to vector<8x8xf32>
    %46 = arith.select %44, %45, %40 : vector<8x8xi1>, vector<8x8xf32>
    %cst_49 = arith.constant dense<0xFF800000> : vector<8xf32>
    %47 = vector.multi_reduction <maximumf>, %46, %cst_49 [1] : vector<8x8xf32> to vector<8xf32>
    %48 = vector.shape_cast %47 : vector<8xf32> to vector<8x1xf32>
    %49 = vector.broadcast %48 : vector<8x1xf32> to vector<8x8xf32>
    %50 = arith.subf %46, %49 : vector<8x8xf32>
    %51 = math.exp %50 : vector<8x8xf32>
    %cst_50 = arith.constant dense<0.000000e+00> : vector<8xf32>
    %52 = vector.multi_reduction <add>, %51, %cst_50 [1] : vector<8x8xf32> to vector<8xf32>
    %53 = vector.shape_cast %52 : vector<8xf32> to vector<8x1xf32>
    %54 = tpu.reciprocal %53 {approx = true} : vector<8x1xf32> -> vector<8x1xf32>
    %55 = vector.broadcast %54 : vector<8x1xf32> to vector<8x8xf32>
    %56 = arith.mulf %51, %55 : vector<8x8xf32>
    %cst_51 = arith.constant dense<0.000000e+00> : vector<8x8xf32>
    %57 = tpu.matmul %56, %36, %cst_51 {dimension_numbers = #tpu.dot_dimension_numbers<[1], [0], [0], [1], [0, 0, 1, 1], [], []>} : vector<8x8xf32>, vector<8x8xf32>, vector<8x8xf32> -> vector<8x8xf32>
    %58 = vector.extract_strided_slice %29 {offsets = [0, 8], sizes = [8, 8], strides = [1, 1]} : vector<8x64xf32> to vector<8x8xf32>
    %59 = vector.extract_strided_slice %31 {offsets = [0, 8], sizes = [8, 8], strides = [1, 1]} : vector<8x64xf32> to vector<8x8xf32>
    %60 = vector.extract_strided_slice %33 {offsets = [0, 8], sizes = [8, 8], strides = [1, 1]} : vector<8x64xf32> to vector<8x8xf32>
    %61 = tpu.transpose %59, [1, 0] : vector<8x8xf32> -> vector<8x8xf32>
    %cst_52 = arith.constant dense<0.000000e+00> : vector<8x8xf32>
    %62 = tpu.matmul %58, %61, %cst_52 {dimension_numbers = #tpu.dot_dimension_numbers<[1], [0], [0], [1], [0, 0, 1, 1], [], []>} : vector<8x8xf32>, vector<8x8xf32>, vector<8x8xf32> -> vector<8x8xf32>
    %cst_53 = arith.constant 0.353553385 : f32
    %63 = vector.broadcast %cst_53 : f32 to vector<8x8xf32>
    %64 = arith.mulf %62, %63 : vector<8x8xf32>
    %65 = vector.extract_strided_slice %27 {offsets = [1, 0, 0], sizes = [1, 8, 8], strides = [1, 1, 1]} : vector<8x8x8xf32> to vector<1x8x8xf32>
    %66 = vector.shape_cast %65 : vector<1x8x8xf32> to vector<8x8xf32>
    %cst_54 = arith.constant 0.000000e+00 : f32
    %67 = vector.broadcast %cst_54 : f32 to vector<8x8xf32>
    %68 = arith.cmpf one, %66, %67 : vector<8x8xf32>
    %cst_55 = arith.constant -1.000000e+09 : f32
    %69 = vector.broadcast %cst_55 : f32 to vector<8x8xf32>
    %70 = arith.select %68, %69, %64 : vector<8x8xi1>, vector<8x8xf32>
    %cst_56 = arith.constant dense<0xFF800000> : vector<8xf32>
    %71 = vector.multi_reduction <maximumf>, %70, %cst_56 [1] : vector<8x8xf32> to vector<8xf32>
    %72 = vector.shape_cast %71 : vector<8xf32> to vector<8x1xf32>
    %73 = vector.broadcast %72 : vector<8x1xf32> to vector<8x8xf32>
    %74 = arith.subf %70, %73 : vector<8x8xf32>
    %75 = math.exp %74 : vector<8x8xf32>
    %cst_57 = arith.constant dense<0.000000e+00> : vector<8xf32>
    %76 = vector.multi_reduction <add>, %75, %cst_57 [1] : vector<8x8xf32> to vector<8xf32>
    %77 = vector.shape_cast %76 : vector<8xf32> to vector<8x1xf32>
    %78 = tpu.reciprocal %77 {approx = true} : vector<8x1xf32> -> vector<8x1xf32>
    %79 = vector.broadcast %78 : vector<8x1xf32> to vector<8x8xf32>
    %80 = arith.mulf %75, %79 : vector<8x8xf32>
    %cst_58 = arith.constant dense<0.000000e+00> : vector<8x8xf32>
    %81 = tpu.matmul %80, %60, %cst_58 {dimension_numbers = #tpu.dot_dimension_numbers<[1], [0], [0], [1], [0, 0, 1, 1], [], []>} : vector<8x8xf32>, vector<8x8xf32>, vector<8x8xf32> -> vector<8x8xf32>
    %82 = vector.extract_strided_slice %29 {offsets = [0, 16], sizes = [8, 8], strides = [1, 1]} : vector<8x64xf32> to vector<8x8xf32>
    %83 = vector.extract_strided_slice %31 {offsets = [0, 16], sizes = [8, 8], strides = [1, 1]} : vector<8x64xf32> to vector<8x8xf32>
    %84 = vector.extract_strided_slice %33 {offsets = [0, 16], sizes = [8, 8], strides = [1, 1]} : vector<8x64xf32> to vector<8x8xf32>
    %85 = tpu.transpose %83, [1, 0] : vector<8x8xf32> -> vector<8x8xf32>
    %cst_59 = arith.constant dense<0.000000e+00> : vector<8x8xf32>
    %86 = tpu.matmul %82, %85, %cst_59 {dimension_numbers = #tpu.dot_dimension_numbers<[1], [0], [0], [1], [0, 0, 1, 1], [], []>} : vector<8x8xf32>, vector<8x8xf32>, vector<8x8xf32> -> vector<8x8xf32>
    %cst_60 = arith.constant 0.353553385 : f32
    %87 = vector.broadcast %cst_60 : f32 to vector<8x8xf32>
    %88 = arith.mulf %86, %87 : vector<8x8xf32>
    %89 = vector.extract_strided_slice %27 {offsets = [2, 0, 0], sizes = [1, 8, 8], strides = [1, 1, 1]} : vector<8x8x8xf32> to vector<1x8x8xf32>
    %90 = vector.shape_cast %89 : vector<1x8x8xf32> to vector<8x8xf32>
    %cst_61 = arith.constant 0.000000e+00 : f32
    %91 = vector.broadcast %cst_61 : f32 to vector<8x8xf32>
    %92 = arith.cmpf one, %90, %91 : vector<8x8xf32>
    %cst_62 = arith.constant -1.000000e+09 : f32
    %93 = vector.broadcast %cst_62 : f32 to vector<8x8xf32>
    %94 = arith.select %92, %93, %88 : vector<8x8xi1>, vector<8x8xf32>
    %cst_63 = arith.constant dense<0xFF800000> : vector<8xf32>
    %95 = vector.multi_reduction <maximumf>, %94, %cst_63 [1] : vector<8x8xf32> to vector<8xf32>
    %96 = vector.shape_cast %95 : vector<8xf32> to vector<8x1xf32>
    %97 = vector.broadcast %96 : vector<8x1xf32> to vector<8x8xf32>
    %98 = arith.subf %94, %97 : vector<8x8xf32>
    %99 = math.exp %98 : vector<8x8xf32>
    %cst_64 = arith.constant dense<0.000000e+00> : vector<8xf32>
    %100 = vector.multi_reduction <add>, %99, %cst_64 [1] : vector<8x8xf32> to vector<8xf32>
    %101 = vector.shape_cast %100 : vector<8xf32> to vector<8x1xf32>
    %102 = tpu.reciprocal %101 {approx = true} : vector<8x1xf32> -> vector<8x1xf32>
    %103 = vector.broadcast %102 : vector<8x1xf32> to vector<8x8xf32>
    %104 = arith.mulf %99, %103 : vector<8x8xf32>
    %cst_65 = arith.constant dense<0.000000e+00> : vector<8x8xf32>
    %105 = tpu.matmul %104, %84, %cst_65 {dimension_numbers = #tpu.dot_dimension_numbers<[1], [0], [0], [1], [0, 0, 1, 1], [], []>} : vector<8x8xf32>, vector<8x8xf32>, vector<8x8xf32> -> vector<8x8xf32>
    %106 = vector.extract_strided_slice %29 {offsets = [0, 24], sizes = [8, 8], strides = [1, 1]} : vector<8x64xf32> to vector<8x8xf32>
    %107 = vector.extract_strided_slice %31 {offsets = [0, 24], sizes = [8, 8], strides = [1, 1]} : vector<8x64xf32> to vector<8x8xf32>
    %108 = vector.extract_strided_slice %33 {offsets = [0, 24], sizes = [8, 8], strides = [1, 1]} : vector<8x64xf32> to vector<8x8xf32>
    %109 = tpu.transpose %107, [1, 0] : vector<8x8xf32> -> vector<8x8xf32>
    %cst_66 = arith.constant dense<0.000000e+00> : vector<8x8xf32>
    %110 = tpu.matmul %106, %109, %cst_66 {dimension_numbers = #tpu.dot_dimension_numbers<[1], [0], [0], [1], [0, 0, 1, 1], [], []>} : vector<8x8xf32>, vector<8x8xf32>, vector<8x8xf32> -> vector<8x8xf32>
    %cst_67 = arith.constant 0.353553385 : f32
    %111 = vector.broadcast %cst_67 : f32 to vector<8x8xf32>
    %112 = arith.mulf %110, %111 : vector<8x8xf32>
    %113 = vector.extract_strided_slice %27 {offsets = [3, 0, 0], sizes = [1, 8, 8], strides = [1, 1, 1]} : vector<8x8x8xf32> to vector<1x8x8xf32>
    %114 = vector.shape_cast %113 : vector<1x8x8xf32> to vector<8x8xf32>
    %cst_68 = arith.constant 0.000000e+00 : f32
    %115 = vector.broadcast %cst_68 : f32 to vector<8x8xf32>
    %116 = arith.cmpf one, %114, %115 : vector<8x8xf32>
    %cst_69 = arith.constant -1.000000e+09 : f32
    %117 = vector.broadcast %cst_69 : f32 to vector<8x8xf32>
    %118 = arith.select %116, %117, %112 : vector<8x8xi1>, vector<8x8xf32>
    %cst_70 = arith.constant dense<0xFF800000> : vector<8xf32>
    %119 = vector.multi_reduction <maximumf>, %118, %cst_70 [1] : vector<8x8xf32> to vector<8xf32>
    %120 = vector.shape_cast %119 : vector<8xf32> to vector<8x1xf32>
    %121 = vector.broadcast %120 : vector<8x1xf32> to vector<8x8xf32>
    %122 = arith.subf %118, %121 : vector<8x8xf32>
    %123 = math.exp %122 : vector<8x8xf32>
    %cst_71 = arith.constant dense<0.000000e+00> : vector<8xf32>
    %124 = vector.multi_reduction <add>, %123, %cst_71 [1] : vector<8x8xf32> to vector<8xf32>
    %125 = vector.shape_cast %124 : vector<8xf32> to vector<8x1xf32>
    %126 = tpu.reciprocal %125 {approx = true} : vector<8x1xf32> -> vector<8x1xf32>
    %127 = vector.broadcast %126 : vector<8x1xf32> to vector<8x8xf32>
    %128 = arith.mulf %123, %127 : vector<8x8xf32>
    %cst_72 = arith.constant dense<0.000000e+00> : vector<8x8xf32>
    %129 = tpu.matmul %128, %108, %cst_72 {dimension_numbers = #tpu.dot_dimension_numbers<[1], [0], [0], [1], [0, 0, 1, 1], [], []>} : vector<8x8xf32>, vector<8x8xf32>, vector<8x8xf32> -> vector<8x8xf32>
    %130 = vector.extract_strided_slice %29 {offsets = [0, 32], sizes = [8, 8], strides = [1, 1]} : vector<8x64xf32> to vector<8x8xf32>
    %131 = vector.extract_strided_slice %31 {offsets = [0, 32], sizes = [8, 8], strides = [1, 1]} : vector<8x64xf32> to vector<8x8xf32>
    %132 = vector.extract_strided_slice %33 {offsets = [0, 32], sizes = [8, 8], strides = [1, 1]} : vector<8x64xf32> to vector<8x8xf32>
    %133 = tpu.transpose %131, [1, 0] : vector<8x8xf32> -> vector<8x8xf32>
    %cst_73 = arith.constant dense<0.000000e+00> : vector<8x8xf32>
    %134 = tpu.matmul %130, %133, %cst_73 {dimension_numbers = #tpu.dot_dimension_numbers<[1], [0], [0], [1], [0, 0, 1, 1], [], []>} : vector<8x8xf32>, vector<8x8xf32>, vector<8x8xf32> -> vector<8x8xf32>
    %cst_74 = arith.constant 0.353553385 : f32
    %135 = vector.broadcast %cst_74 : f32 to vector<8x8xf32>
    %136 = arith.mulf %134, %135 : vector<8x8xf32>
    %137 = vector.extract_strided_slice %27 {offsets = [4, 0, 0], sizes = [1, 8, 8], strides = [1, 1, 1]} : vector<8x8x8xf32> to vector<1x8x8xf32>
    %138 = vector.shape_cast %137 : vector<1x8x8xf32> to vector<8x8xf32>
    %cst_75 = arith.constant 0.000000e+00 : f32
    %139 = vector.broadcast %cst_75 : f32 to vector<8x8xf32>
    %140 = arith.cmpf one, %138, %139 : vector<8x8xf32>
    %cst_76 = arith.constant -1.000000e+09 : f32
    %141 = vector.broadcast %cst_76 : f32 to vector<8x8xf32>
    %142 = arith.select %140, %141, %136 : vector<8x8xi1>, vector<8x8xf32>
    %cst_77 = arith.constant dense<0xFF800000> : vector<8xf32>
    %143 = vector.multi_reduction <maximumf>, %142, %cst_77 [1] : vector<8x8xf32> to vector<8xf32>
    %144 = vector.shape_cast %143 : vector<8xf32> to vector<8x1xf32>
    %145 = vector.broadcast %144 : vector<8x1xf32> to vector<8x8xf32>
    %146 = arith.subf %142, %145 : vector<8x8xf32>
    %147 = math.exp %146 : vector<8x8xf32>
    %cst_78 = arith.constant dense<0.000000e+00> : vector<8xf32>
    %148 = vector.multi_reduction <add>, %147, %cst_78 [1] : vector<8x8xf32> to vector<8xf32>
    %149 = vector.shape_cast %148 : vector<8xf32> to vector<8x1xf32>
    %150 = tpu.reciprocal %149 {approx = true} : vector<8x1xf32> -> vector<8x1xf32>
    %151 = vector.broadcast %150 : vector<8x1xf32> to vector<8x8xf32>
    %152 = arith.mulf %147, %151 : vector<8x8xf32>
    %cst_79 = arith.constant dense<0.000000e+00> : vector<8x8xf32>
    %153 = tpu.matmul %152, %132, %cst_79 {dimension_numbers = #tpu.dot_dimension_numbers<[1], [0], [0], [1], [0, 0, 1, 1], [], []>} : vector<8x8xf32>, vector<8x8xf32>, vector<8x8xf32> -> vector<8x8xf32>
    %154 = vector.extract_strided_slice %29 {offsets = [0, 40], sizes = [8, 8], strides = [1, 1]} : vector<8x64xf32> to vector<8x8xf32>
    %155 = vector.extract_strided_slice %31 {offsets = [0, 40], sizes = [8, 8], strides = [1, 1]} : vector<8x64xf32> to vector<8x8xf32>
    %156 = vector.extract_strided_slice %33 {offsets = [0, 40], sizes = [8, 8], strides = [1, 1]} : vector<8x64xf32> to vector<8x8xf32>
    %157 = tpu.transpose %155, [1, 0] : vector<8x8xf32> -> vector<8x8xf32>
    %cst_80 = arith.constant dense<0.000000e+00> : vector<8x8xf32>
    %158 = tpu.matmul %154, %157, %cst_80 {dimension_numbers = #tpu.dot_dimension_numbers<[1], [0], [0], [1], [0, 0, 1, 1], [], []>} : vector<8x8xf32>, vector<8x8xf32>, vector<8x8xf32> -> vector<8x8xf32>
    %cst_81 = arith.constant 0.353553385 : f32
    %159 = vector.broadcast %cst_81 : f32 to vector<8x8xf32>
    %160 = arith.mulf %158, %159 : vector<8x8xf32>
    %161 = vector.extract_strided_slice %27 {offsets = [5, 0, 0], sizes = [1, 8, 8], strides = [1, 1, 1]} : vector<8x8x8xf32> to vector<1x8x8xf32>
    %162 = vector.shape_cast %161 : vector<1x8x8xf32> to vector<8x8xf32>
    %cst_82 = arith.constant 0.000000e+00 : f32
    %163 = vector.broadcast %cst_82 : f32 to vector<8x8xf32>
    %164 = arith.cmpf one, %162, %163 : vector<8x8xf32>
    %cst_83 = arith.constant -1.000000e+09 : f32
    %165 = vector.broadcast %cst_83 : f32 to vector<8x8xf32>
    %166 = arith.select %164, %165, %160 : vector<8x8xi1>, vector<8x8xf32>
    %cst_84 = arith.constant dense<0xFF800000> : vector<8xf32>
    %167 = vector.multi_reduction <maximumf>, %166, %cst_84 [1] : vector<8x8xf32> to vector<8xf32>
    %168 = vector.shape_cast %167 : vector<8xf32> to vector<8x1xf32>
    %169 = vector.broadcast %168 : vector<8x1xf32> to vector<8x8xf32>
    %170 = arith.subf %166, %169 : vector<8x8xf32>
    %171 = math.exp %170 : vector<8x8xf32>
    %cst_85 = arith.constant dense<0.000000e+00> : vector<8xf32>
    %172 = vector.multi_reduction <add>, %171, %cst_85 [1] : vector<8x8xf32> to vector<8xf32>
    %173 = vector.shape_cast %172 : vector<8xf32> to vector<8x1xf32>
    %174 = tpu.reciprocal %173 {approx = true} : vector<8x1xf32> -> vector<8x1xf32>
    %175 = vector.broadcast %174 : vector<8x1xf32> to vector<8x8xf32>
    %176 = arith.mulf %171, %175 : vector<8x8xf32>
    %cst_86 = arith.constant dense<0.000000e+00> : vector<8x8xf32>
    %177 = tpu.matmul %176, %156, %cst_86 {dimension_numbers = #tpu.dot_dimension_numbers<[1], [0], [0], [1], [0, 0, 1, 1], [], []>} : vector<8x8xf32>, vector<8x8xf32>, vector<8x8xf32> -> vector<8x8xf32>
    %178 = vector.extract_strided_slice %29 {offsets = [0, 48], sizes = [8, 8], strides = [1, 1]} : vector<8x64xf32> to vector<8x8xf32>
    %179 = vector.extract_strided_slice %31 {offsets = [0, 48], sizes = [8, 8], strides = [1, 1]} : vector<8x64xf32> to vector<8x8xf32>
    %180 = vector.extract_strided_slice %33 {offsets = [0, 48], sizes = [8, 8], strides = [1, 1]} : vector<8x64xf32> to vector<8x8xf32>
    %181 = tpu.transpose %179, [1, 0] : vector<8x8xf32> -> vector<8x8xf32>
    %cst_87 = arith.constant dense<0.000000e+00> : vector<8x8xf32>
    %182 = tpu.matmul %178, %181, %cst_87 {dimension_numbers = #tpu.dot_dimension_numbers<[1], [0], [0], [1], [0, 0, 1, 1], [], []>} : vector<8x8xf32>, vector<8x8xf32>, vector<8x8xf32> -> vector<8x8xf32>
    %cst_88 = arith.constant 0.353553385 : f32
    %183 = vector.broadcast %cst_88 : f32 to vector<8x8xf32>
    %184 = arith.mulf %182, %183 : vector<8x8xf32>
    %185 = vector.extract_strided_slice %27 {offsets = [6, 0, 0], sizes = [1, 8, 8], strides = [1, 1, 1]} : vector<8x8x8xf32> to vector<1x8x8xf32>
    %186 = vector.shape_cast %185 : vector<1x8x8xf32> to vector<8x8xf32>
    %cst_89 = arith.constant 0.000000e+00 : f32
    %187 = vector.broadcast %cst_89 : f32 to vector<8x8xf32>
    %188 = arith.cmpf one, %186, %187 : vector<8x8xf32>
    %cst_90 = arith.constant -1.000000e+09 : f32
    %189 = vector.broadcast %cst_90 : f32 to vector<8x8xf32>
    %190 = arith.select %188, %189, %184 : vector<8x8xi1>, vector<8x8xf32>
    %cst_91 = arith.constant dense<0xFF800000> : vector<8xf32>
    %191 = vector.multi_reduction <maximumf>, %190, %cst_91 [1] : vector<8x8xf32> to vector<8xf32>
    %192 = vector.shape_cast %191 : vector<8xf32> to vector<8x1xf32>
    %193 = vector.broadcast %192 : vector<8x1xf32> to vector<8x8xf32>
    %194 = arith.subf %190, %193 : vector<8x8xf32>
    %195 = math.exp %194 : vector<8x8xf32>
    %cst_92 = arith.constant dense<0.000000e+00> : vector<8xf32>
    %196 = vector.multi_reduction <add>, %195, %cst_92 [1] : vector<8x8xf32> to vector<8xf32>
    %197 = vector.shape_cast %196 : vector<8xf32> to vector<8x1xf32>
    %198 = tpu.reciprocal %197 {approx = true} : vector<8x1xf32> -> vector<8x1xf32>
    %199 = vector.broadcast %198 : vector<8x1xf32> to vector<8x8xf32>
    %200 = arith.mulf %195, %199 : vector<8x8xf32>
    %cst_93 = arith.constant dense<0.000000e+00> : vector<8x8xf32>
    %201 = tpu.matmul %200, %180, %cst_93 {dimension_numbers = #tpu.dot_dimension_numbers<[1], [0], [0], [1], [0, 0, 1, 1], [], []>} : vector<8x8xf32>, vector<8x8xf32>, vector<8x8xf32> -> vector<8x8xf32>
    %202 = vector.extract_strided_slice %29 {offsets = [0, 56], sizes = [8, 8], strides = [1, 1]} : vector<8x64xf32> to vector<8x8xf32>
    %203 = vector.extract_strided_slice %31 {offsets = [0, 56], sizes = [8, 8], strides = [1, 1]} : vector<8x64xf32> to vector<8x8xf32>
    %204 = vector.extract_strided_slice %33 {offsets = [0, 56], sizes = [8, 8], strides = [1, 1]} : vector<8x64xf32> to vector<8x8xf32>
    %205 = tpu.transpose %203, [1, 0] : vector<8x8xf32> -> vector<8x8xf32>
    %cst_94 = arith.constant dense<0.000000e+00> : vector<8x8xf32>
    %206 = tpu.matmul %202, %205, %cst_94 {dimension_numbers = #tpu.dot_dimension_numbers<[1], [0], [0], [1], [0, 0, 1, 1], [], []>} : vector<8x8xf32>, vector<8x8xf32>, vector<8x8xf32> -> vector<8x8xf32>
    %cst_95 = arith.constant 0.353553385 : f32
    %207 = vector.broadcast %cst_95 : f32 to vector<8x8xf32>
    %208 = arith.mulf %206, %207 : vector<8x8xf32>
    %209 = vector.extract_strided_slice %27 {offsets = [7, 0, 0], sizes = [1, 8, 8], strides = [1, 1, 1]} : vector<8x8x8xf32> to vector<1x8x8xf32>
    %210 = vector.shape_cast %209 : vector<1x8x8xf32> to vector<8x8xf32>
    %cst_96 = arith.constant 0.000000e+00 : f32
    %211 = vector.broadcast %cst_96 : f32 to vector<8x8xf32>
    %212 = arith.cmpf one, %210, %211 : vector<8x8xf32>
    %cst_97 = arith.constant -1.000000e+09 : f32
    %213 = vector.broadcast %cst_97 : f32 to vector<8x8xf32>
    %214 = arith.select %212, %213, %208 : vector<8x8xi1>, vector<8x8xf32>
    %cst_98 = arith.constant dense<0xFF800000> : vector<8xf32>
    %215 = vector.multi_reduction <maximumf>, %214, %cst_98 [1] : vector<8x8xf32> to vector<8xf32>
    %216 = vector.shape_cast %215 : vector<8xf32> to vector<8x1xf32>
    %217 = vector.broadcast %216 : vector<8x1xf32> to vector<8x8xf32>
    %218 = arith.subf %214, %217 : vector<8x8xf32>
    %219 = math.exp %218 : vector<8x8xf32>
    %cst_99 = arith.constant dense<0.000000e+00> : vector<8xf32>
    %220 = vector.multi_reduction <add>, %219, %cst_99 [1] : vector<8x8xf32> to vector<8xf32>
    %221 = vector.shape_cast %220 : vector<8xf32> to vector<8x1xf32>
    %222 = tpu.reciprocal %221 {approx = true} : vector<8x1xf32> -> vector<8x1xf32>
    %223 = vector.broadcast %222 : vector<8x1xf32> to vector<8x8xf32>
    %224 = arith.mulf %219, %223 : vector<8x8xf32>
    %cst_100 = arith.constant dense<0.000000e+00> : vector<8x8xf32>
    %225 = tpu.matmul %224, %204, %cst_100 {dimension_numbers = #tpu.dot_dimension_numbers<[1], [0], [0], [1], [0, 0, 1, 1], [], []>} : vector<8x8xf32>, vector<8x8xf32>, vector<8x8xf32> -> vector<8x8xf32>
    %226 = tpu.concatenate %57, %81, %105, %129, %153, %177, %201, %225 in 1 : vector<8x8xf32>, vector<8x8xf32>, vector<8x8xf32>, vector<8x8xf32>, vector<8x8xf32>, vector<8x8xf32>, vector<8x8xf32>, vector<8x8xf32> -> vector<8x64xf32>
    %227 = arith.truncf %226 : vector<8x64xf32> to vector<8x64xbf16>
    %cst_101 = arith.constant dense<0.000000e+00> : vector<8x32xf32>
    %228 = tpu.matmul %227, %11, %cst_101 {dimension_numbers = #tpu.dot_dimension_numbers<[1], [0], [0], [1], [0, 0, 1, 1], [], []>} : vector<8x64xbf16>, vector<64x32xbf16>, vector<8x32xf32> -> vector<8x32xf32>
    %229 = arith.addf %25, %228 : vector<8x32xf32>
    %cst_102 = arith.constant dense<0.000000e+00> : vector<8xf32>
    %230 = vector.multi_reduction <add>, %229, %cst_102 [1] : vector<8x32xf32> to vector<8xf32>
    %231 = vector.shape_cast %230 : vector<8xf32> to vector<8x1xf32>
    %cst_103 = arith.constant 3.200000e+01 : f32
    %232 = vector.broadcast %cst_103 : f32 to vector<8x1xf32>
    %233 = arith.divf %231, %232 : vector<8x1xf32>
    %234 = vector.broadcast %233 : vector<8x1xf32> to vector<8x32xf32>
    %235 = arith.subf %229, %234 : vector<8x32xf32>
    %236 = arith.mulf %235, %235 : vector<8x32xf32>
    %cst_104 = arith.constant dense<0.000000e+00> : vector<8xf32>
    %237 = vector.multi_reduction <add>, %236, %cst_104 [1] : vector<8x32xf32> to vector<8xf32>
    %238 = vector.shape_cast %237 : vector<8xf32> to vector<8x1xf32>
    %cst_105 = arith.constant 3.200000e+01 : f32
    %239 = vector.broadcast %cst_105 : f32 to vector<8x1xf32>
    %240 = arith.divf %238, %239 : vector<8x1xf32>
    %241 = vector.broadcast %233 : vector<8x1xf32> to vector<8x32xf32>
    %242 = arith.subf %229, %241 : vector<8x32xf32>
    %cst_106 = arith.constant 9.99999974E-6 : f32
    %243 = vector.broadcast %cst_106 : f32 to vector<8x1xf32>
    %244 = arith.addf %240, %243 : vector<8x1xf32>
    %245 = math.rsqrt %244 : vector<8x1xf32>
    %246 = vector.broadcast %245 : vector<8x1xf32> to vector<8x32xf32>
    %247 = arith.mulf %242, %246 : vector<8x32xf32>
    %248 = vector.extract_strided_slice %1 {offsets = [0, 0, 0], sizes = [1, 8, 32], strides = [1, 1, 1]} : vector<2x8x32xf32> to vector<1x8x32xf32>
    %249 = vector.shape_cast %248 : vector<1x8x32xf32> to vector<8x32xf32>
    %250 = vector.extract_strided_slice %3 {offsets = [0, 0, 0, 0], sizes = [1, 8, 8, 8], strides = [1, 1, 1, 1]} : vector<2x8x8x8xf32> to vector<1x8x8x8xf32>
    %251 = vector.shape_cast %250 : vector<1x8x8x8xf32> to vector<8x8x8xf32>
    %252 = arith.truncf %247 : vector<8x32xf32> to vector<8x32xbf16>
    %cst_107 = arith.constant dense<0.000000e+00> : vector<8x64xf32>
    %253 = tpu.matmul %252, %13, %cst_107 {dimension_numbers = #tpu.dot_dimension_numbers<[1], [0], [0], [1], [0, 0, 1, 1], [], []>} : vector<8x32xbf16>, vector<32x64xbf16>, vector<8x64xf32> -> vector<8x64xf32>
    %254 = arith.truncf %249 : vector<8x32xf32> to vector<8x32xbf16>
    %cst_108 = arith.constant dense<0.000000e+00> : vector<8x64xf32>
    %255 = tpu.matmul %254, %15, %cst_108 {dimension_numbers = #tpu.dot_dimension_numbers<[1], [0], [0], [1], [0, 0, 1, 1], [], []>} : vector<8x32xbf16>, vector<32x64xbf16>, vector<8x64xf32> -> vector<8x64xf32>
    %256 = arith.truncf %249 : vector<8x32xf32> to vector<8x32xbf16>
    %cst_109 = arith.constant dense<0.000000e+00> : vector<8x64xf32>
    %257 = tpu.matmul %256, %17, %cst_109 {dimension_numbers = #tpu.dot_dimension_numbers<[1], [0], [0], [1], [0, 0, 1, 1], [], []>} : vector<8x32xbf16>, vector<32x64xbf16>, vector<8x64xf32> -> vector<8x64xf32>
    %258 = vector.extract_strided_slice %253 {offsets = [0, 0], sizes = [8, 8], strides = [1, 1]} : vector<8x64xf32> to vector<8x8xf32>
    %259 = vector.extract_strided_slice %255 {offsets = [0, 0], sizes = [8, 8], strides = [1, 1]} : vector<8x64xf32> to vector<8x8xf32>
    %260 = vector.extract_strided_slice %257 {offsets = [0, 0], sizes = [8, 8], strides = [1, 1]} : vector<8x64xf32> to vector<8x8xf32>
    %261 = tpu.transpose %259, [1, 0] : vector<8x8xf32> -> vector<8x8xf32>
    %cst_110 = arith.constant dense<0.000000e+00> : vector<8x8xf32>
    %262 = tpu.matmul %258, %261, %cst_110 {dimension_numbers = #tpu.dot_dimension_numbers<[1], [0], [0], [1], [0, 0, 1, 1], [], []>} : vector<8x8xf32>, vector<8x8xf32>, vector<8x8xf32> -> vector<8x8xf32>
    %cst_111 = arith.constant 0.353553385 : f32
    %263 = vector.broadcast %cst_111 : f32 to vector<8x8xf32>
    %264 = arith.mulf %262, %263 : vector<8x8xf32>
    %265 = vector.extract_strided_slice %251 {offsets = [0, 0, 0], sizes = [1, 8, 8], strides = [1, 1, 1]} : vector<8x8x8xf32> to vector<1x8x8xf32>
    %266 = vector.shape_cast %265 : vector<1x8x8xf32> to vector<8x8xf32>
    %cst_112 = arith.constant 0.000000e+00 : f32
    %267 = vector.broadcast %cst_112 : f32 to vector<8x8xf32>
    %268 = arith.cmpf one, %266, %267 : vector<8x8xf32>
    %cst_113 = arith.constant -1.000000e+09 : f32
    %269 = vector.broadcast %cst_113 : f32 to vector<8x8xf32>
    %270 = arith.select %268, %269, %264 : vector<8x8xi1>, vector<8x8xf32>
    %cst_114 = arith.constant dense<0xFF800000> : vector<8xf32>
    %271 = vector.multi_reduction <maximumf>, %270, %cst_114 [1] : vector<8x8xf32> to vector<8xf32>
    %272 = vector.shape_cast %271 : vector<8xf32> to vector<8x1xf32>
    %273 = vector.broadcast %272 : vector<8x1xf32> to vector<8x8xf32>
    %274 = arith.subf %270, %273 : vector<8x8xf32>
    %275 = math.exp %274 : vector<8x8xf32>
    %cst_115 = arith.constant dense<0.000000e+00> : vector<8xf32>
    %276 = vector.multi_reduction <add>, %275, %cst_115 [1] : vector<8x8xf32> to vector<8xf32>
    %277 = vector.shape_cast %276 : vector<8xf32> to vector<8x1xf32>
    %278 = tpu.reciprocal %277 {approx = true} : vector<8x1xf32> -> vector<8x1xf32>
    %279 = vector.broadcast %278 : vector<8x1xf32> to vector<8x8xf32>
    %280 = arith.mulf %275, %279 : vector<8x8xf32>
    %cst_116 = arith.constant dense<0.000000e+00> : vector<8x8xf32>
    %281 = tpu.matmul %280, %260, %cst_116 {dimension_numbers = #tpu.dot_dimension_numbers<[1], [0], [0], [1], [0, 0, 1, 1], [], []>} : vector<8x8xf32>, vector<8x8xf32>, vector<8x8xf32> -> vector<8x8xf32>
    %282 = vector.extract_strided_slice %253 {offsets = [0, 8], sizes = [8, 8], strides = [1, 1]} : vector<8x64xf32> to vector<8x8xf32>
    %283 = vector.extract_strided_slice %255 {offsets = [0, 8], sizes = [8, 8], strides = [1, 1]} : vector<8x64xf32> to vector<8x8xf32>
    %284 = vector.extract_strided_slice %257 {offsets = [0, 8], sizes = [8, 8], strides = [1, 1]} : vector<8x64xf32> to vector<8x8xf32>
    %285 = tpu.transpose %283, [1, 0] : vector<8x8xf32> -> vector<8x8xf32>
    %cst_117 = arith.constant dense<0.000000e+00> : vector<8x8xf32>
    %286 = tpu.matmul %282, %285, %cst_117 {dimension_numbers = #tpu.dot_dimension_numbers<[1], [0], [0], [1], [0, 0, 1, 1], [], []>} : vector<8x8xf32>, vector<8x8xf32>, vector<8x8xf32> -> vector<8x8xf32>
    %cst_118 = arith.constant 0.353553385 : f32
    %287 = vector.broadcast %cst_118 : f32 to vector<8x8xf32>
    %288 = arith.mulf %286, %287 : vector<8x8xf32>
    %289 = vector.extract_strided_slice %251 {offsets = [1, 0, 0], sizes = [1, 8, 8], strides = [1, 1, 1]} : vector<8x8x8xf32> to vector<1x8x8xf32>
    %290 = vector.shape_cast %289 : vector<1x8x8xf32> to vector<8x8xf32>
    %cst_119 = arith.constant 0.000000e+00 : f32
    %291 = vector.broadcast %cst_119 : f32 to vector<8x8xf32>
    %292 = arith.cmpf one, %290, %291 : vector<8x8xf32>
    %cst_120 = arith.constant -1.000000e+09 : f32
    %293 = vector.broadcast %cst_120 : f32 to vector<8x8xf32>
    %294 = arith.select %292, %293, %288 : vector<8x8xi1>, vector<8x8xf32>
    %cst_121 = arith.constant dense<0xFF800000> : vector<8xf32>
    %295 = vector.multi_reduction <maximumf>, %294, %cst_121 [1] : vector<8x8xf32> to vector<8xf32>
    %296 = vector.shape_cast %295 : vector<8xf32> to vector<8x1xf32>
    %297 = vector.broadcast %296 : vector<8x1xf32> to vector<8x8xf32>
    %298 = arith.subf %294, %297 : vector<8x8xf32>
    %299 = math.exp %298 : vector<8x8xf32>
    %cst_122 = arith.constant dense<0.000000e+00> : vector<8xf32>
    %300 = vector.multi_reduction <add>, %299, %cst_122 [1] : vector<8x8xf32> to vector<8xf32>
    %301 = vector.shape_cast %300 : vector<8xf32> to vector<8x1xf32>
    %302 = tpu.reciprocal %301 {approx = true} : vector<8x1xf32> -> vector<8x1xf32>
    %303 = vector.broadcast %302 : vector<8x1xf32> to vector<8x8xf32>
    %304 = arith.mulf %299, %303 : vector<8x8xf32>
    %cst_123 = arith.constant dense<0.000000e+00> : vector<8x8xf32>
    %305 = tpu.matmul %304, %284, %cst_123 {dimension_numbers = #tpu.dot_dimension_numbers<[1], [0], [0], [1], [0, 0, 1, 1], [], []>} : vector<8x8xf32>, vector<8x8xf32>, vector<8x8xf32> -> vector<8x8xf32>
    %306 = vector.extract_strided_slice %253 {offsets = [0, 16], sizes = [8, 8], strides = [1, 1]} : vector<8x64xf32> to vector<8x8xf32>
    %307 = vector.extract_strided_slice %255 {offsets = [0, 16], sizes = [8, 8], strides = [1, 1]} : vector<8x64xf32> to vector<8x8xf32>
    %308 = vector.extract_strided_slice %257 {offsets = [0, 16], sizes = [8, 8], strides = [1, 1]} : vector<8x64xf32> to vector<8x8xf32>
    %309 = tpu.transpose %307, [1, 0] : vector<8x8xf32> -> vector<8x8xf32>
    %cst_124 = arith.constant dense<0.000000e+00> : vector<8x8xf32>
    %310 = tpu.matmul %306, %309, %cst_124 {dimension_numbers = #tpu.dot_dimension_numbers<[1], [0], [0], [1], [0, 0, 1, 1], [], []>} : vector<8x8xf32>, vector<8x8xf32>, vector<8x8xf32> -> vector<8x8xf32>
    %cst_125 = arith.constant 0.353553385 : f32
    %311 = vector.broadcast %cst_125 : f32 to vector<8x8xf32>
    %312 = arith.mulf %310, %311 : vector<8x8xf32>
    %313 = vector.extract_strided_slice %251 {offsets = [2, 0, 0], sizes = [1, 8, 8], strides = [1, 1, 1]} : vector<8x8x8xf32> to vector<1x8x8xf32>
    %314 = vector.shape_cast %313 : vector<1x8x8xf32> to vector<8x8xf32>
    %cst_126 = arith.constant 0.000000e+00 : f32
    %315 = vector.broadcast %cst_126 : f32 to vector<8x8xf32>
    %316 = arith.cmpf one, %314, %315 : vector<8x8xf32>
    %cst_127 = arith.constant -1.000000e+09 : f32
    %317 = vector.broadcast %cst_127 : f32 to vector<8x8xf32>
    %318 = arith.select %316, %317, %312 : vector<8x8xi1>, vector<8x8xf32>
    %cst_128 = arith.constant dense<0xFF800000> : vector<8xf32>
    %319 = vector.multi_reduction <maximumf>, %318, %cst_128 [1] : vector<8x8xf32> to vector<8xf32>
    %320 = vector.shape_cast %319 : vector<8xf32> to vector<8x1xf32>
    %321 = vector.broadcast %320 : vector<8x1xf32> to vector<8x8xf32>
    %322 = arith.subf %318, %321 : vector<8x8xf32>
    %323 = math.exp %322 : vector<8x8xf32>
    %cst_129 = arith.constant dense<0.000000e+00> : vector<8xf32>
    %324 = vector.multi_reduction <add>, %323, %cst_129 [1] : vector<8x8xf32> to vector<8xf32>
    %325 = vector.shape_cast %324 : vector<8xf32> to vector<8x1xf32>
    %326 = tpu.reciprocal %325 {approx = true} : vector<8x1xf32> -> vector<8x1xf32>
    %327 = vector.broadcast %326 : vector<8x1xf32> to vector<8x8xf32>
    %328 = arith.mulf %323, %327 : vector<8x8xf32>
    %cst_130 = arith.constant dense<0.000000e+00> : vector<8x8xf32>
    %329 = tpu.matmul %328, %308, %cst_130 {dimension_numbers = #tpu.dot_dimension_numbers<[1], [0], [0], [1], [0, 0, 1, 1], [], []>} : vector<8x8xf32>, vector<8x8xf32>, vector<8x8xf32> -> vector<8x8xf32>
    %330 = vector.extract_strided_slice %253 {offsets = [0, 24], sizes = [8, 8], strides = [1, 1]} : vector<8x64xf32> to vector<8x8xf32>
    %331 = vector.extract_strided_slice %255 {offsets = [0, 24], sizes = [8, 8], strides = [1, 1]} : vector<8x64xf32> to vector<8x8xf32>
    %332 = vector.extract_strided_slice %257 {offsets = [0, 24], sizes = [8, 8], strides = [1, 1]} : vector<8x64xf32> to vector<8x8xf32>
    %333 = tpu.transpose %331, [1, 0] : vector<8x8xf32> -> vector<8x8xf32>
    %cst_131 = arith.constant dense<0.000000e+00> : vector<8x8xf32>
    %334 = tpu.matmul %330, %333, %cst_131 {dimension_numbers = #tpu.dot_dimension_numbers<[1], [0], [0], [1], [0, 0, 1, 1], [], []>} : vector<8x8xf32>, vector<8x8xf32>, vector<8x8xf32> -> vector<8x8xf32>
    %cst_132 = arith.constant 0.353553385 : f32
    %335 = vector.broadcast %cst_132 : f32 to vector<8x8xf32>
    %336 = arith.mulf %334, %335 : vector<8x8xf32>
    %337 = vector.extract_strided_slice %251 {offsets = [3, 0, 0], sizes = [1, 8, 8], strides = [1, 1, 1]} : vector<8x8x8xf32> to vector<1x8x8xf32>
    %338 = vector.shape_cast %337 : vector<1x8x8xf32> to vector<8x8xf32>
    %cst_133 = arith.constant 0.000000e+00 : f32
    %339 = vector.broadcast %cst_133 : f32 to vector<8x8xf32>
    %340 = arith.cmpf one, %338, %339 : vector<8x8xf32>
    %cst_134 = arith.constant -1.000000e+09 : f32
    %341 = vector.broadcast %cst_134 : f32 to vector<8x8xf32>
    %342 = arith.select %340, %341, %336 : vector<8x8xi1>, vector<8x8xf32>
    %cst_135 = arith.constant dense<0xFF800000> : vector<8xf32>
    %343 = vector.multi_reduction <maximumf>, %342, %cst_135 [1] : vector<8x8xf32> to vector<8xf32>
    %344 = vector.shape_cast %343 : vector<8xf32> to vector<8x1xf32>
    %345 = vector.broadcast %344 : vector<8x1xf32> to vector<8x8xf32>
    %346 = arith.subf %342, %345 : vector<8x8xf32>
    %347 = math.exp %346 : vector<8x8xf32>
    %cst_136 = arith.constant dense<0.000000e+00> : vector<8xf32>
    %348 = vector.multi_reduction <add>, %347, %cst_136 [1] : vector<8x8xf32> to vector<8xf32>
    %349 = vector.shape_cast %348 : vector<8xf32> to vector<8x1xf32>
    %350 = tpu.reciprocal %349 {approx = true} : vector<8x1xf32> -> vector<8x1xf32>
    %351 = vector.broadcast %350 : vector<8x1xf32> to vector<8x8xf32>
    %352 = arith.mulf %347, %351 : vector<8x8xf32>
    %cst_137 = arith.constant dense<0.000000e+00> : vector<8x8xf32>
    %353 = tpu.matmul %352, %332, %cst_137 {dimension_numbers = #tpu.dot_dimension_numbers<[1], [0], [0], [1], [0, 0, 1, 1], [], []>} : vector<8x8xf32>, vector<8x8xf32>, vector<8x8xf32> -> vector<8x8xf32>
    %354 = vector.extract_strided_slice %253 {offsets = [0, 32], sizes = [8, 8], strides = [1, 1]} : vector<8x64xf32> to vector<8x8xf32>
    %355 = vector.extract_strided_slice %255 {offsets = [0, 32], sizes = [8, 8], strides = [1, 1]} : vector<8x64xf32> to vector<8x8xf32>
    %356 = vector.extract_strided_slice %257 {offsets = [0, 32], sizes = [8, 8], strides = [1, 1]} : vector<8x64xf32> to vector<8x8xf32>
    %357 = tpu.transpose %355, [1, 0] : vector<8x8xf32> -> vector<8x8xf32>
    %cst_138 = arith.constant dense<0.000000e+00> : vector<8x8xf32>
    %358 = tpu.matmul %354, %357, %cst_138 {dimension_numbers = #tpu.dot_dimension_numbers<[1], [0], [0], [1], [0, 0, 1, 1], [], []>} : vector<8x8xf32>, vector<8x8xf32>, vector<8x8xf32> -> vector<8x8xf32>
    %cst_139 = arith.constant 0.353553385 : f32
    %359 = vector.broadcast %cst_139 : f32 to vector<8x8xf32>
    %360 = arith.mulf %358, %359 : vector<8x8xf32>
    %361 = vector.extract_strided_slice %251 {offsets = [4, 0, 0], sizes = [1, 8, 8], strides = [1, 1, 1]} : vector<8x8x8xf32> to vector<1x8x8xf32>
    %362 = vector.shape_cast %361 : vector<1x8x8xf32> to vector<8x8xf32>
    %cst_140 = arith.constant 0.000000e+00 : f32
    %363 = vector.broadcast %cst_140 : f32 to vector<8x8xf32>
    %364 = arith.cmpf one, %362, %363 : vector<8x8xf32>
    %cst_141 = arith.constant -1.000000e+09 : f32
    %365 = vector.broadcast %cst_141 : f32 to vector<8x8xf32>
    %366 = arith.select %364, %365, %360 : vector<8x8xi1>, vector<8x8xf32>
    %cst_142 = arith.constant dense<0xFF800000> : vector<8xf32>
    %367 = vector.multi_reduction <maximumf>, %366, %cst_142 [1] : vector<8x8xf32> to vector<8xf32>
    %368 = vector.shape_cast %367 : vector<8xf32> to vector<8x1xf32>
    %369 = vector.broadcast %368 : vector<8x1xf32> to vector<8x8xf32>
    %370 = arith.subf %366, %369 : vector<8x8xf32>
    %371 = math.exp %370 : vector<8x8xf32>
    %cst_143 = arith.constant dense<0.000000e+00> : vector<8xf32>
    %372 = vector.multi_reduction <add>, %371, %cst_143 [1] : vector<8x8xf32> to vector<8xf32>
    %373 = vector.shape_cast %372 : vector<8xf32> to vector<8x1xf32>
    %374 = tpu.reciprocal %373 {approx = true} : vector<8x1xf32> -> vector<8x1xf32>
    %375 = vector.broadcast %374 : vector<8x1xf32> to vector<8x8xf32>
    %376 = arith.mulf %371, %375 : vector<8x8xf32>
    %cst_144 = arith.constant dense<0.000000e+00> : vector<8x8xf32>
    %377 = tpu.matmul %376, %356, %cst_144 {dimension_numbers = #tpu.dot_dimension_numbers<[1], [0], [0], [1], [0, 0, 1, 1], [], []>} : vector<8x8xf32>, vector<8x8xf32>, vector<8x8xf32> -> vector<8x8xf32>
    %378 = vector.extract_strided_slice %253 {offsets = [0, 40], sizes = [8, 8], strides = [1, 1]} : vector<8x64xf32> to vector<8x8xf32>
    %379 = vector.extract_strided_slice %255 {offsets = [0, 40], sizes = [8, 8], strides = [1, 1]} : vector<8x64xf32> to vector<8x8xf32>
    %380 = vector.extract_strided_slice %257 {offsets = [0, 40], sizes = [8, 8], strides = [1, 1]} : vector<8x64xf32> to vector<8x8xf32>
    %381 = tpu.transpose %379, [1, 0] : vector<8x8xf32> -> vector<8x8xf32>
    %cst_145 = arith.constant dense<0.000000e+00> : vector<8x8xf32>
    %382 = tpu.matmul %378, %381, %cst_145 {dimension_numbers = #tpu.dot_dimension_numbers<[1], [0], [0], [1], [0, 0, 1, 1], [], []>} : vector<8x8xf32>, vector<8x8xf32>, vector<8x8xf32> -> vector<8x8xf32>
    %cst_146 = arith.constant 0.353553385 : f32
    %383 = vector.broadcast %cst_146 : f32 to vector<8x8xf32>
    %384 = arith.mulf %382, %383 : vector<8x8xf32>
    %385 = vector.extract_strided_slice %251 {offsets = [5, 0, 0], sizes = [1, 8, 8], strides = [1, 1, 1]} : vector<8x8x8xf32> to vector<1x8x8xf32>
    %386 = vector.shape_cast %385 : vector<1x8x8xf32> to vector<8x8xf32>
    %cst_147 = arith.constant 0.000000e+00 : f32
    %387 = vector.broadcast %cst_147 : f32 to vector<8x8xf32>
    %388 = arith.cmpf one, %386, %387 : vector<8x8xf32>
    %cst_148 = arith.constant -1.000000e+09 : f32
    %389 = vector.broadcast %cst_148 : f32 to vector<8x8xf32>
    %390 = arith.select %388, %389, %384 : vector<8x8xi1>, vector<8x8xf32>
    %cst_149 = arith.constant dense<0xFF800000> : vector<8xf32>
    %391 = vector.multi_reduction <maximumf>, %390, %cst_149 [1] : vector<8x8xf32> to vector<8xf32>
    %392 = vector.shape_cast %391 : vector<8xf32> to vector<8x1xf32>
    %393 = vector.broadcast %392 : vector<8x1xf32> to vector<8x8xf32>
    %394 = arith.subf %390, %393 : vector<8x8xf32>
    %395 = math.exp %394 : vector<8x8xf32>
    %cst_150 = arith.constant dense<0.000000e+00> : vector<8xf32>
    %396 = vector.multi_reduction <add>, %395, %cst_150 [1] : vector<8x8xf32> to vector<8xf32>
    %397 = vector.shape_cast %396 : vector<8xf32> to vector<8x1xf32>
    %398 = tpu.reciprocal %397 {approx = true} : vector<8x1xf32> -> vector<8x1xf32>
    %399 = vector.broadcast %398 : vector<8x1xf32> to vector<8x8xf32>
    %400 = arith.mulf %395, %399 : vector<8x8xf32>
    %cst_151 = arith.constant dense<0.000000e+00> : vector<8x8xf32>
    %401 = tpu.matmul %400, %380, %cst_151 {dimension_numbers = #tpu.dot_dimension_numbers<[1], [0], [0], [1], [0, 0, 1, 1], [], []>} : vector<8x8xf32>, vector<8x8xf32>, vector<8x8xf32> -> vector<8x8xf32>
    %402 = vector.extract_strided_slice %253 {offsets = [0, 48], sizes = [8, 8], strides = [1, 1]} : vector<8x64xf32> to vector<8x8xf32>
    %403 = vector.extract_strided_slice %255 {offsets = [0, 48], sizes = [8, 8], strides = [1, 1]} : vector<8x64xf32> to vector<8x8xf32>
    %404 = vector.extract_strided_slice %257 {offsets = [0, 48], sizes = [8, 8], strides = [1, 1]} : vector<8x64xf32> to vector<8x8xf32>
    %405 = tpu.transpose %403, [1, 0] : vector<8x8xf32> -> vector<8x8xf32>
    %cst_152 = arith.constant dense<0.000000e+00> : vector<8x8xf32>
    %406 = tpu.matmul %402, %405, %cst_152 {dimension_numbers = #tpu.dot_dimension_numbers<[1], [0], [0], [1], [0, 0, 1, 1], [], []>} : vector<8x8xf32>, vector<8x8xf32>, vector<8x8xf32> -> vector<8x8xf32>
    %cst_153 = arith.constant 0.353553385 : f32
    %407 = vector.broadcast %cst_153 : f32 to vector<8x8xf32>
    %408 = arith.mulf %406, %407 : vector<8x8xf32>
    %409 = vector.extract_strided_slice %251 {offsets = [6, 0, 0], sizes = [1, 8, 8], strides = [1, 1, 1]} : vector<8x8x8xf32> to vector<1x8x8xf32>
    %410 = vector.shape_cast %409 : vector<1x8x8xf32> to vector<8x8xf32>
    %cst_154 = arith.constant 0.000000e+00 : f32
    %411 = vector.broadcast %cst_154 : f32 to vector<8x8xf32>
    %412 = arith.cmpf one, %410, %411 : vector<8x8xf32>
    %cst_155 = arith.constant -1.000000e+09 : f32
    %413 = vector.broadcast %cst_155 : f32 to vector<8x8xf32>
    %414 = arith.select %412, %413, %408 : vector<8x8xi1>, vector<8x8xf32>
    %cst_156 = arith.constant dense<0xFF800000> : vector<8xf32>
    %415 = vector.multi_reduction <maximumf>, %414, %cst_156 [1] : vector<8x8xf32> to vector<8xf32>
    %416 = vector.shape_cast %415 : vector<8xf32> to vector<8x1xf32>
    %417 = vector.broadcast %416 : vector<8x1xf32> to vector<8x8xf32>
    %418 = arith.subf %414, %417 : vector<8x8xf32>
    %419 = math.exp %418 : vector<8x8xf32>
    %cst_157 = arith.constant dense<0.000000e+00> : vector<8xf32>
    %420 = vector.multi_reduction <add>, %419, %cst_157 [1] : vector<8x8xf32> to vector<8xf32>
    %421 = vector.shape_cast %420 : vector<8xf32> to vector<8x1xf32>
    %422 = tpu.reciprocal %421 {approx = true} : vector<8x1xf32> -> vector<8x1xf32>
    %423 = vector.broadcast %422 : vector<8x1xf32> to vector<8x8xf32>
    %424 = arith.mulf %419, %423 : vector<8x8xf32>
    %cst_158 = arith.constant dense<0.000000e+00> : vector<8x8xf32>
    %425 = tpu.matmul %424, %404, %cst_158 {dimension_numbers = #tpu.dot_dimension_numbers<[1], [0], [0], [1], [0, 0, 1, 1], [], []>} : vector<8x8xf32>, vector<8x8xf32>, vector<8x8xf32> -> vector<8x8xf32>
    %426 = vector.extract_strided_slice %253 {offsets = [0, 56], sizes = [8, 8], strides = [1, 1]} : vector<8x64xf32> to vector<8x8xf32>
    %427 = vector.extract_strided_slice %255 {offsets = [0, 56], sizes = [8, 8], strides = [1, 1]} : vector<8x64xf32> to vector<8x8xf32>
    %428 = vector.extract_strided_slice %257 {offsets = [0, 56], sizes = [8, 8], strides = [1, 1]} : vector<8x64xf32> to vector<8x8xf32>
    %429 = tpu.transpose %427, [1, 0] : vector<8x8xf32> -> vector<8x8xf32>
    %cst_159 = arith.constant dense<0.000000e+00> : vector<8x8xf32>
    %430 = tpu.matmul %426, %429, %cst_159 {dimension_numbers = #tpu.dot_dimension_numbers<[1], [0], [0], [1], [0, 0, 1, 1], [], []>} : vector<8x8xf32>, vector<8x8xf32>, vector<8x8xf32> -> vector<8x8xf32>
    %cst_160 = arith.constant 0.353553385 : f32
    %431 = vector.broadcast %cst_160 : f32 to vector<8x8xf32>
    %432 = arith.mulf %430, %431 : vector<8x8xf32>
    %433 = vector.extract_strided_slice %251 {offsets = [7, 0, 0], sizes = [1, 8, 8], strides = [1, 1, 1]} : vector<8x8x8xf32> to vector<1x8x8xf32>
    %434 = vector.shape_cast %433 : vector<1x8x8xf32> to vector<8x8xf32>
    %cst_161 = arith.constant 0.000000e+00 : f32
    %435 = vector.broadcast %cst_161 : f32 to vector<8x8xf32>
    %436 = arith.cmpf one, %434, %435 : vector<8x8xf32>
    %cst_162 = arith.constant -1.000000e+09 : f32
    %437 = vector.broadcast %cst_162 : f32 to vector<8x8xf32>
    %438 = arith.select %436, %437, %432 : vector<8x8xi1>, vector<8x8xf32>
    %cst_163 = arith.constant dense<0xFF800000> : vector<8xf32>
    %439 = vector.multi_reduction <maximumf>, %438, %cst_163 [1] : vector<8x8xf32> to vector<8xf32>
    %440 = vector.shape_cast %439 : vector<8xf32> to vector<8x1xf32>
    %441 = vector.broadcast %440 : vector<8x1xf32> to vector<8x8xf32>
    %442 = arith.subf %438, %441 : vector<8x8xf32>
    %443 = math.exp %442 : vector<8x8xf32>
    %cst_164 = arith.constant dense<0.000000e+00> : vector<8xf32>
    %444 = vector.multi_reduction <add>, %443, %cst_164 [1] : vector<8x8xf32> to vector<8xf32>
    %445 = vector.shape_cast %444 : vector<8xf32> to vector<8x1xf32>
    %446 = tpu.reciprocal %445 {approx = true} : vector<8x1xf32> -> vector<8x1xf32>
    %447 = vector.broadcast %446 : vector<8x1xf32> to vector<8x8xf32>
    %448 = arith.mulf %443, %447 : vector<8x8xf32>
    %cst_165 = arith.constant dense<0.000000e+00> : vector<8x8xf32>
    %449 = tpu.matmul %448, %428, %cst_165 {dimension_numbers = #tpu.dot_dimension_numbers<[1], [0], [0], [1], [0, 0, 1, 1], [], []>} : vector<8x8xf32>, vector<8x8xf32>, vector<8x8xf32> -> vector<8x8xf32>
    %450 = tpu.concatenate %281, %305, %329, %353, %377, %401, %425, %449 in 1 : vector<8x8xf32>, vector<8x8xf32>, vector<8x8xf32>, vector<8x8xf32>, vector<8x8xf32>, vector<8x8xf32>, vector<8x8xf32>, vector<8x8xf32> -> vector<8x64xf32>
    %451 = arith.truncf %450 : vector<8x64xf32> to vector<8x64xbf16>
    %cst_166 = arith.constant dense<0.000000e+00> : vector<8x32xf32>
    %452 = tpu.matmul %451, %19, %cst_166 {dimension_numbers = #tpu.dot_dimension_numbers<[1], [0], [0], [1], [0, 0, 1, 1], [], []>} : vector<8x64xbf16>, vector<64x32xbf16>, vector<8x32xf32> -> vector<8x32xf32>
    %453 = arith.addf %247, %452 : vector<8x32xf32>
    %cst_167 = arith.constant dense<0.000000e+00> : vector<8xf32>
    %454 = vector.multi_reduction <add>, %453, %cst_167 [1] : vector<8x32xf32> to vector<8xf32>
    %455 = vector.shape_cast %454 : vector<8xf32> to vector<8x1xf32>
    %cst_168 = arith.constant 3.200000e+01 : f32
    %456 = vector.broadcast %cst_168 : f32 to vector<8x1xf32>
    %457 = arith.divf %455, %456 : vector<8x1xf32>
    %458 = vector.broadcast %457 : vector<8x1xf32> to vector<8x32xf32>
    %459 = arith.subf %453, %458 : vector<8x32xf32>
    %460 = arith.mulf %459, %459 : vector<8x32xf32>
    %cst_169 = arith.constant dense<0.000000e+00> : vector<8xf32>
    %461 = vector.multi_reduction <add>, %460, %cst_169 [1] : vector<8x32xf32> to vector<8xf32>
    %462 = vector.shape_cast %461 : vector<8xf32> to vector<8x1xf32>
    %cst_170 = arith.constant 3.200000e+01 : f32
    %463 = vector.broadcast %cst_170 : f32 to vector<8x1xf32>
    %464 = arith.divf %462, %463 : vector<8x1xf32>
    %465 = vector.broadcast %457 : vector<8x1xf32> to vector<8x32xf32>
    %466 = arith.subf %453, %465 : vector<8x32xf32>
    %cst_171 = arith.constant 9.99999974E-6 : f32
    %467 = vector.broadcast %cst_171 : f32 to vector<8x1xf32>
    %468 = arith.addf %464, %467 : vector<8x1xf32>
    %469 = math.rsqrt %468 : vector<8x1xf32>
    %470 = vector.broadcast %469 : vector<8x1xf32> to vector<8x32xf32>
    %471 = arith.mulf %466, %470 : vector<8x32xf32>
    %472 = arith.truncf %471 : vector<8x32xf32> to vector<8x32xbf16>
    %cst_172 = arith.constant dense<0.000000e+00> : vector<8x64xf32>
    %473 = tpu.matmul %472, %21, %cst_172 {dimension_numbers = #tpu.dot_dimension_numbers<[1], [0], [0], [1], [0, 0, 1, 1], [], []>} : vector<8x32xbf16>, vector<32x64xbf16>, vector<8x64xf32> -> vector<8x64xf32>
    %cst_173 = arith.constant 0.000000e+00 : f32
    %474 = vector.broadcast %cst_173 : f32 to vector<8x64xf32>
    %475 = arith.maximumf %473, %474 : vector<8x64xf32>
    %476 = arith.truncf %475 : vector<8x64xf32> to vector<8x64xbf16>
    %cst_174 = arith.constant dense<0.000000e+00> : vector<8x32xf32>
    %477 = tpu.matmul %476, %23, %cst_174 {dimension_numbers = #tpu.dot_dimension_numbers<[1], [0], [0], [1], [0, 0, 1, 1], [], []>} : vector<8x64xbf16>, vector<64x32xbf16>, vector<8x32xf32> -> vector<8x32xf32>
    %478 = arith.addf %471, %477 : vector<8x32xf32>
    %cst_175 = arith.constant dense<0.000000e+00> : vector<8xf32>
    %479 = vector.multi_reduction <add>, %478, %cst_175 [1] : vector<8x32xf32> to vector<8xf32>
    %480 = vector.shape_cast %479 : vector<8xf32> to vector<8x1xf32>
    %cst_176 = arith.constant 3.200000e+01 : f32
    %481 = vector.broadcast %cst_176 : f32 to vector<8x1xf32>
    %482 = arith.divf %480, %481 : vector<8x1xf32>
    %483 = vector.broadcast %482 : vector<8x1xf32> to vector<8x32xf32>
    %484 = arith.subf %478, %483 : vector<8x32xf32>
    %485 = arith.mulf %484, %484 : vector<8x32xf32>
    %cst_177 = arith.constant dense<0.000000e+00> : vector<8xf32>
    %486 = vector.multi_reduction <add>, %485, %cst_177 [1] : vector<8x32xf32> to vector<8xf32>
    %487 = vector.shape_cast %486 : vector<8xf32> to vector<8x1xf32>
    %cst_178 = arith.constant 3.200000e+01 : f32
    %488 = vector.broadcast %cst_178 : f32 to vector<8x1xf32>
    %489 = arith.divf %487, %488 : vector<8x1xf32>
    %490 = vector.broadcast %482 : vector<8x1xf32> to vector<8x32xf32>
    %491 = arith.subf %478, %490 : vector<8x32xf32>
    %cst_179 = arith.constant 9.99999974E-6 : f32
    %492 = vector.broadcast %cst_179 : f32 to vector<8x1xf32>
    %493 = arith.addf %489, %492 : vector<8x1xf32>
    %494 = math.rsqrt %493 : vector<8x1xf32>
    %495 = vector.broadcast %494 : vector<8x1xf32> to vector<8x32xf32>
    %496 = arith.mulf %491, %495 : vector<8x32xf32>
    %c0_180 = arith.constant 0 : index
    %c0_181 = arith.constant 0 : index
    %c0_182 = arith.constant 0 : index
    %497 = vector.load %arg15[%c0_180, %c0_181, %c0_182] : memref<2x8x32xf32, #tpu.memory_space<vmem>>, vector<1x8x32xf32>
    %498 = vector.shape_cast %497 : vector<1x8x32xf32> to vector<8x32xf32>
    %499 = vector.shape_cast %496 : vector<8x32xf32> to vector<1x8x32xf32>
    tpu.vector_store %arg15[%c0_180, %c0_181, %c0_182], %499 {strides = array<i32>} : memref<2x8x32xf32, #tpu.memory_space<vmem>>, vector<1x8x32xf32>,
    %500 = vector.extract_strided_slice %0 {offsets = [1, 0, 0], sizes = [1, 8, 32], strides = [1, 1, 1]} : vector<2x8x32xf32> to vector<1x8x32xf32>
    %501 = vector.shape_cast %500 : vector<1x8x32xf32> to vector<8x32xf32>
    %502 = vector.extract_strided_slice %2 {offsets = [1, 0, 0, 0], sizes = [1, 8, 8, 8], strides = [1, 1, 1, 1]} : vector<2x8x8x8xf32> to vector<1x8x8x8xf32>
    %503 = vector.shape_cast %502 : vector<1x8x8x8xf32> to vector<8x8x8xf32>
    %504 = arith.truncf %501 : vector<8x32xf32> to vector<8x32xbf16>
    %cst_183 = arith.constant dense<0.000000e+00> : vector<8x64xf32>
    %505 = tpu.matmul %504, %5, %cst_183 {dimension_numbers = #tpu.dot_dimension_numbers<[1], [0], [0], [1], [0, 0, 1, 1], [], []>} : vector<8x32xbf16>, vector<32x64xbf16>, vector<8x64xf32> -> vector<8x64xf32>
    %506 = arith.truncf %501 : vector<8x32xf32> to vector<8x32xbf16>
    %cst_184 = arith.constant dense<0.000000e+00> : vector<8x64xf32>
    %507 = tpu.matmul %506, %7, %cst_184 {dimension_numbers = #tpu.dot_dimension_numbers<[1], [0], [0], [1], [0, 0, 1, 1], [], []>} : vector<8x32xbf16>, vector<32x64xbf16>, vector<8x64xf32> -> vector<8x64xf32>
    %508 = arith.truncf %501 : vector<8x32xf32> to vector<8x32xbf16>
    %cst_185 = arith.constant dense<0.000000e+00> : vector<8x64xf32>
    %509 = tpu.matmul %508, %9, %cst_185 {dimension_numbers = #tpu.dot_dimension_numbers<[1], [0], [0], [1], [0, 0, 1, 1], [], []>} : vector<8x32xbf16>, vector<32x64xbf16>, vector<8x64xf32> -> vector<8x64xf32>
    %510 = vector.extract_strided_slice %505 {offsets = [0, 0], sizes = [8, 8], strides = [1, 1]} : vector<8x64xf32> to vector<8x8xf32>
    %511 = vector.extract_strided_slice %507 {offsets = [0, 0], sizes = [8, 8], strides = [1, 1]} : vector<8x64xf32> to vector<8x8xf32>
    %512 = vector.extract_strided_slice %509 {offsets = [0, 0], sizes = [8, 8], strides = [1, 1]} : vector<8x64xf32> to vector<8x8xf32>
    %513 = tpu.transpose %511, [1, 0] : vector<8x8xf32> -> vector<8x8xf32>
    %cst_186 = arith.constant dense<0.000000e+00> : vector<8x8xf32>
    %514 = tpu.matmul %510, %513, %cst_186 {dimension_numbers = #tpu.dot_dimension_numbers<[1], [0], [0], [1], [0, 0, 1, 1], [], []>} : vector<8x8xf32>, vector<8x8xf32>, vector<8x8xf32> -> vector<8x8xf32>
    %cst_187 = arith.constant 0.353553385 : f32
    %515 = vector.broadcast %cst_187 : f32 to vector<8x8xf32>
    %516 = arith.mulf %514, %515 : vector<8x8xf32>
    %517 = vector.extract_strided_slice %503 {offsets = [0, 0, 0], sizes = [1, 8, 8], strides = [1, 1, 1]} : vector<8x8x8xf32> to vector<1x8x8xf32>
    %518 = vector.shape_cast %517 : vector<1x8x8xf32> to vector<8x8xf32>
    %cst_188 = arith.constant 0.000000e+00 : f32
    %519 = vector.broadcast %cst_188 : f32 to vector<8x8xf32>
    %520 = arith.cmpf one, %518, %519 : vector<8x8xf32>
    %cst_189 = arith.constant -1.000000e+09 : f32
    %521 = vector.broadcast %cst_189 : f32 to vector<8x8xf32>
    %522 = arith.select %520, %521, %516 : vector<8x8xi1>, vector<8x8xf32>
    %cst_190 = arith.constant dense<0xFF800000> : vector<8xf32>
    %523 = vector.multi_reduction <maximumf>, %522, %cst_190 [1] : vector<8x8xf32> to vector<8xf32>
    %524 = vector.shape_cast %523 : vector<8xf32> to vector<8x1xf32>
    %525 = vector.broadcast %524 : vector<8x1xf32> to vector<8x8xf32>
    %526 = arith.subf %522, %525 : vector<8x8xf32>
    %527 = math.exp %526 : vector<8x8xf32>
    %cst_191 = arith.constant dense<0.000000e+00> : vector<8xf32>
    %528 = vector.multi_reduction <add>, %527, %cst_191 [1] : vector<8x8xf32> to vector<8xf32>
    %529 = vector.shape_cast %528 : vector<8xf32> to vector<8x1xf32>
    %530 = tpu.reciprocal %529 {approx = true} : vector<8x1xf32> -> vector<8x1xf32>
    %531 = vector.broadcast %530 : vector<8x1xf32> to vector<8x8xf32>
    %532 = arith.mulf %527, %531 : vector<8x8xf32>
    %cst_192 = arith.constant dense<0.000000e+00> : vector<8x8xf32>
    %533 = tpu.matmul %532, %512, %cst_192 {dimension_numbers = #tpu.dot_dimension_numbers<[1], [0], [0], [1], [0, 0, 1, 1], [], []>} : vector<8x8xf32>, vector<8x8xf32>, vector<8x8xf32> -> vector<8x8xf32>
    %534 = vector.extract_strided_slice %505 {offsets = [0, 8], sizes = [8, 8], strides = [1, 1]} : vector<8x64xf32> to vector<8x8xf32>
    %535 = vector.extract_strided_slice %507 {offsets = [0, 8], sizes = [8, 8], strides = [1, 1]} : vector<8x64xf32> to vector<8x8xf32>
    %536 = vector.extract_strided_slice %509 {offsets = [0, 8], sizes = [8, 8], strides = [1, 1]} : vector<8x64xf32> to vector<8x8xf32>
    %537 = tpu.transpose %535, [1, 0] : vector<8x8xf32> -> vector<8x8xf32>
    %cst_193 = arith.constant dense<0.000000e+00> : vector<8x8xf32>
    %538 = tpu.matmul %534, %537, %cst_193 {dimension_numbers = #tpu.dot_dimension_numbers<[1], [0], [0], [1], [0, 0, 1, 1], [], []>} : vector<8x8xf32>, vector<8x8xf32>, vector<8x8xf32> -> vector<8x8xf32>
    %cst_194 = arith.constant 0.353553385 : f32
    %539 = vector.broadcast %cst_194 : f32 to vector<8x8xf32>
    %540 = arith.mulf %538, %539 : vector<8x8xf32>
    %541 = vector.extract_strided_slice %503 {offsets = [1, 0, 0], sizes = [1, 8, 8], strides = [1, 1, 1]} : vector<8x8x8xf32> to vector<1x8x8xf32>
    %542 = vector.shape_cast %541 : vector<1x8x8xf32> to vector<8x8xf32>
    %cst_195 = arith.constant 0.000000e+00 : f32
    %543 = vector.broadcast %cst_195 : f32 to vector<8x8xf32>
    %544 = arith.cmpf one, %542, %543 : vector<8x8xf32>
    %cst_196 = arith.constant -1.000000e+09 : f32
    %545 = vector.broadcast %cst_196 : f32 to vector<8x8xf32>
    %546 = arith.select %544, %545, %540 : vector<8x8xi1>, vector<8x8xf32>
    %cst_197 = arith.constant dense<0xFF800000> : vector<8xf32>
    %547 = vector.multi_reduction <maximumf>, %546, %cst_197 [1] : vector<8x8xf32> to vector<8xf32>
    %548 = vector.shape_cast %547 : vector<8xf32> to vector<8x1xf32>
    %549 = vector.broadcast %548 : vector<8x1xf32> to vector<8x8xf32>
    %550 = arith.subf %546, %549 : vector<8x8xf32>
    %551 = math.exp %550 : vector<8x8xf32>
    %cst_198 = arith.constant dense<0.000000e+00> : vector<8xf32>
    %552 = vector.multi_reduction <add>, %551, %cst_198 [1] : vector<8x8xf32> to vector<8xf32>
    %553 = vector.shape_cast %552 : vector<8xf32> to vector<8x1xf32>
    %554 = tpu.reciprocal %553 {approx = true} : vector<8x1xf32> -> vector<8x1xf32>
    %555 = vector.broadcast %554 : vector<8x1xf32> to vector<8x8xf32>
    %556 = arith.mulf %551, %555 : vector<8x8xf32>
    %cst_199 = arith.constant dense<0.000000e+00> : vector<8x8xf32>
    %557 = tpu.matmul %556, %536, %cst_199 {dimension_numbers = #tpu.dot_dimension_numbers<[1], [0], [0], [1], [0, 0, 1, 1], [], []>} : vector<8x8xf32>, vector<8x8xf32>, vector<8x8xf32> -> vector<8x8xf32>
    %558 = vector.extract_strided_slice %505 {offsets = [0, 16], sizes = [8, 8], strides = [1, 1]} : vector<8x64xf32> to vector<8x8xf32>
    %559 = vector.extract_strided_slice %507 {offsets = [0, 16], sizes = [8, 8], strides = [1, 1]} : vector<8x64xf32> to vector<8x8xf32>
    %560 = vector.extract_strided_slice %509 {offsets = [0, 16], sizes = [8, 8], strides = [1, 1]} : vector<8x64xf32> to vector<8x8xf32>
    %561 = tpu.transpose %559, [1, 0] : vector<8x8xf32> -> vector<8x8xf32>
    %cst_200 = arith.constant dense<0.000000e+00> : vector<8x8xf32>
    %562 = tpu.matmul %558, %561, %cst_200 {dimension_numbers = #tpu.dot_dimension_numbers<[1], [0], [0], [1], [0, 0, 1, 1], [], []>} : vector<8x8xf32>, vector<8x8xf32>, vector<8x8xf32> -> vector<8x8xf32>
    %cst_201 = arith.constant 0.353553385 : f32
    %563 = vector.broadcast %cst_201 : f32 to vector<8x8xf32>
    %564 = arith.mulf %562, %563 : vector<8x8xf32>
    %565 = vector.extract_strided_slice %503 {offsets = [2, 0, 0], sizes = [1, 8, 8], strides = [1, 1, 1]} : vector<8x8x8xf32> to vector<1x8x8xf32>
    %566 = vector.shape_cast %565 : vector<1x8x8xf32> to vector<8x8xf32>
    %cst_202 = arith.constant 0.000000e+00 : f32
    %567 = vector.broadcast %cst_202 : f32 to vector<8x8xf32>
    %568 = arith.cmpf one, %566, %567 : vector<8x8xf32>
    %cst_203 = arith.constant -1.000000e+09 : f32
    %569 = vector.broadcast %cst_203 : f32 to vector<8x8xf32>
    %570 = arith.select %568, %569, %564 : vector<8x8xi1>, vector<8x8xf32>
    %cst_204 = arith.constant dense<0xFF800000> : vector<8xf32>
    %571 = vector.multi_reduction <maximumf>, %570, %cst_204 [1] : vector<8x8xf32> to vector<8xf32>
    %572 = vector.shape_cast %571 : vector<8xf32> to vector<8x1xf32>
    %573 = vector.broadcast %572 : vector<8x1xf32> to vector<8x8xf32>
    %574 = arith.subf %570, %573 : vector<8x8xf32>
    %575 = math.exp %574 : vector<8x8xf32>
    %cst_205 = arith.constant dense<0.000000e+00> : vector<8xf32>
    %576 = vector.multi_reduction <add>, %575, %cst_205 [1] : vector<8x8xf32> to vector<8xf32>
    %577 = vector.shape_cast %576 : vector<8xf32> to vector<8x1xf32>
    %578 = tpu.reciprocal %577 {approx = true} : vector<8x1xf32> -> vector<8x1xf32>
    %579 = vector.broadcast %578 : vector<8x1xf32> to vector<8x8xf32>
    %580 = arith.mulf %575, %579 : vector<8x8xf32>
    %cst_206 = arith.constant dense<0.000000e+00> : vector<8x8xf32>
    %581 = tpu.matmul %580, %560, %cst_206 {dimension_numbers = #tpu.dot_dimension_numbers<[1], [0], [0], [1], [0, 0, 1, 1], [], []>} : vector<8x8xf32>, vector<8x8xf32>, vector<8x8xf32> -> vector<8x8xf32>
    %582 = vector.extract_strided_slice %505 {offsets = [0, 24], sizes = [8, 8], strides = [1, 1]} : vector<8x64xf32> to vector<8x8xf32>
    %583 = vector.extract_strided_slice %507 {offsets = [0, 24], sizes = [8, 8], strides = [1, 1]} : vector<8x64xf32> to vector<8x8xf32>
    %584 = vector.extract_strided_slice %509 {offsets = [0, 24], sizes = [8, 8], strides = [1, 1]} : vector<8x64xf32> to vector<8x8xf32>
    %585 = tpu.transpose %583, [1, 0] : vector<8x8xf32> -> vector<8x8xf32>
    %cst_207 = arith.constant dense<0.000000e+00> : vector<8x8xf32>
    %586 = tpu.matmul %582, %585, %cst_207 {dimension_numbers = #tpu.dot_dimension_numbers<[1], [0], [0], [1], [0, 0, 1, 1], [], []>} : vector<8x8xf32>, vector<8x8xf32>, vector<8x8xf32> -> vector<8x8xf32>
    %cst_208 = arith.constant 0.353553385 : f32
    %587 = vector.broadcast %cst_208 : f32 to vector<8x8xf32>
    %588 = arith.mulf %586, %587 : vector<8x8xf32>
    %589 = vector.extract_strided_slice %503 {offsets = [3, 0, 0], sizes = [1, 8, 8], strides = [1, 1, 1]} : vector<8x8x8xf32> to vector<1x8x8xf32>
    %590 = vector.shape_cast %589 : vector<1x8x8xf32> to vector<8x8xf32>
    %cst_209 = arith.constant 0.000000e+00 : f32
    %591 = vector.broadcast %cst_209 : f32 to vector<8x8xf32>
    %592 = arith.cmpf one, %590, %591 : vector<8x8xf32>
    %cst_210 = arith.constant -1.000000e+09 : f32
    %593 = vector.broadcast %cst_210 : f32 to vector<8x8xf32>
    %594 = arith.select %592, %593, %588 : vector<8x8xi1>, vector<8x8xf32>
    %cst_211 = arith.constant dense<0xFF800000> : vector<8xf32>
    %595 = vector.multi_reduction <maximumf>, %594, %cst_211 [1] : vector<8x8xf32> to vector<8xf32>
    %596 = vector.shape_cast %595 : vector<8xf32> to vector<8x1xf32>
    %597 = vector.broadcast %596 : vector<8x1xf32> to vector<8x8xf32>
    %598 = arith.subf %594, %597 : vector<8x8xf32>
    %599 = math.exp %598 : vector<8x8xf32>
    %cst_212 = arith.constant dense<0.000000e+00> : vector<8xf32>
    %600 = vector.multi_reduction <add>, %599, %cst_212 [1] : vector<8x8xf32> to vector<8xf32>
    %601 = vector.shape_cast %600 : vector<8xf32> to vector<8x1xf32>
    %602 = tpu.reciprocal %601 {approx = true} : vector<8x1xf32> -> vector<8x1xf32>
    %603 = vector.broadcast %602 : vector<8x1xf32> to vector<8x8xf32>
    %604 = arith.mulf %599, %603 : vector<8x8xf32>
    %cst_213 = arith.constant dense<0.000000e+00> : vector<8x8xf32>
    %605 = tpu.matmul %604, %584, %cst_213 {dimension_numbers = #tpu.dot_dimension_numbers<[1], [0], [0], [1], [0, 0, 1, 1], [], []>} : vector<8x8xf32>, vector<8x8xf32>, vector<8x8xf32> -> vector<8x8xf32>
    %606 = vector.extract_strided_slice %505 {offsets = [0, 32], sizes = [8, 8], strides = [1, 1]} : vector<8x64xf32> to vector<8x8xf32>
    %607 = vector.extract_strided_slice %507 {offsets = [0, 32], sizes = [8, 8], strides = [1, 1]} : vector<8x64xf32> to vector<8x8xf32>
    %608 = vector.extract_strided_slice %509 {offsets = [0, 32], sizes = [8, 8], strides = [1, 1]} : vector<8x64xf32> to vector<8x8xf32>
    %609 = tpu.transpose %607, [1, 0] : vector<8x8xf32> -> vector<8x8xf32>
    %cst_214 = arith.constant dense<0.000000e+00> : vector<8x8xf32>
    %610 = tpu.matmul %606, %609, %cst_214 {dimension_numbers = #tpu.dot_dimension_numbers<[1], [0], [0], [1], [0, 0, 1, 1], [], []>} : vector<8x8xf32>, vector<8x8xf32>, vector<8x8xf32> -> vector<8x8xf32>
    %cst_215 = arith.constant 0.353553385 : f32
    %611 = vector.broadcast %cst_215 : f32 to vector<8x8xf32>
    %612 = arith.mulf %610, %611 : vector<8x8xf32>
    %613 = vector.extract_strided_slice %503 {offsets = [4, 0, 0], sizes = [1, 8, 8], strides = [1, 1, 1]} : vector<8x8x8xf32> to vector<1x8x8xf32>
    %614 = vector.shape_cast %613 : vector<1x8x8xf32> to vector<8x8xf32>
    %cst_216 = arith.constant 0.000000e+00 : f32
    %615 = vector.broadcast %cst_216 : f32 to vector<8x8xf32>
    %616 = arith.cmpf one, %614, %615 : vector<8x8xf32>
    %cst_217 = arith.constant -1.000000e+09 : f32
    %617 = vector.broadcast %cst_217 : f32 to vector<8x8xf32>
    %618 = arith.select %616, %617, %612 : vector<8x8xi1>, vector<8x8xf32>
    %cst_218 = arith.constant dense<0xFF800000> : vector<8xf32>
    %619 = vector.multi_reduction <maximumf>, %618, %cst_218 [1] : vector<8x8xf32> to vector<8xf32>
    %620 = vector.shape_cast %619 : vector<8xf32> to vector<8x1xf32>
    %621 = vector.broadcast %620 : vector<8x1xf32> to vector<8x8xf32>
    %622 = arith.subf %618, %621 : vector<8x8xf32>
    %623 = math.exp %622 : vector<8x8xf32>
    %cst_219 = arith.constant dense<0.000000e+00> : vector<8xf32>
    %624 = vector.multi_reduction <add>, %623, %cst_219 [1] : vector<8x8xf32> to vector<8xf32>
    %625 = vector.shape_cast %624 : vector<8xf32> to vector<8x1xf32>
    %626 = tpu.reciprocal %625 {approx = true} : vector<8x1xf32> -> vector<8x1xf32>
    %627 = vector.broadcast %626 : vector<8x1xf32> to vector<8x8xf32>
    %628 = arith.mulf %623, %627 : vector<8x8xf32>
    %cst_220 = arith.constant dense<0.000000e+00> : vector<8x8xf32>
    %629 = tpu.matmul %628, %608, %cst_220 {dimension_numbers = #tpu.dot_dimension_numbers<[1], [0], [0], [1], [0, 0, 1, 1], [], []>} : vector<8x8xf32>, vector<8x8xf32>, vector<8x8xf32> -> vector<8x8xf32>
    %630 = vector.extract_strided_slice %505 {offsets = [0, 40], sizes = [8, 8], strides = [1, 1]} : vector<8x64xf32> to vector<8x8xf32>
    %631 = vector.extract_strided_slice %507 {offsets = [0, 40], sizes = [8, 8], strides = [1, 1]} : vector<8x64xf32> to vector<8x8xf32>
    %632 = vector.extract_strided_slice %509 {offsets = [0, 40], sizes = [8, 8], strides = [1, 1]} : vector<8x64xf32> to vector<8x8xf32>
    %633 = tpu.transpose %631, [1, 0] : vector<8x8xf32> -> vector<8x8xf32>
    %cst_221 = arith.constant dense<0.000000e+00> : vector<8x8xf32>
    %634 = tpu.matmul %630, %633, %cst_221 {dimension_numbers = #tpu.dot_dimension_numbers<[1], [0], [0], [1], [0, 0, 1, 1], [], []>} : vector<8x8xf32>, vector<8x8xf32>, vector<8x8xf32> -> vector<8x8xf32>
    %cst_222 = arith.constant 0.353553385 : f32
    %635 = vector.broadcast %cst_222 : f32 to vector<8x8xf32>
    %636 = arith.mulf %634, %635 : vector<8x8xf32>
    %637 = vector.extract_strided_slice %503 {offsets = [5, 0, 0], sizes = [1, 8, 8], strides = [1, 1, 1]} : vector<8x8x8xf32> to vector<1x8x8xf32>
    %638 = vector.shape_cast %637 : vector<1x8x8xf32> to vector<8x8xf32>
    %cst_223 = arith.constant 0.000000e+00 : f32
    %639 = vector.broadcast %cst_223 : f32 to vector<8x8xf32>
    %640 = arith.cmpf one, %638, %639 : vector<8x8xf32>
    %cst_224 = arith.constant -1.000000e+09 : f32
    %641 = vector.broadcast %cst_224 : f32 to vector<8x8xf32>
    %642 = arith.select %640, %641, %636 : vector<8x8xi1>, vector<8x8xf32>
    %cst_225 = arith.constant dense<0xFF800000> : vector<8xf32>
    %643 = vector.multi_reduction <maximumf>, %642, %cst_225 [1] : vector<8x8xf32> to vector<8xf32>
    %644 = vector.shape_cast %643 : vector<8xf32> to vector<8x1xf32>
    %645 = vector.broadcast %644 : vector<8x1xf32> to vector<8x8xf32>
    %646 = arith.subf %642, %645 : vector<8x8xf32>
    %647 = math.exp %646 : vector<8x8xf32>
    %cst_226 = arith.constant dense<0.000000e+00> : vector<8xf32>
    %648 = vector.multi_reduction <add>, %647, %cst_226 [1] : vector<8x8xf32> to vector<8xf32>
    %649 = vector.shape_cast %648 : vector<8xf32> to vector<8x1xf32>
    %650 = tpu.reciprocal %649 {approx = true} : vector<8x1xf32> -> vector<8x1xf32>
    %651 = vector.broadcast %650 : vector<8x1xf32> to vector<8x8xf32>
    %652 = arith.mulf %647, %651 : vector<8x8xf32>
    %cst_227 = arith.constant dense<0.000000e+00> : vector<8x8xf32>
    %653 = tpu.matmul %652, %632, %cst_227 {dimension_numbers = #tpu.dot_dimension_numbers<[1], [0], [0], [1], [0, 0, 1, 1], [], []>} : vector<8x8xf32>, vector<8x8xf32>, vector<8x8xf32> -> vector<8x8xf32>
    %654 = vector.extract_strided_slice %505 {offsets = [0, 48], sizes = [8, 8], strides = [1, 1]} : vector<8x64xf32> to vector<8x8xf32>
    %655 = vector.extract_strided_slice %507 {offsets = [0, 48], sizes = [8, 8], strides = [1, 1]} : vector<8x64xf32> to vector<8x8xf32>
    %656 = vector.extract_strided_slice %509 {offsets = [0, 48], sizes = [8, 8], strides = [1, 1]} : vector<8x64xf32> to vector<8x8xf32>
    %657 = tpu.transpose %655, [1, 0] : vector<8x8xf32> -> vector<8x8xf32>
    %cst_228 = arith.constant dense<0.000000e+00> : vector<8x8xf32>
    %658 = tpu.matmul %654, %657, %cst_228 {dimension_numbers = #tpu.dot_dimension_numbers<[1], [0], [0], [1], [0, 0, 1, 1], [], []>} : vector<8x8xf32>, vector<8x8xf32>, vector<8x8xf32> -> vector<8x8xf32>
    %cst_229 = arith.constant 0.353553385 : f32
    %659 = vector.broadcast %cst_229 : f32 to vector<8x8xf32>
    %660 = arith.mulf %658, %659 : vector<8x8xf32>
    %661 = vector.extract_strided_slice %503 {offsets = [6, 0, 0], sizes = [1, 8, 8], strides = [1, 1, 1]} : vector<8x8x8xf32> to vector<1x8x8xf32>
    %662 = vector.shape_cast %661 : vector<1x8x8xf32> to vector<8x8xf32>
    %cst_230 = arith.constant 0.000000e+00 : f32
    %663 = vector.broadcast %cst_230 : f32 to vector<8x8xf32>
    %664 = arith.cmpf one, %662, %663 : vector<8x8xf32>
    %cst_231 = arith.constant -1.000000e+09 : f32
    %665 = vector.broadcast %cst_231 : f32 to vector<8x8xf32>
    %666 = arith.select %664, %665, %660 : vector<8x8xi1>, vector<8x8xf32>
    %cst_232 = arith.constant dense<0xFF800000> : vector<8xf32>
    %667 = vector.multi_reduction <maximumf>, %666, %cst_232 [1] : vector<8x8xf32> to vector<8xf32>
    %668 = vector.shape_cast %667 : vector<8xf32> to vector<8x1xf32>
    %669 = vector.broadcast %668 : vector<8x1xf32> to vector<8x8xf32>
    %670 = arith.subf %666, %669 : vector<8x8xf32>
    %671 = math.exp %670 : vector<8x8xf32>
    %cst_233 = arith.constant dense<0.000000e+00> : vector<8xf32>
    %672 = vector.multi_reduction <add>, %671, %cst_233 [1] : vector<8x8xf32> to vector<8xf32>
    %673 = vector.shape_cast %672 : vector<8xf32> to vector<8x1xf32>
    %674 = tpu.reciprocal %673 {approx = true} : vector<8x1xf32> -> vector<8x1xf32>
    %675 = vector.broadcast %674 : vector<8x1xf32> to vector<8x8xf32>
    %676 = arith.mulf %671, %675 : vector<8x8xf32>
    %cst_234 = arith.constant dense<0.000000e+00> : vector<8x8xf32>
    %677 = tpu.matmul %676, %656, %cst_234 {dimension_numbers = #tpu.dot_dimension_numbers<[1], [0], [0], [1], [0, 0, 1, 1], [], []>} : vector<8x8xf32>, vector<8x8xf32>, vector<8x8xf32> -> vector<8x8xf32>
    %678 = vector.extract_strided_slice %505 {offsets = [0, 56], sizes = [8, 8], strides = [1, 1]} : vector<8x64xf32> to vector<8x8xf32>
    %679 = vector.extract_strided_slice %507 {offsets = [0, 56], sizes = [8, 8], strides = [1, 1]} : vector<8x64xf32> to vector<8x8xf32>
    %680 = vector.extract_strided_slice %509 {offsets = [0, 56], sizes = [8, 8], strides = [1, 1]} : vector<8x64xf32> to vector<8x8xf32>
    %681 = tpu.transpose %679, [1, 0] : vector<8x8xf32> -> vector<8x8xf32>
    %cst_235 = arith.constant dense<0.000000e+00> : vector<8x8xf32>
    %682 = tpu.matmul %678, %681, %cst_235 {dimension_numbers = #tpu.dot_dimension_numbers<[1], [0], [0], [1], [0, 0, 1, 1], [], []>} : vector<8x8xf32>, vector<8x8xf32>, vector<8x8xf32> -> vector<8x8xf32>
    %cst_236 = arith.constant 0.353553385 : f32
    %683 = vector.broadcast %cst_236 : f32 to vector<8x8xf32>
    %684 = arith.mulf %682, %683 : vector<8x8xf32>
    %685 = vector.extract_strided_slice %503 {offsets = [7, 0, 0], sizes = [1, 8, 8], strides = [1, 1, 1]} : vector<8x8x8xf32> to vector<1x8x8xf32>
    %686 = vector.shape_cast %685 : vector<1x8x8xf32> to vector<8x8xf32>
    %cst_237 = arith.constant 0.000000e+00 : f32
    %687 = vector.broadcast %cst_237 : f32 to vector<8x8xf32>
    %688 = arith.cmpf one, %686, %687 : vector<8x8xf32>
    %cst_238 = arith.constant -1.000000e+09 : f32
    %689 = vector.broadcast %cst_238 : f32 to vector<8x8xf32>
    %690 = arith.select %688, %689, %684 : vector<8x8xi1>, vector<8x8xf32>
    %cst_239 = arith.constant dense<0xFF800000> : vector<8xf32>
    %691 = vector.multi_reduction <maximumf>, %690, %cst_239 [1] : vector<8x8xf32> to vector<8xf32>
    %692 = vector.shape_cast %691 : vector<8xf32> to vector<8x1xf32>
    %693 = vector.broadcast %692 : vector<8x1xf32> to vector<8x8xf32>
    %694 = arith.subf %690, %693 : vector<8x8xf32>
    %695 = math.exp %694 : vector<8x8xf32>
    %cst_240 = arith.constant dense<0.000000e+00> : vector<8xf32>
    %696 = vector.multi_reduction <add>, %695, %cst_240 [1] : vector<8x8xf32> to vector<8xf32>
    %697 = vector.shape_cast %696 : vector<8xf32> to vector<8x1xf32>
    %698 = tpu.reciprocal %697 {approx = true} : vector<8x1xf32> -> vector<8x1xf32>
    %699 = vector.broadcast %698 : vector<8x1xf32> to vector<8x8xf32>
    %700 = arith.mulf %695, %699 : vector<8x8xf32>
    %cst_241 = arith.constant dense<0.000000e+00> : vector<8x8xf32>
    %701 = tpu.matmul %700, %680, %cst_241 {dimension_numbers = #tpu.dot_dimension_numbers<[1], [0], [0], [1], [0, 0, 1, 1], [], []>} : vector<8x8xf32>, vector<8x8xf32>, vector<8x8xf32> -> vector<8x8xf32>
    %702 = tpu.concatenate %533, %557, %581, %605, %629, %653, %677, %701 in 1 : vector<8x8xf32>, vector<8x8xf32>, vector<8x8xf32>, vector<8x8xf32>, vector<8x8xf32>, vector<8x8xf32>, vector<8x8xf32>, vector<8x8xf32> -> vector<8x64xf32>
    %703 = arith.truncf %702 : vector<8x64xf32> to vector<8x64xbf16>
    %cst_242 = arith.constant dense<0.000000e+00> : vector<8x32xf32>
    %704 = tpu.matmul %703, %11, %cst_242 {dimension_numbers = #tpu.dot_dimension_numbers<[1], [0], [0], [1], [0, 0, 1, 1], [], []>} : vector<8x64xbf16>, vector<64x32xbf16>, vector<8x32xf32> -> vector<8x32xf32>
    %705 = arith.addf %501, %704 : vector<8x32xf32>
    %cst_243 = arith.constant dense<0.000000e+00> : vector<8xf32>
    %706 = vector.multi_reduction <add>, %705, %cst_243 [1] : vector<8x32xf32> to vector<8xf32>
    %707 = vector.shape_cast %706 : vector<8xf32> to vector<8x1xf32>
    %cst_244 = arith.constant 3.200000e+01 : f32
    %708 = vector.broadcast %cst_244 : f32 to vector<8x1xf32>
    %709 = arith.divf %707, %708 : vector<8x1xf32>
    %710 = vector.broadcast %709 : vector<8x1xf32> to vector<8x32xf32>
    %711 = arith.subf %705, %710 : vector<8x32xf32>
    %712 = arith.mulf %711, %711 : vector<8x32xf32>
    %cst_245 = arith.constant dense<0.000000e+00> : vector<8xf32>
    %713 = vector.multi_reduction <add>, %712, %cst_245 [1] : vector<8x32xf32> to vector<8xf32>
    %714 = vector.shape_cast %713 : vector<8xf32> to vector<8x1xf32>
    %cst_246 = arith.constant 3.200000e+01 : f32
    %715 = vector.broadcast %cst_246 : f32 to vector<8x1xf32>
    %716 = arith.divf %714, %715 : vector<8x1xf32>
    %717 = vector.broadcast %709 : vector<8x1xf32> to vector<8x32xf32>
    %718 = arith.subf %705, %717 : vector<8x32xf32>
    %cst_247 = arith.constant 9.99999974E-6 : f32
    %719 = vector.broadcast %cst_247 : f32 to vector<8x1xf32>
    %720 = arith.addf %716, %719 : vector<8x1xf32>
    %721 = math.rsqrt %720 : vector<8x1xf32>
    %722 = vector.broadcast %721 : vector<8x1xf32> to vector<8x32xf32>
    %723 = arith.mulf %718, %722 : vector<8x32xf32>
    %724 = vector.extract_strided_slice %1 {offsets = [1, 0, 0], sizes = [1, 8, 32], strides = [1, 1, 1]} : vector<2x8x32xf32> to vector<1x8x32xf32>
    %725 = vector.shape_cast %724 : vector<1x8x32xf32> to vector<8x32xf32>
    %726 = vector.extract_strided_slice %3 {offsets = [1, 0, 0, 0], sizes = [1, 8, 8, 8], strides = [1, 1, 1, 1]} : vector<2x8x8x8xf32> to vector<1x8x8x8xf32>
    %727 = vector.shape_cast %726 : vector<1x8x8x8xf32> to vector<8x8x8xf32>
    %728 = arith.truncf %723 : vector<8x32xf32> to vector<8x32xbf16>
    %cst_248 = arith.constant dense<0.000000e+00> : vector<8x64xf32>
    %729 = tpu.matmul %728, %13, %cst_248 {dimension_numbers = #tpu.dot_dimension_numbers<[1], [0], [0], [1], [0, 0, 1, 1], [], []>} : vector<8x32xbf16>, vector<32x64xbf16>, vector<8x64xf32> -> vector<8x64xf32>
    %730 = arith.truncf %725 : vector<8x32xf32> to vector<8x32xbf16>
    %cst_249 = arith.constant dense<0.000000e+00> : vector<8x64xf32>
    %731 = tpu.matmul %730, %15, %cst_249 {dimension_numbers = #tpu.dot_dimension_numbers<[1], [0], [0], [1], [0, 0, 1, 1], [], []>} : vector<8x32xbf16>, vector<32x64xbf16>, vector<8x64xf32> -> vector<8x64xf32>
    %732 = arith.truncf %725 : vector<8x32xf32> to vector<8x32xbf16>
    %cst_250 = arith.constant dense<0.000000e+00> : vector<8x64xf32>
    %733 = tpu.matmul %732, %17, %cst_250 {dimension_numbers = #tpu.dot_dimension_numbers<[1], [0], [0], [1], [0, 0, 1, 1], [], []>} : vector<8x32xbf16>, vector<32x64xbf16>, vector<8x64xf32> -> vector<8x64xf32>
    %734 = vector.extract_strided_slice %729 {offsets = [0, 0], sizes = [8, 8], strides = [1, 1]} : vector<8x64xf32> to vector<8x8xf32>
    %735 = vector.extract_strided_slice %731 {offsets = [0, 0], sizes = [8, 8], strides = [1, 1]} : vector<8x64xf32> to vector<8x8xf32>
    %736 = vector.extract_strided_slice %733 {offsets = [0, 0], sizes = [8, 8], strides = [1, 1]} : vector<8x64xf32> to vector<8x8xf32>
    %737 = tpu.transpose %735, [1, 0] : vector<8x8xf32> -> vector<8x8xf32>
    %cst_251 = arith.constant dense<0.000000e+00> : vector<8x8xf32>
    %738 = tpu.matmul %734, %737, %cst_251 {dimension_numbers = #tpu.dot_dimension_numbers<[1], [0], [0], [1], [0, 0, 1, 1], [], []>} : vector<8x8xf32>, vector<8x8xf32>, vector<8x8xf32> -> vector<8x8xf32>
    %cst_252 = arith.constant 0.353553385 : f32
    %739 = vector.broadcast %cst_252 : f32 to vector<8x8xf32>
    %740 = arith.mulf %738, %739 : vector<8x8xf32>
    %741 = vector.extract_strided_slice %727 {offsets = [0, 0, 0], sizes = [1, 8, 8], strides = [1, 1, 1]} : vector<8x8x8xf32> to vector<1x8x8xf32>
    %742 = vector.shape_cast %741 : vector<1x8x8xf32> to vector<8x8xf32>
    %cst_253 = arith.constant 0.000000e+00 : f32
    %743 = vector.broadcast %cst_253 : f32 to vector<8x8xf32>
    %744 = arith.cmpf one, %742, %743 : vector<8x8xf32>
    %cst_254 = arith.constant -1.000000e+09 : f32
    %745 = vector.broadcast %cst_254 : f32 to vector<8x8xf32>
    %746 = arith.select %744, %745, %740 : vector<8x8xi1>, vector<8x8xf32>
    %cst_255 = arith.constant dense<0xFF800000> : vector<8xf32>
    %747 = vector.multi_reduction <maximumf>, %746, %cst_255 [1] : vector<8x8xf32> to vector<8xf32>
    %748 = vector.shape_cast %747 : vector<8xf32> to vector<8x1xf32>
    %749 = vector.broadcast %748 : vector<8x1xf32> to vector<8x8xf32>
    %750 = arith.subf %746, %749 : vector<8x8xf32>
    %751 = math.exp %750 : vector<8x8xf32>
    %cst_256 = arith.constant dense<0.000000e+00> : vector<8xf32>
    %752 = vector.multi_reduction <add>, %751, %cst_256 [1] : vector<8x8xf32> to vector<8xf32>
    %753 = vector.shape_cast %752 : vector<8xf32> to vector<8x1xf32>
    %754 = tpu.reciprocal %753 {approx = true} : vector<8x1xf32> -> vector<8x1xf32>
    %755 = vector.broadcast %754 : vector<8x1xf32> to vector<8x8xf32>
    %756 = arith.mulf %751, %755 : vector<8x8xf32>
    %cst_257 = arith.constant dense<0.000000e+00> : vector<8x8xf32>
    %757 = tpu.matmul %756, %736, %cst_257 {dimension_numbers = #tpu.dot_dimension_numbers<[1], [0], [0], [1], [0, 0, 1, 1], [], []>} : vector<8x8xf32>, vector<8x8xf32>, vector<8x8xf32> -> vector<8x8xf32>
    %758 = vector.extract_strided_slice %729 {offsets = [0, 8], sizes = [8, 8], strides = [1, 1]} : vector<8x64xf32> to vector<8x8xf32>
    %759 = vector.extract_strided_slice %731 {offsets = [0, 8], sizes = [8, 8], strides = [1, 1]} : vector<8x64xf32> to vector<8x8xf32>
    %760 = vector.extract_strided_slice %733 {offsets = [0, 8], sizes = [8, 8], strides = [1, 1]} : vector<8x64xf32> to vector<8x8xf32>
    %761 = tpu.transpose %759, [1, 0] : vector<8x8xf32> -> vector<8x8xf32>
    %cst_258 = arith.constant dense<0.000000e+00> : vector<8x8xf32>
    %762 = tpu.matmul %758, %761, %cst_258 {dimension_numbers = #tpu.dot_dimension_numbers<[1], [0], [0], [1], [0, 0, 1, 1], [], []>} : vector<8x8xf32>, vector<8x8xf32>, vector<8x8xf32> -> vector<8x8xf32>
    %cst_259 = arith.constant 0.353553385 : f32
    %763 = vector.broadcast %cst_259 : f32 to vector<8x8xf32>
    %764 = arith.mulf %762, %763 : vector<8x8xf32>
    %765 = vector.extract_strided_slice %727 {offsets = [1, 0, 0], sizes = [1, 8, 8], strides = [1, 1, 1]} : vector<8x8x8xf32> to vector<1x8x8xf32>
    %766 = vector.shape_cast %765 : vector<1x8x8xf32> to vector<8x8xf32>
    %cst_260 = arith.constant 0.000000e+00 : f32
    %767 = vector.broadcast %cst_260 : f32 to vector<8x8xf32>
    %768 = arith.cmpf one, %766, %767 : vector<8x8xf32>
    %cst_261 = arith.constant -1.000000e+09 : f32
    %769 = vector.broadcast %cst_261 : f32 to vector<8x8xf32>
    %770 = arith.select %768, %769, %764 : vector<8x8xi1>, vector<8x8xf32>
    %cst_262 = arith.constant dense<0xFF800000> : vector<8xf32>
    %771 = vector.multi_reduction <maximumf>, %770, %cst_262 [1] : vector<8x8xf32> to vector<8xf32>
    %772 = vector.shape_cast %771 : vector<8xf32> to vector<8x1xf32>
    %773 = vector.broadcast %772 : vector<8x1xf32> to vector<8x8xf32>
    %774 = arith.subf %770, %773 : vector<8x8xf32>
    %775 = math.exp %774 : vector<8x8xf32>
    %cst_263 = arith.constant dense<0.000000e+00> : vector<8xf32>
    %776 = vector.multi_reduction <add>, %775, %cst_263 [1] : vector<8x8xf32> to vector<8xf32>
    %777 = vector.shape_cast %776 : vector<8xf32> to vector<8x1xf32>
    %778 = tpu.reciprocal %777 {approx = true} : vector<8x1xf32> -> vector<8x1xf32>
    %779 = vector.broadcast %778 : vector<8x1xf32> to vector<8x8xf32>
    %780 = arith.mulf %775, %779 : vector<8x8xf32>
    %cst_264 = arith.constant dense<0.000000e+00> : vector<8x8xf32>
    %781 = tpu.matmul %780, %760, %cst_264 {dimension_numbers = #tpu.dot_dimension_numbers<[1], [0], [0], [1], [0, 0, 1, 1], [], []>} : vector<8x8xf32>, vector<8x8xf32>, vector<8x8xf32> -> vector<8x8xf32>
    %782 = vector.extract_strided_slice %729 {offsets = [0, 16], sizes = [8, 8], strides = [1, 1]} : vector<8x64xf32> to vector<8x8xf32>
    %783 = vector.extract_strided_slice %731 {offsets = [0, 16], sizes = [8, 8], strides = [1, 1]} : vector<8x64xf32> to vector<8x8xf32>
    %784 = vector.extract_strided_slice %733 {offsets = [0, 16], sizes = [8, 8], strides = [1, 1]} : vector<8x64xf32> to vector<8x8xf32>
    %785 = tpu.transpose %783, [1, 0] : vector<8x8xf32> -> vector<8x8xf32>
    %cst_265 = arith.constant dense<0.000000e+00> : vector<8x8xf32>
    %786 = tpu.matmul %782, %785, %cst_265 {dimension_numbers = #tpu.dot_dimension_numbers<[1], [0], [0], [1], [0, 0, 1, 1], [], []>} : vector<8x8xf32>, vector<8x8xf32>, vector<8x8xf32> -> vector<8x8xf32>
    %cst_266 = arith.constant 0.353553385 : f32
    %787 = vector.broadcast %cst_266 : f32 to vector<8x8xf32>
    %788 = arith.mulf %786, %787 : vector<8x8xf32>
    %789 = vector.extract_strided_slice %727 {offsets = [2, 0, 0], sizes = [1, 8, 8], strides = [1, 1, 1]} : vector<8x8x8xf32> to vector<1x8x8xf32>
    %790 = vector.shape_cast %789 : vector<1x8x8xf32> to vector<8x8xf32>
    %cst_267 = arith.constant 0.000000e+00 : f32
    %791 = vector.broadcast %cst_267 : f32 to vector<8x8xf32>
    %792 = arith.cmpf one, %790, %791 : vector<8x8xf32>
    %cst_268 = arith.constant -1.000000e+09 : f32
    %793 = vector.broadcast %cst_268 : f32 to vector<8x8xf32>
    %794 = arith.select %792, %793, %788 : vector<8x8xi1>, vector<8x8xf32>
    %cst_269 = arith.constant dense<0xFF800000> : vector<8xf32>
    %795 = vector.multi_reduction <maximumf>, %794, %cst_269 [1] : vector<8x8xf32> to vector<8xf32>
    %796 = vector.shape_cast %795 : vector<8xf32> to vector<8x1xf32>
    %797 = vector.broadcast %796 : vector<8x1xf32> to vector<8x8xf32>
    %798 = arith.subf %794, %797 : vector<8x8xf32>
    %799 = math.exp %798 : vector<8x8xf32>
    %cst_270 = arith.constant dense<0.000000e+00> : vector<8xf32>
    %800 = vector.multi_reduction <add>, %799, %cst_270 [1] : vector<8x8xf32> to vector<8xf32>
    %801 = vector.shape_cast %800 : vector<8xf32> to vector<8x1xf32>
    %802 = tpu.reciprocal %801 {approx = true} : vector<8x1xf32> -> vector<8x1xf32>
    %803 = vector.broadcast %802 : vector<8x1xf32> to vector<8x8xf32>
    %804 = arith.mulf %799, %803 : vector<8x8xf32>
    %cst_271 = arith.constant dense<0.000000e+00> : vector<8x8xf32>
    %805 = tpu.matmul %804, %784, %cst_271 {dimension_numbers = #tpu.dot_dimension_numbers<[1], [0], [0], [1], [0, 0, 1, 1], [], []>} : vector<8x8xf32>, vector<8x8xf32>, vector<8x8xf32> -> vector<8x8xf32>
    %806 = vector.extract_strided_slice %729 {offsets = [0, 24], sizes = [8, 8], strides = [1, 1]} : vector<8x64xf32> to vector<8x8xf32>
    %807 = vector.extract_strided_slice %731 {offsets = [0, 24], sizes = [8, 8], strides = [1, 1]} : vector<8x64xf32> to vector<8x8xf32>
    %808 = vector.extract_strided_slice %733 {offsets = [0, 24], sizes = [8, 8], strides = [1, 1]} : vector<8x64xf32> to vector<8x8xf32>
    %809 = tpu.transpose %807, [1, 0] : vector<8x8xf32> -> vector<8x8xf32>
    %cst_272 = arith.constant dense<0.000000e+00> : vector<8x8xf32>
    %810 = tpu.matmul %806, %809, %cst_272 {dimension_numbers = #tpu.dot_dimension_numbers<[1], [0], [0], [1], [0, 0, 1, 1], [], []>} : vector<8x8xf32>, vector<8x8xf32>, vector<8x8xf32> -> vector<8x8xf32>
    %cst_273 = arith.constant 0.353553385 : f32
    %811 = vector.broadcast %cst_273 : f32 to vector<8x8xf32>
    %812 = arith.mulf %810, %811 : vector<8x8xf32>
    %813 = vector.extract_strided_slice %727 {offsets = [3, 0, 0], sizes = [1, 8, 8], strides = [1, 1, 1]} : vector<8x8x8xf32> to vector<1x8x8xf32>
    %814 = vector.shape_cast %813 : vector<1x8x8xf32> to vector<8x8xf32>
    %cst_274 = arith.constant 0.000000e+00 : f32
    %815 = vector.broadcast %cst_274 : f32 to vector<8x8xf32>
    %816 = arith.cmpf one, %814, %815 : vector<8x8xf32>
    %cst_275 = arith.constant -1.000000e+09 : f32
    %817 = vector.broadcast %cst_275 : f32 to vector<8x8xf32>
    %818 = arith.select %816, %817, %812 : vector<8x8xi1>, vector<8x8xf32>
    %cst_276 = arith.constant dense<0xFF800000> : vector<8xf32>
    %819 = vector.multi_reduction <maximumf>, %818, %cst_276 [1] : vector<8x8xf32> to vector<8xf32>
    %820 = vector.shape_cast %819 : vector<8xf32> to vector<8x1xf32>
    %821 = vector.broadcast %820 : vector<8x1xf32> to vector<8x8xf32>
    %822 = arith.subf %818, %821 : vector<8x8xf32>
    %823 = math.exp %822 : vector<8x8xf32>
    %cst_277 = arith.constant dense<0.000000e+00> : vector<8xf32>
    %824 = vector.multi_reduction <add>, %823, %cst_277 [1] : vector<8x8xf32> to vector<8xf32>
    %825 = vector.shape_cast %824 : vector<8xf32> to vector<8x1xf32>
    %826 = tpu.reciprocal %825 {approx = true} : vector<8x1xf32> -> vector<8x1xf32>
    %827 = vector.broadcast %826 : vector<8x1xf32> to vector<8x8xf32>
    %828 = arith.mulf %823, %827 : vector<8x8xf32>
    %cst_278 = arith.constant dense<0.000000e+00> : vector<8x8xf32>
    %829 = tpu.matmul %828, %808, %cst_278 {dimension_numbers = #tpu.dot_dimension_numbers<[1], [0], [0], [1], [0, 0, 1, 1], [], []>} : vector<8x8xf32>, vector<8x8xf32>, vector<8x8xf32> -> vector<8x8xf32>
    %830 = vector.extract_strided_slice %729 {offsets = [0, 32], sizes = [8, 8], strides = [1, 1]} : vector<8x64xf32> to vector<8x8xf32>
    %831 = vector.extract_strided_slice %731 {offsets = [0, 32], sizes = [8, 8], strides = [1, 1]} : vector<8x64xf32> to vector<8x8xf32>
    %832 = vector.extract_strided_slice %733 {offsets = [0, 32], sizes = [8, 8], strides = [1, 1]} : vector<8x64xf32> to vector<8x8xf32>
    %833 = tpu.transpose %831, [1, 0] : vector<8x8xf32> -> vector<8x8xf32>
    %cst_279 = arith.constant dense<0.000000e+00> : vector<8x8xf32>
    %834 = tpu.matmul %830, %833, %cst_279 {dimension_numbers = #tpu.dot_dimension_numbers<[1], [0], [0], [1], [0, 0, 1, 1], [], []>} : vector<8x8xf32>, vector<8x8xf32>, vector<8x8xf32> -> vector<8x8xf32>
    %cst_280 = arith.constant 0.353553385 : f32
    %835 = vector.broadcast %cst_280 : f32 to vector<8x8xf32>
    %836 = arith.mulf %834, %835 : vector<8x8xf32>
    %837 = vector.extract_strided_slice %727 {offsets = [4, 0, 0], sizes = [1, 8, 8], strides = [1, 1, 1]} : vector<8x8x8xf32> to vector<1x8x8xf32>
    %838 = vector.shape_cast %837 : vector<1x8x8xf32> to vector<8x8xf32>
    %cst_281 = arith.constant 0.000000e+00 : f32
    %839 = vector.broadcast %cst_281 : f32 to vector<8x8xf32>
    %840 = arith.cmpf one, %838, %839 : vector<8x8xf32>
    %cst_282 = arith.constant -1.000000e+09 : f32
    %841 = vector.broadcast %cst_282 : f32 to vector<8x8xf32>
    %842 = arith.select %840, %841, %836 : vector<8x8xi1>, vector<8x8xf32>
    %cst_283 = arith.constant dense<0xFF800000> : vector<8xf32>
    %843 = vector.multi_reduction <maximumf>, %842, %cst_283 [1] : vector<8x8xf32> to vector<8xf32>
    %844 = vector.shape_cast %843 : vector<8xf32> to vector<8x1xf32>
    %845 = vector.broadcast %844 : vector<8x1xf32> to vector<8x8xf32>
    %846 = arith.subf %842, %845 : vector<8x8xf32>
    %847 = math.exp %846 : vector<8x8xf32>
    %cst_284 = arith.constant dense<0.000000e+00> : vector<8xf32>
    %848 = vector.multi_reduction <add>, %847, %cst_284 [1] : vector<8x8xf32> to vector<8xf32>
    %849 = vector.shape_cast %848 : vector<8xf32> to vector<8x1xf32>
    %850 = tpu.reciprocal %849 {approx = true} : vector<8x1xf32> -> vector<8x1xf32>
    %851 = vector.broadcast %850 : vector<8x1xf32> to vector<8x8xf32>
    %852 = arith.mulf %847, %851 : vector<8x8xf32>
    %cst_285 = arith.constant dense<0.000000e+00> : vector<8x8xf32>
    %853 = tpu.matmul %852, %832, %cst_285 {dimension_numbers = #tpu.dot_dimension_numbers<[1], [0], [0], [1], [0, 0, 1, 1], [], []>} : vector<8x8xf32>, vector<8x8xf32>, vector<8x8xf32> -> vector<8x8xf32>
    %854 = vector.extract_strided_slice %729 {offsets = [0, 40], sizes = [8, 8], strides = [1, 1]} : vector<8x64xf32> to vector<8x8xf32>
    %855 = vector.extract_strided_slice %731 {offsets = [0, 40], sizes = [8, 8], strides = [1, 1]} : vector<8x64xf32> to vector<8x8xf32>
    %856 = vector.extract_strided_slice %733 {offsets = [0, 40], sizes = [8, 8], strides = [1, 1]} : vector<8x64xf32> to vector<8x8xf32>
    %857 = tpu.transpose %855, [1, 0] : vector<8x8xf32> -> vector<8x8xf32>
    %cst_286 = arith.constant dense<0.000000e+00> : vector<8x8xf32>
    %858 = tpu.matmul %854, %857, %cst_286 {dimension_numbers = #tpu.dot_dimension_numbers<[1], [0], [0], [1], [0, 0, 1, 1], [], []>} : vector<8x8xf32>, vector<8x8xf32>, vector<8x8xf32> -> vector<8x8xf32>
    %cst_287 = arith.constant 0.353553385 : f32
    %859 = vector.broadcast %cst_287 : f32 to vector<8x8xf32>
    %860 = arith.mulf %858, %859 : vector<8x8xf32>
    %861 = vector.extract_strided_slice %727 {offsets = [5, 0, 0], sizes = [1, 8, 8], strides = [1, 1, 1]} : vector<8x8x8xf32> to vector<1x8x8xf32>
    %862 = vector.shape_cast %861 : vector<1x8x8xf32> to vector<8x8xf32>
    %cst_288 = arith.constant 0.000000e+00 : f32
    %863 = vector.broadcast %cst_288 : f32 to vector<8x8xf32>
    %864 = arith.cmpf one, %862, %863 : vector<8x8xf32>
    %cst_289 = arith.constant -1.000000e+09 : f32
    %865 = vector.broadcast %cst_289 : f32 to vector<8x8xf32>
    %866 = arith.select %864, %865, %860 : vector<8x8xi1>, vector<8x8xf32>
    %cst_290 = arith.constant dense<0xFF800000> : vector<8xf32>
    %867 = vector.multi_reduction <maximumf>, %866, %cst_290 [1] : vector<8x8xf32> to vector<8xf32>
    %868 = vector.shape_cast %867 : vector<8xf32> to vector<8x1xf32>
    %869 = vector.broadcast %868 : vector<8x1xf32> to vector<8x8xf32>
    %870 = arith.subf %866, %869 : vector<8x8xf32>
    %871 = math.exp %870 : vector<8x8xf32>
    %cst_291 = arith.constant dense<0.000000e+00> : vector<8xf32>
    %872 = vector.multi_reduction <add>, %871, %cst_291 [1] : vector<8x8xf32> to vector<8xf32>
    %873 = vector.shape_cast %872 : vector<8xf32> to vector<8x1xf32>
    %874 = tpu.reciprocal %873 {approx = true} : vector<8x1xf32> -> vector<8x1xf32>
    %875 = vector.broadcast %874 : vector<8x1xf32> to vector<8x8xf32>
    %876 = arith.mulf %871, %875 : vector<8x8xf32>
    %cst_292 = arith.constant dense<0.000000e+00> : vector<8x8xf32>
    %877 = tpu.matmul %876, %856, %cst_292 {dimension_numbers = #tpu.dot_dimension_numbers<[1], [0], [0], [1], [0, 0, 1, 1], [], []>} : vector<8x8xf32>, vector<8x8xf32>, vector<8x8xf32> -> vector<8x8xf32>
    %878 = vector.extract_strided_slice %729 {offsets = [0, 48], sizes = [8, 8], strides = [1, 1]} : vector<8x64xf32> to vector<8x8xf32>
    %879 = vector.extract_strided_slice %731 {offsets = [0, 48], sizes = [8, 8], strides = [1, 1]} : vector<8x64xf32> to vector<8x8xf32>
    %880 = vector.extract_strided_slice %733 {offsets = [0, 48], sizes = [8, 8], strides = [1, 1]} : vector<8x64xf32> to vector<8x8xf32>
    %881 = tpu.transpose %879, [1, 0] : vector<8x8xf32> -> vector<8x8xf32>
    %cst_293 = arith.constant dense<0.000000e+00> : vector<8x8xf32>
    %882 = tpu.matmul %878, %881, %cst_293 {dimension_numbers = #tpu.dot_dimension_numbers<[1], [0], [0], [1], [0, 0, 1, 1], [], []>} : vector<8x8xf32>, vector<8x8xf32>, vector<8x8xf32> -> vector<8x8xf32>
    %cst_294 = arith.constant 0.353553385 : f32
    %883 = vector.broadcast %cst_294 : f32 to vector<8x8xf32>
    %884 = arith.mulf %882, %883 : vector<8x8xf32>
    %885 = vector.extract_strided_slice %727 {offsets = [6, 0, 0], sizes = [1, 8, 8], strides = [1, 1, 1]} : vector<8x8x8xf32> to vector<1x8x8xf32>
    %886 = vector.shape_cast %885 : vector<1x8x8xf32> to vector<8x8xf32>
    %cst_295 = arith.constant 0.000000e+00 : f32
    %887 = vector.broadcast %cst_295 : f32 to vector<8x8xf32>
    %888 = arith.cmpf one, %886, %887 : vector<8x8xf32>
    %cst_296 = arith.constant -1.000000e+09 : f32
    %889 = vector.broadcast %cst_296 : f32 to vector<8x8xf32>
    %890 = arith.select %888, %889, %884 : vector<8x8xi1>, vector<8x8xf32>
    %cst_297 = arith.constant dense<0xFF800000> : vector<8xf32>
    %891 = vector.multi_reduction <maximumf>, %890, %cst_297 [1] : vector<8x8xf32> to vector<8xf32>
    %892 = vector.shape_cast %891 : vector<8xf32> to vector<8x1xf32>
    %893 = vector.broadcast %892 : vector<8x1xf32> to vector<8x8xf32>
    %894 = arith.subf %890, %893 : vector<8x8xf32>
    %895 = math.exp %894 : vector<8x8xf32>
    %cst_298 = arith.constant dense<0.000000e+00> : vector<8xf32>
    %896 = vector.multi_reduction <add>, %895, %cst_298 [1] : vector<8x8xf32> to vector<8xf32>
    %897 = vector.shape_cast %896 : vector<8xf32> to vector<8x1xf32>
    %898 = tpu.reciprocal %897 {approx = true} : vector<8x1xf32> -> vector<8x1xf32>
    %899 = vector.broadcast %898 : vector<8x1xf32> to vector<8x8xf32>
    %900 = arith.mulf %895, %899 : vector<8x8xf32>
    %cst_299 = arith.constant dense<0.000000e+00> : vector<8x8xf32>
    %901 = tpu.matmul %900, %880, %cst_299 {dimension_numbers = #tpu.dot_dimension_numbers<[1], [0], [0], [1], [0, 0, 1, 1], [], []>} : vector<8x8xf32>, vector<8x8xf32>, vector<8x8xf32> -> vector<8x8xf32>
    %902 = vector.extract_strided_slice %729 {offsets = [0, 56], sizes = [8, 8], strides = [1, 1]} : vector<8x64xf32> to vector<8x8xf32>
    %903 = vector.extract_strided_slice %731 {offsets = [0, 56], sizes = [8, 8], strides = [1, 1]} : vector<8x64xf32> to vector<8x8xf32>
    %904 = vector.extract_strided_slice %733 {offsets = [0, 56], sizes = [8, 8], strides = [1, 1]} : vector<8x64xf32> to vector<8x8xf32>
    %905 = tpu.transpose %903, [1, 0] : vector<8x8xf32> -> vector<8x8xf32>
    %cst_300 = arith.constant dense<0.000000e+00> : vector<8x8xf32>
    %906 = tpu.matmul %902, %905, %cst_300 {dimension_numbers = #tpu.dot_dimension_numbers<[1], [0], [0], [1], [0, 0, 1, 1], [], []>} : vector<8x8xf32>, vector<8x8xf32>, vector<8x8xf32> -> vector<8x8xf32>
    %cst_301 = arith.constant 0.353553385 : f32
    %907 = vector.broadcast %cst_301 : f32 to vector<8x8xf32>
    %908 = arith.mulf %906, %907 : vector<8x8xf32>
    %909 = vector.extract_strided_slice %727 {offsets = [7, 0, 0], sizes = [1, 8, 8], strides = [1, 1, 1]} : vector<8x8x8xf32> to vector<1x8x8xf32>
    %910 = vector.shape_cast %909 : vector<1x8x8xf32> to vector<8x8xf32>
    %cst_302 = arith.constant 0.000000e+00 : f32
    %911 = vector.broadcast %cst_302 : f32 to vector<8x8xf32>
    %912 = arith.cmpf one, %910, %911 : vector<8x8xf32>
    %cst_303 = arith.constant -1.000000e+09 : f32
    %913 = vector.broadcast %cst_303 : f32 to vector<8x8xf32>
    %914 = arith.select %912, %913, %908 : vector<8x8xi1>, vector<8x8xf32>
    %cst_304 = arith.constant dense<0xFF800000> : vector<8xf32>
    %915 = vector.multi_reduction <maximumf>, %914, %cst_304 [1] : vector<8x8xf32> to vector<8xf32>
    %916 = vector.shape_cast %915 : vector<8xf32> to vector<8x1xf32>
    %917 = vector.broadcast %916 : vector<8x1xf32> to vector<8x8xf32>
    %918 = arith.subf %914, %917 : vector<8x8xf32>
    %919 = math.exp %918 : vector<8x8xf32>
    %cst_305 = arith.constant dense<0.000000e+00> : vector<8xf32>
    %920 = vector.multi_reduction <add>, %919, %cst_305 [1] : vector<8x8xf32> to vector<8xf32>
    %921 = vector.shape_cast %920 : vector<8xf32> to vector<8x1xf32>
    %922 = tpu.reciprocal %921 {approx = true} : vector<8x1xf32> -> vector<8x1xf32>
    %923 = vector.broadcast %922 : vector<8x1xf32> to vector<8x8xf32>
    %924 = arith.mulf %919, %923 : vector<8x8xf32>
    %cst_306 = arith.constant dense<0.000000e+00> : vector<8x8xf32>
    %925 = tpu.matmul %924, %904, %cst_306 {dimension_numbers = #tpu.dot_dimension_numbers<[1], [0], [0], [1], [0, 0, 1, 1], [], []>} : vector<8x8xf32>, vector<8x8xf32>, vector<8x8xf32> -> vector<8x8xf32>
    %926 = tpu.concatenate %757, %781, %805, %829, %853, %877, %901, %925 in 1 : vector<8x8xf32>, vector<8x8xf32>, vector<8x8xf32>, vector<8x8xf32>, vector<8x8xf32>, vector<8x8xf32>, vector<8x8xf32>, vector<8x8xf32> -> vector<8x64xf32>
    %927 = arith.truncf %926 : vector<8x64xf32> to vector<8x64xbf16>
    %cst_307 = arith.constant dense<0.000000e+00> : vector<8x32xf32>
    %928 = tpu.matmul %927, %19, %cst_307 {dimension_numbers = #tpu.dot_dimension_numbers<[1], [0], [0], [1], [0, 0, 1, 1], [], []>} : vector<8x64xbf16>, vector<64x32xbf16>, vector<8x32xf32> -> vector<8x32xf32>
    %929 = arith.addf %723, %928 : vector<8x32xf32>
    %cst_308 = arith.constant dense<0.000000e+00> : vector<8xf32>
    %930 = vector.multi_reduction <add>, %929, %cst_308 [1] : vector<8x32xf32> to vector<8xf32>
    %931 = vector.shape_cast %930 : vector<8xf32> to vector<8x1xf32>
    %cst_309 = arith.constant 3.200000e+01 : f32
    %932 = vector.broadcast %cst_309 : f32 to vector<8x1xf32>
    %933 = arith.divf %931, %932 : vector<8x1xf32>
    %934 = vector.broadcast %933 : vector<8x1xf32> to vector<8x32xf32>
    %935 = arith.subf %929, %934 : vector<8x32xf32>
    %936 = arith.mulf %935, %935 : vector<8x32xf32>
    %cst_310 = arith.constant dense<0.000000e+00> : vector<8xf32>
    %937 = vector.multi_reduction <add>, %936, %cst_310 [1] : vector<8x32xf32> to vector<8xf32>
    %938 = vector.shape_cast %937 : vector<8xf32> to vector<8x1xf32>
    %cst_311 = arith.constant 3.200000e+01 : f32
    %939 = vector.broadcast %cst_311 : f32 to vector<8x1xf32>
    %940 = arith.divf %938, %939 : vector<8x1xf32>
    %941 = vector.broadcast %933 : vector<8x1xf32> to vector<8x32xf32>
    %942 = arith.subf %929, %941 : vector<8x32xf32>
    %cst_312 = arith.constant 9.99999974E-6 : f32
    %943 = vector.broadcast %cst_312 : f32 to vector<8x1xf32>
    %944 = arith.addf %940, %943 : vector<8x1xf32>
    %945 = math.rsqrt %944 : vector<8x1xf32>
    %946 = vector.broadcast %945 : vector<8x1xf32> to vector<8x32xf32>
    %947 = arith.mulf %942, %946 : vector<8x32xf32>
    %948 = arith.truncf %947 : vector<8x32xf32> to vector<8x32xbf16>
    %cst_313 = arith.constant dense<0.000000e+00> : vector<8x64xf32>
    %949 = tpu.matmul %948, %21, %cst_313 {dimension_numbers = #tpu.dot_dimension_numbers<[1], [0], [0], [1], [0, 0, 1, 1], [], []>} : vector<8x32xbf16>, vector<32x64xbf16>, vector<8x64xf32> -> vector<8x64xf32>
    %cst_314 = arith.constant 0.000000e+00 : f32
    %950 = vector.broadcast %cst_314 : f32 to vector<8x64xf32>
    %951 = arith.maximumf %949, %950 : vector<8x64xf32>
    %952 = arith.truncf %951 : vector<8x64xf32> to vector<8x64xbf16>
    %cst_315 = arith.constant dense<0.000000e+00> : vector<8x32xf32>
    %953 = tpu.matmul %952, %23, %cst_315 {dimension_numbers = #tpu.dot_dimension_numbers<[1], [0], [0], [1], [0, 0, 1, 1], [], []>} : vector<8x64xbf16>, vector<64x32xbf16>, vector<8x32xf32> -> vector<8x32xf32>
    %954 = arith.addf %947, %953 : vector<8x32xf32>
    %cst_316 = arith.constant dense<0.000000e+00> : vector<8xf32>
    %955 = vector.multi_reduction <add>, %954, %cst_316 [1] : vector<8x32xf32> to vector<8xf32>
    %956 = vector.shape_cast %955 : vector<8xf32> to vector<8x1xf32>
    %cst_317 = arith.constant 3.200000e+01 : f32
    %957 = vector.broadcast %cst_317 : f32 to vector<8x1xf32>
    %958 = arith.divf %956, %957 : vector<8x1xf32>
    %959 = vector.broadcast %958 : vector<8x1xf32> to vector<8x32xf32>
    %960 = arith.subf %954, %959 : vector<8x32xf32>
    %961 = arith.mulf %960, %960 : vector<8x32xf32>
    %cst_318 = arith.constant dense<0.000000e+00> : vector<8xf32>
    %962 = vector.multi_reduction <add>, %961, %cst_318 [1] : vector<8x32xf32> to vector<8xf32>
    %963 = vector.shape_cast %962 : vector<8xf32> to vector<8x1xf32>
    %cst_319 = arith.constant 3.200000e+01 : f32
    %964 = vector.broadcast %cst_319 : f32 to vector<8x1xf32>
    %965 = arith.divf %963, %964 : vector<8x1xf32>
    %966 = vector.broadcast %958 : vector<8x1xf32> to vector<8x32xf32>
    %967 = arith.subf %954, %966 : vector<8x32xf32>
    %cst_320 = arith.constant 9.99999974E-6 : f32
    %968 = vector.broadcast %cst_320 : f32 to vector<8x1xf32>
    %969 = arith.addf %965, %968 : vector<8x1xf32>
    %970 = math.rsqrt %969 : vector<8x1xf32>
    %971 = vector.broadcast %970 : vector<8x1xf32> to vector<8x32xf32>
    %972 = arith.mulf %967, %971 : vector<8x32xf32>
    %c1 = arith.constant 1 : index
    %c0_321 = arith.constant 0 : index
    %c0_322 = arith.constant 0 : index
    %973 = vector.load %arg15[%c1, %c0_321, %c0_322] : memref<2x8x32xf32, #tpu.memory_space<vmem>>, vector<1x8x32xf32>
    %974 = vector.shape_cast %973 : vector<1x8x32xf32> to vector<8x32xf32>
    %975 = vector.shape_cast %972 : vector<8x32xf32> to vector<1x8x32xf32>
    tpu.vector_store %arg15[%c1, %c0_321, %c0_322], %975 {strides = array<i32>} : memref<2x8x32xf32, #tpu.memory_space<vmem>>, vector<1x8x32xf32>,
    return
  }
  func.func @transform_0(%arg0: i32) -> (i32, i32, i32) {
    %c0_i32 = arith.constant 0 : i32
    %c0_i32_0 = arith.constant 0 : i32
    %c0_i32_1 = arith.constant 0 : i32
    %c0_i32_2 = arith.constant 0 : i32
    return %c0_i32, %c0_i32_0, %c0_i32_1 : i32, i32, i32
  }
  func.func @transform_1(%arg0: i32) -> (i32, i32, i32) {
    %c0_i32 = arith.constant 0 : i32
    %c0_i32_0 = arith.constant 0 : i32
    %c0_i32_1 = arith.constant 0 : i32
    %c0_i32_2 = arith.constant 0 : i32
    return %c0_i32, %c0_i32_0, %c0_i32_1 : i32, i32, i32
  }
  func.func @transform_2(%arg0: i32) -> (i32, i32, i32, i32) {
    %c0_i32 = arith.constant 0 : i32
    %c0_i32_0 = arith.constant 0 : i32
    %c0_i32_1 = arith.constant 0 : i32
    %c0_i32_2 = arith.constant 0 : i32
    %c0_i32_3 = arith.constant 0 : i32
    return %c0_i32, %c0_i32_0, %c0_i32_1, %c0_i32_2 : i32, i32, i32, i32
  }
  func.func @transform_3(%arg0: i32) -> (i32, i32, i32, i32) {
    %c0_i32 = arith.constant 0 : i32
    %c0_i32_0 = arith.constant 0 : i32
    %c0_i32_1 = arith.constant 0 : i32
    %c0_i32_2 = arith.constant 0 : i32
    %c0_i32_3 = arith.constant 0 : i32
    return %c0_i32, %c0_i32_0, %c0_i32_1, %c0_i32_2 : i32, i32, i32, i32
  }
  func.func @transform_4(%arg0: i32) -> (i32, i32, i32) {
    %c0_i32 = arith.constant 0 : i32
    %c0_i32_0 = arith.constant 0 : i32
    %c0_i32_1 = arith.constant 0 : i32
    return %arg0, %c0_i32, %c0_i32_0 : i32, i32, i32
  }
  func.func @transform_5(%arg0: i32) -> (i32, i32, i32) {
    %c0_i32 = arith.constant 0 : i32
    %c0_i32_0 = arith.constant 0 : i32
    %c0_i32_1 = arith.constant 0 : i32
    return %arg0, %c0_i32, %c0_i32_0 : i32, i32, i32
  }
  func.func @transform_6(%arg0: i32) -> (i32, i32, i32) {
    %c0_i32 = arith.constant 0 : i32
    %c0_i32_0 = arith.constant 0 : i32
    %c0_i32_1 = arith.constant 0 : i32
    return %arg0, %c0_i32, %c0_i32_0 : i32, i32, i32
  }
  func.func @transform_7(%arg0: i32) -> (i32, i32, i32) {
    %c0_i32 = arith.constant 0 : i32
    %c0_i32_0 = arith.constant 0 : i32
    %c0_i32_1 = arith.constant 0 : i32
    return %arg0, %c0_i32, %c0_i32_0 : i32, i32, i32
  }
  func.func @transform_8(%arg0: i32) -> (i32, i32, i32) {
    %c0_i32 = arith.constant 0 : i32
    %c0_i32_0 = arith.constant 0 : i32
    %c0_i32_1 = arith.constant 0 : i32
    return %arg0, %c0_i32, %c0_i32_0 : i32, i32, i32
  }
  func.func @transform_9(%arg0: i32) -> (i32, i32, i32) {
    %c0_i32 = arith.constant 0 : i32
    %c0_i32_0 = arith.constant 0 : i32
    %c0_i32_1 = arith.constant 0 : i32
    return %arg0, %c0_i32, %c0_i32_0 : i32, i32, i32
  }
  func.func @transform_10(%arg0: i32) -> (i32, i32, i32) {
    %c0_i32 = arith.constant 0 : i32
    %c0_i32_0 = arith.constant 0 : i32
    %c0_i32_1 = arith.constant 0 : i32
    return %arg0, %c0_i32, %c0_i32_0 : i32, i32, i32
  }
  func.func @transform_11(%arg0: i32) -> (i32, i32, i32) {
    %c0_i32 = arith.constant 0 : i32
    %c0_i32_0 = arith.constant 0 : i32
    %c0_i32_1 = arith.constant 0 : i32
    return %arg0, %c0_i32, %c0_i32_0 : i32, i32, i32
  }
  func.func @transform_12(%arg0: i32) -> (i32, i32, i32) {
    %c0_i32 = arith.constant 0 : i32
    %c0_i32_0 = arith.constant 0 : i32
    %c0_i32_1 = arith.constant 0 : i32
    return %arg0, %c0_i32, %c0_i32_0 : i32, i32, i32
  }
  func.func @transform_13(%arg0: i32) -> (i32, i32, i32) {
    %c0_i32 = arith.constant 0 : i32
    %c0_i32_0 = arith.constant 0 : i32
    %c0_i32_1 = arith.constant 0 : i32
    return %arg0, %c0_i32, %c0_i32_0 : i32, i32, i32
  }
  func.func @transform_14(%arg0: i32) -> (i32, i32, i32) {
    %c0_i32 = arith.constant 0 : i32
    %c0_i32_0 = arith.constant 0 : i32
    %c0_i32_1 = arith.constant 0 : i32
    %c0_i32_2 = arith.constant 0 : i32
    return %c0_i32, %c0_i32_0, %c0_i32_1 : i32, i32, i32
  }
}

</mosaic_0001>

<llo_original>
// kernel: tpu_custom_call.1
$region0: #{tpu_custom_call.1}
  #allocation0 [shape = 'u32[]', space=smem, size = 0x4, offset = 0x4, fixed_abs, tag = 'smem constant byte address 0x4 - core index']
  #allocation1 [shape = 'u32[144,128]{1,0:T(1,128)}', space=vmem, size = 0x12000, scoped, tag = 'internal scratch']
  %s0 = inlined_call_operand.hbm [shape: f32[2,8,32], index: 0, kind: input, shape index: {}]
  %s1 = inlined_call_operand.hbm [shape: f32[2,8,32], index: 1, kind: input, shape index: {}]
  %s2 = inlined_call_operand.vmem [shape: f32[2,8,8,8], index: 2, kind: input, shape index: {}]
  %s3 = inlined_call_operand.vmem [shape: f32[2,8,8,8], index: 3, kind: input, shape index: {}]
  %s4 = inlined_call_operand.vmem [shape: bf16[8,32,64], index: 4, kind: input, shape index: {}]
  %s5 = inlined_call_operand.vmem [shape: bf16[8,32,64], index: 5, kind: input, shape index: {}]
  %s6 = inlined_call_operand.vmem [shape: bf16[8,32,64], index: 6, kind: input, shape index: {}]
  %s7 = inlined_call_operand.vmem [shape: bf16[8,64,32], index: 7, kind: input, shape index: {}]
  %s8 = inlined_call_operand.vmem [shape: bf16[8,32,64], index: 8, kind: input, shape index: {}]
  %s9 = inlined_call_operand.vmem [shape: bf16[8,32,64], index: 9, kind: input, shape index: {}]
  %s10 = inlined_call_operand.hbm [shape: bf16[8,32,64], index: 10, kind: input, shape index: {}]
  %s11 = inlined_call_operand.vmem [shape: bf16[8,64,32], index: 11, kind: input, shape index: {}]
  %s12 = inlined_call_operand.hbm [shape: bf16[8,32,64], index: 12, kind: input, shape index: {}]
  %s13 = inlined_call_operand.vmem [shape: bf16[8,64,32], index: 13, kind: input, shape index: {}]
  %s14 = inlined_call_operand.hbm [shape: f32[2,8,32], index: 14, kind: output, shape index: {}]
  %s15 = sld [smem:[#allocation0]]
  $region105: #{tpu_custom_call.1} parent=0
    _
  %s17 = ssub.s32 1, %s15
  %s18 = scalar_select 0, %s17, %s15
  $region1: #{tpu_custom_call.1} parent=0
    #allocation2 [shape = 'u8[8192]{0}', space=vmem, size = 0x2000, scoped, tag = 'input window, operand 0, single buffered']
    #allocation3 [shape = 's32[2]{0}', space=sflag, size = 0x8, scoped, tag = 'scoped memory for tpu_custom_call.1']
    #allocation4 [shape = 's32[2]{0}', space=sflag, size = 0x8, scoped, tag = 'scoped memory for tpu_custom_call.1']
    #allocation5 [shape = 'u8[8192]{0}', space=vmem, size = 0x2000, scoped, tag = 'input window, operand 1, single buffered']
    #allocation6 [shape = 's32[1]{0}', space=sflag, size = 0x4, scoped, tag = 'scoped memory for tpu_custom_call.1']
    #allocation7 [shape = 'u8[16384]{0}', space=vmem, size = 0x4000, scoped, tag = 'input window, operand 10']
    #allocation8 [shape = 'u8[16384]{0}', space=vmem, size = 0x4000, scoped, tag = 'input window, operand 12']
    #allocation9 [shape = 'u8[8192]{0}', space=vmem, size = 0x2000, scoped, tag = 'output window, operand 0, single buffered']
    %19 = vsyncpa [#allocation3], 0
    %20 = vsyncpa [#allocation6], 0
    %21 = vsyncpa [#allocation4], 0
    loop: start=0, step=1, limit=10
    $region2: #{tpu_custom_call.1} parent=1 // loop_pre_header
      _
    $region3: #{tpu_custom_call.1} parent=1 // loop_header
      %s23 = sphi 0, %s27
      %p24 = scmp.ge.s32.totalorder %s23, 10
      %s31 = sphi 0, %s31
      %s33 = sphi 0, %s31
      %s34 = sphi 0, %s33
      %s48 = sphi 0, %s34
      %s52 = sphi 0, %s52
      %s54 = sphi 0, %s52
      %s55 = sphi 0, %s54
      %s69 = sphi 0, %s55
      %s73 = sphi 0, %s73
      %s75 = sphi 0, %s73
      %s76 = sphi 0, %s75
      %s90 = sphi 0, %s76
      %s94 = sphi 0, %s94
      %s96 = sphi 0, %s94
      %s97 = sphi 0, %s96
      %s111 = sphi 0, %s97
      %s117 = sphi 0, %s119
      %s120 = sphi 0, %s117
      %s121 = sphi 0, %s120
      %s137 = sphi 0, %s121
      %s143 = sphi 0, %s145
      %s146 = sphi 0, %s143
      %s147 = sphi 0, %s146
      %s163 = sphi 0, %s147
      %s169 = sphi 0, %s171
      %s172 = sphi 0, %s169
      %s173 = sphi 0, %s172
      %s189 = sphi 0, %s173
      %s195 = sphi 0, %s197
      %s198 = sphi 0, %s195
      %s199 = sphi 0, %s198
      %s215 = sphi 0, %s199
      %s221 = sphi 0, %s223
      %s224 = sphi 0, %s221
      %s225 = sphi 0, %s224
      %s241 = sphi 0, %s225
      %s247 = sphi 0, %s249
      %s250 = sphi 0, %s247
      %s251 = sphi 0, %s250
      %s267 = sphi 0, %s251
      %s273 = sphi 0, %s275
      %s276 = sphi 0, %s273
      %s277 = sphi 0, %s276
      %s293 = sphi 0, %s277
      %s299 = sphi 0, %s301
      %s302 = sphi 0, %s299
      %s303 = sphi 0, %s302
      %s319 = sphi 0, %s303
      %s325 = sphi 0, %s327
      %s328 = sphi 0, %s325
      %s329 = sphi 0, %s328
      %s345 = sphi 0, %s329
      %s351 = sphi 0, %s353
      %s354 = sphi 0, %s351
      %s355 = sphi 0, %s354
      %s371 = sphi 0, %s355
      %s375 = sphi 0, %s375
      %s377 = sphi 0, %s375
      %s378 = sphi 0, %s377
      %s392 = sphi 0, %s378
    $region4: #{tpu_custom_call.1} parent=1 // loop_header_branch
      %26 = sbr.rel (%p24) target = $region8
    $region5: #{tpu_custom_call.1} parent=1 // loop_body
      %s28 = ssub.s32 %s23, 1
      %s29 = ssub.s32 %s23, 2
      %s30 = sadd.s32 %s23, 1
      %s32 = sadd.s32 %s31, 1
      %p35 = scmp.eq.s32.totalorder %s23, 7
      %p36 = scmp.ne.s32.totalorder %s31, %s33
      %p37 = scmp.eq.s32.totalorder %s23, 0
      %p38 = por %p36, %p37
      %p39 = scmp.ne.s32.totalorder %s31, %s33
      %p40 = scmp.eq.s32.totalorder %s28, 7
      %p41 = por %p39, %p40
      %p42 = scmp.ne.s32.totalorder %s33, %s34
      %p43 = scmp.eq.s32.totalorder %s28, 0
      %p44 = por %p42, %p43
      %p45 = scmp.ne.s32.totalorder %s33, %s34
      %p46 = scmp.eq.s32.totalorder %s29, 7
      %p47 = por %p45, %p46
      %p49 = scmp.ne.s32.totalorder %s34, %s48
      %p50 = scmp.eq.s32.totalorder %s29, 0
      %p51 = por %p49, %p50
      %s53 = sadd.s32 %s52, 1
      %p56 = scmp.eq.s32.totalorder %s23, 7
      %p57 = scmp.ne.s32.totalorder %s52, %s54
      %p58 = scmp.eq.s32.totalorder %s23, 0
      %p59 = por %p57, %p58
      %p60 = scmp.ne.s32.totalorder %s52, %s54
      %p61 = scmp.eq.s32.totalorder %s28, 7
      %p62 = por %p60, %p61
      %p63 = scmp.ne.s32.totalorder %s54, %s55
      %p64 = scmp.eq.s32.totalorder %s28, 0
      %p65 = por %p63, %p64
      %p66 = scmp.ne.s32.totalorder %s54, %s55
      %p67 = scmp.eq.s32.totalorder %s29, 7
      %p68 = por %p66, %p67
      %p70 = scmp.ne.s32.totalorder %s55, %s69
      %p71 = scmp.eq.s32.totalorder %s29, 0
      %p72 = por %p70, %p71
      %s74 = sadd.s32 %s73, 1
      %p77 = scmp.eq.s32.totalorder %s23, 7
      %p78 = scmp.ne.s32.totalorder %s73, %s75
      %p79 = scmp.eq.s32.totalorder %s23, 0
      %p80 = por %p78, %p79
      %p81 = scmp.ne.s32.totalorder %s73, %s75
      %p82 = scmp.eq.s32.totalorder %s28, 7
      %p83 = por %p81, %p82
      %p84 = scmp.ne.s32.totalorder %s75, %s76
      %p85 = scmp.eq.s32.totalorder %s28, 0
      %p86 = por %p84, %p85
      %p87 = scmp.ne.s32.totalorder %s75, %s76
      %p88 = scmp.eq.s32.totalorder %s29, 7
      %p89 = por %p87, %p88
      %p91 = scmp.ne.s32.totalorder %s76, %s90
      %p92 = scmp.eq.s32.totalorder %s29, 0
      %p93 = por %p91, %p92
      %s95 = sadd.s32 %s94, 1
      %p98 = scmp.eq.s32.totalorder %s23, 7
      %p99 = scmp.ne.s32.totalorder %s94, %s96
      %p100 = scmp.eq.s32.totalorder %s23, 0
      %p101 = por %p99, %p100
      %p102 = scmp.ne.s32.totalorder %s94, %s96
      %p103 = scmp.eq.s32.totalorder %s28, 7
      %p104 = por %p102, %p103
      %p105 = scmp.ne.s32.totalorder %s96, %s97
      %p106 = scmp.eq.s32.totalorder %s28, 0
      %p107 = por %p105, %p106
      %p108 = scmp.ne.s32.totalorder %s96, %s97
      %p109 = scmp.eq.s32.totalorder %s29, 7
      %p110 = por %p108, %p109
      %p112 = scmp.ne.s32.totalorder %s97, %s111
      %p113 = scmp.eq.s32.totalorder %s29, 0
      %p114 = por %p112, %p113
      %s115 = ssub.s32 %s23, %s30
      %p116 = scmp.eq.s32.totalorder %s115, 0
      %s118 = sadd.s32 %s117, 1
      %s119 = scalar_select %p116, %s117, %s118
      %p122 = pneg %p116
      %p123 = scmp.eq.s32.totalorder %s23, 7
      %p124 = por %p122, %p123
      %p125 = scmp.ne.s32.totalorder %s117, %s120
      %p126 = scmp.eq.s32.totalorder %s23, 0
      %p127 = por %p125, %p126
      %p128 = scmp.ne.s32.totalorder %s117, %s120
      %p129 = scmp.eq.s32.totalorder %s28, 7
      %p130 = por %p128, %p129
      %p131 = scmp.ne.s32.totalorder %s120, %s121
      %p132 = scmp.eq.s32.totalorder %s28, 0
      %p133 = por %p131, %p132
      %p134 = scmp.ne.s32.totalorder %s120, %s121
      %p135 = scmp.eq.s32.totalorder %s29, 7
      %p136 = por %p134, %p135
      %p138 = scmp.ne.s32.totalorder %s121, %s137
      %p139 = scmp.eq.s32.totalorder %s29, 0
      %p140 = por %p138, %p139
      %s141 = ssub.s32 %s23, %s30
      %p142 = scmp.eq.s32.totalorder %s141, 0
      %s144 = sadd.s32 %s143, 1
      %s145 = scalar_select %p142, %s143, %s144
      %p148 = pneg %p142
      %p149 = scmp.eq.s32.totalorder %s23, 7
      %p150 = por %p148, %p149
      %p151 = scmp.ne.s32.totalorder %s143, %s146
      %p152 = scmp.eq.s32.totalorder %s23, 0
      %p153 = por %p151, %p152
      %p154 = scmp.ne.s32.totalorder %s143, %s146
      %p155 = scmp.eq.s32.totalorder %s28, 7
      %p156 = por %p154, %p155
      %p157 = scmp.ne.s32.totalorder %s146, %s147
      %p158 = scmp.eq.s32.totalorder %s28, 0
      %p159 = por %p157, %p158
      %p160 = scmp.ne.s32.totalorder %s146, %s147
      %p161 = scmp.eq.s32.totalorder %s29, 7
      %p162 = por %p160, %p161
      %p164 = scmp.ne.s32.totalorder %s147, %s163
      %p165 = scmp.eq.s32.totalorder %s29, 0
      %p166 = por %p164, %p165
      %s167 = ssub.s32 %s23, %s30
      %p168 = scmp.eq.s32.totalorder %s167, 0
      %s170 = sadd.s32 %s169, 1
      %s171 = scalar_select %p168, %s169, %s170
      %p174 = pneg %p168
      %p175 = scmp.eq.s32.totalorder %s23, 7
      %p176 = por %p174, %p175
      %p177 = scmp.ne.s32.totalorder %s169, %s172
      %p178 = scmp.eq.s32.totalorder %s23, 0
      %p179 = por %p177, %p178
      %p180 = scmp.ne.s32.totalorder %s169, %s172
      %p181 = scmp.eq.s32.totalorder %s28, 7
      %p182 = por %p180, %p181
      %p183 = scmp.ne.s32.totalorder %s172, %s173
      %p184 = scmp.eq.s32.totalorder %s28, 0
      %p185 = por %p183, %p184
      %p186 = scmp.ne.s32.totalorder %s172, %s173
      %p187 = scmp.eq.s32.totalorder %s29, 7
      %p188 = por %p186, %p187
      %p190 = scmp.ne.s32.totalorder %s173, %s189
      %p191 = scmp.eq.s32.totalorder %s29, 0
      %p192 = por %p190, %p191
      %s193 = ssub.s32 %s23, %s30
      %p194 = scmp.eq.s32.totalorder %s193, 0
      %s196 = sadd.s32 %s195, 1
      %s197 = scalar_select %p194, %s195, %s196
      %p200 = pneg %p194
      %p201 = scmp.eq.s32.totalorder %s23, 7
      %p202 = por %p200, %p201
      %p203 = scmp.ne.s32.totalorder %s195, %s198
      %p204 = scmp.eq.s32.totalorder %s23, 0
      %p205 = por %p203, %p204
      %p206 = scmp.ne.s32.totalorder %s195, %s198
      %p207 = scmp.eq.s32.totalorder %s28, 7
      %p208 = por %p206, %p207
      %p209 = scmp.ne.s32.totalorder %s198, %s199
      %p210 = scmp.eq.s32.totalorder %s28, 0
      %p211 = por %p209, %p210
      %p212 = scmp.ne.s32.totalorder %s198, %s199
      %p213 = scmp.eq.s32.totalorder %s29, 7
      %p214 = por %p212, %p213
      %p216 = scmp.ne.s32.totalorder %s199, %s215
      %p217 = scmp.eq.s32.totalorder %s29, 0
      %p218 = por %p216, %p217
      %s219 = ssub.s32 %s23, %s30
      %p220 = scmp.eq.s32.totalorder %s219, 0
      %s222 = sadd.s32 %s221, 1
      %s223 = scalar_select %p220, %s221, %s222
      %p226 = pneg %p220
      %p227 = scmp.eq.s32.totalorder %s23, 7
      %p228 = por %p226, %p227
      %p229 = scmp.ne.s32.totalorder %s221, %s224
      %p230 = scmp.eq.s32.totalorder %s23, 0
      %p231 = por %p229, %p230
      %p232 = scmp.ne.s32.totalorder %s221, %s224
      %p233 = scmp.eq.s32.totalorder %s28, 7
      %p234 = por %p232, %p233
      %p235 = scmp.ne.s32.totalorder %s224, %s225
      %p236 = scmp.eq.s32.totalorder %s28, 0
      %p237 = por %p235, %p236
      %p238 = scmp.ne.s32.totalorder %s224, %s225
      %p239 = scmp.eq.s32.totalorder %s29, 7
      %p240 = por %p238, %p239
      %p242 = scmp.ne.s32.totalorder %s225, %s241
      %p243 = scmp.eq.s32.totalorder %s29, 0
      %p244 = por %p242, %p243
      %s245 = ssub.s32 %s23, %s30
      %p246 = scmp.eq.s32.totalorder %s245, 0
      %s248 = sadd.s32 %s247, 1
      %s249 = scalar_select %p246, %s247, %s248
      %p252 = pneg %p246
      %p253 = scmp.eq.s32.totalorder %s23, 7
      %p254 = por %p252, %p253
      %p255 = scmp.ne.s32.totalorder %s247, %s250
      %p256 = scmp.eq.s32.totalorder %s23, 0
      %p257 = por %p255, %p256
      %p258 = scmp.ne.s32.totalorder %s247, %s250
      %p259 = scmp.eq.s32.totalorder %s28, 7
      %p260 = por %p258, %p259
      %p261 = scmp.ne.s32.totalorder %s250, %s251
      %p262 = scmp.eq.s32.totalorder %s28, 0
      %p263 = por %p261, %p262
      %p264 = scmp.ne.s32.totalorder %s250, %s251
      %p265 = scmp.eq.s32.totalorder %s29, 7
      %p266 = por %p264, %p265
      %p268 = scmp.ne.s32.totalorder %s251, %s267
      %p269 = scmp.eq.s32.totalorder %s29, 0
      %p270 = por %p268, %p269
      %s271 = ssub.s32 %s23, %s30
      %p272 = scmp.eq.s32.totalorder %s271, 0
      %s274 = sadd.s32 %s273, 1
      %s275 = scalar_select %p272, %s273, %s274
      %p278 = pneg %p272
      %p279 = scmp.eq.s32.totalorder %s23, 7
      %p280 = por %p278, %p279
      %p281 = scmp.ne.s32.totalorder %s273, %s276
      %p282 = scmp.eq.s32.totalorder %s23, 0
      %p283 = por %p281, %p282
      %p284 = scmp.ne.s32.totalorder %s273, %s276
      %p285 = scmp.eq.s32.totalorder %s28, 7
      %p286 = por %p284, %p285
      %p287 = scmp.ne.s32.totalorder %s276, %s277
      %p288 = scmp.eq.s32.totalorder %s28, 0
      %p289 = por %p287, %p288
      %p290 = scmp.ne.s32.totalorder %s276, %s277
      %p291 = scmp.eq.s32.totalorder %s29, 7
      %p292 = por %p290, %p291
      %p294 = scmp.ne.s32.totalorder %s277, %s293
      %p295 = scmp.eq.s32.totalorder %s29, 0
      %p296 = por %p294, %p295
      %s297 = ssub.s32 %s23, %s30
      %p298 = scmp.eq.s32.totalorder %s297, 0
      %s300 = sadd.s32 %s299, 1
      %s301 = scalar_select %p298, %s299, %s300
      %p304 = pneg %p298
      %p305 = scmp.eq.s32.totalorder %s23, 7
      %p306 = por %p304, %p305
      %p307 = scmp.ne.s32.totalorder %s299, %s302
      %p308 = scmp.eq.s32.totalorder %s23, 0
      %p309 = por %p307, %p308
      %p310 = scmp.ne.s32.totalorder %s299, %s302
      %p311 = scmp.eq.s32.totalorder %s28, 7
      %p312 = por %p310, %p311
      %p313 = scmp.ne.s32.totalorder %s302, %s303
      %p314 = scmp.eq.s32.totalorder %s28, 0
      %p315 = por %p313, %p314
      %p316 = scmp.ne.s32.totalorder %s302, %s303
      %p317 = scmp.eq.s32.totalorder %s29, 7
      %p318 = por %p316, %p317
      %p320 = scmp.ne.s32.totalorder %s303, %s319
      %p321 = scmp.eq.s32.totalorder %s29, 0
      %p322 = por %p320, %p321
      %s323 = ssub.s32 %s23, %s30
      %p324 = scmp.eq.s32.totalorder %s323, 0
      %s326 = sadd.s32 %s325, 1
      %s327 = scalar_select %p324, %s325, %s326
      %p330 = pneg %p324
      %p331 = scmp.eq.s32.totalorder %s23, 7
      %p332 = por %p330, %p331
      %p333 = scmp.ne.s32.totalorder %s325, %s328
      %p334 = scmp.eq.s32.totalorder %s23, 0
      %p335 = por %p333, %p334
      %p336 = scmp.ne.s32.totalorder %s325, %s328
      %p337 = scmp.eq.s32.totalorder %s28, 7
      %p338 = por %p336, %p337
      %p339 = scmp.ne.s32.totalorder %s328, %s329
      %p340 = scmp.eq.s32.totalorder %s28, 0
      %p341 = por %p339, %p340
      %p342 = scmp.ne.s32.totalorder %s328, %s329
      %p343 = scmp.eq.s32.totalorder %s29, 7
      %p344 = por %p342, %p343
      %p346 = scmp.ne.s32.totalorder %s329, %s345
      %p347 = scmp.eq.s32.totalorder %s29, 0
      %p348 = por %p346, %p347
      %s349 = ssub.s32 %s23, %s30
      %p350 = scmp.eq.s32.totalorder %s349, 0
      %s352 = sadd.s32 %s351, 1
      %s353 = scalar_select %p350, %s351, %s352
      %p356 = pneg %p350
      %p357 = scmp.eq.s32.totalorder %s23, 7
      %p358 = por %p356, %p357
      %p359 = scmp.ne.s32.totalorder %s351, %s354
      %p360 = scmp.eq.s32.totalorder %s23, 0
      %p361 = por %p359, %p360
      %p362 = scmp.ne.s32.totalorder %s351, %s354
      %p363 = scmp.eq.s32.totalorder %s28, 7
      %p364 = por %p362, %p363
      %p365 = scmp.ne.s32.totalorder %s354, %s355
      %p366 = scmp.eq.s32.totalorder %s28, 0
      %p367 = por %p365, %p366
      %p368 = scmp.ne.s32.totalorder %s354, %s355
      %p369 = scmp.eq.s32.totalorder %s29, 7
      %p370 = por %p368, %p369
      %p372 = scmp.ne.s32.totalorder %s355, %s371
      %p373 = scmp.eq.s32.totalorder %s29, 0
      %p374 = por %p372, %p373
      %s376 = sadd.s32 %s375, 1
      %p379 = scmp.eq.s32.totalorder %s23, 7
      %p380 = scmp.ne.s32.totalorder %s375, %s377
      %p381 = scmp.eq.s32.totalorder %s23, 0
      %p382 = por %p380, %p381
      %p383 = scmp.ne.s32.totalorder %s375, %s377
      %p384 = scmp.eq.s32.totalorder %s28, 7
      %p385 = por %p383, %p384
      %p386 = scmp.ne.s32.totalorder %s377, %s378
      %p387 = scmp.eq.s32.totalorder %s28, 0
      %p388 = por %p386, %p387
      %p389 = scmp.ne.s32.totalorder %s377, %s378
      %p390 = scmp.eq.s32.totalorder %s29, 7
      %p391 = por %p389, %p390
      %p393 = scmp.ne.s32.totalorder %s378, %s392
      %p394 = scmp.eq.s32.totalorder %s29, 0
      %p395 = por %p393, %p394
      %p396 = scmp.le.s32.totalorder 1, %s23
      %p397 = scmp.lt.s32.totalorder %s23, 9
      %p398 = pnand %p396, %p397
      %p399 = pneg %p398
      // Predicated region
      $region9: #{tpu_custom_call.1} parent=5 // pred_check
        _
      $region10: #{tpu_custom_call.1} parent=5 // pred_check_branch
        %401 = sbr.rel (%p398) target = $region12
      $region11: #{tpu_custom_call.1} parent=5 // pred_region
        %s402 = ssub.s32 %s23, 1
        // Predicated region
        $region13: #{tpu_custom_call.1} parent=11 // pred_check
          %p403 = pneg %p44
        $region14: #{tpu_custom_call.1} parent=11 // pred_check_branch
          %405 = sbr.rel (%p403) target = $region16
        $region15: #{tpu_custom_call.1} parent=11 // pred_region
          %s407 = ssub.s32 256, 256
          %408 = vsyncadd [#allocation3], %s407
          %s409 = sshll.u32 [#allocation2], 4
          %s410 = int_to_ptr.vmem [resolvable:$true] %s409
          %415 = dma.hbm_to_vmem [thread:$0]  %s0, 256, %s410, [#allocation3], 128, 128, 8
        $region16: #{tpu_custom_call.1} parent=11 // pred_fallthru
          _
        // Predicated region
        $region17: #{tpu_custom_call.1} parent=11 // pred_check
          %p416 = pneg %p65
        $region18: #{tpu_custom_call.1} parent=11 // pred_check_branch
          %418 = sbr.rel (%p416) target = $region20
        $region19: #{tpu_custom_call.1} parent=11 // pred_region
          %s420 = ssub.s32 256, 256
          %421 = vsyncadd [#allocation6], %s420
          %s422 = sshll.u32 [#allocation5], 4
          %s423 = int_to_ptr.vmem [resolvable:$true] %s422
          %428 = dma.hbm_to_vmem [thread:$0]  %s1, 256, %s423, [#allocation6], 128, 128, 8
        $region20: #{tpu_custom_call.1} parent=11 // pred_fallthru
          _
        // Predicated region
        $region21: #{tpu_custom_call.1} parent=11 // pred_check
          %p429 = pneg %p86
        $region22: #{tpu_custom_call.1} parent=11 // pred_check_branch
          %431 = sbr.rel (%p429) target = $region24
        $region23: #{tpu_custom_call.1} parent=11 // pred_region
          _
        $region24: #{tpu_custom_call.1} parent=11 // pred_fallthru
          _
        // Predicated region
        $region25: #{tpu_custom_call.1} parent=11 // pred_check
          %p432 = pneg %p107
        $region26: #{tpu_custom_call.1} parent=11 // pred_check_branch
          %434 = sbr.rel (%p432) target = $region28
        $region27: #{tpu_custom_call.1} parent=11 // pred_region
          _
        $region28: #{tpu_custom_call.1} parent=11 // pred_fallthru
          _
      $region12: #{tpu_custom_call.1} parent=5 // pred_fallthru
        _
      %p435 = scmp.lt.s32.totalorder %s23, 8
      // Predicated region
      $region29: #{tpu_custom_call.1} parent=5 // pred_check
        %p436 = pneg %p435
      $region30: #{tpu_custom_call.1} parent=5 // pred_check_branch
        %438 = sbr.rel (%p436) target = $region32
      $region31: #{tpu_custom_call.1} parent=5 // pred_region
        // Predicated region
        $region33: #{tpu_custom_call.1} parent=31 // pred_check
          %p439 = pneg %p127
        $region34: #{tpu_custom_call.1} parent=31 // pred_check_branch
          %441 = sbr.rel (%p439) target = $region36
        $region35: #{tpu_custom_call.1} parent=31 // pred_region
          %p442 = scmp.lt.s32.totalorder %s23, 7
          %s443 = scalar_select %p442, %s23, 7
          %s444 = smul.addr %s443, 4
          %s445 = smul.addr %s444, 4
          %s446 = scalar_lea.vmem %s4, %s445
        $region36: #{tpu_custom_call.1} parent=31 // pred_fallthru
          _
        // Predicated region
        $region37: #{tpu_custom_call.1} parent=31 // pred_check
          %p447 = pneg %p153
        $region38: #{tpu_custom_call.1} parent=31 // pred_check_branch
          %449 = sbr.rel (%p447) target = $region40
        $region39: #{tpu_custom_call.1} parent=31 // pred_region
          %p450 = scmp.lt.s32.totalorder %s23, 7
          %s451 = scalar_select %p450, %s23, 7
          %s452 = smul.addr %s451, 4
          %s453 = smul.addr %s452, 4
          %s454 = scalar_lea.vmem %s5, %s453
        $region40: #{tpu_custom_call.1} parent=31 // pred_fallthru
          _
        // Predicated region
        $region41: #{tpu_custom_call.1} parent=31 // pred_check
          %p455 = pneg %p179
        $region42: #{tpu_custom_call.1} parent=31 // pred_check_branch
          %457 = sbr.rel (%p455) target = $region44
        $region43: #{tpu_custom_call.1} parent=31 // pred_region
          %p458 = scmp.lt.s32.totalorder %s23, 7
          %s459 = scalar_select %p458, %s23, 7
          %s460 = smul.addr %s459, 4
          %s461 = smul.addr %s460, 4
          %s462 = scalar_lea.vmem %s6, %s461
        $region44: #{tpu_custom_call.1} parent=31 // pred_fallthru
          _
        // Predicated region
        $region45: #{tpu_custom_call.1} parent=31 // pred_check
          %p463 = pneg %p205
        $region46: #{tpu_custom_call.1} parent=31 // pred_check_branch
          %465 = sbr.rel (%p463) target = $region48
        $region47: #{tpu_custom_call.1} parent=31 // pred_region
          %p466 = scmp.lt.s32.totalorder %s23, 7
          %s467 = scalar_select %p466, %s23, 7
          %s468 = smul.addr %s467, 8
          %s469 = smul.addr %s468, 4
          %s470 = scalar_lea.vmem %s7, %s469
        $region48: #{tpu_custom_call.1} parent=31 // pred_fallthru
          _
        // Predicated region
        $region49: #{tpu_custom_call.1} parent=31 // pred_check
          %p471 = pneg %p231
        $region50: #{tpu_custom_call.1} parent=31 // pred_check_branch
          %473 = sbr.rel (%p471) target = $region52
        $region51: #{tpu_custom_call.1} parent=31 // pred_region
          %p474 = scmp.lt.s32.totalorder %s23, 7
          %s475 = scalar_select %p474, %s23, 7
          %s476 = smul.addr %s475, 4
          %s477 = smul.addr %s476, 4
          %s478 = scalar_lea.vmem %s8, %s477
        $region52: #{tpu_custom_call.1} parent=31 // pred_fallthru
          _
        // Predicated region
        $region53: #{tpu_custom_call.1} parent=31 // pred_check
          %p479 = pneg %p257
        $region54: #{tpu_custom_call.1} parent=31 // pred_check_branch
          %481 = sbr.rel (%p479) target = $region56
        $region55: #{tpu_custom_call.1} parent=31 // pred_region
          %p482 = scmp.lt.s32.totalorder %s23, 7
          %s483 = scalar_select %p482, %s23, 7
          %s484 = smul.addr %s483, 4
          %s485 = smul.addr %s484, 4
          %s486 = scalar_lea.vmem %s9, %s485
        $region56: #{tpu_custom_call.1} parent=31 // pred_fallthru
          _
        // Predicated region
        $region57: #{tpu_custom_call.1} parent=31 // pred_check
          %p487 = pneg %p283
        $region58: #{tpu_custom_call.1} parent=31 // pred_check_branch
          %489 = sbr.rel (%p487) target = $region60
        $region59: #{tpu_custom_call.1} parent=31 // pred_region
          %s490 = sand.u32 %s23, 1
          %s491 = scalar_lea.sflag [#allocation3], %s490
          %s492 = sand.u32 %s273, 1
          %s493 = smul.addr %s492, 16
          %s494 = scalar_lea.vmem [#allocation7], %s493
          %s496 = ssub.s32 256, 256
          %497 = vsyncadd %s491, %s496
          %s498 = smul.addr %s23, 4
          %s499 = smul.addr %s498, 64
          %s500 = scalar_lea.hbm %s10, %s499
          %s501 = sshll.u32 %s494, 4
          %s502 = int_to_ptr.vmem [resolvable:$true] %s501
          %507 = dma.hbm_to_vmem [thread:$0]  %s500, 256, %s502, %s491, 64, 64, 4
        $region60: #{tpu_custom_call.1} parent=31 // pred_fallthru
          _
        // Predicated region
        $region61: #{tpu_custom_call.1} parent=31 // pred_check
          %p508 = pneg %p309
        $region62: #{tpu_custom_call.1} parent=31 // pred_check_branch
          %510 = sbr.rel (%p508) target = $region64
        $region63: #{tpu_custom_call.1} parent=31 // pred_region
          %p511 = scmp.lt.s32.totalorder %s23, 7
          %s512 = scalar_select %p511, %s23, 7
          %s513 = smul.addr %s512, 8
          %s514 = smul.addr %s513, 4
          %s515 = scalar_lea.vmem %s11, %s514
        $region64: #{tpu_custom_call.1} parent=31 // pred_fallthru
          _
        // Predicated region
        $region65: #{tpu_custom_call.1} parent=31 // pred_check
          %p516 = pneg %p335
        $region66: #{tpu_custom_call.1} parent=31 // pred_check_branch
          %518 = sbr.rel (%p516) target = $region68
        $region67: #{tpu_custom_call.1} parent=31 // pred_region
          %s519 = sand.u32 %s23, 1
          %s520 = scalar_lea.sflag [#allocation3], %s519
          %s521 = sand.u32 %s325, 1
          %s522 = smul.addr %s521, 16
          %s523 = scalar_lea.vmem [#allocation8], %s522
          %s525 = ssub.s32 256, 256
          %526 = vsyncadd %s520, %s525
          %s527 = smul.addr %s23, 4
          %s528 = smul.addr %s527, 64
          %s529 = scalar_lea.hbm %s12, %s528
          %s530 = sshll.u32 %s523, 4
          %s531 = int_to_ptr.vmem [resolvable:$true] %s530
          %536 = dma.hbm_to_vmem [thread:$0]  %s529, 256, %s531, %s520, 64, 64, 4
        $region68: #{tpu_custom_call.1} parent=31 // pred_fallthru
          _
        // Predicated region
        $region69: #{tpu_custom_call.1} parent=31 // pred_check
          %p537 = pneg %p361
        $region70: #{tpu_custom_call.1} parent=31 // pred_check_branch
          %539 = sbr.rel (%p537) target = $region72
        $region71: #{tpu_custom_call.1} parent=31 // pred_region
          %p540 = scmp.lt.s32.totalorder %s23, 7
          %s541 = scalar_select %p540, %s23, 7
          %s542 = smul.addr %s541, 8
          %s543 = smul.addr %s542, 4
          %s544 = scalar_lea.vmem %s13, %s543
        $region72: #{tpu_custom_call.1} parent=31 // pred_fallthru
          _
      $region32: #{tpu_custom_call.1} parent=5 // pred_fallthru
        _
      %p545 = scmp.le.s32.totalorder 1, %s23
      %p546 = scmp.lt.s32.totalorder %s23, 9
      %p547 = pnand %p545, %p546
      %p548 = pneg %p547
      // Predicated region
      $region73: #{tpu_custom_call.1} parent=5 // pred_check
        _
      $region74: #{tpu_custom_call.1} parent=5 // pred_check_branch
        %550 = sbr.rel (%p547) target = $region76
      $region75: #{tpu_custom_call.1} parent=5 // pred_region
        %s551 = ssub.s32 %s23, 1
        // Predicated region
        $region77: #{tpu_custom_call.1} parent=75 // pred_check
          %p552 = pneg %p44
        $region78: #{tpu_custom_call.1} parent=75 // pred_check_branch
          %554 = sbr.rel (%p552) target = $region80
        $region79: #{tpu_custom_call.1} parent=75 // pred_region
          %555 = dma.done [#allocation3], 256
        $region80: #{tpu_custom_call.1} parent=75 // pred_fallthru
          _
        // Predicated region
        $region81: #{tpu_custom_call.1} parent=75 // pred_check
          %p556 = pneg %p65
        $region82: #{tpu_custom_call.1} parent=75 // pred_check_branch
          %558 = sbr.rel (%p556) target = $region84
        $region83: #{tpu_custom_call.1} parent=75 // pred_region
          %559 = dma.done [#allocation6], 256
        $region84: #{tpu_custom_call.1} parent=75 // pred_fallthru
          _
        %s560 = sand.u32 %s28, 1
        %s561 = scalar_lea.sflag [#allocation3], %s560
        %s562 = sand.u32 %s276, 1
        %s563 = smul.addr %s562, 16
        %s564 = scalar_lea.vmem [#allocation7], %s563
        // Predicated region
        $region85: #{tpu_custom_call.1} parent=75 // pred_check
          %p565 = pneg %p289
        $region86: #{tpu_custom_call.1} parent=75 // pred_check_branch
          %567 = sbr.rel (%p565) target = $region88
        $region87: #{tpu_custom_call.1} parent=75 // pred_region
          %568 = dma.done %s561, 256
        $region88: #{tpu_custom_call.1} parent=75 // pred_fallthru
          _
        %s569 = sand.u32 %s28, 1
        %s570 = scalar_lea.sflag [#allocation3], %s569
        %s571 = sand.u32 %s328, 1
        %s572 = smul.addr %s571, 16
        %s573 = scalar_lea.vmem [#allocation8], %s572
        // Predicated region
        $region89: #{tpu_custom_call.1} parent=75 // pred_check
          %p574 = pneg %p341
        $region90: #{tpu_custom_call.1} parent=75 // pred_check_branch
          %576 = sbr.rel (%p574) target = $region92
        $region91: #{tpu_custom_call.1} parent=75 // pred_region
          %577 = dma.done %s570, 256
        $region92: #{tpu_custom_call.1} parent=75 // pred_fallthru
          _
        %p578 = pneg %p44
        %p579 = pneg %p41
        %p580 = pneg %p65
        %p581 = pneg %p62
        %p582 = pneg %p86
        %p583 = pneg %p83
        %p584 = pneg %p107
        %p585 = pneg %p104
        %p586 = scmp.lt.s32.totalorder %s28, 7
        %s587 = scalar_select %p586, %s28, 7
        %s588 = smul.addr %s587, 4
        %s589 = smul.addr %s588, 4
        %s590 = scalar_lea.vmem %s4, %s589
        %p591 = pneg %p133
        %p592 = pneg %p130
        %p593 = scmp.lt.s32.totalorder %s28, 7
        %s594 = scalar_select %p593, %s28, 7
        %s595 = smul.addr %s594, 4
        %s596 = smul.addr %s595, 4
        %s597 = scalar_lea.vmem %s5, %s596
        %p598 = pneg %p159
        %p599 = pneg %p156
        %p600 = scmp.lt.s32.totalorder %s28, 7
        %s601 = scalar_select %p600, %s28, 7
        %s602 = smul.addr %s601, 4
        %s603 = smul.addr %s602, 4
        %s604 = scalar_lea.vmem %s6, %s603
        %p605 = pneg %p185
        %p606 = pneg %p182
        %p607 = scmp.lt.s32.totalorder %s28, 7
        %s608 = scalar_select %p607, %s28, 7
        %s609 = smul.addr %s608, 8
        %s610 = smul.addr %s609, 4
        %s611 = scalar_lea.vmem %s7, %s610
        %p612 = pneg %p211
        %p613 = pneg %p208
        %p614 = scmp.lt.s32.totalorder %s28, 7
        %s615 = scalar_select %p614, %s28, 7
        %s616 = smul.addr %s615, 4
        %s617 = smul.addr %s616, 4
        %s618 = scalar_lea.vmem %s8, %s617
        %p619 = pneg %p237
        %p620 = pneg %p234
        %p621 = scmp.lt.s32.totalorder %s28, 7
        %s622 = scalar_select %p621, %s28, 7
        %s623 = smul.addr %s622, 4
        %s624 = smul.addr %s623, 4
        %s625 = scalar_lea.vmem %s9, %s624
        %p626 = pneg %p263
        %p627 = pneg %p260
        %s628 = sand.u32 %s28, 1
        %s629 = scalar_lea.sflag [#allocation3], %s628
        %s630 = sand.u32 %s276, 1
        %s631 = smul.addr %s630, 16
        %s632 = scalar_lea.vmem [#allocation7], %s631
        %p633 = pneg %p289
        %p634 = pneg %p286
        %p635 = scmp.lt.s32.totalorder %s28, 7
        %s636 = scalar_select %p635, %s28, 7
        %s637 = smul.addr %s636, 8
        %s638 = smul.addr %s637, 4
        %s639 = scalar_lea.vmem %s11, %s638
        %p640 = pneg %p315
        %p641 = pneg %p312
        %s642 = sand.u32 %s28, 1
        %s643 = scalar_lea.sflag [#allocation3], %s642
        %s644 = sand.u32 %s328, 1
        %s645 = smul.addr %s644, 16
        %s646 = scalar_lea.vmem [#allocation8], %s645
        %p647 = pneg %p341
        %p648 = pneg %p338
        %p649 = scmp.lt.s32.totalorder %s28, 7
        %s650 = scalar_select %p649, %s28, 7
        %s651 = smul.addr %s650, 8
        %s652 = smul.addr %s651, 4
        %s653 = scalar_lea.vmem %s13, %s652
        %p654 = pneg %p367
        %p655 = pneg %p364
        %p656 = pneg %p388
        %p657 = pneg %p385
        %p658 = scmp.lt.s32.totalorder %s28, 7
        %s659 = scalar_select %p658, %s28, 7
        %s660 = smul.addr %s659, 4
        %s661 = smul.addr %s660, 4
        %s662 = scalar_lea.vmem %s4, %s661
        %p663 = scmp.lt.s32.totalorder %s28, 7
        %s664 = scalar_select %p663, %s28, 7
        %s665 = smul.addr %s664, 4
        %s666 = smul.addr %s665, 4
        %s667 = scalar_lea.vmem %s5, %s666
        %p668 = scmp.lt.s32.totalorder %s28, 7
        %s669 = scalar_select %p668, %s28, 7
        %s670 = smul.addr %s669, 4
        %s671 = smul.addr %s670, 4
        %s672 = scalar_lea.vmem %s6, %s671
        %p673 = scmp.lt.s32.totalorder %s28, 7
        %s674 = scalar_select %p673, %s28, 7
        %s675 = smul.addr %s674, 8
        %s676 = smul.addr %s675, 4
        %s677 = scalar_lea.vmem %s7, %s676
        %p678 = scmp.lt.s32.totalorder %s28, 7
        %s679 = scalar_select %p678, %s28, 7
        %s680 = smul.addr %s679, 4
        %s681 = smul.addr %s680, 4
        %s682 = scalar_lea.vmem %s8, %s681
        %p683 = scmp.lt.s32.totalorder %s28, 7
        %s684 = scalar_select %p683, %s28, 7
        %s685 = smul.addr %s684, 4
        %s686 = smul.addr %s685, 4
        %s687 = scalar_lea.vmem %s9, %s686
        %p688 = scmp.lt.s32.totalorder %s28, 7
        %s689 = scalar_select %p688, %s28, 7
        %s690 = smul.addr %s689, 8
        %s691 = smul.addr %s690, 4
        %s692 = scalar_lea.vmem %s11, %s691
        %p693 = scmp.lt.s32.totalorder %s28, 7
        %s694 = scalar_select %p693, %s28, 7
        %s695 = smul.addr %s694, 8
        %s696 = smul.addr %s695, 4
        %s697 = scalar_lea.vmem %s13, %s696
        %v699 = vld [vmem:[#allocation2] sm:$0xff]
        %v700 = vld [vmem:[#allocation2 + $0x8] sm:$0xff]
        %v701 = vld [vmem:[#allocation5] sm:$0xff]
        %v702 = vld [vmem:[#allocation5 + $0x8] sm:$0xff]
        %v703 = vld [vmem:[%s2] sm:$0xff]
        %v704 = vld [vmem:[%s2 + $0x8] sm:$0xff]
        %v705 = vld [vmem:[%s2 + $0x10] sm:$0xff]
        %v706 = vld [vmem:[%s2 + $0x18] sm:$0xff]
        %v707 = vld [vmem:[%s2 + $0x20] sm:$0xff]
        %v708 = vld [vmem:[%s2 + $0x28] sm:$0xff]
        %v709 = vld [vmem:[%s2 + $0x30] sm:$0xff]
        %v710 = vld [vmem:[%s2 + $0x38] sm:$0xff]
        %v711 = vld [vmem:[%s2 + $0x40] sm:$0xff]
        %v712 = vld [vmem:[%s2 + $0x48] sm:$0xff]
        %v713 = vld [vmem:[%s2 + $0x50] sm:$0xff]
        %v714 = vld [vmem:[%s2 + $0x58] sm:$0xff]
        %v715 = vld [vmem:[%s2 + $0x60] sm:$0xff]
        %v716 = vld [vmem:[%s2 + $0x68] sm:$0xff]
        %v717 = vld [vmem:[%s2 + $0x70] sm:$0xff]
        %v718 = vld [vmem:[%s2 + $0x78] sm:$0xff]
        %v719 = vld [vmem:[%s3] sm:$0xff]
        %v720 = vld [vmem:[%s3 + $0x8] sm:$0xff]
        %v721 = vld [vmem:[%s3 + $0x10] sm:$0xff]
        %v722 = vld [vmem:[%s3 + $0x18] sm:$0xff]
        %v723 = vld [vmem:[%s3 + $0x20] sm:$0xff]
        %v724 = vld [vmem:[%s3 + $0x28] sm:$0xff]
        %v725 = vld [vmem:[%s3 + $0x30] sm:$0xff]
        %v726 = vld [vmem:[%s3 + $0x38] sm:$0xff]
        %v727 = vld [vmem:[%s3 + $0x40] sm:$0xff]
        %v728 = vld [vmem:[%s3 + $0x48] sm:$0xff]
        %v729 = vld [vmem:[%s3 + $0x50] sm:$0xff]
        %v730 = vld [vmem:[%s3 + $0x58] sm:$0xff]
        %v731 = vld [vmem:[%s3 + $0x60] sm:$0xff]
        %v732 = vld [vmem:[%s3 + $0x68] sm:$0xff]
        %v733 = vld [vmem:[%s3 + $0x70] sm:$0xff]
        %v734 = vld [vmem:[%s3 + $0x78] sm:$0xff]
        %v735 = vld [vmem:[%s662] sm:$0xf]
        %v736 = vld [vmem:[%s662 + $0x4] sm:$0xf]
        %v737 = vld [vmem:[%s662 + $0x8] sm:$0xf]
        %v738 = vld [vmem:[%s662 + $0xc] sm:$0xf]
        %v739 = vld [vmem:[%s667] sm:$0xf]
        %v740 = vld [vmem:[%s667 + $0x4] sm:$0xf]
        %v741 = vld [vmem:[%s667 + $0x8] sm:$0xf]
        %v742 = vld [vmem:[%s667 + $0xc] sm:$0xf]
        %v743 = vld [vmem:[%s672] sm:$0xf]
        %v744 = vld [vmem:[%s672 + $0x4] sm:$0xf]
        %v745 = vld [vmem:[%s672 + $0x8] sm:$0xf]
        %v746 = vld [vmem:[%s672 + $0xc] sm:$0xf]
        %v747 = vld [vmem:[%s677] sm:$0xf]
        %v748 = vld [vmem:[%s677 + $0x4] sm:$0xf]
        %v749 = vld [vmem:[%s677 + $0x8] sm:$0xf]
        %v750 = vld [vmem:[%s677 + $0xc] sm:$0xf]
        %v751 = vld [vmem:[%s677 + $0x10] sm:$0xf]
        %v752 = vld [vmem:[%s677 + $0x14] sm:$0xf]
        %v753 = vld [vmem:[%s677 + $0x18] sm:$0xf]
        %v754 = vld [vmem:[%s677 + $0x1c] sm:$0xf]
        %v755 = vld [vmem:[%s682] sm:$0xf]
        %v756 = vld [vmem:[%s682 + $0x4] sm:$0xf]
        %v757 = vld [vmem:[%s682 + $0x8] sm:$0xf]
        %v758 = vld [vmem:[%s682 + $0xc] sm:$0xf]
        %v759 = vld [vmem:[%s687] sm:$0xf]
        %v760 = vld [vmem:[%s687 + $0x4] sm:$0xf]
        %v761 = vld [vmem:[%s687 + $0x8] sm:$0xf]
        %v762 = vld [vmem:[%s687 + $0xc] sm:$0xf]
        %v763 = vld [vmem:[%s564] sm:$0xf]
        %v764 = vld [vmem:[%s564 + $0x4] sm:$0xf]
        %v765 = vld [vmem:[%s564 + $0x8] sm:$0xf]
        %v766 = vld [vmem:[%s564 + $0xc] sm:$0xf]
        %v767 = vld [vmem:[%s692] sm:$0xf]
        %v768 = vld [vmem:[%s692 + $0x4] sm:$0xf]
        %v769 = vld [vmem:[%s692 + $0x8] sm:$0xf]
        %v770 = vld [vmem:[%s692 + $0xc] sm:$0xf]
        %v771 = vld [vmem:[%s692 + $0x10] sm:$0xf]
        %v772 = vld [vmem:[%s692 + $0x14] sm:$0xf]
        %v773 = vld [vmem:[%s692 + $0x18] sm:$0xf]
        %v774 = vld [vmem:[%s692 + $0x1c] sm:$0xf]
        %v775 = vld [vmem:[%s573] sm:$0xf]
        %v776 = vld [vmem:[%s573 + $0x4] sm:$0xf]
        %v777 = vld [vmem:[%s573 + $0x8] sm:$0xf]
        %v778 = vld [vmem:[%s573 + $0xc] sm:$0xf]
        %v779 = vld [vmem:[%s697] sm:$0xf]
        %v780 = vld [vmem:[%s697 + $0x4] sm:$0xf]
        %v781 = vld [vmem:[%s697 + $0x8] sm:$0xf]
        %v782 = vld [vmem:[%s697 + $0xc] sm:$0xf]
        %v783 = vld [vmem:[%s697 + $0x10] sm:$0xf]
        %v784 = vld [vmem:[%s697 + $0x14] sm:$0xf]
        %v785 = vld [vmem:[%s697 + $0x18] sm:$0xf]
        %v786 = vld [vmem:[%s697 + $0x1c] sm:$0xf]
        %v787 = vpack.c.bf16 %v699, %v699
        %v792 = vunpack.c.l.b16 %v735
        %v793 = vunpack.c.l.b16 %v736
        %v794 = vunpack.c.l.b16 %v737
        %v795 = vunpack.c.l.b16 %v738
        %v796 = vpack.c.b16 %v793, %v792
        %v797 = vpack.c.b16 %v795, %v794
        %vm800 = vcmask 261120
        %v802 = vsel %vm800, %v787, 0
        %804 = vmatprep.subr.bf16.mxu0 0
        %805 = vmatpush1.bf16.msra.mxu0 %v796
        %806 = vmatprep.subr.bf16.mxu0 0
        %807 = vmatpush1.bf16.msra.mxu0 %v797
        %808 = vmatprep.subr.bf16.mxu0 0
        %809 = vmatpush1.bf16.msra.mxu0 0
        %810 = vmatprep.subr.bf16.mxu0 0
        %811 = vmatpush1.bf16.msra.mxu0 0
        %812 = vmatprep.subr.bf16.mxu0 0
        %813 = vmatpush1.bf16.msra.mxu0 0
        %814 = vmatprep.subr.bf16.mxu0 0
        %815 = vmatpush1.bf16.msra.mxu0 0
        %816 = vmatprep.subr.bf16.mxu0 0
        %817 = vmatpush1.bf16.msra.mxu0 0
        %818 = vmatprep.subr.bf16.mxu0 0
        %819 = vmatpush1.bf16.msra.mxu0 0
        %820 = vmatprep.subr.bf16.mxu0 0
        %821 = vmatpush1.bf16.msra.mxu0 0
        %822 = vmatprep.subr.bf16.mxu0 0
        %823 = vmatpush1.bf16.msra.mxu0 0
        %824 = vmatprep.subr.bf16.mxu0 0
        %825 = vmatpush1.bf16.msra.mxu0 0
        %826 = vmatprep.subr.bf16.mxu0 0
        %827 = vmatpush1.bf16.msra.mxu0 0
        %828 = vmatprep.subr.bf16.mxu0 0
        %829 = vmatpush1.bf16.msra.mxu0 0
        %830 = vmatprep.subr.bf16.mxu0 0
        %831 = vmatpush1.bf16.msra.mxu0 0
        %832 = vmatprep.subr.bf16.mxu0 0
        %833 = vmatpush1.bf16.msra.mxu0 0
        %834 = vmatprep.subr.bf16.mxu0 0
        %835 = vmatpush1.bf16.msra.mxu0 0
        %836 = vmatprep.mubr.bf16.mxu0 0
        %837 = vmatmul.mubr.bf16.gmra.mrb[0].mxu0 %v802
        %v838 = vpop.f32.mrb[0].mxu0
        %v839 = vadd.f32 0.0, %v838
        %v840 = vpop.f32.mrb[0].mxu0
        %v841 = vpop.f32.mrb[0].mxu0
        %v842 = vpop.f32.mrb[0].mxu0
        %843 = vdwg.mxu0
        %v848 = vunpack.c.l.b16 %v739
        %v849 = vunpack.c.l.b16 %v740
        %v850 = vunpack.c.l.b16 %v741
        %v851 = vunpack.c.l.b16 %v742
        %v852 = vpack.c.b16 %v849, %v848
        %v853 = vpack.c.b16 %v851, %v850
        %856 = vmatprep.subr.bf16.mxu0 0
        %857 = vmatpush1.bf16.msra.mxu0 %v852
        %858 = vmatprep.subr.bf16.mxu0 0
        %859 = vmatpush1.bf16.msra.mxu0 %v853
        %860 = vmatprep.subr.bf16.mxu0 0
        %861 = vmatpush1.bf16.msra.mxu0 0
        %862 = vmatprep.subr.bf16.mxu0 0
        %863 = vmatpush1.bf16.msra.mxu0 0
        %864 = vmatprep.subr.bf16.mxu0 0
        %865 = vmatpush1.bf16.msra.mxu0 0
        %866 = vmatprep.subr.bf16.mxu0 0
        %867 = vmatpush1.bf16.msra.mxu0 0
        %868 = vmatprep.subr.bf16.mxu0 0
        %869 = vmatpush1.bf16.msra.mxu0 0
        %870 = vmatprep.subr.bf16.mxu0 0
        %871 = vmatpush1.bf16.msra.mxu0 0
        %872 = vmatprep.subr.bf16.mxu0 0
        %873 = vmatpush1.bf16.msra.mxu0 0
        %874 = vmatprep.subr.bf16.mxu0 0
        %875 = vmatpush1.bf16.msra.mxu0 0
        %876 = vmatprep.subr.bf16.mxu0 0
        %877 = vmatpush1.bf16.msra.mxu0 0
        %878 = vmatprep.subr.bf16.mxu0 0
        %879 = vmatpush1.bf16.msra.mxu0 0
        %880 = vmatprep.subr.bf16.mxu0 0
        %881 = vmatpush1.bf16.msra.mxu0 0
        %882 = vmatprep.subr.bf16.mxu0 0
        %883 = vmatpush1.bf16.msra.mxu0 0
        %884 = vmatprep.subr.bf16.mxu0 0
        %885 = vmatpush1.bf16.msra.mxu0 0
        %886 = vmatprep.subr.bf16.mxu0 0
        %887 = vmatpush1.bf16.msra.mxu0 0
        %888 = vmatprep.mubr.bf16.mxu0 0
        %889 = vmatmul.mubr.bf16.gmra.mrb[0].mxu0 %v802
        %v890 = vpop.f32.mrb[0].mxu0
        %v891 = vadd.f32 0.0, %v890
        %v892 = vpop.f32.mrb[0].mxu0
        %v893 = vpop.f32.mrb[0].mxu0
        %v894 = vpop.f32.mrb[0].mxu0
        %895 = vdwg.mxu0
        %v900 = vunpack.c.l.b16 %v743
        %v901 = vunpack.c.l.b16 %v744
        %v902 = vunpack.c.l.b16 %v745
        %v903 = vunpack.c.l.b16 %v746
        %v904 = vpack.c.b16 %v901, %v900
        %v905 = vpack.c.b16 %v903, %v902
        %908 = vmatprep.subr.bf16.mxu0 0
        %909 = vmatpush1.bf16.msra.mxu0 %v904
        %910 = vmatprep.subr.bf16.mxu0 0
        %911 = vmatpush1.bf16.msra.mxu0 %v905
        %912 = vmatprep.subr.bf16.mxu0 0
        %913 = vmatpush1.bf16.msra.mxu0 0
        %914 = vmatprep.subr.bf16.mxu0 0
        %915 = vmatpush1.bf16.msra.mxu0 0
        %916 = vmatprep.subr.bf16.mxu0 0
        %917 = vmatpush1.bf16.msra.mxu0 0
        %918 = vmatprep.subr.bf16.mxu0 0
        %919 = vmatpush1.bf16.msra.mxu0 0
        %920 = vmatprep.subr.bf16.mxu0 0
        %921 = vmatpush1.bf16.msra.mxu0 0
        %922 = vmatprep.subr.bf16.mxu0 0
        %923 = vmatpush1.bf16.msra.mxu0 0
        %924 = vmatprep.subr.bf16.mxu0 0
        %925 = vmatpush1.bf16.msra.mxu0 0
        %926 = vmatprep.subr.bf16.mxu0 0
        %927 = vmatpush1.bf16.msra.mxu0 0
        %928 = vmatprep.subr.bf16.mxu0 0
        %929 = vmatpush1.bf16.msra.mxu0 0
        %930 = vmatprep.subr.bf16.mxu0 0
        %931 = vmatpush1.bf16.msra.mxu0 0
        %932 = vmatprep.subr.bf16.mxu0 0
        %933 = vmatpush1.bf16.msra.mxu0 0
        %934 = vmatprep.subr.bf16.mxu0 0
        %935 = vmatpush1.bf16.msra.mxu0 0
        %936 = vmatprep.subr.bf16.mxu0 0
        %937 = vmatpush1.bf16.msra.mxu0 0
        %938 = vmatprep.subr.bf16.mxu0 0
        %939 = vmatpush1.bf16.msra.mxu0 0
        %940 = vmatprep.mubr.bf16.mxu0 0
        %941 = vmatmul.mubr.bf16.gmra.mrb[0].mxu0 %v802
        %v942 = vpop.f32.mrb[0].mxu0
        %v943 = vadd.f32 0.0, %v942
        %v944 = vpop.f32.mrb[0].mxu0
        %v945 = vpop.f32.mrb[0].mxu0
        %v946 = vpop.f32.mrb[0].mxu0
        %947 = vdwg.mxu0
        %vm948 = vcmask 64512
        %v950 = vsel %vm948, %v839, 0
        %v953 = vsel %vm948, %v891, 0
        %955 = vmatprep.subr.mxu0 0.0
        %956 = vmatpush1.xpose.msra.mxu0 %v953
        %957 = vmatprep.subr.mxu0 0.0
        %958 = vmatpush1.xpose.msra.mxu0 0.0
        %959 = vmatprep.subr.mxu0 0.0
        %960 = vmatpush1.xpose.msra.mxu0 0.0
        %961 = vmatprep.subr.mxu0 0.0
        %962 = vmatpush1.xpose.msra.mxu0 0.0
        %963 = vmatprep.subr.mxu0 0.0
        %964 = vmatpush1.xpose.msra.mxu0 0.0
        %965 = vmatprep.subr.mxu0 0.0
        %966 = vmatpush1.xpose.msra.mxu0 0.0
        %967 = vmatprep.subr.mxu0 0.0
        %968 = vmatpush1.xpose.msra.mxu0 0.0
        %969 = vmatprep.subr.mxu0 0.0
        %970 = vmatpush1.xpose.msra.mxu0 0.0
        %971 = vmatprep.subr.mxu0 0.0
        %972 = vmatpush1.xpose.msra.mxu0 0.0
        %973 = vmatprep.subr.mxu0 0.0
        %974 = vmatpush1.xpose.msra.mxu0 0.0
        %975 = vmatprep.subr.mxu0 0.0
        %976 = vmatpush1.xpose.msra.mxu0 0.0
        %977 = vmatprep.subr.mxu0 0.0
        %978 = vmatpush1.xpose.msra.mxu0 0.0
        %979 = vmatprep.subr.mxu0 0.0
        %980 = vmatpush1.xpose.msra.mxu0 0.0
        %981 = vmatprep.subr.mxu0 0.0
        %982 = vmatpush1.xpose.msra.mxu0 0.0
        %983 = vmatprep.subr.mxu0 0.0
        %984 = vmatpush1.xpose.msra.mxu0 0.0
        %985 = vmatprep.subr.mxu0 0.0
        %986 = vmatpush1.xpose.msra.mxu0 0.0
        %987 = vmatprep.subr.mxu0 0.0
        %988 = vmatpush1.xpose.msra.mxu0 0.0
        %989 = vmatprep.subr.mxu0 0.0
        %990 = vmatpush1.xpose.msra.mxu0 0.0
        %991 = vmatprep.subr.mxu0 0.0
        %992 = vmatpush1.xpose.msra.mxu0 0.0
        %993 = vmatprep.subr.mxu0 0.0
        %994 = vmatpush1.xpose.msra.mxu0 0.0
        %995 = vmatprep.subr.mxu0 0.0
        %996 = vmatpush1.xpose.msra.mxu0 0.0
        %997 = vmatprep.subr.mxu0 0.0
        %998 = vmatpush1.xpose.msra.mxu0 0.0
        %999 = vmatprep.subr.mxu0 0.0
        %1000 = vmatpush1.xpose.msra.mxu0 0.0
        %1001 = vmatprep.subr.mxu0 0.0
        %1002 = vmatpush1.xpose.msra.mxu0 0.0
        %1003 = vmatprep.subr.mxu0 0.0
        %1004 = vmatpush1.xpose.msra.mxu0 0.0
        %1005 = vmatprep.subr.mxu0 0.0
        %1006 = vmatpush1.xpose.msra.mxu0 0.0
        %1007 = vmatprep.subr.mxu0 0.0
        %1008 = vmatpush1.xpose.msra.mxu0 0.0
        %1009 = vmatprep.subr.mxu0 0.0
        %1010 = vmatpush1.xpose.msra.mxu0 0.0
        %1011 = vmatprep.subr.mxu0 0.0
        %1012 = vmatpush1.xpose.msra.mxu0 0.0
        %1013 = vmatprep.subr.mxu0 0.0
        %1014 = vmatpush1.xpose.msra.mxu0 0.0
        %1015 = vmatprep.subr.mxu0 0.0
        %1016 = vmatpush1.xpose.msra.mxu0 0.0
        %1017 = vmatprep.subr.mxu0 0.0
        %1018 = vmatpush1.xpose.msra.mxu0 0.0
        %1019 = vmatprep.mubr.f32.mxu0 0.0
        %1020 = vmatmul.mubr.f32.gmra.mrb[0].mxu0 %v950
        %v1021 = vpop.f32.mrb[0].mxu0
        %v1022 = vadd.f32 0.0, %v1021
        %v1023 = vpop.f32.mrb[0].mxu0
        %1024 = vdwg.mxu0
        %v1025 = vmul.f32 %v1022, 0.35355338
        %vm1026 = vcmp.ne.f32.partialorder %v703, 0.0
        %v1027 = vsel %vm1026, -1e+09, %v1025
        %v1028 = vsel %vm948, %v1027, -inf
        %1029 = vmax.xlane.f32.xlu0 %v1028
        %v1030 = vpop.xlane.xlu0 %1029
        %v1031 = vsub.f32 %v1027, %v1030
        %v1032 = vmul.f32 %v1031, 1.442695
        %v1033 = vpow.pop %v1032
        %v1034 = vsel %vm948, %v1033, 0.0
        %1035 = vadd.xlane.f32.xlu0 %v1034
        %v1036 = vpop.xlane.xlu0 %1035
        %v1037 = vrcp.pop %v1036
        %v1038 = vmul.f32 %v1033, %v1037
        %v1040 = vsel %vm948, %v1038, 0
        %1042 = vmatprep.subr.mxu0 0.0
        %1043 = vmatpush1.msra.mxu0 %v943
        %1044 = vmatprep.subr.mxu0 0.0
        %1045 = vmatpush1.msra.mxu0 0.0
        %1046 = vmatprep.subr.mxu0 0.0
        %1047 = vmatpush1.msra.mxu0 0.0
        %1048 = vmatprep.subr.mxu0 0.0
        %1049 = vmatpush1.msra.mxu0 0.0
        %1050 = vmatprep.subr.mxu0 0.0
        %1051 = vmatpush1.msra.mxu0 0.0
        %1052 = vmatprep.subr.mxu0 0.0
        %1053 = vmatpush1.msra.mxu0 0.0
        %1054 = vmatprep.subr.mxu0 0.0
        %1055 = vmatpush1.msra.mxu0 0.0
        %1056 = vmatprep.subr.mxu0 0.0
        %1057 = vmatpush1.msra.mxu0 0.0
        %1058 = vmatprep.subr.mxu0 0.0
        %1059 = vmatpush1.msra.mxu0 0.0
        %1060 = vmatprep.subr.mxu0 0.0
        %1061 = vmatpush1.msra.mxu0 0.0
        %1062 = vmatprep.subr.mxu0 0.0
        %1063 = vmatpush1.msra.mxu0 0.0
        %1064 = vmatprep.subr.mxu0 0.0
        %1065 = vmatpush1.msra.mxu0 0.0
        %1066 = vmatprep.subr.mxu0 0.0
        %1067 = vmatpush1.msra.mxu0 0.0
        %1068 = vmatprep.subr.mxu0 0.0
        %1069 = vmatpush1.msra.mxu0 0.0
        %1070 = vmatprep.subr.mxu0 0.0
        %1071 = vmatpush1.msra.mxu0 0.0
        %1072 = vmatprep.subr.mxu0 0.0
        %1073 = vmatpush1.msra.mxu0 0.0
        %1074 = vmatprep.subr.mxu0 0.0
        %1075 = vmatpush1.msra.mxu0 0.0
        %1076 = vmatprep.subr.mxu0 0.0
        %1077 = vmatpush1.msra.mxu0 0.0
        %1078 = vmatprep.subr.mxu0 0.0
        %1079 = vmatpush1.msra.mxu0 0.0
        %1080 = vmatprep.subr.mxu0 0.0
        %1081 = vmatpush1.msra.mxu0 0.0
        %1082 = vmatprep.subr.mxu0 0.0
        %1083 = vmatpush1.msra.mxu0 0.0
        %1084 = vmatprep.subr.mxu0 0.0
        %1085 = vmatpush1.msra.mxu0 0.0
        %1086 = vmatprep.subr.mxu0 0.0
        %1087 = vmatpush1.msra.mxu0 0.0
        %1088 = vmatprep.subr.mxu0 0.0
        %1089 = vmatpush1.msra.mxu0 0.0
        %1090 = vmatprep.subr.mxu0 0.0
        %1091 = vmatpush1.msra.mxu0 0.0
        %1092 = vmatprep.subr.mxu0 0.0
        %1093 = vmatpush1.msra.mxu0 0.0
        %1094 = vmatprep.subr.mxu0 0.0
        %1095 = vmatpush1.msra.mxu0 0.0
        %1096 = vmatprep.subr.mxu0 0.0
        %1097 = vmatpush1.msra.mxu0 0.0
        %1098 = vmatprep.subr.mxu0 0.0
        %1099 = vmatpush1.msra.mxu0 0.0
        %1100 = vmatprep.subr.mxu0 0.0
        %1101 = vmatpush1.msra.mxu0 0.0
        %1102 = vmatprep.subr.mxu0 0.0
        %1103 = vmatpush1.msra.mxu0 0.0
        %1104 = vmatprep.subr.mxu0 0.0
        %1105 = vmatpush1.msra.mxu0 0.0
        %1106 = vmatprep.mubr.f32.mxu0 0.0
        %1107 = vmatmul.mubr.f32.gmra.mrb[0].mxu0 %v1040
        %v1108 = vpop.f32.mrb[0].mxu0
        %v1109 = vadd.f32 0.0, %v1108
        %v1110 = vpop.f32.mrb[0].mxu0
        %1111 = vdwg.mxu0
        %1112 = vrot.lane.b32.xlu0 %v839, 120
        %v1113 = vpop.permute.xlu0 %1112
        %1114 = vrot.lane.b32.xlu0 %v891, 120
        %v1115 = vpop.permute.xlu0 %1114
        %v1116 = vsel %vm948, %v1113, 0
        %v1118 = vsel %vm948, %v1115, 0
        %1120 = vmatprep.subr.mxu0 0.0
        %1121 = vmatpush1.xpose.msra.mxu0 %v1118
        %1122 = vmatprep.subr.mxu0 0.0
        %1123 = vmatpush1.xpose.msra.mxu0 0.0
        %1124 = vmatprep.subr.mxu0 0.0
        %1125 = vmatpush1.xpose.msra.mxu0 0.0
        %1126 = vmatprep.subr.mxu0 0.0
        %1127 = vmatpush1.xpose.msra.mxu0 0.0
        %1128 = vmatprep.subr.mxu0 0.0
        %1129 = vmatpush1.xpose.msra.mxu0 0.0
        %1130 = vmatprep.subr.mxu0 0.0
        %1131 = vmatpush1.xpose.msra.mxu0 0.0
        %1132 = vmatprep.subr.mxu0 0.0
        %1133 = vmatpush1.xpose.msra.mxu0 0.0
        %1134 = vmatprep.subr.mxu0 0.0
        %1135 = vmatpush1.xpose.msra.mxu0 0.0
        %1136 = vmatprep.subr.mxu0 0.0
        %1137 = vmatpush1.xpose.msra.mxu0 0.0
        %1138 = vmatprep.subr.mxu0 0.0
        %1139 = vmatpush1.xpose.msra.mxu0 0.0
        %1140 = vmatprep.subr.mxu0 0.0
        %1141 = vmatpush1.xpose.msra.mxu0 0.0
        %1142 = vmatprep.subr.mxu0 0.0
        %1143 = vmatpush1.xpose.msra.mxu0 0.0
        %1144 = vmatprep.subr.mxu0 0.0
        %1145 = vmatpush1.xpose.msra.mxu0 0.0
        %1146 = vmatprep.subr.mxu0 0.0
        %1147 = vmatpush1.xpose.msra.mxu0 0.0
        %1148 = vmatprep.subr.mxu0 0.0
        %1149 = vmatpush1.xpose.msra.mxu0 0.0
        %1150 = vmatprep.subr.mxu0 0.0
        %1151 = vmatpush1.xpose.msra.mxu0 0.0
        %1152 = vmatprep.subr.mxu0 0.0
        %1153 = vmatpush1.xpose.msra.mxu0 0.0
        %1154 = vmatprep.subr.mxu0 0.0
        %1155 = vmatpush1.xpose.msra.mxu0 0.0
        %1156 = vmatprep.subr.mxu0 0.0
        %1157 = vmatpush1.xpose.msra.mxu0 0.0
        %1158 = vmatprep.subr.mxu0 0.0
        %1159 = vmatpush1.xpose.msra.mxu0 0.0
        %1160 = vmatprep.subr.mxu0 0.0
        %1161 = vmatpush1.xpose.msra.mxu0 0.0
        %1162 = vmatprep.subr.mxu0 0.0
        %1163 = vmatpush1.xpose.msra.mxu0 0.0
        %1164 = vmatprep.subr.mxu0 0.0
        %1165 = vmatpush1.xpose.msra.mxu0 0.0
        %1166 = vmatprep.subr.mxu0 0.0
        %1167 = vmatpush1.xpose.msra.mxu0 0.0
        %1168 = vmatprep.subr.mxu0 0.0
        %1169 = vmatpush1.xpose.msra.mxu0 0.0
        %1170 = vmatprep.subr.mxu0 0.0
        %1171 = vmatpush1.xpose.msra.mxu0 0.0
        %1172 = vmatprep.subr.mxu0 0.0
        %1173 = vmatpush1.xpose.msra.mxu0 0.0
        %1174 = vmatprep.subr.mxu0 0.0
        %1175 = vmatpush1.xpose.msra.mxu0 0.0
        %1176 = vmatprep.subr.mxu0 0.0
        %1177 = vmatpush1.xpose.msra.mxu0 0.0
        %1178 = vmatprep.subr.mxu0 0.0
        %1179 = vmatpush1.xpose.msra.mxu0 0.0
        %1180 = vmatprep.subr.mxu0 0.0
        %1181 = vmatpush1.xpose.msra.mxu0 0.0
        %1182 = vmatprep.subr.mxu0 0.0
        %1183 = vmatpush1.xpose.msra.mxu0 0.0
        %1184 = vmatprep.mubr.f32.mxu0 0.0
        %1185 = vmatmul.mubr.f32.gmra.mrb[0].mxu0 %v1116
        %v1186 = vpop.f32.mrb[0].mxu0
        %v1187 = vadd.f32 0.0, %v1186
        %v1188 = vpop.f32.mrb[0].mxu0
        %1189 = vdwg.mxu0
        %v1190 = vmul.f32 %v1187, 0.35355338
        %vm1191 = vcmp.ne.f32.partialorder %v704, 0.0
        %v1192 = vsel %vm1191, -1e+09, %v1190
        %v1193 = vsel %vm948, %v1192, -inf
        %1194 = vmax.xlane.f32.xlu0 %v1193
        %v1195 = vpop.xlane.xlu0 %1194
        %v1196 = vsub.f32 %v1192, %v1195
        %v1197 = vmul.f32 %v1196, 1.442695
        %v1198 = vpow.pop %v1197
        %v1199 = vsel %vm948, %v1198, 0.0
        %1200 = vadd.xlane.f32.xlu0 %v1199
        %v1201 = vpop.xlane.xlu0 %1200
        %v1202 = vrcp.pop %v1201
        %v1203 = vmul.f32 %v1198, %v1202
        %1205 = vrot.lane.b32.xlu0 %v943, 120
        %v1206 = vpop.permute.xlu0 %1205
        %v1209 = vsel %vm948, %v1203, 0
        %1211 = vmatprep.subr.mxu0 0.0
        %1212 = vmatpush1.msra.mxu0 %v1206
        %1213 = vmatprep.subr.mxu0 0.0
        %1214 = vmatpush1.msra.mxu0 0.0
        %1215 = vmatprep.subr.mxu0 0.0
        %1216 = vmatpush1.msra.mxu0 0.0
        %1217 = vmatprep.subr.mxu0 0.0
        %1218 = vmatpush1.msra.mxu0 0.0
        %1219 = vmatprep.subr.mxu0 0.0
        %1220 = vmatpush1.msra.mxu0 0.0
        %1221 = vmatprep.subr.mxu0 0.0
        %1222 = vmatpush1.msra.mxu0 0.0
        %1223 = vmatprep.subr.mxu0 0.0
        %1224 = vmatpush1.msra.mxu0 0.0
        %1225 = vmatprep.subr.mxu0 0.0
        %1226 = vmatpush1.msra.mxu0 0.0
        %1227 = vmatprep.subr.mxu0 0.0
        %1228 = vmatpush1.msra.mxu0 0.0
        %1229 = vmatprep.subr.mxu0 0.0
        %1230 = vmatpush1.msra.mxu0 0.0
        %1231 = vmatprep.subr.mxu0 0.0
        %1232 = vmatpush1.msra.mxu0 0.0
        %1233 = vmatprep.subr.mxu0 0.0
        %1234 = vmatpush1.msra.mxu0 0.0
        %1235 = vmatprep.subr.mxu0 0.0
        %1236 = vmatpush1.msra.mxu0 0.0
        %1237 = vmatprep.subr.mxu0 0.0
        %1238 = vmatpush1.msra.mxu0 0.0
        %1239 = vmatprep.subr.mxu0 0.0
        %1240 = vmatpush1.msra.mxu0 0.0
        %1241 = vmatprep.subr.mxu0 0.0
        %1242 = vmatpush1.msra.mxu0 0.0
        %1243 = vmatprep.subr.mxu0 0.0
        %1244 = vmatpush1.msra.mxu0 0.0
        %1245 = vmatprep.subr.mxu0 0.0
        %1246 = vmatpush1.msra.mxu0 0.0
        %1247 = vmatprep.subr.mxu0 0.0
        %1248 = vmatpush1.msra.mxu0 0.0
        %1249 = vmatprep.subr.mxu0 0.0
        %1250 = vmatpush1.msra.mxu0 0.0
        %1251 = vmatprep.subr.mxu0 0.0
        %1252 = vmatpush1.msra.mxu0 0.0
        %1253 = vmatprep.subr.mxu0 0.0
        %1254 = vmatpush1.msra.mxu0 0.0
        %1255 = vmatprep.subr.mxu0 0.0
        %1256 = vmatpush1.msra.mxu0 0.0
        %1257 = vmatprep.subr.mxu0 0.0
        %1258 = vmatpush1.msra.mxu0 0.0
        %1259 = vmatprep.subr.mxu0 0.0
        %1260 = vmatpush1.msra.mxu0 0.0
        %1261 = vmatprep.subr.mxu0 0.0
        %1262 = vmatpush1.msra.mxu0 0.0
        %1263 = vmatprep.subr.mxu0 0.0
        %1264 = vmatpush1.msra.mxu0 0.0
        %1265 = vmatprep.subr.mxu0 0.0
        %1266 = vmatpush1.msra.mxu0 0.0
        %1267 = vmatprep.subr.mxu0 0.0
        %1268 = vmatpush1.msra.mxu0 0.0
        %1269 = vmatprep.subr.mxu0 0.0
        %1270 = vmatpush1.msra.mxu0 0.0
        %1271 = vmatprep.subr.mxu0 0.0
        %1272 = vmatpush1.msra.mxu0 0.0
        %1273 = vmatprep.subr.mxu0 0.0
        %1274 = vmatpush1.msra.mxu0 0.0
        %1275 = vmatprep.mubr.f32.mxu0 0.0
        %1276 = vmatmul.mubr.f32.gmra.mrb[0].mxu0 %v1209
        %v1277 = vpop.f32.mrb[0].mxu0
        %v1278 = vadd.f32 0.0, %v1277
        %v1279 = vpop.f32.mrb[0].mxu0
        %1280 = vdwg.mxu0
        %1281 = vrot.lane.b32.xlu0 %v839, 112
        %v1282 = vpop.permute.xlu0 %1281
        %1283 = vrot.lane.b32.xlu0 %v891, 112
        %v1284 = vpop.permute.xlu0 %1283
        %v1285 = vsel %vm948, %v1282, 0
        %v1287 = vsel %vm948, %v1284, 0
        %1289 = vmatprep.subr.mxu0 0.0
        %1290 = vmatpush1.xpose.msra.mxu0 %v1287
        %1291 = vmatprep.subr.mxu0 0.0
        %1292 = vmatpush1.xpose.msra.mxu0 0.0
        %1293 = vmatprep.subr.mxu0 0.0
        %1294 = vmatpush1.xpose.msra.mxu0 0.0
        %1295 = vmatprep.subr.mxu0 0.0
        %1296 = vmatpush1.xpose.msra.mxu0 0.0
        %1297 = vmatprep.subr.mxu0 0.0
        %1298 = vmatpush1.xpose.msra.mxu0 0.0
        %1299 = vmatprep.subr.mxu0 0.0
        %1300 = vmatpush1.xpose.msra.mxu0 0.0
        %1301 = vmatprep.subr.mxu0 0.0
        %1302 = vmatpush1.xpose.msra.mxu0 0.0
        %1303 = vmatprep.subr.mxu0 0.0
        %1304 = vmatpush1.xpose.msra.mxu0 0.0
        %1305 = vmatprep.subr.mxu0 0.0
        %1306 = vmatpush1.xpose.msra.mxu0 0.0
        %1307 = vmatprep.subr.mxu0 0.0
        %1308 = vmatpush1.xpose.msra.mxu0 0.0
        %1309 = vmatprep.subr.mxu0 0.0
        %1310 = vmatpush1.xpose.msra.mxu0 0.0
        %1311 = vmatprep.subr.mxu0 0.0
        %1312 = vmatpush1.xpose.msra.mxu0 0.0
        %1313 = vmatprep.subr.mxu0 0.0
        %1314 = vmatpush1.xpose.msra.mxu0 0.0
        %1315 = vmatprep.subr.mxu0 0.0
        %1316 = vmatpush1.xpose.msra.mxu0 0.0
        %1317 = vmatprep.subr.mxu0 0.0
        %1318 = vmatpush1.xpose.msra.mxu0 0.0
        %1319 = vmatprep.subr.mxu0 0.0
        %1320 = vmatpush1.xpose.msra.mxu0 0.0
        %1321 = vmatprep.subr.mxu0 0.0
        %1322 = vmatpush1.xpose.msra.mxu0 0.0
        %1323 = vmatprep.subr.mxu0 0.0
        %1324 = vmatpush1.xpose.msra.mxu0 0.0
        %1325 = vmatprep.subr.mxu0 0.0
        %1326 = vmatpush1.xpose.msra.mxu0 0.0
        %1327 = vmatprep.subr.mxu0 0.0
        %1328 = vmatpush1.xpose.msra.mxu0 0.0
        %1329 = vmatprep.subr.mxu0 0.0
        %1330 = vmatpush1.xpose.msra.mxu0 0.0
        %1331 = vmatprep.subr.mxu0 0.0
        %1332 = vmatpush1.xpose.msra.mxu0 0.0
        %1333 = vmatprep.subr.mxu0 0.0
        %1334 = vmatpush1.xpose.msra.mxu0 0.0
        %1335 = vmatprep.subr.mxu0 0.0
        %1336 = vmatpush1.xpose.msra.mxu0 0.0
        %1337 = vmatprep.subr.mxu0 0.0
        %1338 = vmatpush1.xpose.msra.mxu0 0.0
        %1339 = vmatprep.subr.mxu0 0.0
        %1340 = vmatpush1.xpose.msra.mxu0 0.0
        %1341 = vmatprep.subr.mxu0 0.0
        %1342 = vmatpush1.xpose.msra.mxu0 0.0
        %1343 = vmatprep.subr.mxu0 0.0
        %1344 = vmatpush1.xpose.msra.mxu0 0.0
        %1345 = vmatprep.subr.mxu0 0.0
        %1346 = vmatpush1.xpose.msra.mxu0 0.0
        %1347 = vmatprep.subr.mxu0 0.0
        %1348 = vmatpush1.xpose.msra.mxu0 0.0
        %1349 = vmatprep.subr.mxu0 0.0
        %1350 = vmatpush1.xpose.msra.mxu0 0.0
        %1351 = vmatprep.subr.mxu0 0.0
        %1352 = vmatpush1.xpose.msra.mxu0 0.0
        %1353 = vmatprep.mubr.f32.mxu0 0.0
        %1354 = vmatmul.mubr.f32.gmra.mrb[0].mxu0 %v1285
        %v1355 = vpop.f32.mrb[0].mxu0
        %v1356 = vadd.f32 0.0, %v1355
        %v1357 = vpop.f32.mrb[0].mxu0
        %1358 = vdwg.mxu0
        %v1359 = vmul.f32 %v1356, 0.35355338
        %vm1360 = vcmp.ne.f32.partialorder %v705, 0.0
        %v1361 = vsel %vm1360, -1e+09, %v1359
        %v1362 = vsel %vm948, %v1361, -inf
        %1363 = vmax.xlane.f32.xlu0 %v1362
        %v1364 = vpop.xlane.xlu0 %1363
        %v1365 = vsub.f32 %v1361, %v1364
        %v1366 = vmul.f32 %v1365, 1.442695
        %v1367 = vpow.pop %v1366
        %v1368 = vsel %vm948, %v1367, 0.0
        %1369 = vadd.xlane.f32.xlu0 %v1368
        %v1370 = vpop.xlane.xlu0 %1369
        %v1371 = vrcp.pop %v1370
        %v1372 = vmul.f32 %v1367, %v1371
        %1373 = vrot.lane.b32.xlu0 %v943, 112
        %v1374 = vpop.permute.xlu0 %1373
        %v1377 = vsel %vm948, %v1372, 0
        %1379 = vmatprep.subr.mxu0 0.0
        %1380 = vmatpush1.msra.mxu0 %v1374
        %1381 = vmatprep.subr.mxu0 0.0
        %1382 = vmatpush1.msra.mxu0 0.0
        %1383 = vmatprep.subr.mxu0 0.0
        %1384 = vmatpush1.msra.mxu0 0.0
        %1385 = vmatprep.subr.mxu0 0.0
        %1386 = vmatpush1.msra.mxu0 0.0
        %1387 = vmatprep.subr.mxu0 0.0
        %1388 = vmatpush1.msra.mxu0 0.0
        %1389 = vmatprep.subr.mxu0 0.0
        %1390 = vmatpush1.msra.mxu0 0.0
        %1391 = vmatprep.subr.mxu0 0.0
        %1392 = vmatpush1.msra.mxu0 0.0
        %1393 = vmatprep.subr.mxu0 0.0
        %1394 = vmatpush1.msra.mxu0 0.0
        %1395 = vmatprep.subr.mxu0 0.0
        %1396 = vmatpush1.msra.mxu0 0.0
        %1397 = vmatprep.subr.mxu0 0.0
        %1398 = vmatpush1.msra.mxu0 0.0
        %1399 = vmatprep.subr.mxu0 0.0
        %1400 = vmatpush1.msra.mxu0 0.0
        %1401 = vmatprep.subr.mxu0 0.0
        %1402 = vmatpush1.msra.mxu0 0.0
        %1403 = vmatprep.subr.mxu0 0.0
        %1404 = vmatpush1.msra.mxu0 0.0
        %1405 = vmatprep.subr.mxu0 0.0
        %1406 = vmatpush1.msra.mxu0 0.0
        %1407 = vmatprep.subr.mxu0 0.0
        %1408 = vmatpush1.msra.mxu0 0.0
        %1409 = vmatprep.subr.mxu0 0.0
        %1410 = vmatpush1.msra.mxu0 0.0
        %1411 = vmatprep.subr.mxu0 0.0
        %1412 = vmatpush1.msra.mxu0 0.0
        %1413 = vmatprep.subr.mxu0 0.0
        %1414 = vmatpush1.msra.mxu0 0.0
        %1415 = vmatprep.subr.mxu0 0.0
        %1416 = vmatpush1.msra.mxu0 0.0
        %1417 = vmatprep.subr.mxu0 0.0
        %1418 = vmatpush1.msra.mxu0 0.0
        %1419 = vmatprep.subr.mxu0 0.0
        %1420 = vmatpush1.msra.mxu0 0.0
        %1421 = vmatprep.subr.mxu0 0.0
        %1422 = vmatpush1.msra.mxu0 0.0
        %1423 = vmatprep.subr.mxu0 0.0
        %1424 = vmatpush1.msra.mxu0 0.0
        %1425 = vmatprep.subr.mxu0 0.0
        %1426 = vmatpush1.msra.mxu0 0.0
        %1427 = vmatprep.subr.mxu0 0.0
        %1428 = vmatpush1.msra.mxu0 0.0
        %1429 = vmatprep.subr.mxu0 0.0
        %1430 = vmatpush1.msra.mxu0 0.0
        %1431 = vmatprep.subr.mxu0 0.0
        %1432 = vmatpush1.msra.mxu0 0.0
        %1433 = vmatprep.subr.mxu0 0.0
        %1434 = vmatpush1.msra.mxu0 0.0
        %1435 = vmatprep.subr.mxu0 0.0
        %1436 = vmatpush1.msra.mxu0 0.0
        %1437 = vmatprep.subr.mxu0 0.0
        %1438 = vmatpush1.msra.mxu0 0.0
        %1439 = vmatprep.subr.mxu0 0.0
        %1440 = vmatpush1.msra.mxu0 0.0
        %1441 = vmatprep.subr.mxu0 0.0
        %1442 = vmatpush1.msra.mxu0 0.0
        %1443 = vmatprep.mubr.f32.mxu0 0.0
        %1444 = vmatmul.mubr.f32.gmra.mrb[0].mxu0 %v1377
        %v1445 = vpop.f32.mrb[0].mxu0
        %v1446 = vadd.f32 0.0, %v1445
        %v1447 = vpop.f32.mrb[0].mxu0
        %1448 = vdwg.mxu0
        %1449 = vrot.lane.b32.xlu0 %v839, 104
        %v1450 = vpop.permute.xlu0 %1449
        %1451 = vrot.lane.b32.xlu0 %v891, 104
        %v1452 = vpop.permute.xlu0 %1451
        %v1453 = vsel %vm948, %v1450, 0
        %v1455 = vsel %vm948, %v1452, 0
        %1457 = vmatprep.subr.mxu0 0.0
        %1458 = vmatpush1.xpose.msra.mxu0 %v1455
        %1459 = vmatprep.subr.mxu0 0.0
        %1460 = vmatpush1.xpose.msra.mxu0 0.0
        %1461 = vmatprep.subr.mxu0 0.0
        %1462 = vmatpush1.xpose.msra.mxu0 0.0
        %1463 = vmatprep.subr.mxu0 0.0
        %1464 = vmatpush1.xpose.msra.mxu0 0.0
        %1465 = vmatprep.subr.mxu0 0.0
        %1466 = vmatpush1.xpose.msra.mxu0 0.0
        %1467 = vmatprep.subr.mxu0 0.0
        %1468 = vmatpush1.xpose.msra.mxu0 0.0
        %1469 = vmatprep.subr.mxu0 0.0
        %1470 = vmatpush1.xpose.msra.mxu0 0.0
        %1471 = vmatprep.subr.mxu0 0.0
        %1472 = vmatpush1.xpose.msra.mxu0 0.0
        %1473 = vmatprep.subr.mxu0 0.0
        %1474 = vmatpush1.xpose.msra.mxu0 0.0
        %1475 = vmatprep.subr.mxu0 0.0
        %1476 = vmatpush1.xpose.msra.mxu0 0.0
        %1477 = vmatprep.subr.mxu0 0.0
        %1478 = vmatpush1.xpose.msra.mxu0 0.0
        %1479 = vmatprep.subr.mxu0 0.0
        %1480 = vmatpush1.xpose.msra.mxu0 0.0
        %1481 = vmatprep.subr.mxu0 0.0
        %1482 = vmatpush1.xpose.msra.mxu0 0.0
        %1483 = vmatprep.subr.mxu0 0.0
        %1484 = vmatpush1.xpose.msra.mxu0 0.0
        %1485 = vmatprep.subr.mxu0 0.0
        %1486 = vmatpush1.xpose.msra.mxu0 0.0
        %1487 = vmatprep.subr.mxu0 0.0
        %1488 = vmatpush1.xpose.msra.mxu0 0.0
        %1489 = vmatprep.subr.mxu0 0.0
        %1490 = vmatpush1.xpose.msra.mxu0 0.0
        %1491 = vmatprep.subr.mxu0 0.0
        %1492 = vmatpush1.xpose.msra.mxu0 0.0
        %1493 = vmatprep.subr.mxu0 0.0
        %1494 = vmatpush1.xpose.msra.mxu0 0.0
        %1495 = vmatprep.subr.mxu0 0.0
        %1496 = vmatpush1.xpose.msra.mxu0 0.0
        %1497 = vmatprep.subr.mxu0 0.0
        %1498 = vmatpush1.xpose.msra.mxu0 0.0
        %1499 = vmatprep.subr.mxu0 0.0
        %1500 = vmatpush1.xpose.msra.mxu0 0.0
        %1501 = vmatprep.subr.mxu0 0.0
        %1502 = vmatpush1.xpose.msra.mxu0 0.0
        %1503 = vmatprep.subr.mxu0 0.0
        %1504 = vmatpush1.xpose.msra.mxu0 0.0
        %1505 = vmatprep.subr.mxu0 0.0
        %1506 = vmatpush1.xpose.msra.mxu0 0.0
        %1507 = vmatprep.subr.mxu0 0.0
        %1508 = vmatpush1.xpose.msra.mxu0 0.0
        %1509 = vmatprep.subr.mxu0 0.0
        %1510 = vmatpush1.xpose.msra.mxu0 0.0
        %1511 = vmatprep.subr.mxu0 0.0
        %1512 = vmatpush1.xpose.msra.mxu0 0.0
        %1513 = vmatprep.subr.mxu0 0.0
        %1514 = vmatpush1.xpose.msra.mxu0 0.0
        %1515 = vmatprep.subr.mxu0 0.0
        %1516 = vmatpush1.xpose.msra.mxu0 0.0
        %1517 = vmatprep.subr.mxu0 0.0
        %1518 = vmatpush1.xpose.msra.mxu0 0.0
        %1519 = vmatprep.subr.mxu0 0.0
        %1520 = vmatpush1.xpose.msra.mxu0 0.0
        %1521 = vmatprep.mubr.f32.mxu0 0.0
        %1522 = vmatmul.mubr.f32.gmra.mrb[0].mxu0 %v1453
        %v1523 = vpop.f32.mrb[0].mxu0
        %v1524 = vadd.f32 0.0, %v1523
        %v1525 = vpop.f32.mrb[0].mxu0
        %1526 = vdwg.mxu0
        %v1527 = vmul.f32 %v1524, 0.35355338
        %vm1528 = vcmp.ne.f32.partialorder %v706, 0.0
        %v1529 = vsel %vm1528, -1e+09, %v1527
        %v1530 = vsel %vm948, %v1529, -inf
        %1531 = vmax.xlane.f32.xlu0 %v1530
        %v1532 = vpop.xlane.xlu0 %1531
        %v1533 = vsub.f32 %v1529, %v1532
        %v1534 = vmul.f32 %v1533, 1.442695
        %v1535 = vpow.pop %v1534
        %v1536 = vsel %vm948, %v1535, 0.0
        %1537 = vadd.xlane.f32.xlu0 %v1536
        %v1538 = vpop.xlane.xlu0 %1537
        %v1539 = vrcp.pop %v1538
        %v1540 = vmul.f32 %v1535, %v1539
        %1541 = vrot.lane.b32.xlu0 %v943, 104
        %v1542 = vpop.permute.xlu0 %1541
        %v1545 = vsel %vm948, %v1540, 0
        %1547 = vmatprep.subr.mxu0 0.0
        %1548 = vmatpush1.msra.mxu0 %v1542
        %1549 = vmatprep.subr.mxu0 0.0
        %1550 = vmatpush1.msra.mxu0 0.0
        %1551 = vmatprep.subr.mxu0 0.0
        %1552 = vmatpush1.msra.mxu0 0.0
        %1553 = vmatprep.subr.mxu0 0.0
        %1554 = vmatpush1.msra.mxu0 0.0
        %1555 = vmatprep.subr.mxu0 0.0
        %1556 = vmatpush1.msra.mxu0 0.0
        %1557 = vmatprep.subr.mxu0 0.0
        %1558 = vmatpush1.msra.mxu0 0.0
        %1559 = vmatprep.subr.mxu0 0.0
        %1560 = vmatpush1.msra.mxu0 0.0
        %1561 = vmatprep.subr.mxu0 0.0
        %1562 = vmatpush1.msra.mxu0 0.0
        %1563 = vmatprep.subr.mxu0 0.0
        %1564 = vmatpush1.msra.mxu0 0.0
        %1565 = vmatprep.subr.mxu0 0.0
        %1566 = vmatpush1.msra.mxu0 0.0
        %1567 = vmatprep.subr.mxu0 0.0
        %1568 = vmatpush1.msra.mxu0 0.0
        %1569 = vmatprep.subr.mxu0 0.0
        %1570 = vmatpush1.msra.mxu0 0.0
        %1571 = vmatprep.subr.mxu0 0.0
        %1572 = vmatpush1.msra.mxu0 0.0
        %1573 = vmatprep.subr.mxu0 0.0
        %1574 = vmatpush1.msra.mxu0 0.0
        %1575 = vmatprep.subr.mxu0 0.0
        %1576 = vmatpush1.msra.mxu0 0.0
        %1577 = vmatprep.subr.mxu0 0.0
        %1578 = vmatpush1.msra.mxu0 0.0
        %1579 = vmatprep.subr.mxu0 0.0
        %1580 = vmatpush1.msra.mxu0 0.0
        %1581 = vmatprep.subr.mxu0 0.0
        %1582 = vmatpush1.msra.mxu0 0.0
        %1583 = vmatprep.subr.mxu0 0.0
        %1584 = vmatpush1.msra.mxu0 0.0
        %1585 = vmatprep.subr.mxu0 0.0
        %1586 = vmatpush1.msra.mxu0 0.0
        %1587 = vmatprep.subr.mxu0 0.0
        %1588 = vmatpush1.msra.mxu0 0.0
        %1589 = vmatprep.subr.mxu0 0.0
        %1590 = vmatpush1.msra.mxu0 0.0
        %1591 = vmatprep.subr.mxu0 0.0
        %1592 = vmatpush1.msra.mxu0 0.0
        %1593 = vmatprep.subr.mxu0 0.0
        %1594 = vmatpush1.msra.mxu0 0.0
        %1595 = vmatprep.subr.mxu0 0.0
        %1596 = vmatpush1.msra.mxu0 0.0
        %1597 = vmatprep.subr.mxu0 0.0
        %1598 = vmatpush1.msra.mxu0 0.0
        %1599 = vmatprep.subr.mxu0 0.0
        %1600 = vmatpush1.msra.mxu0 0.0
        %1601 = vmatprep.subr.mxu0 0.0
        %1602 = vmatpush1.msra.mxu0 0.0
        %1603 = vmatprep.subr.mxu0 0.0
        %1604 = vmatpush1.msra.mxu0 0.0
        %1605 = vmatprep.subr.mxu0 0.0
        %1606 = vmatpush1.msra.mxu0 0.0
        %1607 = vmatprep.subr.mxu0 0.0
        %1608 = vmatpush1.msra.mxu0 0.0
        %1609 = vmatprep.subr.mxu0 0.0
        %1610 = vmatpush1.msra.mxu0 0.0
        %1611 = vmatprep.mubr.f32.mxu0 0.0
        %1612 = vmatmul.mubr.f32.gmra.mrb[0].mxu0 %v1545
        %v1613 = vpop.f32.mrb[0].mxu0
        %v1614 = vadd.f32 0.0, %v1613
        %v1615 = vpop.f32.mrb[0].mxu0
        %1616 = vdwg.mxu0
        %1617 = vrot.lane.b32.xlu0 %v839, 96
        %v1618 = vpop.permute.xlu0 %1617
        %1619 = vrot.lane.b32.xlu0 %v891, 96
        %v1620 = vpop.permute.xlu0 %1619
        %v1621 = vsel %vm948, %v1618, 0
        %v1623 = vsel %vm948, %v1620, 0
        %1625 = vmatprep.subr.mxu0 0.0
        %1626 = vmatpush1.xpose.msra.mxu0 %v1623
        %1627 = vmatprep.subr.mxu0 0.0
        %1628 = vmatpush1.xpose.msra.mxu0 0.0
        %1629 = vmatprep.subr.mxu0 0.0
        %1630 = vmatpush1.xpose.msra.mxu0 0.0
        %1631 = vmatprep.subr.mxu0 0.0
        %1632 = vmatpush1.xpose.msra.mxu0 0.0
        %1633 = vmatprep.subr.mxu0 0.0
        %1634 = vmatpush1.xpose.msra.mxu0 0.0
        %1635 = vmatprep.subr.mxu0 0.0
        %1636 = vmatpush1.xpose.msra.mxu0 0.0
        %1637 = vmatprep.subr.mxu0 0.0
        %1638 = vmatpush1.xpose.msra.mxu0 0.0
        %1639 = vmatprep.subr.mxu0 0.0
        %1640 = vmatpush1.xpose.msra.mxu0 0.0
        %1641 = vmatprep.subr.mxu0 0.0
        %1642 = vmatpush1.xpose.msra.mxu0 0.0
        %1643 = vmatprep.subr.mxu0 0.0
        %1644 = vmatpush1.xpose.msra.mxu0 0.0
        %1645 = vmatprep.subr.mxu0 0.0
        %1646 = vmatpush1.xpose.msra.mxu0 0.0
        %1647 = vmatprep.subr.mxu0 0.0
        %1648 = vmatpush1.xpose.msra.mxu0 0.0
        %1649 = vmatprep.subr.mxu0 0.0
        %1650 = vmatpush1.xpose.msra.mxu0 0.0
        %1651 = vmatprep.subr.mxu0 0.0
        %1652 = vmatpush1.xpose.msra.mxu0 0.0
        %1653 = vmatprep.subr.mxu0 0.0
        %1654 = vmatpush1.xpose.msra.mxu0 0.0
        %1655 = vmatprep.subr.mxu0 0.0
        %1656 = vmatpush1.xpose.msra.mxu0 0.0
        %1657 = vmatprep.subr.mxu0 0.0
        %1658 = vmatpush1.xpose.msra.mxu0 0.0
        %1659 = vmatprep.subr.mxu0 0.0
        %1660 = vmatpush1.xpose.msra.mxu0 0.0
        %1661 = vmatprep.subr.mxu0 0.0
        %1662 = vmatpush1.xpose.msra.mxu0 0.0
        %1663 = vmatprep.subr.mxu0 0.0
        %1664 = vmatpush1.xpose.msra.mxu0 0.0
        %1665 = vmatprep.subr.mxu0 0.0
        %1666 = vmatpush1.xpose.msra.mxu0 0.0
        %1667 = vmatprep.subr.mxu0 0.0
        %1668 = vmatpush1.xpose.msra.mxu0 0.0
        %1669 = vmatprep.subr.mxu0 0.0
        %1670 = vmatpush1.xpose.msra.mxu0 0.0
        %1671 = vmatprep.subr.mxu0 0.0
        %1672 = vmatpush1.xpose.msra.mxu0 0.0
        %1673 = vmatprep.subr.mxu0 0.0
        %1674 = vmatpush1.xpose.msra.mxu0 0.0
        %1675 = vmatprep.subr.mxu0 0.0
        %1676 = vmatpush1.xpose.msra.mxu0 0.0
        %1677 = vmatprep.subr.mxu0 0.0
        %1678 = vmatpush1.xpose.msra.mxu0 0.0
        %1679 = vmatprep.subr.mxu0 0.0
        %1680 = vmatpush1.xpose.msra.mxu0 0.0
        %1681 = vmatprep.subr.mxu0 0.0
        %1682 = vmatpush1.xpose.msra.mxu0 0.0
        %1683 = vmatprep.subr.mxu0 0.0
        %1684 = vmatpush1.xpose.msra.mxu0 0.0
        %1685 = vmatprep.subr.mxu0 0.0
        %1686 = vmatpush1.xpose.msra.mxu0 0.0
        %1687 = vmatprep.subr.mxu0 0.0
        %1688 = vmatpush1.xpose.msra.mxu0 0.0
        %1689 = vmatprep.mubr.f32.mxu0 0.0
        %1690 = vmatmul.mubr.f32.gmra.mrb[0].mxu0 %v1621
        %v1691 = vpop.f32.mrb[0].mxu0
        %v1692 = vadd.f32 0.0, %v1691
        %v1693 = vpop.f32.mrb[0].mxu0
        %1694 = vdwg.mxu0
        %v1695 = vmul.f32 %v1692, 0.35355338
        %vm1696 = vcmp.ne.f32.partialorder %v707, 0.0
        %v1697 = vsel %vm1696, -1e+09, %v1695
        %v1698 = vsel %vm948, %v1697, -inf
        %1699 = vmax.xlane.f32.xlu0 %v1698
        %v1700 = vpop.xlane.xlu0 %1699
        %v1701 = vsub.f32 %v1697, %v1700
        %v1702 = vmul.f32 %v1701, 1.442695
        %v1703 = vpow.pop %v1702
        %v1704 = vsel %vm948, %v1703, 0.0
        %1705 = vadd.xlane.f32.xlu0 %v1704
        %v1706 = vpop.xlane.xlu0 %1705
        %v1707 = vrcp.pop %v1706
        %v1708 = vmul.f32 %v1703, %v1707
        %1709 = vrot.lane.b32.xlu0 %v943, 96
        %v1710 = vpop.permute.xlu0 %1709
        %v1713 = vsel %vm948, %v1708, 0
        %1715 = vmatprep.subr.mxu0 0.0
        %1716 = vmatpush1.msra.mxu0 %v1710
        %1717 = vmatprep.subr.mxu0 0.0
        %1718 = vmatpush1.msra.mxu0 0.0
        %1719 = vmatprep.subr.mxu0 0.0
        %1720 = vmatpush1.msra.mxu0 0.0
        %1721 = vmatprep.subr.mxu0 0.0
        %1722 = vmatpush1.msra.mxu0 0.0
        %1723 = vmatprep.subr.mxu0 0.0
        %1724 = vmatpush1.msra.mxu0 0.0
        %1725 = vmatprep.subr.mxu0 0.0
        %1726 = vmatpush1.msra.mxu0 0.0
        %1727 = vmatprep.subr.mxu0 0.0
        %1728 = vmatpush1.msra.mxu0 0.0
        %1729 = vmatprep.subr.mxu0 0.0
        %1730 = vmatpush1.msra.mxu0 0.0
        %1731 = vmatprep.subr.mxu0 0.0
        %1732 = vmatpush1.msra.mxu0 0.0
        %1733 = vmatprep.subr.mxu0 0.0
        %1734 = vmatpush1.msra.mxu0 0.0
        %1735 = vmatprep.subr.mxu0 0.0
        %1736 = vmatpush1.msra.mxu0 0.0
        %1737 = vmatprep.subr.mxu0 0.0
        %1738 = vmatpush1.msra.mxu0 0.0
        %1739 = vmatprep.subr.mxu0 0.0
        %1740 = vmatpush1.msra.mxu0 0.0
        %1741 = vmatprep.subr.mxu0 0.0
        %1742 = vmatpush1.msra.mxu0 0.0
        %1743 = vmatprep.subr.mxu0 0.0
        %1744 = vmatpush1.msra.mxu0 0.0
        %1745 = vmatprep.subr.mxu0 0.0
        %1746 = vmatpush1.msra.mxu0 0.0
        %1747 = vmatprep.subr.mxu0 0.0
        %1748 = vmatpush1.msra.mxu0 0.0
        %1749 = vmatprep.subr.mxu0 0.0
        %1750 = vmatpush1.msra.mxu0 0.0
        %1751 = vmatprep.subr.mxu0 0.0
        %1752 = vmatpush1.msra.mxu0 0.0
        %1753 = vmatprep.subr.mxu0 0.0
        %1754 = vmatpush1.msra.mxu0 0.0
        %1755 = vmatprep.subr.mxu0 0.0
        %1756 = vmatpush1.msra.mxu0 0.0
        %1757 = vmatprep.subr.mxu0 0.0
        %1758 = vmatpush1.msra.mxu0 0.0
        %1759 = vmatprep.subr.mxu0 0.0
        %1760 = vmatpush1.msra.mxu0 0.0
        %1761 = vmatprep.subr.mxu0 0.0
        %1762 = vmatpush1.msra.mxu0 0.0
        %1763 = vmatprep.subr.mxu0 0.0
        %1764 = vmatpush1.msra.mxu0 0.0
        %1765 = vmatprep.subr.mxu0 0.0
        %1766 = vmatpush1.msra.mxu0 0.0
        %1767 = vmatprep.subr.mxu0 0.0
        %1768 = vmatpush1.msra.mxu0 0.0
        %1769 = vmatprep.subr.mxu0 0.0
        %1770 = vmatpush1.msra.mxu0 0.0
        %1771 = vmatprep.subr.mxu0 0.0
        %1772 = vmatpush1.msra.mxu0 0.0
        %1773 = vmatprep.subr.mxu0 0.0
        %1774 = vmatpush1.msra.mxu0 0.0
        %1775 = vmatprep.subr.mxu0 0.0
        %1776 = vmatpush1.msra.mxu0 0.0
        %1777 = vmatprep.subr.mxu0 0.0
        %1778 = vmatpush1.msra.mxu0 0.0
        %1779 = vmatprep.mubr.f32.mxu0 0.0
        %1780 = vmatmul.mubr.f32.gmra.mrb[0].mxu0 %v1713
        %v1781 = vpop.f32.mrb[0].mxu0
        %v1782 = vadd.f32 0.0, %v1781
        %v1783 = vpop.f32.mrb[0].mxu0
        %1784 = vdwg.mxu0
        %1785 = vrot.lane.b32.xlu0 %v839, 88
        %v1786 = vpop.permute.xlu0 %1785
        %1787 = vrot.lane.b32.xlu0 %v891, 88
        %v1788 = vpop.permute.xlu0 %1787
        %v1789 = vsel %vm948, %v1786, 0
        %v1791 = vsel %vm948, %v1788, 0
        %1793 = vmatprep.subr.mxu0 0.0
        %1794 = vmatpush1.xpose.msra.mxu0 %v1791
        %1795 = vmatprep.subr.mxu0 0.0
        %1796 = vmatpush1.xpose.msra.mxu0 0.0
        %1797 = vmatprep.subr.mxu0 0.0
        %1798 = vmatpush1.xpose.msra.mxu0 0.0
        %1799 = vmatprep.subr.mxu0 0.0
        %1800 = vmatpush1.xpose.msra.mxu0 0.0
        %1801 = vmatprep.subr.mxu0 0.0
        %1802 = vmatpush1.xpose.msra.mxu0 0.0
        %1803 = vmatprep.subr.mxu0 0.0
        %1804 = vmatpush1.xpose.msra.mxu0 0.0
        %1805 = vmatprep.subr.mxu0 0.0
        %1806 = vmatpush1.xpose.msra.mxu0 0.0
        %1807 = vmatprep.subr.mxu0 0.0
        %1808 = vmatpush1.xpose.msra.mxu0 0.0
        %1809 = vmatprep.subr.mxu0 0.0
        %1810 = vmatpush1.xpose.msra.mxu0 0.0
        %1811 = vmatprep.subr.mxu0 0.0
        %1812 = vmatpush1.xpose.msra.mxu0 0.0
        %1813 = vmatprep.subr.mxu0 0.0
        %1814 = vmatpush1.xpose.msra.mxu0 0.0
        %1815 = vmatprep.subr.mxu0 0.0
        %1816 = vmatpush1.xpose.msra.mxu0 0.0
        %1817 = vmatprep.subr.mxu0 0.0
        %1818 = vmatpush1.xpose.msra.mxu0 0.0
        %1819 = vmatprep.subr.mxu0 0.0
        %1820 = vmatpush1.xpose.msra.mxu0 0.0
        %1821 = vmatprep.subr.mxu0 0.0
        %1822 = vmatpush1.xpose.msra.mxu0 0.0
        %1823 = vmatprep.subr.mxu0 0.0
        %1824 = vmatpush1.xpose.msra.mxu0 0.0
        %1825 = vmatprep.subr.mxu0 0.0
        %1826 = vmatpush1.xpose.msra.mxu0 0.0
        %1827 = vmatprep.subr.mxu0 0.0
        %1828 = vmatpush1.xpose.msra.mxu0 0.0
        %1829 = vmatprep.subr.mxu0 0.0
        %1830 = vmatpush1.xpose.msra.mxu0 0.0
        %1831 = vmatprep.subr.mxu0 0.0
        %1832 = vmatpush1.xpose.msra.mxu0 0.0
        %1833 = vmatprep.subr.mxu0 0.0
        %1834 = vmatpush1.xpose.msra.mxu0 0.0
        %1835 = vmatprep.subr.mxu0 0.0
        %1836 = vmatpush1.xpose.msra.mxu0 0.0
        %1837 = vmatprep.subr.mxu0 0.0
        %1838 = vmatpush1.xpose.msra.mxu0 0.0
        %1839 = vmatprep.subr.mxu0 0.0
        %1840 = vmatpush1.xpose.msra.mxu0 0.0
        %1841 = vmatprep.subr.mxu0 0.0
        %1842 = vmatpush1.xpose.msra.mxu0 0.0
        %1843 = vmatprep.subr.mxu0 0.0
        %1844 = vmatpush1.xpose.msra.mxu0 0.0
        %1845 = vmatprep.subr.mxu0 0.0
        %1846 = vmatpush1.xpose.msra.mxu0 0.0
        %1847 = vmatprep.subr.mxu0 0.0
        %1848 = vmatpush1.xpose.msra.mxu0 0.0
        %1849 = vmatprep.subr.mxu0 0.0
        %1850 = vmatpush1.xpose.msra.mxu0 0.0
        %1851 = vmatprep.subr.mxu0 0.0
        %1852 = vmatpush1.xpose.msra.mxu0 0.0
        %1853 = vmatprep.subr.mxu0 0.0
        %1854 = vmatpush1.xpose.msra.mxu0 0.0
        %1855 = vmatprep.subr.mxu0 0.0
        %1856 = vmatpush1.xpose.msra.mxu0 0.0
        %1857 = vmatprep.mubr.f32.mxu0 0.0
        %1858 = vmatmul.mubr.f32.gmra.mrb[0].mxu0 %v1789
        %v1859 = vpop.f32.mrb[0].mxu0
        %v1860 = vadd.f32 0.0, %v1859
        %v1861 = vpop.f32.mrb[0].mxu0
        %1862 = vdwg.mxu0
        %v1863 = vmul.f32 %v1860, 0.35355338
        %vm1864 = vcmp.ne.f32.partialorder %v708, 0.0
        %v1865 = vsel %vm1864, -1e+09, %v1863
        %v1866 = vsel %vm948, %v1865, -inf
        %1867 = vmax.xlane.f32.xlu0 %v1866
        %v1868 = vpop.xlane.xlu0 %1867
        %v1869 = vsub.f32 %v1865, %v1868
        %v1870 = vmul.f32 %v1869, 1.442695
        %v1871 = vpow.pop %v1870
        %v1872 = vsel %vm948, %v1871, 0.0
        %1873 = vadd.xlane.f32.xlu0 %v1872
        %v1874 = vpop.xlane.xlu0 %1873
        %v1875 = vrcp.pop %v1874
        %v1876 = vmul.f32 %v1871, %v1875
        %1877 = vrot.lane.b32.xlu0 %v943, 88
        %v1878 = vpop.permute.xlu0 %1877
        %v1881 = vsel %vm948, %v1876, 0
        %1883 = vmatprep.subr.mxu0 0.0
        %1884 = vmatpush1.msra.mxu0 %v1878
        %1885 = vmatprep.subr.mxu0 0.0
        %1886 = vmatpush1.msra.mxu0 0.0
        %1887 = vmatprep.subr.mxu0 0.0
        %1888 = vmatpush1.msra.mxu0 0.0
        %1889 = vmatprep.subr.mxu0 0.0
        %1890 = vmatpush1.msra.mxu0 0.0
        %1891 = vmatprep.subr.mxu0 0.0
        %1892 = vmatpush1.msra.mxu0 0.0
        %1893 = vmatprep.subr.mxu0 0.0
        %1894 = vmatpush1.msra.mxu0 0.0
        %1895 = vmatprep.subr.mxu0 0.0
        %1896 = vmatpush1.msra.mxu0 0.0
        %1897 = vmatprep.subr.mxu0 0.0
        %1898 = vmatpush1.msra.mxu0 0.0
        %1899 = vmatprep.subr.mxu0 0.0
        %1900 = vmatpush1.msra.mxu0 0.0
        %1901 = vmatprep.subr.mxu0 0.0
        %1902 = vmatpush1.msra.mxu0 0.0
        %1903 = vmatprep.subr.mxu0 0.0
        %1904 = vmatpush1.msra.mxu0 0.0
        %1905 = vmatprep.subr.mxu0 0.0
        %1906 = vmatpush1.msra.mxu0 0.0
        %1907 = vmatprep.subr.mxu0 0.0
        %1908 = vmatpush1.msra.mxu0 0.0
        %1909 = vmatprep.subr.mxu0 0.0
        %1910 = vmatpush1.msra.mxu0 0.0
        %1911 = vmatprep.subr.mxu0 0.0
        %1912 = vmatpush1.msra.mxu0 0.0
        %1913 = vmatprep.subr.mxu0 0.0
        %1914 = vmatpush1.msra.mxu0 0.0
        %1915 = vmatprep.subr.mxu0 0.0
        %1916 = vmatpush1.msra.mxu0 0.0
        %1917 = vmatprep.subr.mxu0 0.0
        %1918 = vmatpush1.msra.mxu0 0.0
        %1919 = vmatprep.subr.mxu0 0.0
        %1920 = vmatpush1.msra.mxu0 0.0
        %1921 = vmatprep.subr.mxu0 0.0
        %1922 = vmatpush1.msra.mxu0 0.0
        %1923 = vmatprep.subr.mxu0 0.0
        %1924 = vmatpush1.msra.mxu0 0.0
        %1925 = vmatprep.subr.mxu0 0.0
        %1926 = vmatpush1.msra.mxu0 0.0
        %1927 = vmatprep.subr.mxu0 0.0
        %1928 = vmatpush1.msra.mxu0 0.0
        %1929 = vmatprep.subr.mxu0 0.0
        %1930 = vmatpush1.msra.mxu0 0.0
        %1931 = vmatprep.subr.mxu0 0.0
        %1932 = vmatpush1.msra.mxu0 0.0
        %1933 = vmatprep.subr.mxu0 0.0
        %1934 = vmatpush1.msra.mxu0 0.0
        %1935 = vmatprep.subr.mxu0 0.0
        %1936 = vmatpush1.msra.mxu0 0.0
        %1937 = vmatprep.subr.mxu0 0.0
        %1938 = vmatpush1.msra.mxu0 0.0
        %1939 = vmatprep.subr.mxu0 0.0
        %1940 = vmatpush1.msra.mxu0 0.0
        %1941 = vmatprep.subr.mxu0 0.0
        %1942 = vmatpush1.msra.mxu0 0.0
        %1943 = vmatprep.subr.mxu0 0.0
        %1944 = vmatpush1.msra.mxu0 0.0
        %1945 = vmatprep.subr.mxu0 0.0
        %1946 = vmatpush1.msra.mxu0 0.0
        %1947 = vmatprep.mubr.f32.mxu0 0.0
        %1948 = vmatmul.mubr.f32.gmra.mrb[0].mxu0 %v1881
        %v1949 = vpop.f32.mrb[0].mxu0
        %v1950 = vadd.f32 0.0, %v1949
        %v1951 = vpop.f32.mrb[0].mxu0
        %1952 = vdwg.mxu0
        %1953 = vrot.lane.b32.xlu0 %v839, 80
        %v1954 = vpop.permute.xlu0 %1953
        %1955 = vrot.lane.b32.xlu0 %v891, 80
        %v1956 = vpop.permute.xlu0 %1955
        %v1957 = vsel %vm948, %v1954, 0
        %v1959 = vsel %vm948, %v1956, 0
        %1961 = vmatprep.subr.mxu0 0.0
        %1962 = vmatpush1.xpose.msra.mxu0 %v1959
        %1963 = vmatprep.subr.mxu0 0.0
        %1964 = vmatpush1.xpose.msra.mxu0 0.0
        %1965 = vmatprep.subr.mxu0 0.0
        %1966 = vmatpush1.xpose.msra.mxu0 0.0
        %1967 = vmatprep.subr.mxu0 0.0
        %1968 = vmatpush1.xpose.msra.mxu0 0.0
        %1969 = vmatprep.subr.mxu0 0.0
        %1970 = vmatpush1.xpose.msra.mxu0 0.0
        %1971 = vmatprep.subr.mxu0 0.0
        %1972 = vmatpush1.xpose.msra.mxu0 0.0
        %1973 = vmatprep.subr.mxu0 0.0
        %1974 = vmatpush1.xpose.msra.mxu0 0.0
        %1975 = vmatprep.subr.mxu0 0.0
        %1976 = vmatpush1.xpose.msra.mxu0 0.0
        %1977 = vmatprep.subr.mxu0 0.0
        %1978 = vmatpush1.xpose.msra.mxu0 0.0
        %1979 = vmatprep.subr.mxu0 0.0
        %1980 = vmatpush1.xpose.msra.mxu0 0.0
        %1981 = vmatprep.subr.mxu0 0.0
        %1982 = vmatpush1.xpose.msra.mxu0 0.0
        %1983 = vmatprep.subr.mxu0 0.0
        %1984 = vmatpush1.xpose.msra.mxu0 0.0
        %1985 = vmatprep.subr.mxu0 0.0
        %1986 = vmatpush1.xpose.msra.mxu0 0.0
        %1987 = vmatprep.subr.mxu0 0.0
        %1988 = vmatpush1.xpose.msra.mxu0 0.0
        %1989 = vmatprep.subr.mxu0 0.0
        %1990 = vmatpush1.xpose.msra.mxu0 0.0
        %1991 = vmatprep.subr.mxu0 0.0
        %1992 = vmatpush1.xpose.msra.mxu0 0.0
        %1993 = vmatprep.subr.mxu0 0.0
        %1994 = vmatpush1.xpose.msra.mxu0 0.0
        %1995 = vmatprep.subr.mxu0 0.0
        %1996 = vmatpush1.xpose.msra.mxu0 0.0
        %1997 = vmatprep.subr.mxu0 0.0
        %1998 = vmatpush1.xpose.msra.mxu0 0.0
        %1999 = vmatprep.subr.mxu0 0.0
        %2000 = vmatpush1.xpose.msra.mxu0 0.0
        %2001 = vmatprep.subr.mxu0 0.0
        %2002 = vmatpush1.xpose.msra.mxu0 0.0
        %2003 = vmatprep.subr.mxu0 0.0
        %2004 = vmatpush1.xpose.msra.mxu0 0.0
        %2005 = vmatprep.subr.mxu0 0.0
        %2006 = vmatpush1.xpose.msra.mxu0 0.0
        %2007 = vmatprep.subr.mxu0 0.0
        %2008 = vmatpush1.xpose.msra.mxu0 0.0
        %2009 = vmatprep.subr.mxu0 0.0
        %2010 = vmatpush1.xpose.msra.mxu0 0.0
        %2011 = vmatprep.subr.mxu0 0.0
        %2012 = vmatpush1.xpose.msra.mxu0 0.0
        %2013 = vmatprep.subr.mxu0 0.0
        %2014 = vmatpush1.xpose.msra.mxu0 0.0
        %2015 = vmatprep.subr.mxu0 0.0
        %2016 = vmatpush1.xpose.msra.mxu0 0.0
        %2017 = vmatprep.subr.mxu0 0.0
        %2018 = vmatpush1.xpose.msra.mxu0 0.0
        %2019 = vmatprep.subr.mxu0 0.0
        %2020 = vmatpush1.xpose.msra.mxu0 0.0
        %2021 = vmatprep.subr.mxu0 0.0
        %2022 = vmatpush1.xpose.msra.mxu0 0.0
        %2023 = vmatprep.subr.mxu0 0.0
        %2024 = vmatpush1.xpose.msra.mxu0 0.0
        %2025 = vmatprep.mubr.f32.mxu0 0.0
        %2026 = vmatmul.mubr.f32.gmra.mrb[0].mxu0 %v1957
        %v2027 = vpop.f32.mrb[0].mxu0
        %v2028 = vadd.f32 0.0, %v2027
        %v2029 = vpop.f32.mrb[0].mxu0
        %2030 = vdwg.mxu0
        %v2031 = vmul.f32 %v2028, 0.35355338
        %vm2032 = vcmp.ne.f32.partialorder %v709, 0.0
        %v2033 = vsel %vm2032, -1e+09, %v2031
        %v2034 = vsel %vm948, %v2033, -inf
        %2035 = vmax.xlane.f32.xlu0 %v2034
        %v2036 = vpop.xlane.xlu0 %2035
        %v2037 = vsub.f32 %v2033, %v2036
        %v2038 = vmul.f32 %v2037, 1.442695
        %v2039 = vpow.pop %v2038
        %v2040 = vsel %vm948, %v2039, 0.0
        %2041 = vadd.xlane.f32.xlu0 %v2040
        %v2042 = vpop.xlane.xlu0 %2041
        %v2043 = vrcp.pop %v2042
        %v2044 = vmul.f32 %v2039, %v2043
        %2045 = vrot.lane.b32.xlu0 %v943, 80
        %v2046 = vpop.permute.xlu0 %2045
        %v2049 = vsel %vm948, %v2044, 0
        %2051 = vmatprep.subr.mxu0 0.0
        %2052 = vmatpush1.msra.mxu0 %v2046
        %2053 = vmatprep.subr.mxu0 0.0
        %2054 = vmatpush1.msra.mxu0 0.0
        %2055 = vmatprep.subr.mxu0 0.0
        %2056 = vmatpush1.msra.mxu0 0.0
        %2057 = vmatprep.subr.mxu0 0.0
        %2058 = vmatpush1.msra.mxu0 0.0
        %2059 = vmatprep.subr.mxu0 0.0
        %2060 = vmatpush1.msra.mxu0 0.0
        %2061 = vmatprep.subr.mxu0 0.0
        %2062 = vmatpush1.msra.mxu0 0.0
        %2063 = vmatprep.subr.mxu0 0.0
        %2064 = vmatpush1.msra.mxu0 0.0
        %2065 = vmatprep.subr.mxu0 0.0
        %2066 = vmatpush1.msra.mxu0 0.0
        %2067 = vmatprep.subr.mxu0 0.0
        %2068 = vmatpush1.msra.mxu0 0.0
        %2069 = vmatprep.subr.mxu0 0.0
        %2070 = vmatpush1.msra.mxu0 0.0
        %2071 = vmatprep.subr.mxu0 0.0
        %2072 = vmatpush1.msra.mxu0 0.0
        %2073 = vmatprep.subr.mxu0 0.0
        %2074 = vmatpush1.msra.mxu0 0.0
        %2075 = vmatprep.subr.mxu0 0.0
        %2076 = vmatpush1.msra.mxu0 0.0
        %2077 = vmatprep.subr.mxu0 0.0
        %2078 = vmatpush1.msra.mxu0 0.0
        %2079 = vmatprep.subr.mxu0 0.0
        %2080 = vmatpush1.msra.mxu0 0.0
        %2081 = vmatprep.subr.mxu0 0.0
        %2082 = vmatpush1.msra.mxu0 0.0
        %2083 = vmatprep.subr.mxu0 0.0
        %2084 = vmatpush1.msra.mxu0 0.0
        %2085 = vmatprep.subr.mxu0 0.0
        %2086 = vmatpush1.msra.mxu0 0.0
        %2087 = vmatprep.subr.mxu0 0.0
        %2088 = vmatpush1.msra.mxu0 0.0
        %2089 = vmatprep.subr.mxu0 0.0
        %2090 = vmatpush1.msra.mxu0 0.0
        %2091 = vmatprep.subr.mxu0 0.0
        %2092 = vmatpush1.msra.mxu0 0.0
        %2093 = vmatprep.subr.mxu0 0.0
        %2094 = vmatpush1.msra.mxu0 0.0
        %2095 = vmatprep.subr.mxu0 0.0
        %2096 = vmatpush1.msra.mxu0 0.0
        %2097 = vmatprep.subr.mxu0 0.0
        %2098 = vmatpush1.msra.mxu0 0.0
        %2099 = vmatprep.subr.mxu0 0.0
        %2100 = vmatpush1.msra.mxu0 0.0
        %2101 = vmatprep.subr.mxu0 0.0
        %2102 = vmatpush1.msra.mxu0 0.0
        %2103 = vmatprep.subr.mxu0 0.0
        %2104 = vmatpush1.msra.mxu0 0.0
        %2105 = vmatprep.subr.mxu0 0.0
        %2106 = vmatpush1.msra.mxu0 0.0
        %2107 = vmatprep.subr.mxu0 0.0
        %2108 = vmatpush1.msra.mxu0 0.0
        %2109 = vmatprep.subr.mxu0 0.0
        %2110 = vmatpush1.msra.mxu0 0.0
        %2111 = vmatprep.subr.mxu0 0.0
        %2112 = vmatpush1.msra.mxu0 0.0
        %2113 = vmatprep.subr.mxu0 0.0
        %2114 = vmatpush1.msra.mxu0 0.0
        %2115 = vmatprep.mubr.f32.mxu0 0.0
        %2116 = vmatmul.mubr.f32.gmra.mrb[0].mxu0 %v2049
        %v2117 = vpop.f32.mrb[0].mxu0
        %v2118 = vadd.f32 0.0, %v2117
        %v2119 = vpop.f32.mrb[0].mxu0
        %2120 = vdwg.mxu0
        %2121 = vrot.lane.b32.xlu0 %v839, 72
        %v2122 = vpop.permute.xlu0 %2121
        %2123 = vrot.lane.b32.xlu0 %v891, 72
        %v2124 = vpop.permute.xlu0 %2123
        %v2125 = vsel %vm948, %v2122, 0
        %v2127 = vsel %vm948, %v2124, 0
        %2129 = vmatprep.subr.mxu0 0.0
        %2130 = vmatpush1.xpose.msra.mxu0 %v2127
        %2131 = vmatprep.subr.mxu0 0.0
        %2132 = vmatpush1.xpose.msra.mxu0 0.0
        %2133 = vmatprep.subr.mxu0 0.0
        %2134 = vmatpush1.xpose.msra.mxu0 0.0
        %2135 = vmatprep.subr.mxu0 0.0
        %2136 = vmatpush1.xpose.msra.mxu0 0.0
        %2137 = vmatprep.subr.mxu0 0.0
        %2138 = vmatpush1.xpose.msra.mxu0 0.0
        %2139 = vmatprep.subr.mxu0 0.0
        %2140 = vmatpush1.xpose.msra.mxu0 0.0
        %2141 = vmatprep.subr.mxu0 0.0
        %2142 = vmatpush1.xpose.msra.mxu0 0.0
        %2143 = vmatprep.subr.mxu0 0.0
        %2144 = vmatpush1.xpose.msra.mxu0 0.0
        %2145 = vmatprep.subr.mxu0 0.0
        %2146 = vmatpush1.xpose.msra.mxu0 0.0
        %2147 = vmatprep.subr.mxu0 0.0
        %2148 = vmatpush1.xpose.msra.mxu0 0.0
        %2149 = vmatprep.subr.mxu0 0.0
        %2150 = vmatpush1.xpose.msra.mxu0 0.0
        %2151 = vmatprep.subr.mxu0 0.0
        %2152 = vmatpush1.xpose.msra.mxu0 0.0
        %2153 = vmatprep.subr.mxu0 0.0
        %2154 = vmatpush1.xpose.msra.mxu0 0.0
        %2155 = vmatprep.subr.mxu0 0.0
        %2156 = vmatpush1.xpose.msra.mxu0 0.0
        %2157 = vmatprep.subr.mxu0 0.0
        %2158 = vmatpush1.xpose.msra.mxu0 0.0
        %2159 = vmatprep.subr.mxu0 0.0
        %2160 = vmatpush1.xpose.msra.mxu0 0.0
        %2161 = vmatprep.subr.mxu0 0.0
        %2162 = vmatpush1.xpose.msra.mxu0 0.0
        %2163 = vmatprep.subr.mxu0 0.0
        %2164 = vmatpush1.xpose.msra.mxu0 0.0
        %2165 = vmatprep.subr.mxu0 0.0
        %2166 = vmatpush1.xpose.msra.mxu0 0.0
        %2167 = vmatprep.subr.mxu0 0.0
        %2168 = vmatpush1.xpose.msra.mxu0 0.0
        %2169 = vmatprep.subr.mxu0 0.0
        %2170 = vmatpush1.xpose.msra.mxu0 0.0
        %2171 = vmatprep.subr.mxu0 0.0
        %2172 = vmatpush1.xpose.msra.mxu0 0.0
        %2173 = vmatprep.subr.mxu0 0.0
        %2174 = vmatpush1.xpose.msra.mxu0 0.0
        %2175 = vmatprep.subr.mxu0 0.0
        %2176 = vmatpush1.xpose.msra.mxu0 0.0
        %2177 = vmatprep.subr.mxu0 0.0
        %2178 = vmatpush1.xpose.msra.mxu0 0.0
        %2179 = vmatprep.subr.mxu0 0.0
        %2180 = vmatpush1.xpose.msra.mxu0 0.0
        %2181 = vmatprep.subr.mxu0 0.0
        %2182 = vmatpush1.xpose.msra.mxu0 0.0
        %2183 = vmatprep.subr.mxu0 0.0
        %2184 = vmatpush1.xpose.msra.mxu0 0.0
        %2185 = vmatprep.subr.mxu0 0.0
        %2186 = vmatpush1.xpose.msra.mxu0 0.0
        %2187 = vmatprep.subr.mxu0 0.0
        %2188 = vmatpush1.xpose.msra.mxu0 0.0
        %2189 = vmatprep.subr.mxu0 0.0
        %2190 = vmatpush1.xpose.msra.mxu0 0.0
        %2191 = vmatprep.subr.mxu0 0.0
        %2192 = vmatpush1.xpose.msra.mxu0 0.0
        %2193 = vmatprep.mubr.f32.mxu0 0.0
        %2194 = vmatmul.mubr.f32.gmra.mrb[0].mxu0 %v2125
        %v2195 = vpop.f32.mrb[0].mxu0
        %v2196 = vadd.f32 0.0, %v2195
        %v2197 = vpop.f32.mrb[0].mxu0
        %2198 = vdwg.mxu0
        %v2199 = vmul.f32 %v2196, 0.35355338
        %vm2200 = vcmp.ne.f32.partialorder %v710, 0.0
        %v2201 = vsel %vm2200, -1e+09, %v2199
        %v2202 = vsel %vm948, %v2201, -inf
        %2203 = vmax.xlane.f32.xlu0 %v2202
        %v2204 = vpop.xlane.xlu0 %2203
        %v2205 = vsub.f32 %v2201, %v2204
        %v2206 = vmul.f32 %v2205, 1.442695
        %v2207 = vpow.pop %v2206
        %v2208 = vsel %vm948, %v2207, 0.0
        %2209 = vadd.xlane.f32.xlu0 %v2208
        %v2210 = vpop.xlane.xlu0 %2209
        %v2211 = vrcp.pop %v2210
        %v2212 = vmul.f32 %v2207, %v2211
        %2213 = vrot.lane.b32.xlu0 %v943, 72
        %v2214 = vpop.permute.xlu0 %2213
        %v2217 = vsel %vm948, %v2212, 0
        %2219 = vmatprep.subr.mxu0 0.0
        %2220 = vmatpush1.msra.mxu0 %v2214
        %2221 = vmatprep.subr.mxu0 0.0
        %2222 = vmatpush1.msra.mxu0 0.0
        %2223 = vmatprep.subr.mxu0 0.0
        %2224 = vmatpush1.msra.mxu0 0.0
        %2225 = vmatprep.subr.mxu0 0.0
        %2226 = vmatpush1.msra.mxu0 0.0
        %2227 = vmatprep.subr.mxu0 0.0
        %2228 = vmatpush1.msra.mxu0 0.0
        %2229 = vmatprep.subr.mxu0 0.0
        %2230 = vmatpush1.msra.mxu0 0.0
        %2231 = vmatprep.subr.mxu0 0.0
        %2232 = vmatpush1.msra.mxu0 0.0
        %2233 = vmatprep.subr.mxu0 0.0
        %2234 = vmatpush1.msra.mxu0 0.0
        %2235 = vmatprep.subr.mxu0 0.0
        %2236 = vmatpush1.msra.mxu0 0.0
        %2237 = vmatprep.subr.mxu0 0.0
        %2238 = vmatpush1.msra.mxu0 0.0
        %2239 = vmatprep.subr.mxu0 0.0
        %2240 = vmatpush1.msra.mxu0 0.0
        %2241 = vmatprep.subr.mxu0 0.0
        %2242 = vmatpush1.msra.mxu0 0.0
        %2243 = vmatprep.subr.mxu0 0.0
        %2244 = vmatpush1.msra.mxu0 0.0
        %2245 = vmatprep.subr.mxu0 0.0
        %2246 = vmatpush1.msra.mxu0 0.0
        %2247 = vmatprep.subr.mxu0 0.0
        %2248 = vmatpush1.msra.mxu0 0.0
        %2249 = vmatprep.subr.mxu0 0.0
        %2250 = vmatpush1.msra.mxu0 0.0
        %2251 = vmatprep.subr.mxu0 0.0
        %2252 = vmatpush1.msra.mxu0 0.0
        %2253 = vmatprep.subr.mxu0 0.0
        %2254 = vmatpush1.msra.mxu0 0.0
        %2255 = vmatprep.subr.mxu0 0.0
        %2256 = vmatpush1.msra.mxu0 0.0
        %2257 = vmatprep.subr.mxu0 0.0
        %2258 = vmatpush1.msra.mxu0 0.0
        %2259 = vmatprep.subr.mxu0 0.0
        %2260 = vmatpush1.msra.mxu0 0.0
        %2261 = vmatprep.subr.mxu0 0.0
        %2262 = vmatpush1.msra.mxu0 0.0
        %2263 = vmatprep.subr.mxu0 0.0
        %2264 = vmatpush1.msra.mxu0 0.0
        %2265 = vmatprep.subr.mxu0 0.0
        %2266 = vmatpush1.msra.mxu0 0.0
        %2267 = vmatprep.subr.mxu0 0.0
        %2268 = vmatpush1.msra.mxu0 0.0
        %2269 = vmatprep.subr.mxu0 0.0
        %2270 = vmatpush1.msra.mxu0 0.0
        %2271 = vmatprep.subr.mxu0 0.0
        %2272 = vmatpush1.msra.mxu0 0.0
        %2273 = vmatprep.subr.mxu0 0.0
        %2274 = vmatpush1.msra.mxu0 0.0
        %2275 = vmatprep.subr.mxu0 0.0
        %2276 = vmatpush1.msra.mxu0 0.0
        %2277 = vmatprep.subr.mxu0 0.0
        %2278 = vmatpush1.msra.mxu0 0.0
        %2279 = vmatprep.subr.mxu0 0.0
        %2280 = vmatpush1.msra.mxu0 0.0
        %2281 = vmatprep.subr.mxu0 0.0
        %2282 = vmatpush1.msra.mxu0 0.0
        %2283 = vmatprep.mubr.f32.mxu0 0.0
        %2284 = vmatmul.mubr.f32.gmra.mrb[0].mxu0 %v2217
        %v2285 = vpop.f32.mrb[0].mxu0
        %v2286 = vadd.f32 0.0, %v2285
        %v2287 = vpop.f32.mrb[0].mxu0
        %2288 = vdwg.mxu0
        %2290 = vrot.lane.b32.xlu0 %v1278, 8
        %v2291 = vpop.permute.xlu0 %2290
        %2294 = vrot.lane.b32.xlu0 %v1446, 16
        %v2295 = vpop.permute.xlu0 %2294
        %2298 = vrot.lane.b32.xlu0 %v1614, 24
        %v2299 = vpop.permute.xlu0 %2298
        %2302 = vrot.lane.b32.xlu0 %v1782, 32
        %v2303 = vpop.permute.xlu0 %2302
        %2306 = vrot.lane.b32.xlu0 %v1950, 40
        %v2307 = vpop.permute.xlu0 %2306
        %2310 = vrot.lane.b32.xlu0 %v2118, 48
        %v2311 = vpop.permute.xlu0 %2310
        %2314 = vrot.lane.b32.xlu0 %v2286, 56
        %v2315 = vpop.permute.xlu0 %2314
        %v2317 = vsel %vm948, %v1109, %v2291
        %vm2318 = vcmask 130048
        %v2319 = vsel %vm2318, %v2317, %v2295
        %vm2320 = vcmask 195584
        %v2321 = vsel %vm2320, %v2319, %v2299
        %v2322 = vsel %vm800, %v2321, %v2303
        %vm2323 = vcmask 326656
        %v2324 = vsel %vm2323, %v2322, %v2307
        %vm2325 = vcmask 392192
        %v2326 = vsel %vm2325, %v2324, %v2311
        %vm2327 = vcmask 457728
        %v2328 = vsel %vm2327, %v2326, %v2315
        %v2329 = vpack.c.bf16 %v2328, %v2328
        %v2338 = vunpack.c.l.b16 %v747
        %v2339 = vunpack.c.l.b16 %v748
        %v2340 = vunpack.c.l.b16 %v749
        %v2341 = vunpack.c.l.b16 %v750
        %v2342 = vunpack.c.l.b16 %v751
        %v2343 = vunpack.c.l.b16 %v752
        %v2344 = vunpack.c.l.b16 %v753
        %v2345 = vunpack.c.l.b16 %v754
        %v2346 = vpack.c.b16 %v2339, %v2338
        %v2347 = vpack.c.b16 %v2341, %v2340
        %v2348 = vpack.c.b16 %v2343, %v2342
        %v2349 = vpack.c.b16 %v2345, %v2344
        %vm2354 = vcmask 523264
        %v2356 = vsel %vm2354, %v2329, 0
        %2358 = vmatprep.subr.bf16.mxu0 0
        %2359 = vmatpush1.bf16.msra.mxu0 %v2346
        %2360 = vmatprep.subr.bf16.mxu0 0
        %2361 = vmatpush1.bf16.msra.mxu0 %v2347
        %2362 = vmatprep.subr.bf16.mxu0 0
        %2363 = vmatpush1.bf16.msra.mxu0 %v2348
        %2364 = vmatprep.subr.bf16.mxu0 0
        %2365 = vmatpush1.bf16.msra.mxu0 %v2349
        %2366 = vmatprep.subr.bf16.mxu0 0
        %2367 = vmatpush1.bf16.msra.mxu0 0
        %2368 = vmatprep.subr.bf16.mxu0 0
        %2369 = vmatpush1.bf16.msra.mxu0 0
        %2370 = vmatprep.subr.bf16.mxu0 0
        %2371 = vmatpush1.bf16.msra.mxu0 0
        %2372 = vmatprep.subr.bf16.mxu0 0
        %2373 = vmatpush1.bf16.msra.mxu0 0
        %2374 = vmatprep.subr.bf16.mxu0 0
        %2375 = vmatpush1.bf16.msra.mxu0 0
        %2376 = vmatprep.subr.bf16.mxu0 0
        %2377 = vmatpush1.bf16.msra.mxu0 0
        %2378 = vmatprep.subr.bf16.mxu0 0
        %2379 = vmatpush1.bf16.msra.mxu0 0
        %2380 = vmatprep.subr.bf16.mxu0 0
        %2381 = vmatpush1.bf16.msra.mxu0 0
        %2382 = vmatprep.subr.bf16.mxu0 0
        %2383 = vmatpush1.bf16.msra.mxu0 0
        %2384 = vmatprep.subr.bf16.mxu0 0
        %2385 = vmatpush1.bf16.msra.mxu0 0
        %2386 = vmatprep.subr.bf16.mxu0 0
        %2387 = vmatpush1.bf16.msra.mxu0 0
        %2388 = vmatprep.subr.bf16.mxu0 0
        %2389 = vmatpush1.bf16.msra.mxu0 0
        %2390 = vmatprep.mubr.bf16.mxu0 0
        %2391 = vmatmul.mubr.bf16.gmra.mrb[0].mxu0 %v2356
        %v2392 = vpop.f32.mrb[0].mxu0
        %v2393 = vadd.f32 0.0, %v2392
        %v2394 = vpop.f32.mrb[0].mxu0
        %v2395 = vpop.f32.mrb[0].mxu0
        %v2396 = vpop.f32.mrb[0].mxu0
        %2397 = vdwg.mxu0
        %v2398 = vadd.f32 %v699, %v2393
        %v2399 = vsel %vm800, %v2398, 0.0
        %2400 = vadd.xlane.f32.xlu0 %v2399
        %v2401 = vpop.xlane.xlu0 %2400
        %v2402 = vrcp.pop 32.0
        %v2403 = vmul.f32 %v2401, %v2402
        %v2404 = vsub.f32 %v2398, %v2403
        %v2405 = vmul.f32 %v2404, %v2404
        %v2406 = vsel %vm800, %v2405, 0.0
        %2407 = vadd.xlane.f32.xlu0 %v2406
        %v2408 = vpop.xlane.xlu0 %2407
        %v2409 = vmul.f32 %v2408, %v2402
        %v2410 = vadd.f32 %v2409, 1e-05
        %v2411 = vrsqrt.pop %v2410
        %v2412 = vmul.f32 %v2404, %v2411
        %v2413 = vpack.c.bf16 %v2412, %v2412
        %v2418 = vunpack.c.l.b16 %v755
        %v2419 = vunpack.c.l.b16 %v756
        %v2420 = vunpack.c.l.b16 %v757
        %v2421 = vunpack.c.l.b16 %v758
        %v2422 = vpack.c.b16 %v2419, %v2418
        %v2423 = vpack.c.b16 %v2421, %v2420
        %v2427 = vsel %vm800, %v2413, 0
        %2429 = vmatprep.subr.bf16.mxu0 0
        %2430 = vmatpush1.bf16.msra.mxu0 %v2422
        %2431 = vmatprep.subr.bf16.mxu0 0
        %2432 = vmatpush1.bf16.msra.mxu0 %v2423
        %2433 = vmatprep.subr.bf16.mxu0 0
        %2434 = vmatpush1.bf16.msra.mxu0 0
        %2435 = vmatprep.subr.bf16.mxu0 0
        %2436 = vmatpush1.bf16.msra.mxu0 0
        %2437 = vmatprep.subr.bf16.mxu0 0
        %2438 = vmatpush1.bf16.msra.mxu0 0
        %2439 = vmatprep.subr.bf16.mxu0 0
        %2440 = vmatpush1.bf16.msra.mxu0 0
        %2441 = vmatprep.subr.bf16.mxu0 0
        %2442 = vmatpush1.bf16.msra.mxu0 0
        %2443 = vmatprep.subr.bf16.mxu0 0
        %2444 = vmatpush1.bf16.msra.mxu0 0
        %2445 = vmatprep.subr.bf16.mxu0 0
        %2446 = vmatpush1.bf16.msra.mxu0 0
        %2447 = vmatprep.subr.bf16.mxu0 0
        %2448 = vmatpush1.bf16.msra.mxu0 0
        %2449 = vmatprep.subr.bf16.mxu0 0
        %2450 = vmatpush1.bf16.msra.mxu0 0
        %2451 = vmatprep.subr.bf16.mxu0 0
        %2452 = vmatpush1.bf16.msra.mxu0 0
        %2453 = vmatprep.subr.bf16.mxu0 0
        %2454 = vmatpush1.bf16.msra.mxu0 0
        %2455 = vmatprep.subr.bf16.mxu0 0
        %2456 = vmatpush1.bf16.msra.mxu0 0
        %2457 = vmatprep.subr.bf16.mxu0 0
        %2458 = vmatpush1.bf16.msra.mxu0 0
        %2459 = vmatprep.subr.bf16.mxu0 0
        %2460 = vmatpush1.bf16.msra.mxu0 0
        %2461 = vmatprep.mubr.bf16.mxu0 0
        %2462 = vmatmul.mubr.bf16.gmra.mrb[0].mxu0 %v2427
        %v2463 = vpop.f32.mrb[0].mxu0
        %v2464 = vadd.f32 0.0, %v2463
        %v2465 = vpop.f32.mrb[0].mxu0
        %v2466 = vpop.f32.mrb[0].mxu0
        %v2467 = vpop.f32.mrb[0].mxu0
        %2468 = vdwg.mxu0
        %v2469 = vpack.c.bf16 %v701, %v701
        %v2474 = vunpack.c.l.b16 %v759
        %v2475 = vunpack.c.l.b16 %v760
        %v2476 = vunpack.c.l.b16 %v761
        %v2477 = vunpack.c.l.b16 %v762
        %v2478 = vpack.c.b16 %v2475, %v2474
        %v2479 = vpack.c.b16 %v2477, %v2476
        %v2483 = vsel %vm800, %v2469, 0
        %2485 = vmatprep.subr.bf16.mxu0 0
        %2486 = vmatpush1.bf16.msra.mxu0 %v2478
        %2487 = vmatprep.subr.bf16.mxu0 0
        %2488 = vmatpush1.bf16.msra.mxu0 %v2479
        %2489 = vmatprep.subr.bf16.mxu0 0
        %2490 = vmatpush1.bf16.msra.mxu0 0
        %2491 = vmatprep.subr.bf16.mxu0 0
        %2492 = vmatpush1.bf16.msra.mxu0 0
        %2493 = vmatprep.subr.bf16.mxu0 0
        %2494 = vmatpush1.bf16.msra.mxu0 0
        %2495 = vmatprep.subr.bf16.mxu0 0
        %2496 = vmatpush1.bf16.msra.mxu0 0
        %2497 = vmatprep.subr.bf16.mxu0 0
        %2498 = vmatpush1.bf16.msra.mxu0 0
        %2499 = vmatprep.subr.bf16.mxu0 0
        %2500 = vmatpush1.bf16.msra.mxu0 0
        %2501 = vmatprep.subr.bf16.mxu0 0
        %2502 = vmatpush1.bf16.msra.mxu0 0
        %2503 = vmatprep.subr.bf16.mxu0 0
        %2504 = vmatpush1.bf16.msra.mxu0 0
        %2505 = vmatprep.subr.bf16.mxu0 0
        %2506 = vmatpush1.bf16.msra.mxu0 0
        %2507 = vmatprep.subr.bf16.mxu0 0
        %2508 = vmatpush1.bf16.msra.mxu0 0
        %2509 = vmatprep.subr.bf16.mxu0 0
        %2510 = vmatpush1.bf16.msra.mxu0 0
        %2511 = vmatprep.subr.bf16.mxu0 0
        %2512 = vmatpush1.bf16.msra.mxu0 0
        %2513 = vmatprep.subr.bf16.mxu0 0
        %2514 = vmatpush1.bf16.msra.mxu0 0
        %2515 = vmatprep.subr.bf16.mxu0 0
        %2516 = vmatpush1.bf16.msra.mxu0 0
        %2517 = vmatprep.mubr.bf16.mxu0 0
        %2518 = vmatmul.mubr.bf16.gmra.mrb[0].mxu0 %v2483
        %v2519 = vpop.f32.mrb[0].mxu0
        %v2520 = vadd.f32 0.0, %v2519
        %v2521 = vpop.f32.mrb[0].mxu0
        %v2522 = vpop.f32.mrb[0].mxu0
        %v2523 = vpop.f32.mrb[0].mxu0
        %2524 = vdwg.mxu0
        %v2529 = vunpack.c.l.b16 %v763
        %v2530 = vunpack.c.l.b16 %v764
        %v2531 = vunpack.c.l.b16 %v765
        %v2532 = vunpack.c.l.b16 %v766
        %v2533 = vpack.c.b16 %v2530, %v2529
        %v2534 = vpack.c.b16 %v2532, %v2531
        %2537 = vmatprep.subr.bf16.mxu0 0
        %2538 = vmatpush1.bf16.msra.mxu0 %v2533
        %2539 = vmatprep.subr.bf16.mxu0 0
        %2540 = vmatpush1.bf16.msra.mxu0 %v2534
        %2541 = vmatprep.subr.bf16.mxu0 0
        %2542 = vmatpush1.bf16.msra.mxu0 0
        %2543 = vmatprep.subr.bf16.mxu0 0
        %2544 = vmatpush1.bf16.msra.mxu0 0
        %2545 = vmatprep.subr.bf16.mxu0 0
        %2546 = vmatpush1.bf16.msra.mxu0 0
        %2547 = vmatprep.subr.bf16.mxu0 0
        %2548 = vmatpush1.bf16.msra.mxu0 0
        %2549 = vmatprep.subr.bf16.mxu0 0
        %2550 = vmatpush1.bf16.msra.mxu0 0
        %2551 = vmatprep.subr.bf16.mxu0 0
        %2552 = vmatpush1.bf16.msra.mxu0 0
        %2553 = vmatprep.subr.bf16.mxu0 0
        %2554 = vmatpush1.bf16.msra.mxu0 0
        %2555 = vmatprep.subr.bf16.mxu0 0
        %2556 = vmatpush1.bf16.msra.mxu0 0
        %2557 = vmatprep.subr.bf16.mxu0 0
        %2558 = vmatpush1.bf16.msra.mxu0 0
        %2559 = vmatprep.subr.bf16.mxu0 0
        %2560 = vmatpush1.bf16.msra.mxu0 0
        %2561 = vmatprep.subr.bf16.mxu0 0
        %2562 = vmatpush1.bf16.msra.mxu0 0
        %2563 = vmatprep.subr.bf16.mxu0 0
        %2564 = vmatpush1.bf16.msra.mxu0 0
        %2565 = vmatprep.subr.bf16.mxu0 0
        %2566 = vmatpush1.bf16.msra.mxu0 0
        %2567 = vmatprep.subr.bf16.mxu0 0
        %2568 = vmatpush1.bf16.msra.mxu0 0
        %2569 = vmatprep.mubr.bf16.mxu0 0
        %2570 = vmatmul.mubr.bf16.gmra.mrb[0].mxu0 %v2483
        %v2571 = vpop.f32.mrb[0].mxu0
        %v2572 = vadd.f32 0.0, %v2571
        %v2573 = vpop.f32.mrb[0].mxu0
        %v2574 = vpop.f32.mrb[0].mxu0
        %v2575 = vpop.f32.mrb[0].mxu0
        %2576 = vdwg.mxu0
        %v2578 = vsel %vm948, %v2464, 0
        %v2581 = vsel %vm948, %v2520, 0
        %2583 = vmatprep.subr.mxu0 0.0
        %2584 = vmatpush1.xpose.msra.mxu0 %v2581
        %2585 = vmatprep.subr.mxu0 0.0
        %2586 = vmatpush1.xpose.msra.mxu0 0.0
        %2587 = vmatprep.subr.mxu0 0.0
        %2588 = vmatpush1.xpose.msra.mxu0 0.0
        %2589 = vmatprep.subr.mxu0 0.0
        %2590 = vmatpush1.xpose.msra.mxu0 0.0
        %2591 = vmatprep.subr.mxu0 0.0
        %2592 = vmatpush1.xpose.msra.mxu0 0.0
        %2593 = vmatprep.subr.mxu0 0.0
        %2594 = vmatpush1.xpose.msra.mxu0 0.0
        %2595 = vmatprep.subr.mxu0 0.0
        %2596 = vmatpush1.xpose.msra.mxu0 0.0
        %2597 = vmatprep.subr.mxu0 0.0
        %2598 = vmatpush1.xpose.msra.mxu0 0.0
        %2599 = vmatprep.subr.mxu0 0.0
        %2600 = vmatpush1.xpose.msra.mxu0 0.0
        %2601 = vmatprep.subr.mxu0 0.0
        %2602 = vmatpush1.xpose.msra.mxu0 0.0
        %2603 = vmatprep.subr.mxu0 0.0
        %2604 = vmatpush1.xpose.msra.mxu0 0.0
        %2605 = vmatprep.subr.mxu0 0.0
        %2606 = vmatpush1.xpose.msra.mxu0 0.0
        %2607 = vmatprep.subr.mxu0 0.0
        %2608 = vmatpush1.xpose.msra.mxu0 0.0
        %2609 = vmatprep.subr.mxu0 0.0
        %2610 = vmatpush1.xpose.msra.mxu0 0.0
        %2611 = vmatprep.subr.mxu0 0.0
        %2612 = vmatpush1.xpose.msra.mxu0 0.0
        %2613 = vmatprep.subr.mxu0 0.0
        %2614 = vmatpush1.xpose.msra.mxu0 0.0
        %2615 = vmatprep.subr.mxu0 0.0
        %2616 = vmatpush1.xpose.msra.mxu0 0.0
        %2617 = vmatprep.subr.mxu0 0.0
        %2618 = vmatpush1.xpose.msra.mxu0 0.0
        %2619 = vmatprep.subr.mxu0 0.0
        %2620 = vmatpush1.xpose.msra.mxu0 0.0
        %2621 = vmatprep.subr.mxu0 0.0
        %2622 = vmatpush1.xpose.msra.mxu0 0.0
        %2623 = vmatprep.subr.mxu0 0.0
        %2624 = vmatpush1.xpose.msra.mxu0 0.0
        %2625 = vmatprep.subr.mxu0 0.0
        %2626 = vmatpush1.xpose.msra.mxu0 0.0
        %2627 = vmatprep.subr.mxu0 0.0
        %2628 = vmatpush1.xpose.msra.mxu0 0.0
        %2629 = vmatprep.subr.mxu0 0.0
        %2630 = vmatpush1.xpose.msra.mxu0 0.0
        %2631 = vmatprep.subr.mxu0 0.0
        %2632 = vmatpush1.xpose.msra.mxu0 0.0
        %2633 = vmatprep.subr.mxu0 0.0
        %2634 = vmatpush1.xpose.msra.mxu0 0.0
        %2635 = vmatprep.subr.mxu0 0.0
        %2636 = vmatpush1.xpose.msra.mxu0 0.0
        %2637 = vmatprep.subr.mxu0 0.0
        %2638 = vmatpush1.xpose.msra.mxu0 0.0
        %2639 = vmatprep.subr.mxu0 0.0
        %2640 = vmatpush1.xpose.msra.mxu0 0.0
        %2641 = vmatprep.subr.mxu0 0.0
        %2642 = vmatpush1.xpose.msra.mxu0 0.0
        %2643 = vmatprep.subr.mxu0 0.0
        %2644 = vmatpush1.xpose.msra.mxu0 0.0
        %2645 = vmatprep.subr.mxu0 0.0
        %2646 = vmatpush1.xpose.msra.mxu0 0.0
        %2647 = vmatprep.mubr.f32.mxu0 0.0
        %2648 = vmatmul.mubr.f32.gmra.mrb[0].mxu0 %v2578
        %v2649 = vpop.f32.mrb[0].mxu0
        %v2650 = vadd.f32 0.0, %v2649
        %v2651 = vpop.f32.mrb[0].mxu0
        %2652 = vdwg.mxu0
        %v2653 = vmul.f32 %v2650, 0.35355338
        %vm2654 = vcmp.ne.f32.partialorder %v719, 0.0
        %v2655 = vsel %vm2654, -1e+09, %v2653
        %v2656 = vsel %vm948, %v2655, -inf
        %2657 = vmax.xlane.f32.xlu0 %v2656
        %v2658 = vpop.xlane.xlu0 %2657
        %v2659 = vsub.f32 %v2655, %v2658
        %v2660 = vmul.f32 %v2659, 1.442695
        %v2661 = vpow.pop %v2660
        %v2662 = vsel %vm948, %v2661, 0.0
        %2663 = vadd.xlane.f32.xlu0 %v2662
        %v2664 = vpop.xlane.xlu0 %2663
        %v2665 = vrcp.pop %v2664
        %v2666 = vmul.f32 %v2661, %v2665
        %v2668 = vsel %vm948, %v2666, 0
        %2670 = vmatprep.subr.mxu0 0.0
        %2671 = vmatpush1.msra.mxu0 %v2572
        %2672 = vmatprep.subr.mxu0 0.0
        %2673 = vmatpush1.msra.mxu0 0.0
        %2674 = vmatprep.subr.mxu0 0.0
        %2675 = vmatpush1.msra.mxu0 0.0
        %2676 = vmatprep.subr.mxu0 0.0
        %2677 = vmatpush1.msra.mxu0 0.0
        %2678 = vmatprep.subr.mxu0 0.0
        %2679 = vmatpush1.msra.mxu0 0.0
        %2680 = vmatprep.subr.mxu0 0.0
        %2681 = vmatpush1.msra.mxu0 0.0
        %2682 = vmatprep.subr.mxu0 0.0
        %2683 = vmatpush1.msra.mxu0 0.0
        %2684 = vmatprep.subr.mxu0 0.0
        %2685 = vmatpush1.msra.mxu0 0.0
        %2686 = vmatprep.subr.mxu0 0.0
        %2687 = vmatpush1.msra.mxu0 0.0
        %2688 = vmatprep.subr.mxu0 0.0
        %2689 = vmatpush1.msra.mxu0 0.0
        %2690 = vmatprep.subr.mxu0 0.0
        %2691 = vmatpush1.msra.mxu0 0.0
        %2692 = vmatprep.subr.mxu0 0.0
        %2693 = vmatpush1.msra.mxu0 0.0
        %2694 = vmatprep.subr.mxu0 0.0
        %2695 = vmatpush1.msra.mxu0 0.0
        %2696 = vmatprep.subr.mxu0 0.0
        %2697 = vmatpush1.msra.mxu0 0.0
        %2698 = vmatprep.subr.mxu0 0.0
        %2699 = vmatpush1.msra.mxu0 0.0
        %2700 = vmatprep.subr.mxu0 0.0
        %2701 = vmatpush1.msra.mxu0 0.0
        %2702 = vmatprep.subr.mxu0 0.0
        %2703 = vmatpush1.msra.mxu0 0.0
        %2704 = vmatprep.subr.mxu0 0.0
        %2705 = vmatpush1.msra.mxu0 0.0
        %2706 = vmatprep.subr.mxu0 0.0
        %2707 = vmatpush1.msra.mxu0 0.0
        %2708 = vmatprep.subr.mxu0 0.0
        %2709 = vmatpush1.msra.mxu0 0.0
        %2710 = vmatprep.subr.mxu0 0.0
        %2711 = vmatpush1.msra.mxu0 0.0
        %2712 = vmatprep.subr.mxu0 0.0
        %2713 = vmatpush1.msra.mxu0 0.0
        %2714 = vmatprep.subr.mxu0 0.0
        %2715 = vmatpush1.msra.mxu0 0.0
        %2716 = vmatprep.subr.mxu0 0.0
        %2717 = vmatpush1.msra.mxu0 0.0
        %2718 = vmatprep.subr.mxu0 0.0
        %2719 = vmatpush1.msra.mxu0 0.0
        %2720 = vmatprep.subr.mxu0 0.0
        %2721 = vmatpush1.msra.mxu0 0.0
        %2722 = vmatprep.subr.mxu0 0.0
        %2723 = vmatpush1.msra.mxu0 0.0
        %2724 = vmatprep.subr.mxu0 0.0
        %2725 = vmatpush1.msra.mxu0 0.0
        %2726 = vmatprep.subr.mxu0 0.0
        %2727 = vmatpush1.msra.mxu0 0.0
        %2728 = vmatprep.subr.mxu0 0.0
        %2729 = vmatpush1.msra.mxu0 0.0
        %2730 = vmatprep.subr.mxu0 0.0
        %2731 = vmatpush1.msra.mxu0 0.0
        %2732 = vmatprep.subr.mxu0 0.0
        %2733 = vmatpush1.msra.mxu0 0.0
        %2734 = vmatprep.mubr.f32.mxu0 0.0
        %2735 = vmatmul.mubr.f32.gmra.mrb[0].mxu0 %v2668
        %v2736 = vpop.f32.mrb[0].mxu0
        %v2737 = vadd.f32 0.0, %v2736
        %v2738 = vpop.f32.mrb[0].mxu0
        %2739 = vdwg.mxu0
        %2740 = vrot.lane.b32.xlu0 %v2464, 120
        %v2741 = vpop.permute.xlu0 %2740
        %2742 = vrot.lane.b32.xlu0 %v2520, 120
        %v2743 = vpop.permute.xlu0 %2742
        %v2744 = vsel %vm948, %v2741, 0
        %v2746 = vsel %vm948, %v2743, 0
        %2748 = vmatprep.subr.mxu0 0.0
        %2749 = vmatpush1.xpose.msra.mxu0 %v2746
        %2750 = vmatprep.subr.mxu0 0.0
        %2751 = vmatpush1.xpose.msra.mxu0 0.0
        %2752 = vmatprep.subr.mxu0 0.0
        %2753 = vmatpush1.xpose.msra.mxu0 0.0
        %2754 = vmatprep.subr.mxu0 0.0
        %2755 = vmatpush1.xpose.msra.mxu0 0.0
        %2756 = vmatprep.subr.mxu0 0.0
        %2757 = vmatpush1.xpose.msra.mxu0 0.0
        %2758 = vmatprep.subr.mxu0 0.0
        %2759 = vmatpush1.xpose.msra.mxu0 0.0
        %2760 = vmatprep.subr.mxu0 0.0
        %2761 = vmatpush1.xpose.msra.mxu0 0.0
        %2762 = vmatprep.subr.mxu0 0.0
        %2763 = vmatpush1.xpose.msra.mxu0 0.0
        %2764 = vmatprep.subr.mxu0 0.0
        %2765 = vmatpush1.xpose.msra.mxu0 0.0
        %2766 = vmatprep.subr.mxu0 0.0
        %2767 = vmatpush1.xpose.msra.mxu0 0.0
        %2768 = vmatprep.subr.mxu0 0.0
        %2769 = vmatpush1.xpose.msra.mxu0 0.0
        %2770 = vmatprep.subr.mxu0 0.0
        %2771 = vmatpush1.xpose.msra.mxu0 0.0
        %2772 = vmatprep.subr.mxu0 0.0
        %2773 = vmatpush1.xpose.msra.mxu0 0.0
        %2774 = vmatprep.subr.mxu0 0.0
        %2775 = vmatpush1.xpose.msra.mxu0 0.0
        %2776 = vmatprep.subr.mxu0 0.0
        %2777 = vmatpush1.xpose.msra.mxu0 0.0
        %2778 = vmatprep.subr.mxu0 0.0
        %2779 = vmatpush1.xpose.msra.mxu0 0.0
        %2780 = vmatprep.subr.mxu0 0.0
        %2781 = vmatpush1.xpose.msra.mxu0 0.0
        %2782 = vmatprep.subr.mxu0 0.0
        %2783 = vmatpush1.xpose.msra.mxu0 0.0
        %2784 = vmatprep.subr.mxu0 0.0
        %2785 = vmatpush1.xpose.msra.mxu0 0.0
        %2786 = vmatprep.subr.mxu0 0.0
        %2787 = vmatpush1.xpose.msra.mxu0 0.0
        %2788 = vmatprep.subr.mxu0 0.0
        %2789 = vmatpush1.xpose.msra.mxu0 0.0
        %2790 = vmatprep.subr.mxu0 0.0
        %2791 = vmatpush1.xpose.msra.mxu0 0.0
        %2792 = vmatprep.subr.mxu0 0.0
        %2793 = vmatpush1.xpose.msra.mxu0 0.0
        %2794 = vmatprep.subr.mxu0 0.0
        %2795 = vmatpush1.xpose.msra.mxu0 0.0
        %2796 = vmatprep.subr.mxu0 0.0
        %2797 = vmatpush1.xpose.msra.mxu0 0.0
        %2798 = vmatprep.subr.mxu0 0.0
        %2799 = vmatpush1.xpose.msra.mxu0 0.0
        %2800 = vmatprep.subr.mxu0 0.0
        %2801 = vmatpush1.xpose.msra.mxu0 0.0
        %2802 = vmatprep.subr.mxu0 0.0
        %2803 = vmatpush1.xpose.msra.mxu0 0.0
        %2804 = vmatprep.subr.mxu0 0.0
        %2805 = vmatpush1.xpose.msra.mxu0 0.0
        %2806 = vmatprep.subr.mxu0 0.0
        %2807 = vmatpush1.xpose.msra.mxu0 0.0
        %2808 = vmatprep.subr.mxu0 0.0
        %2809 = vmatpush1.xpose.msra.mxu0 0.0
        %2810 = vmatprep.subr.mxu0 0.0
        %2811 = vmatpush1.xpose.msra.mxu0 0.0
        %2812 = vmatprep.mubr.f32.mxu0 0.0
        %2813 = vmatmul.mubr.f32.gmra.mrb[0].mxu0 %v2744
        %v2814 = vpop.f32.mrb[0].mxu0
        %v2815 = vadd.f32 0.0, %v2814
        %v2816 = vpop.f32.mrb[0].mxu0
        %2817 = vdwg.mxu0
        %v2818 = vmul.f32 %v2815, 0.35355338
        %vm2819 = vcmp.ne.f32.partialorder %v720, 0.0
        %v2820 = vsel %vm2819, -1e+09, %v2818
        %v2821 = vsel %vm948, %v2820, -inf
        %2822 = vmax.xlane.f32.xlu0 %v2821
        %v2823 = vpop.xlane.xlu0 %2822
        %v2824 = vsub.f32 %v2820, %v2823
        %v2825 = vmul.f32 %v2824, 1.442695
        %v2826 = vpow.pop %v2825
        %v2827 = vsel %vm948, %v2826, 0.0
        %2828 = vadd.xlane.f32.xlu0 %v2827
        %v2829 = vpop.xlane.xlu0 %2828
        %v2830 = vrcp.pop %v2829
        %v2831 = vmul.f32 %v2826, %v2830
        %2833 = vrot.lane.b32.xlu0 %v2572, 120
        %v2834 = vpop.permute.xlu0 %2833
        %v2837 = vsel %vm948, %v2831, 0
        %2839 = vmatprep.subr.mxu0 0.0
        %2840 = vmatpush1.msra.mxu0 %v2834
        %2841 = vmatprep.subr.mxu0 0.0
        %2842 = vmatpush1.msra.mxu0 0.0
        %2843 = vmatprep.subr.mxu0 0.0
        %2844 = vmatpush1.msra.mxu0 0.0
        %2845 = vmatprep.subr.mxu0 0.0
        %2846 = vmatpush1.msra.mxu0 0.0
        %2847 = vmatprep.subr.mxu0 0.0
        %2848 = vmatpush1.msra.mxu0 0.0
        %2849 = vmatprep.subr.mxu0 0.0
        %2850 = vmatpush1.msra.mxu0 0.0
        %2851 = vmatprep.subr.mxu0 0.0
        %2852 = vmatpush1.msra.mxu0 0.0
        %2853 = vmatprep.subr.mxu0 0.0
        %2854 = vmatpush1.msra.mxu0 0.0
        %2855 = vmatprep.subr.mxu0 0.0
        %2856 = vmatpush1.msra.mxu0 0.0
        %2857 = vmatprep.subr.mxu0 0.0
        %2858 = vmatpush1.msra.mxu0 0.0
        %2859 = vmatprep.subr.mxu0 0.0
        %2860 = vmatpush1.msra.mxu0 0.0
        %2861 = vmatprep.subr.mxu0 0.0
        %2862 = vmatpush1.msra.mxu0 0.0
        %2863 = vmatprep.subr.mxu0 0.0
        %2864 = vmatpush1.msra.mxu0 0.0
        %2865 = vmatprep.subr.mxu0 0.0
        %2866 = vmatpush1.msra.mxu0 0.0
        %2867 = vmatprep.subr.mxu0 0.0
        %2868 = vmatpush1.msra.mxu0 0.0
        %2869 = vmatprep.subr.mxu0 0.0
        %2870 = vmatpush1.msra.mxu0 0.0
        %2871 = vmatprep.subr.mxu0 0.0
        %2872 = vmatpush1.msra.mxu0 0.0
        %2873 = vmatprep.subr.mxu0 0.0
        %2874 = vmatpush1.msra.mxu0 0.0
        %2875 = vmatprep.subr.mxu0 0.0
        %2876 = vmatpush1.msra.mxu0 0.0
        %2877 = vmatprep.subr.mxu0 0.0
        %2878 = vmatpush1.msra.mxu0 0.0
        %2879 = vmatprep.subr.mxu0 0.0
        %2880 = vmatpush1.msra.mxu0 0.0
        %2881 = vmatprep.subr.mxu0 0.0
        %2882 = vmatpush1.msra.mxu0 0.0
        %2883 = vmatprep.subr.mxu0 0.0
        %2884 = vmatpush1.msra.mxu0 0.0
        %2885 = vmatprep.subr.mxu0 0.0
        %2886 = vmatpush1.msra.mxu0 0.0
        %2887 = vmatprep.subr.mxu0 0.0
        %2888 = vmatpush1.msra.mxu0 0.0
        %2889 = vmatprep.subr.mxu0 0.0
        %2890 = vmatpush1.msra.mxu0 0.0
        %2891 = vmatprep.subr.mxu0 0.0
        %2892 = vmatpush1.msra.mxu0 0.0
        %2893 = vmatprep.subr.mxu0 0.0
        %2894 = vmatpush1.msra.mxu0 0.0
        %2895 = vmatprep.subr.mxu0 0.0
        %2896 = vmatpush1.msra.mxu0 0.0
        %2897 = vmatprep.subr.mxu0 0.0
        %2898 = vmatpush1.msra.mxu0 0.0
        %2899 = vmatprep.subr.mxu0 0.0
        %2900 = vmatpush1.msra.mxu0 0.0
        %2901 = vmatprep.subr.mxu0 0.0
        %2902 = vmatpush1.msra.mxu0 0.0
        %2903 = vmatprep.mubr.f32.mxu0 0.0
        %2904 = vmatmul.mubr.f32.gmra.mrb[0].mxu0 %v2837
        %v2905 = vpop.f32.mrb[0].mxu0
        %v2906 = vadd.f32 0.0, %v2905
        %v2907 = vpop.f32.mrb[0].mxu0
        %2908 = vdwg.mxu0
        %2909 = vrot.lane.b32.xlu0 %v2464, 112
        %v2910 = vpop.permute.xlu0 %2909
        %2911 = vrot.lane.b32.xlu0 %v2520, 112
        %v2912 = vpop.permute.xlu0 %2911
        %v2913 = vsel %vm948, %v2910, 0
        %v2915 = vsel %vm948, %v2912, 0
        %2917 = vmatprep.subr.mxu0 0.0
        %2918 = vmatpush1.xpose.msra.mxu0 %v2915
        %2919 = vmatprep.subr.mxu0 0.0
        %2920 = vmatpush1.xpose.msra.mxu0 0.0
        %2921 = vmatprep.subr.mxu0 0.0
        %2922 = vmatpush1.xpose.msra.mxu0 0.0
        %2923 = vmatprep.subr.mxu0 0.0
        %2924 = vmatpush1.xpose.msra.mxu0 0.0
        %2925 = vmatprep.subr.mxu0 0.0
        %2926 = vmatpush1.xpose.msra.mxu0 0.0
        %2927 = vmatprep.subr.mxu0 0.0
        %2928 = vmatpush1.xpose.msra.mxu0 0.0
        %2929 = vmatprep.subr.mxu0 0.0
        %2930 = vmatpush1.xpose.msra.mxu0 0.0
        %2931 = vmatprep.subr.mxu0 0.0
        %2932 = vmatpush1.xpose.msra.mxu0 0.0
        %2933 = vmatprep.subr.mxu0 0.0
        %2934 = vmatpush1.xpose.msra.mxu0 0.0
        %2935 = vmatprep.subr.mxu0 0.0
        %2936 = vmatpush1.xpose.msra.mxu0 0.0
        %2937 = vmatprep.subr.mxu0 0.0
        %2938 = vmatpush1.xpose.msra.mxu0 0.0
        %2939 = vmatprep.subr.mxu0 0.0
        %2940 = vmatpush1.xpose.msra.mxu0 0.0
        %2941 = vmatprep.subr.mxu0 0.0
        %2942 = vmatpush1.xpose.msra.mxu0 0.0
        %2943 = vmatprep.subr.mxu0 0.0
        %2944 = vmatpush1.xpose.msra.mxu0 0.0
        %2945 = vmatprep.subr.mxu0 0.0
        %2946 = vmatpush1.xpose.msra.mxu0 0.0
        %2947 = vmatprep.subr.mxu0 0.0
        %2948 = vmatpush1.xpose.msra.mxu0 0.0
        %2949 = vmatprep.subr.mxu0 0.0
        %2950 = vmatpush1.xpose.msra.mxu0 0.0
        %2951 = vmatprep.subr.mxu0 0.0
        %2952 = vmatpush1.xpose.msra.mxu0 0.0
        %2953 = vmatprep.subr.mxu0 0.0
        %2954 = vmatpush1.xpose.msra.mxu0 0.0
        %2955 = vmatprep.subr.mxu0 0.0
        %2956 = vmatpush1.xpose.msra.mxu0 0.0
        %2957 = vmatprep.subr.mxu0 0.0
        %2958 = vmatpush1.xpose.msra.mxu0 0.0
        %2959 = vmatprep.subr.mxu0 0.0
        %2960 = vmatpush1.xpose.msra.mxu0 0.0
        %2961 = vmatprep.subr.mxu0 0.0
        %2962 = vmatpush1.xpose.msra.mxu0 0.0
        %2963 = vmatprep.subr.mxu0 0.0
        %2964 = vmatpush1.xpose.msra.mxu0 0.0
        %2965 = vmatprep.subr.mxu0 0.0
        %2966 = vmatpush1.xpose.msra.mxu0 0.0
        %2967 = vmatprep.subr.mxu0 0.0
        %2968 = vmatpush1.xpose.msra.mxu0 0.0
        %2969 = vmatprep.subr.mxu0 0.0
        %2970 = vmatpush1.xpose.msra.mxu0 0.0
        %2971 = vmatprep.subr.mxu0 0.0
        %2972 = vmatpush1.xpose.msra.mxu0 0.0
        %2973 = vmatprep.subr.mxu0 0.0
        %2974 = vmatpush1.xpose.msra.mxu0 0.0
        %2975 = vmatprep.subr.mxu0 0.0
        %2976 = vmatpush1.xpose.msra.mxu0 0.0
        %2977 = vmatprep.subr.mxu0 0.0
        %2978 = vmatpush1.xpose.msra.mxu0 0.0
        %2979 = vmatprep.subr.mxu0 0.0
        %2980 = vmatpush1.xpose.msra.mxu0 0.0
        %2981 = vmatprep.mubr.f32.mxu0 0.0
        %2982 = vmatmul.mubr.f32.gmra.mrb[0].mxu0 %v2913
        %v2983 = vpop.f32.mrb[0].mxu0
        %v2984 = vadd.f32 0.0, %v2983
        %v2985 = vpop.f32.mrb[0].mxu0
        %2986 = vdwg.mxu0
        %v2987 = vmul.f32 %v2984, 0.35355338
        %vm2988 = vcmp.ne.f32.partialorder %v721, 0.0
        %v2989 = vsel %vm2988, -1e+09, %v2987
        %v2990 = vsel %vm948, %v2989, -inf
        %2991 = vmax.xlane.f32.xlu0 %v2990
        %v2992 = vpop.xlane.xlu0 %2991
        %v2993 = vsub.f32 %v2989, %v2992
        %v2994 = vmul.f32 %v2993, 1.442695
        %v2995 = vpow.pop %v2994
        %v2996 = vsel %vm948, %v2995, 0.0
        %2997 = vadd.xlane.f32.xlu0 %v2996
        %v2998 = vpop.xlane.xlu0 %2997
        %v2999 = vrcp.pop %v2998
        %v3000 = vmul.f32 %v2995, %v2999
        %3001 = vrot.lane.b32.xlu0 %v2572, 112
        %v3002 = vpop.permute.xlu0 %3001
        %v3005 = vsel %vm948, %v3000, 0
        %3007 = vmatprep.subr.mxu0 0.0
        %3008 = vmatpush1.msra.mxu0 %v3002
        %3009 = vmatprep.subr.mxu0 0.0
        %3010 = vmatpush1.msra.mxu0 0.0
        %3011 = vmatprep.subr.mxu0 0.0
        %3012 = vmatpush1.msra.mxu0 0.0
        %3013 = vmatprep.subr.mxu0 0.0
        %3014 = vmatpush1.msra.mxu0 0.0
        %3015 = vmatprep.subr.mxu0 0.0
        %3016 = vmatpush1.msra.mxu0 0.0
        %3017 = vmatprep.subr.mxu0 0.0
        %3018 = vmatpush1.msra.mxu0 0.0
        %3019 = vmatprep.subr.mxu0 0.0
        %3020 = vmatpush1.msra.mxu0 0.0
        %3021 = vmatprep.subr.mxu0 0.0
        %3022 = vmatpush1.msra.mxu0 0.0
        %3023 = vmatprep.subr.mxu0 0.0
        %3024 = vmatpush1.msra.mxu0 0.0
        %3025 = vmatprep.subr.mxu0 0.0
        %3026 = vmatpush1.msra.mxu0 0.0
        %3027 = vmatprep.subr.mxu0 0.0
        %3028 = vmatpush1.msra.mxu0 0.0
        %3029 = vmatprep.subr.mxu0 0.0
        %3030 = vmatpush1.msra.mxu0 0.0
        %3031 = vmatprep.subr.mxu0 0.0
        %3032 = vmatpush1.msra.mxu0 0.0
        %3033 = vmatprep.subr.mxu0 0.0
        %3034 = vmatpush1.msra.mxu0 0.0
        %3035 = vmatprep.subr.mxu0 0.0
        %3036 = vmatpush1.msra.mxu0 0.0
        %3037 = vmatprep.subr.mxu0 0.0
        %3038 = vmatpush1.msra.mxu0 0.0
        %3039 = vmatprep.subr.mxu0 0.0
        %3040 = vmatpush1.msra.mxu0 0.0
        %3041 = vmatprep.subr.mxu0 0.0
        %3042 = vmatpush1.msra.mxu0 0.0
        %3043 = vmatprep.subr.mxu0 0.0
        %3044 = vmatpush1.msra.mxu0 0.0
        %3045 = vmatprep.subr.mxu0 0.0
        %3046 = vmatpush1.msra.mxu0 0.0
        %3047 = vmatprep.subr.mxu0 0.0
        %3048 = vmatpush1.msra.mxu0 0.0
        %3049 = vmatprep.subr.mxu0 0.0
        %3050 = vmatpush1.msra.mxu0 0.0
        %3051 = vmatprep.subr.mxu0 0.0
        %3052 = vmatpush1.msra.mxu0 0.0
        %3053 = vmatprep.subr.mxu0 0.0
        %3054 = vmatpush1.msra.mxu0 0.0
        %3055 = vmatprep.subr.mxu0 0.0
        %3056 = vmatpush1.msra.mxu0 0.0
        %3057 = vmatprep.subr.mxu0 0.0
        %3058 = vmatpush1.msra.mxu0 0.0
        %3059 = vmatprep.subr.mxu0 0.0
        %3060 = vmatpush1.msra.mxu0 0.0
        %3061 = vmatprep.subr.mxu0 0.0
        %3062 = vmatpush1.msra.mxu0 0.0
        %3063 = vmatprep.subr.mxu0 0.0
        %3064 = vmatpush1.msra.mxu0 0.0
        %3065 = vmatprep.subr.mxu0 0.0
        %3066 = vmatpush1.msra.mxu0 0.0
        %3067 = vmatprep.subr.mxu0 0.0
        %3068 = vmatpush1.msra.mxu0 0.0
        %3069 = vmatprep.subr.mxu0 0.0
        %3070 = vmatpush1.msra.mxu0 0.0
        %3071 = vmatprep.mubr.f32.mxu0 0.0
        %3072 = vmatmul.mubr.f32.gmra.mrb[0].mxu0 %v3005
        %v3073 = vpop.f32.mrb[0].mxu0
        %v3074 = vadd.f32 0.0, %v3073
        %v3075 = vpop.f32.mrb[0].mxu0
        %3076 = vdwg.mxu0
        %3077 = vrot.lane.b32.xlu0 %v2464, 104
        %v3078 = vpop.permute.xlu0 %3077
        %3079 = vrot.lane.b32.xlu0 %v2520, 104
        %v3080 = vpop.permute.xlu0 %3079
        %v3081 = vsel %vm948, %v3078, 0
        %v3083 = vsel %vm948, %v3080, 0
        %3085 = vmatprep.subr.mxu0 0.0
        %3086 = vmatpush1.xpose.msra.mxu0 %v3083
        %3087 = vmatprep.subr.mxu0 0.0
        %3088 = vmatpush1.xpose.msra.mxu0 0.0
        %3089 = vmatprep.subr.mxu0 0.0
        %3090 = vmatpush1.xpose.msra.mxu0 0.0
        %3091 = vmatprep.subr.mxu0 0.0
        %3092 = vmatpush1.xpose.msra.mxu0 0.0
        %3093 = vmatprep.subr.mxu0 0.0
        %3094 = vmatpush1.xpose.msra.mxu0 0.0
        %3095 = vmatprep.subr.mxu0 0.0
        %3096 = vmatpush1.xpose.msra.mxu0 0.0
        %3097 = vmatprep.subr.mxu0 0.0
        %3098 = vmatpush1.xpose.msra.mxu0 0.0
        %3099 = vmatprep.subr.mxu0 0.0
        %3100 = vmatpush1.xpose.msra.mxu0 0.0
        %3101 = vmatprep.subr.mxu0 0.0
        %3102 = vmatpush1.xpose.msra.mxu0 0.0
        %3103 = vmatprep.subr.mxu0 0.0
        %3104 = vmatpush1.xpose.msra.mxu0 0.0
        %3105 = vmatprep.subr.mxu0 0.0
        %3106 = vmatpush1.xpose.msra.mxu0 0.0
        %3107 = vmatprep.subr.mxu0 0.0
        %3108 = vmatpush1.xpose.msra.mxu0 0.0
        %3109 = vmatprep.subr.mxu0 0.0
        %3110 = vmatpush1.xpose.msra.mxu0 0.0
        %3111 = vmatprep.subr.mxu0 0.0
        %3112 = vmatpush1.xpose.msra.mxu0 0.0
        %3113 = vmatprep.subr.mxu0 0.0
        %3114 = vmatpush1.xpose.msra.mxu0 0.0
        %3115 = vmatprep.subr.mxu0 0.0
        %3116 = vmatpush1.xpose.msra.mxu0 0.0
        %3117 = vmatprep.subr.mxu0 0.0
        %3118 = vmatpush1.xpose.msra.mxu0 0.0
        %3119 = vmatprep.subr.mxu0 0.0
        %3120 = vmatpush1.xpose.msra.mxu0 0.0
        %3121 = vmatprep.subr.mxu0 0.0
        %3122 = vmatpush1.xpose.msra.mxu0 0.0
        %3123 = vmatprep.subr.mxu0 0.0
        %3124 = vmatpush1.xpose.msra.mxu0 0.0
        %3125 = vmatprep.subr.mxu0 0.0
        %3126 = vmatpush1.xpose.msra.mxu0 0.0
        %3127 = vmatprep.subr.mxu0 0.0
        %3128 = vmatpush1.xpose.msra.mxu0 0.0
        %3129 = vmatprep.subr.mxu0 0.0
        %3130 = vmatpush1.xpose.msra.mxu0 0.0
        %3131 = vmatprep.subr.mxu0 0.0
        %3132 = vmatpush1.xpose.msra.mxu0 0.0
        %3133 = vmatprep.subr.mxu0 0.0
        %3134 = vmatpush1.xpose.msra.mxu0 0.0
        %3135 = vmatprep.subr.mxu0 0.0
        %3136 = vmatpush1.xpose.msra.mxu0 0.0
        %3137 = vmatprep.subr.mxu0 0.0
        %3138 = vmatpush1.xpose.msra.mxu0 0.0
        %3139 = vmatprep.subr.mxu0 0.0
        %3140 = vmatpush1.xpose.msra.mxu0 0.0
        %3141 = vmatprep.subr.mxu0 0.0
        %3142 = vmatpush1.xpose.msra.mxu0 0.0
        %3143 = vmatprep.subr.mxu0 0.0
        %3144 = vmatpush1.xpose.msra.mxu0 0.0
        %3145 = vmatprep.subr.mxu0 0.0
        %3146 = vmatpush1.xpose.msra.mxu0 0.0
        %3147 = vmatprep.subr.mxu0 0.0
        %3148 = vmatpush1.xpose.msra.mxu0 0.0
        %3149 = vmatprep.mubr.f32.mxu0 0.0
        %3150 = vmatmul.mubr.f32.gmra.mrb[0].mxu0 %v3081
        %v3151 = vpop.f32.mrb[0].mxu0
        %v3152 = vadd.f32 0.0, %v3151
        %v3153 = vpop.f32.mrb[0].mxu0
        %3154 = vdwg.mxu0
        %v3155 = vmul.f32 %v3152, 0.35355338
        %vm3156 = vcmp.ne.f32.partialorder %v722, 0.0
        %v3157 = vsel %vm3156, -1e+09, %v3155
        %v3158 = vsel %vm948, %v3157, -inf
        %3159 = vmax.xlane.f32.xlu0 %v3158
        %v3160 = vpop.xlane.xlu0 %3159
        %v3161 = vsub.f32 %v3157, %v3160
        %v3162 = vmul.f32 %v3161, 1.442695
        %v3163 = vpow.pop %v3162
        %v3164 = vsel %vm948, %v3163, 0.0
        %3165 = vadd.xlane.f32.xlu0 %v3164
        %v3166 = vpop.xlane.xlu0 %3165
        %v3167 = vrcp.pop %v3166
        %v3168 = vmul.f32 %v3163, %v3167
        %3169 = vrot.lane.b32.xlu0 %v2572, 104
        %v3170 = vpop.permute.xlu0 %3169
        %v3173 = vsel %vm948, %v3168, 0
        %3175 = vmatprep.subr.mxu0 0.0
        %3176 = vmatpush1.msra.mxu0 %v3170
        %3177 = vmatprep.subr.mxu0 0.0
        %3178 = vmatpush1.msra.mxu0 0.0
        %3179 = vmatprep.subr.mxu0 0.0
        %3180 = vmatpush1.msra.mxu0 0.0
        %3181 = vmatprep.subr.mxu0 0.0
        %3182 = vmatpush1.msra.mxu0 0.0
        %3183 = vmatprep.subr.mxu0 0.0
        %3184 = vmatpush1.msra.mxu0 0.0
        %3185 = vmatprep.subr.mxu0 0.0
        %3186 = vmatpush1.msra.mxu0 0.0
        %3187 = vmatprep.subr.mxu0 0.0
        %3188 = vmatpush1.msra.mxu0 0.0
        %3189 = vmatprep.subr.mxu0 0.0
        %3190 = vmatpush1.msra.mxu0 0.0
        %3191 = vmatprep.subr.mxu0 0.0
        %3192 = vmatpush1.msra.mxu0 0.0
        %3193 = vmatprep.subr.mxu0 0.0
        %3194 = vmatpush1.msra.mxu0 0.0
        %3195 = vmatprep.subr.mxu0 0.0
        %3196 = vmatpush1.msra.mxu0 0.0
        %3197 = vmatprep.subr.mxu0 0.0
        %3198 = vmatpush1.msra.mxu0 0.0
        %3199 = vmatprep.subr.mxu0 0.0
        %3200 = vmatpush1.msra.mxu0 0.0
        %3201 = vmatprep.subr.mxu0 0.0
        %3202 = vmatpush1.msra.mxu0 0.0
        %3203 = vmatprep.subr.mxu0 0.0
        %3204 = vmatpush1.msra.mxu0 0.0
        %3205 = vmatprep.subr.mxu0 0.0
        %3206 = vmatpush1.msra.mxu0 0.0
        %3207 = vmatprep.subr.mxu0 0.0
        %3208 = vmatpush1.msra.mxu0 0.0
        %3209 = vmatprep.subr.mxu0 0.0
        %3210 = vmatpush1.msra.mxu0 0.0
        %3211 = vmatprep.subr.mxu0 0.0
        %3212 = vmatpush1.msra.mxu0 0.0
        %3213 = vmatprep.subr.mxu0 0.0
        %3214 = vmatpush1.msra.mxu0 0.0
        %3215 = vmatprep.subr.mxu0 0.0
        %3216 = vmatpush1.msra.mxu0 0.0
        %3217 = vmatprep.subr.mxu0 0.0
        %3218 = vmatpush1.msra.mxu0 0.0
        %3219 = vmatprep.subr.mxu0 0.0
        %3220 = vmatpush1.msra.mxu0 0.0
        %3221 = vmatprep.subr.mxu0 0.0
        %3222 = vmatpush1.msra.mxu0 0.0
        %3223 = vmatprep.subr.mxu0 0.0
        %3224 = vmatpush1.msra.mxu0 0.0
        %3225 = vmatprep.subr.mxu0 0.0
        %3226 = vmatpush1.msra.mxu0 0.0
        %3227 = vmatprep.subr.mxu0 0.0
        %3228 = vmatpush1.msra.mxu0 0.0
        %3229 = vmatprep.subr.mxu0 0.0
        %3230 = vmatpush1.msra.mxu0 0.0
        %3231 = vmatprep.subr.mxu0 0.0
        %3232 = vmatpush1.msra.mxu0 0.0
        %3233 = vmatprep.subr.mxu0 0.0
        %3234 = vmatpush1.msra.mxu0 0.0
        %3235 = vmatprep.subr.mxu0 0.0
        %3236 = vmatpush1.msra.mxu0 0.0
        %3237 = vmatprep.subr.mxu0 0.0
        %3238 = vmatpush1.msra.mxu0 0.0
        %3239 = vmatprep.mubr.f32.mxu0 0.0
        %3240 = vmatmul.mubr.f32.gmra.mrb[0].mxu0 %v3173
        %v3241 = vpop.f32.mrb[0].mxu0
        %v3242 = vadd.f32 0.0, %v3241
        %v3243 = vpop.f32.mrb[0].mxu0
        %3244 = vdwg.mxu0
        %3245 = vrot.lane.b32.xlu0 %v2464, 96
        %v3246 = vpop.permute.xlu0 %3245
        %3247 = vrot.lane.b32.xlu0 %v2520, 96
        %v3248 = vpop.permute.xlu0 %3247
        %v3249 = vsel %vm948, %v3246, 0
        %v3251 = vsel %vm948, %v3248, 0
        %3253 = vmatprep.subr.mxu0 0.0
        %3254 = vmatpush1.xpose.msra.mxu0 %v3251
        %3255 = vmatprep.subr.mxu0 0.0
        %3256 = vmatpush1.xpose.msra.mxu0 0.0
        %3257 = vmatprep.subr.mxu0 0.0
        %3258 = vmatpush1.xpose.msra.mxu0 0.0
        %3259 = vmatprep.subr.mxu0 0.0
        %3260 = vmatpush1.xpose.msra.mxu0 0.0
        %3261 = vmatprep.subr.mxu0 0.0
        %3262 = vmatpush1.xpose.msra.mxu0 0.0
        %3263 = vmatprep.subr.mxu0 0.0
        %3264 = vmatpush1.xpose.msra.mxu0 0.0
        %3265 = vmatprep.subr.mxu0 0.0
        %3266 = vmatpush1.xpose.msra.mxu0 0.0
        %3267 = vmatprep.subr.mxu0 0.0
        %3268 = vmatpush1.xpose.msra.mxu0 0.0
        %3269 = vmatprep.subr.mxu0 0.0
        %3270 = vmatpush1.xpose.msra.mxu0 0.0
        %3271 = vmatprep.subr.mxu0 0.0
        %3272 = vmatpush1.xpose.msra.mxu0 0.0
        %3273 = vmatprep.subr.mxu0 0.0
        %3274 = vmatpush1.xpose.msra.mxu0 0.0
        %3275 = vmatprep.subr.mxu0 0.0
        %3276 = vmatpush1.xpose.msra.mxu0 0.0
        %3277 = vmatprep.subr.mxu0 0.0
        %3278 = vmatpush1.xpose.msra.mxu0 0.0
        %3279 = vmatprep.subr.mxu0 0.0
        %3280 = vmatpush1.xpose.msra.mxu0 0.0
        %3281 = vmatprep.subr.mxu0 0.0
        %3282 = vmatpush1.xpose.msra.mxu0 0.0
        %3283 = vmatprep.subr.mxu0 0.0
        %3284 = vmatpush1.xpose.msra.mxu0 0.0
        %3285 = vmatprep.subr.mxu0 0.0
        %3286 = vmatpush1.xpose.msra.mxu0 0.0
        %3287 = vmatprep.subr.mxu0 0.0
        %3288 = vmatpush1.xpose.msra.mxu0 0.0
        %3289 = vmatprep.subr.mxu0 0.0
        %3290 = vmatpush1.xpose.msra.mxu0 0.0
        %3291 = vmatprep.subr.mxu0 0.0
        %3292 = vmatpush1.xpose.msra.mxu0 0.0
        %3293 = vmatprep.subr.mxu0 0.0
        %3294 = vmatpush1.xpose.msra.mxu0 0.0
        %3295 = vmatprep.subr.mxu0 0.0
        %3296 = vmatpush1.xpose.msra.mxu0 0.0
        %3297 = vmatprep.subr.mxu0 0.0
        %3298 = vmatpush1.xpose.msra.mxu0 0.0
        %3299 = vmatprep.subr.mxu0 0.0
        %3300 = vmatpush1.xpose.msra.mxu0 0.0
        %3301 = vmatprep.subr.mxu0 0.0
        %3302 = vmatpush1.xpose.msra.mxu0 0.0
        %3303 = vmatprep.subr.mxu0 0.0
        %3304 = vmatpush1.xpose.msra.mxu0 0.0
        %3305 = vmatprep.subr.mxu0 0.0
        %3306 = vmatpush1.xpose.msra.mxu0 0.0
        %3307 = vmatprep.subr.mxu0 0.0
        %3308 = vmatpush1.xpose.msra.mxu0 0.0
        %3309 = vmatprep.subr.mxu0 0.0
        %3310 = vmatpush1.xpose.msra.mxu0 0.0
        %3311 = vmatprep.subr.mxu0 0.0
        %3312 = vmatpush1.xpose.msra.mxu0 0.0
        %3313 = vmatprep.subr.mxu0 0.0
        %3314 = vmatpush1.xpose.msra.mxu0 0.0
        %3315 = vmatprep.subr.mxu0 0.0
        %3316 = vmatpush1.xpose.msra.mxu0 0.0
        %3317 = vmatprep.mubr.f32.mxu0 0.0
        %3318 = vmatmul.mubr.f32.gmra.mrb[0].mxu0 %v3249
        %v3319 = vpop.f32.mrb[0].mxu0
        %v3320 = vadd.f32 0.0, %v3319
        %v3321 = vpop.f32.mrb[0].mxu0
        %3322 = vdwg.mxu0
        %v3323 = vmul.f32 %v3320, 0.35355338
        %vm3324 = vcmp.ne.f32.partialorder %v723, 0.0
        %v3325 = vsel %vm3324, -1e+09, %v3323
        %v3326 = vsel %vm948, %v3325, -inf
        %3327 = vmax.xlane.f32.xlu0 %v3326
        %v3328 = vpop.xlane.xlu0 %3327
        %v3329 = vsub.f32 %v3325, %v3328
        %v3330 = vmul.f32 %v3329, 1.442695
        %v3331 = vpow.pop %v3330
        %v3332 = vsel %vm948, %v3331, 0.0
        %3333 = vadd.xlane.f32.xlu0 %v3332
        %v3334 = vpop.xlane.xlu0 %3333
        %v3335 = vrcp.pop %v3334
        %v3336 = vmul.f32 %v3331, %v3335
        %3337 = vrot.lane.b32.xlu0 %v2572, 96
        %v3338 = vpop.permute.xlu0 %3337
        %v3341 = vsel %vm948, %v3336, 0
        %3343 = vmatprep.subr.mxu0 0.0
        %3344 = vmatpush1.msra.mxu0 %v3338
        %3345 = vmatprep.subr.mxu0 0.0
        %3346 = vmatpush1.msra.mxu0 0.0
        %3347 = vmatprep.subr.mxu0 0.0
        %3348 = vmatpush1.msra.mxu0 0.0
        %3349 = vmatprep.subr.mxu0 0.0
        %3350 = vmatpush1.msra.mxu0 0.0
        %3351 = vmatprep.subr.mxu0 0.0
        %3352 = vmatpush1.msra.mxu0 0.0
        %3353 = vmatprep.subr.mxu0 0.0
        %3354 = vmatpush1.msra.mxu0 0.0
        %3355 = vmatprep.subr.mxu0 0.0
        %3356 = vmatpush1.msra.mxu0 0.0
        %3357 = vmatprep.subr.mxu0 0.0
        %3358 = vmatpush1.msra.mxu0 0.0
        %3359 = vmatprep.subr.mxu0 0.0
        %3360 = vmatpush1.msra.mxu0 0.0
        %3361 = vmatprep.subr.mxu0 0.0
        %3362 = vmatpush1.msra.mxu0 0.0
        %3363 = vmatprep.subr.mxu0 0.0
        %3364 = vmatpush1.msra.mxu0 0.0
        %3365 = vmatprep.subr.mxu0 0.0
        %3366 = vmatpush1.msra.mxu0 0.0
        %3367 = vmatprep.subr.mxu0 0.0
        %3368 = vmatpush1.msra.mxu0 0.0
        %3369 = vmatprep.subr.mxu0 0.0
        %3370 = vmatpush1.msra.mxu0 0.0
        %3371 = vmatprep.subr.mxu0 0.0
        %3372 = vmatpush1.msra.mxu0 0.0
        %3373 = vmatprep.subr.mxu0 0.0
        %3374 = vmatpush1.msra.mxu0 0.0
        %3375 = vmatprep.subr.mxu0 0.0
        %3376 = vmatpush1.msra.mxu0 0.0
        %3377 = vmatprep.subr.mxu0 0.0
        %3378 = vmatpush1.msra.mxu0 0.0
        %3379 = vmatprep.subr.mxu0 0.0
        %3380 = vmatpush1.msra.mxu0 0.0
        %3381 = vmatprep.subr.mxu0 0.0
        %3382 = vmatpush1.msra.mxu0 0.0
        %3383 = vmatprep.subr.mxu0 0.0
        %3384 = vmatpush1.msra.mxu0 0.0
        %3385 = vmatprep.subr.mxu0 0.0
        %3386 = vmatpush1.msra.mxu0 0.0
        %3387 = vmatprep.subr.mxu0 0.0
        %3388 = vmatpush1.msra.mxu0 0.0
        %3389 = vmatprep.subr.mxu0 0.0
        %3390 = vmatpush1.msra.mxu0 0.0
        %3391 = vmatprep.subr.mxu0 0.0
        %3392 = vmatpush1.msra.mxu0 0.0
        %3393 = vmatprep.subr.mxu0 0.0
        %3394 = vmatpush1.msra.mxu0 0.0
        %3395 = vmatprep.subr.mxu0 0.0
        %3396 = vmatpush1.msra.mxu0 0.0
        %3397 = vmatprep.subr.mxu0 0.0
        %3398 = vmatpush1.msra.mxu0 0.0
        %3399 = vmatprep.subr.mxu0 0.0
        %3400 = vmatpush1.msra.mxu0 0.0
        %3401 = vmatprep.subr.mxu0 0.0
        %3402 = vmatpush1.msra.mxu0 0.0
        %3403 = vmatprep.subr.mxu0 0.0
        %3404 = vmatpush1.msra.mxu0 0.0
        %3405 = vmatprep.subr.mxu0 0.0
        %3406 = vmatpush1.msra.mxu0 0.0
        %3407 = vmatprep.mubr.f32.mxu0 0.0
        %3408 = vmatmul.mubr.f32.gmra.mrb[0].mxu0 %v3341
        %v3409 = vpop.f32.mrb[0].mxu0
        %v3410 = vadd.f32 0.0, %v3409
        %v3411 = vpop.f32.mrb[0].mxu0
        %3412 = vdwg.mxu0
        %3413 = vrot.lane.b32.xlu0 %v2464, 88
        %v3414 = vpop.permute.xlu0 %3413
        %3415 = vrot.lane.b32.xlu0 %v2520, 88
        %v3416 = vpop.permute.xlu0 %3415
        %v3417 = vsel %vm948, %v3414, 0
        %v3419 = vsel %vm948, %v3416, 0
        %3421 = vmatprep.subr.mxu0 0.0
        %3422 = vmatpush1.xpose.msra.mxu0 %v3419
        %3423 = vmatprep.subr.mxu0 0.0
        %3424 = vmatpush1.xpose.msra.mxu0 0.0
        %3425 = vmatprep.subr.mxu0 0.0
        %3426 = vmatpush1.xpose.msra.mxu0 0.0
        %3427 = vmatprep.subr.mxu0 0.0
        %3428 = vmatpush1.xpose.msra.mxu0 0.0
        %3429 = vmatprep.subr.mxu0 0.0
        %3430 = vmatpush1.xpose.msra.mxu0 0.0
        %3431 = vmatprep.subr.mxu0 0.0
        %3432 = vmatpush1.xpose.msra.mxu0 0.0
        %3433 = vmatprep.subr.mxu0 0.0
        %3434 = vmatpush1.xpose.msra.mxu0 0.0
        %3435 = vmatprep.subr.mxu0 0.0
        %3436 = vmatpush1.xpose.msra.mxu0 0.0
        %3437 = vmatprep.subr.mxu0 0.0
        %3438 = vmatpush1.xpose.msra.mxu0 0.0
        %3439 = vmatprep.subr.mxu0 0.0
        %3440 = vmatpush1.xpose.msra.mxu0 0.0
        %3441 = vmatprep.subr.mxu0 0.0
        %3442 = vmatpush1.xpose.msra.mxu0 0.0
        %3443 = vmatprep.subr.mxu0 0.0
        %3444 = vmatpush1.xpose.msra.mxu0 0.0
        %3445 = vmatprep.subr.mxu0 0.0
        %3446 = vmatpush1.xpose.msra.mxu0 0.0
        %3447 = vmatprep.subr.mxu0 0.0
        %3448 = vmatpush1.xpose.msra.mxu0 0.0
        %3449 = vmatprep.subr.mxu0 0.0
        %3450 = vmatpush1.xpose.msra.mxu0 0.0
        %3451 = vmatprep.subr.mxu0 0.0
        %3452 = vmatpush1.xpose.msra.mxu0 0.0
        %3453 = vmatprep.subr.mxu0 0.0
        %3454 = vmatpush1.xpose.msra.mxu0 0.0
        %3455 = vmatprep.subr.mxu0 0.0
        %3456 = vmatpush1.xpose.msra.mxu0 0.0
        %3457 = vmatprep.subr.mxu0 0.0
        %3458 = vmatpush1.xpose.msra.mxu0 0.0
        %3459 = vmatprep.subr.mxu0 0.0
        %3460 = vmatpush1.xpose.msra.mxu0 0.0
        %3461 = vmatprep.subr.mxu0 0.0
        %3462 = vmatpush1.xpose.msra.mxu0 0.0
        %3463 = vmatprep.subr.mxu0 0.0
        %3464 = vmatpush1.xpose.msra.mxu0 0.0
        %3465 = vmatprep.subr.mxu0 0.0
        %3466 = vmatpush1.xpose.msra.mxu0 0.0
        %3467 = vmatprep.subr.mxu0 0.0
        %3468 = vmatpush1.xpose.msra.mxu0 0.0
        %3469 = vmatprep.subr.mxu0 0.0
        %3470 = vmatpush1.xpose.msra.mxu0 0.0
        %3471 = vmatprep.subr.mxu0 0.0
        %3472 = vmatpush1.xpose.msra.mxu0 0.0
        %3473 = vmatprep.subr.mxu0 0.0
        %3474 = vmatpush1.xpose.msra.mxu0 0.0
        %3475 = vmatprep.subr.mxu0 0.0
        %3476 = vmatpush1.xpose.msra.mxu0 0.0
        %3477 = vmatprep.subr.mxu0 0.0
        %3478 = vmatpush1.xpose.msra.mxu0 0.0
        %3479 = vmatprep.subr.mxu0 0.0
        %3480 = vmatpush1.xpose.msra.mxu0 0.0
        %3481 = vmatprep.subr.mxu0 0.0
        %3482 = vmatpush1.xpose.msra.mxu0 0.0
        %3483 = vmatprep.subr.mxu0 0.0
        %3484 = vmatpush1.xpose.msra.mxu0 0.0
        %3485 = vmatprep.mubr.f32.mxu0 0.0
        %3486 = vmatmul.mubr.f32.gmra.mrb[0].mxu0 %v3417
        %v3487 = vpop.f32.mrb[0].mxu0
        %v3488 = vadd.f32 0.0, %v3487
        %v3489 = vpop.f32.mrb[0].mxu0
        %3490 = vdwg.mxu0
        %v3491 = vmul.f32 %v3488, 0.35355338
        %vm3492 = vcmp.ne.f32.partialorder %v724, 0.0
        %v3493 = vsel %vm3492, -1e+09, %v3491
        %v3494 = vsel %vm948, %v3493, -inf
        %3495 = vmax.xlane.f32.xlu0 %v3494
        %v3496 = vpop.xlane.xlu0 %3495
        %v3497 = vsub.f32 %v3493, %v3496
        %v3498 = vmul.f32 %v3497, 1.442695
        %v3499 = vpow.pop %v3498
        %v3500 = vsel %vm948, %v3499, 0.0
        %3501 = vadd.xlane.f32.xlu0 %v3500
        %v3502 = vpop.xlane.xlu0 %3501
        %v3503 = vrcp.pop %v3502
        %v3504 = vmul.f32 %v3499, %v3503
        %3505 = vrot.lane.b32.xlu0 %v2572, 88
        %v3506 = vpop.permute.xlu0 %3505
        %v3509 = vsel %vm948, %v3504, 0
        %3511 = vmatprep.subr.mxu0 0.0
        %3512 = vmatpush1.msra.mxu0 %v3506
        %3513 = vmatprep.subr.mxu0 0.0
        %3514 = vmatpush1.msra.mxu0 0.0
        %3515 = vmatprep.subr.mxu0 0.0
        %3516 = vmatpush1.msra.mxu0 0.0
        %3517 = vmatprep.subr.mxu0 0.0
        %3518 = vmatpush1.msra.mxu0 0.0
        %3519 = vmatprep.subr.mxu0 0.0
        %3520 = vmatpush1.msra.mxu0 0.0
        %3521 = vmatprep.subr.mxu0 0.0
        %3522 = vmatpush1.msra.mxu0 0.0
        %3523 = vmatprep.subr.mxu0 0.0
        %3524 = vmatpush1.msra.mxu0 0.0
        %3525 = vmatprep.subr.mxu0 0.0
        %3526 = vmatpush1.msra.mxu0 0.0
        %3527 = vmatprep.subr.mxu0 0.0
        %3528 = vmatpush1.msra.mxu0 0.0
        %3529 = vmatprep.subr.mxu0 0.0
        %3530 = vmatpush1.msra.mxu0 0.0
        %3531 = vmatprep.subr.mxu0 0.0
        %3532 = vmatpush1.msra.mxu0 0.0
        %3533 = vmatprep.subr.mxu0 0.0
        %3534 = vmatpush1.msra.mxu0 0.0
        %3535 = vmatprep.subr.mxu0 0.0
        %3536 = vmatpush1.msra.mxu0 0.0
        %3537 = vmatprep.subr.mxu0 0.0
        %3538 = vmatpush1.msra.mxu0 0.0
        %3539 = vmatprep.subr.mxu0 0.0
        %3540 = vmatpush1.msra.mxu0 0.0
        %3541 = vmatprep.subr.mxu0 0.0
        %3542 = vmatpush1.msra.mxu0 0.0
        %3543 = vmatprep.subr.mxu0 0.0
        %3544 = vmatpush1.msra.mxu0 0.0
        %3545 = vmatprep.subr.mxu0 0.0
        %3546 = vmatpush1.msra.mxu0 0.0
        %3547 = vmatprep.subr.mxu0 0.0
        %3548 = vmatpush1.msra.mxu0 0.0
        %3549 = vmatprep.subr.mxu0 0.0
        %3550 = vmatpush1.msra.mxu0 0.0
        %3551 = vmatprep.subr.mxu0 0.0
        %3552 = vmatpush1.msra.mxu0 0.0
        %3553 = vmatprep.subr.mxu0 0.0
        %3554 = vmatpush1.msra.mxu0 0.0
        %3555 = vmatprep.subr.mxu0 0.0
        %3556 = vmatpush1.msra.mxu0 0.0
        %3557 = vmatprep.subr.mxu0 0.0
        %3558 = vmatpush1.msra.mxu0 0.0
        %3559 = vmatprep.subr.mxu0 0.0
        %3560 = vmatpush1.msra.mxu0 0.0
        %3561 = vmatprep.subr.mxu0 0.0
        %3562 = vmatpush1.msra.mxu0 0.0
        %3563 = vmatprep.subr.mxu0 0.0
        %3564 = vmatpush1.msra.mxu0 0.0
        %3565 = vmatprep.subr.mxu0 0.0
        %3566 = vmatpush1.msra.mxu0 0.0
        %3567 = vmatprep.subr.mxu0 0.0
        %3568 = vmatpush1.msra.mxu0 0.0
        %3569 = vmatprep.subr.mxu0 0.0
        %3570 = vmatpush1.msra.mxu0 0.0
        %3571 = vmatprep.subr.mxu0 0.0
        %3572 = vmatpush1.msra.mxu0 0.0
        %3573 = vmatprep.subr.mxu0 0.0
        %3574 = vmatpush1.msra.mxu0 0.0
        %3575 = vmatprep.mubr.f32.mxu0 0.0
        %3576 = vmatmul.mubr.f32.gmra.mrb[0].mxu0 %v3509
        %v3577 = vpop.f32.mrb[0].mxu0
        %v3578 = vadd.f32 0.0, %v3577
        %v3579 = vpop.f32.mrb[0].mxu0
        %3580 = vdwg.mxu0
        %3581 = vrot.lane.b32.xlu0 %v2464, 80
        %v3582 = vpop.permute.xlu0 %3581
        %3583 = vrot.lane.b32.xlu0 %v2520, 80
        %v3584 = vpop.permute.xlu0 %3583
        %v3585 = vsel %vm948, %v3582, 0
        %v3587 = vsel %vm948, %v3584, 0
        %3589 = vmatprep.subr.mxu0 0.0
        %3590 = vmatpush1.xpose.msra.mxu0 %v3587
        %3591 = vmatprep.subr.mxu0 0.0
        %3592 = vmatpush1.xpose.msra.mxu0 0.0
        %3593 = vmatprep.subr.mxu0 0.0
        %3594 = vmatpush1.xpose.msra.mxu0 0.0
        %3595 = vmatprep.subr.mxu0 0.0
        %3596 = vmatpush1.xpose.msra.mxu0 0.0
        %3597 = vmatprep.subr.mxu0 0.0
        %3598 = vmatpush1.xpose.msra.mxu0 0.0
        %3599 = vmatprep.subr.mxu0 0.0
        %3600 = vmatpush1.xpose.msra.mxu0 0.0
        %3601 = vmatprep.subr.mxu0 0.0
        %3602 = vmatpush1.xpose.msra.mxu0 0.0
        %3603 = vmatprep.subr.mxu0 0.0
        %3604 = vmatpush1.xpose.msra.mxu0 0.0
        %3605 = vmatprep.subr.mxu0 0.0
        %3606 = vmatpush1.xpose.msra.mxu0 0.0
        %3607 = vmatprep.subr.mxu0 0.0
        %3608 = vmatpush1.xpose.msra.mxu0 0.0
        %3609 = vmatprep.subr.mxu0 0.0
        %3610 = vmatpush1.xpose.msra.mxu0 0.0
        %3611 = vmatprep.subr.mxu0 0.0
        %3612 = vmatpush1.xpose.msra.mxu0 0.0
        %3613 = vmatprep.subr.mxu0 0.0
        %3614 = vmatpush1.xpose.msra.mxu0 0.0
        %3615 = vmatprep.subr.mxu0 0.0
        %3616 = vmatpush1.xpose.msra.mxu0 0.0
        %3617 = vmatprep.subr.mxu0 0.0
        %3618 = vmatpush1.xpose.msra.mxu0 0.0
        %3619 = vmatprep.subr.mxu0 0.0
        %3620 = vmatpush1.xpose.msra.mxu0 0.0
        %3621 = vmatprep.subr.mxu0 0.0
        %3622 = vmatpush1.xpose.msra.mxu0 0.0
        %3623 = vmatprep.subr.mxu0 0.0
        %3624 = vmatpush1.xpose.msra.mxu0 0.0
        %3625 = vmatprep.subr.mxu0 0.0
        %3626 = vmatpush1.xpose.msra.mxu0 0.0
        %3627 = vmatprep.subr.mxu0 0.0
        %3628 = vmatpush1.xpose.msra.mxu0 0.0
        %3629 = vmatprep.subr.mxu0 0.0
        %3630 = vmatpush1.xpose.msra.mxu0 0.0
        %3631 = vmatprep.subr.mxu0 0.0
        %3632 = vmatpush1.xpose.msra.mxu0 0.0
        %3633 = vmatprep.subr.mxu0 0.0
        %3634 = vmatpush1.xpose.msra.mxu0 0.0
        %3635 = vmatprep.subr.mxu0 0.0
        %3636 = vmatpush1.xpose.msra.mxu0 0.0
        %3637 = vmatprep.subr.mxu0 0.0
        %3638 = vmatpush1.xpose.msra.mxu0 0.0
        %3639 = vmatprep.subr.mxu0 0.0
        %3640 = vmatpush1.xpose.msra.mxu0 0.0
        %3641 = vmatprep.subr.mxu0 0.0
        %3642 = vmatpush1.xpose.msra.mxu0 0.0
        %3643 = vmatprep.subr.mxu0 0.0
        %3644 = vmatpush1.xpose.msra.mxu0 0.0
        %3645 = vmatprep.subr.mxu0 0.0
        %3646 = vmatpush1.xpose.msra.mxu0 0.0
        %3647 = vmatprep.subr.mxu0 0.0
        %3648 = vmatpush1.xpose.msra.mxu0 0.0
        %3649 = vmatprep.subr.mxu0 0.0
        %3650 = vmatpush1.xpose.msra.mxu0 0.0
        %3651 = vmatprep.subr.mxu0 0.0
        %3652 = vmatpush1.xpose.msra.mxu0 0.0
        %3653 = vmatprep.mubr.f32.mxu0 0.0
        %3654 = vmatmul.mubr.f32.gmra.mrb[0].mxu0 %v3585
        %v3655 = vpop.f32.mrb[0].mxu0
        %v3656 = vadd.f32 0.0, %v3655
        %v3657 = vpop.f32.mrb[0].mxu0
        %3658 = vdwg.mxu0
        %v3659 = vmul.f32 %v3656, 0.35355338
        %vm3660 = vcmp.ne.f32.partialorder %v725, 0.0
        %v3661 = vsel %vm3660, -1e+09, %v3659
        %v3662 = vsel %vm948, %v3661, -inf
        %3663 = vmax.xlane.f32.xlu0 %v3662
        %v3664 = vpop.xlane.xlu0 %3663
        %v3665 = vsub.f32 %v3661, %v3664
        %v3666 = vmul.f32 %v3665, 1.442695
        %v3667 = vpow.pop %v3666
        %v3668 = vsel %vm948, %v3667, 0.0
        %3669 = vadd.xlane.f32.xlu0 %v3668
        %v3670 = vpop.xlane.xlu0 %3669
        %v3671 = vrcp.pop %v3670
        %v3672 = vmul.f32 %v3667, %v3671
        %3673 = vrot.lane.b32.xlu0 %v2572, 80
        %v3674 = vpop.permute.xlu0 %3673
        %v3677 = vsel %vm948, %v3672, 0
        %3679 = vmatprep.subr.mxu0 0.0
        %3680 = vmatpush1.msra.mxu0 %v3674
        %3681 = vmatprep.subr.mxu0 0.0
        %3682 = vmatpush1.msra.mxu0 0.0
        %3683 = vmatprep.subr.mxu0 0.0
        %3684 = vmatpush1.msra.mxu0 0.0
        %3685 = vmatprep.subr.mxu0 0.0
        %3686 = vmatpush1.msra.mxu0 0.0
        %3687 = vmatprep.subr.mxu0 0.0
        %3688 = vmatpush1.msra.mxu0 0.0
        %3689 = vmatprep.subr.mxu0 0.0
        %3690 = vmatpush1.msra.mxu0 0.0
        %3691 = vmatprep.subr.mxu0 0.0
        %3692 = vmatpush1.msra.mxu0 0.0
        %3693 = vmatprep.subr.mxu0 0.0
        %3694 = vmatpush1.msra.mxu0 0.0
        %3695 = vmatprep.subr.mxu0 0.0
        %3696 = vmatpush1.msra.mxu0 0.0
        %3697 = vmatprep.subr.mxu0 0.0
        %3698 = vmatpush1.msra.mxu0 0.0
        %3699 = vmatprep.subr.mxu0 0.0
        %3700 = vmatpush1.msra.mxu0 0.0
        %3701 = vmatprep.subr.mxu0 0.0
        %3702 = vmatpush1.msra.mxu0 0.0
        %3703 = vmatprep.subr.mxu0 0.0
        %3704 = vmatpush1.msra.mxu0 0.0
        %3705 = vmatprep.subr.mxu0 0.0
        %3706 = vmatpush1.msra.mxu0 0.0
        %3707 = vmatprep.subr.mxu0 0.0
        %3708 = vmatpush1.msra.mxu0 0.0
        %3709 = vmatprep.subr.mxu0 0.0
        %3710 = vmatpush1.msra.mxu0 0.0
        %3711 = vmatprep.subr.mxu0 0.0
        %3712 = vmatpush1.msra.mxu0 0.0
        %3713 = vmatprep.subr.mxu0 0.0
        %3714 = vmatpush1.msra.mxu0 0.0
        %3715 = vmatprep.subr.mxu0 0.0
        %3716 = vmatpush1.msra.mxu0 0.0
        %3717 = vmatprep.subr.mxu0 0.0
        %3718 = vmatpush1.msra.mxu0 0.0
        %3719 = vmatprep.subr.mxu0 0.0
        %3720 = vmatpush1.msra.mxu0 0.0
        %3721 = vmatprep.subr.mxu0 0.0
        %3722 = vmatpush1.msra.mxu0 0.0
        %3723 = vmatprep.subr.mxu0 0.0
        %3724 = vmatpush1.msra.mxu0 0.0
        %3725 = vmatprep.subr.mxu0 0.0
        %3726 = vmatpush1.msra.mxu0 0.0
        %3727 = vmatprep.subr.mxu0 0.0
        %3728 = vmatpush1.msra.mxu0 0.0
        %3729 = vmatprep.subr.mxu0 0.0
        %3730 = vmatpush1.msra.mxu0 0.0
        %3731 = vmatprep.subr.mxu0 0.0
        %3732 = vmatpush1.msra.mxu0 0.0
        %3733 = vmatprep.subr.mxu0 0.0
        %3734 = vmatpush1.msra.mxu0 0.0
        %3735 = vmatprep.subr.mxu0 0.0
        %3736 = vmatpush1.msra.mxu0 0.0
        %3737 = vmatprep.subr.mxu0 0.0
        %3738 = vmatpush1.msra.mxu0 0.0
        %3739 = vmatprep.subr.mxu0 0.0
        %3740 = vmatpush1.msra.mxu0 0.0
        %3741 = vmatprep.subr.mxu0 0.0
        %3742 = vmatpush1.msra.mxu0 0.0
        %3743 = vmatprep.mubr.f32.mxu0 0.0
        %3744 = vmatmul.mubr.f32.gmra.mrb[0].mxu0 %v3677
        %v3745 = vpop.f32.mrb[0].mxu0
        %v3746 = vadd.f32 0.0, %v3745
        %v3747 = vpop.f32.mrb[0].mxu0
        %3748 = vdwg.mxu0
        %3749 = vrot.lane.b32.xlu0 %v2464, 72
        %v3750 = vpop.permute.xlu0 %3749
        %3751 = vrot.lane.b32.xlu0 %v2520, 72
        %v3752 = vpop.permute.xlu0 %3751
        %v3753 = vsel %vm948, %v3750, 0
        %v3755 = vsel %vm948, %v3752, 0
        %3757 = vmatprep.subr.mxu0 0.0
        %3758 = vmatpush1.xpose.msra.mxu0 %v3755
        %3759 = vmatprep.subr.mxu0 0.0
        %3760 = vmatpush1.xpose.msra.mxu0 0.0
        %3761 = vmatprep.subr.mxu0 0.0
        %3762 = vmatpush1.xpose.msra.mxu0 0.0
        %3763 = vmatprep.subr.mxu0 0.0
        %3764 = vmatpush1.xpose.msra.mxu0 0.0
        %3765 = vmatprep.subr.mxu0 0.0
        %3766 = vmatpush1.xpose.msra.mxu0 0.0
        %3767 = vmatprep.subr.mxu0 0.0
        %3768 = vmatpush1.xpose.msra.mxu0 0.0
        %3769 = vmatprep.subr.mxu0 0.0
        %3770 = vmatpush1.xpose.msra.mxu0 0.0
        %3771 = vmatprep.subr.mxu0 0.0
        %3772 = vmatpush1.xpose.msra.mxu0 0.0
        %3773 = vmatprep.subr.mxu0 0.0
        %3774 = vmatpush1.xpose.msra.mxu0 0.0
        %3775 = vmatprep.subr.mxu0 0.0
        %3776 = vmatpush1.xpose.msra.mxu0 0.0
        %3777 = vmatprep.subr.mxu0 0.0
        %3778 = vmatpush1.xpose.msra.mxu0 0.0
        %3779 = vmatprep.subr.mxu0 0.0
        %3780 = vmatpush1.xpose.msra.mxu0 0.0
        %3781 = vmatprep.subr.mxu0 0.0
        %3782 = vmatpush1.xpose.msra.mxu0 0.0
        %3783 = vmatprep.subr.mxu0 0.0
        %3784 = vmatpush1.xpose.msra.mxu0 0.0
        %3785 = vmatprep.subr.mxu0 0.0
        %3786 = vmatpush1.xpose.msra.mxu0 0.0
        %3787 = vmatprep.subr.mxu0 0.0
        %3788 = vmatpush1.xpose.msra.mxu0 0.0
        %3789 = vmatprep.subr.mxu0 0.0
        %3790 = vmatpush1.xpose.msra.mxu0 0.0
        %3791 = vmatprep.subr.mxu0 0.0
        %3792 = vmatpush1.xpose.msra.mxu0 0.0
        %3793 = vmatprep.subr.mxu0 0.0
        %3794 = vmatpush1.xpose.msra.mxu0 0.0
        %3795 = vmatprep.subr.mxu0 0.0
        %3796 = vmatpush1.xpose.msra.mxu0 0.0
        %3797 = vmatprep.subr.mxu0 0.0
        %3798 = vmatpush1.xpose.msra.mxu0 0.0
        %3799 = vmatprep.subr.mxu0 0.0
        %3800 = vmatpush1.xpose.msra.mxu0 0.0
        %3801 = vmatprep.subr.mxu0 0.0
        %3802 = vmatpush1.xpose.msra.mxu0 0.0
        %3803 = vmatprep.subr.mxu0 0.0
        %3804 = vmatpush1.xpose.msra.mxu0 0.0
        %3805 = vmatprep.subr.mxu0 0.0
        %3806 = vmatpush1.xpose.msra.mxu0 0.0
        %3807 = vmatprep.subr.mxu0 0.0
        %3808 = vmatpush1.xpose.msra.mxu0 0.0
        %3809 = vmatprep.subr.mxu0 0.0
        %3810 = vmatpush1.xpose.msra.mxu0 0.0
        %3811 = vmatprep.subr.mxu0 0.0
        %3812 = vmatpush1.xpose.msra.mxu0 0.0
        %3813 = vmatprep.subr.mxu0 0.0
        %3814 = vmatpush1.xpose.msra.mxu0 0.0
        %3815 = vmatprep.subr.mxu0 0.0
        %3816 = vmatpush1.xpose.msra.mxu0 0.0
        %3817 = vmatprep.subr.mxu0 0.0
        %3818 = vmatpush1.xpose.msra.mxu0 0.0
        %3819 = vmatprep.subr.mxu0 0.0
        %3820 = vmatpush1.xpose.msra.mxu0 0.0
        %3821 = vmatprep.mubr.f32.mxu0 0.0
        %3822 = vmatmul.mubr.f32.gmra.mrb[0].mxu0 %v3753
        %v3823 = vpop.f32.mrb[0].mxu0
        %v3824 = vadd.f32 0.0, %v3823
        %v3825 = vpop.f32.mrb[0].mxu0
        %3826 = vdwg.mxu0
        %v3827 = vmul.f32 %v3824, 0.35355338
        %vm3828 = vcmp.ne.f32.partialorder %v726, 0.0
        %v3829 = vsel %vm3828, -1e+09, %v3827
        %v3830 = vsel %vm948, %v3829, -inf
        %3831 = vmax.xlane.f32.xlu0 %v3830
        %v3832 = vpop.xlane.xlu0 %3831
        %v3833 = vsub.f32 %v3829, %v3832
        %v3834 = vmul.f32 %v3833, 1.442695
        %v3835 = vpow.pop %v3834
        %v3836 = vsel %vm948, %v3835, 0.0
        %3837 = vadd.xlane.f32.xlu0 %v3836
        %v3838 = vpop.xlane.xlu0 %3837
        %v3839 = vrcp.pop %v3838
        %v3840 = vmul.f32 %v3835, %v3839
        %3841 = vrot.lane.b32.xlu0 %v2572, 72
        %v3842 = vpop.permute.xlu0 %3841
        %v3845 = vsel %vm948, %v3840, 0
        %3847 = vmatprep.subr.mxu0 0.0
        %3848 = vmatpush1.msra.mxu0 %v3842
        %3849 = vmatprep.subr.mxu0 0.0
        %3850 = vmatpush1.msra.mxu0 0.0
        %3851 = vmatprep.subr.mxu0 0.0
        %3852 = vmatpush1.msra.mxu0 0.0
        %3853 = vmatprep.subr.mxu0 0.0
        %3854 = vmatpush1.msra.mxu0 0.0
        %3855 = vmatprep.subr.mxu0 0.0
        %3856 = vmatpush1.msra.mxu0 0.0
        %3857 = vmatprep.subr.mxu0 0.0
        %3858 = vmatpush1.msra.mxu0 0.0
        %3859 = vmatprep.subr.mxu0 0.0
        %3860 = vmatpush1.msra.mxu0 0.0
        %3861 = vmatprep.subr.mxu0 0.0
        %3862 = vmatpush1.msra.mxu0 0.0
        %3863 = vmatprep.subr.mxu0 0.0
        %3864 = vmatpush1.msra.mxu0 0.0
        %3865 = vmatprep.subr.mxu0 0.0
        %3866 = vmatpush1.msra.mxu0 0.0
        %3867 = vmatprep.subr.mxu0 0.0
        %3868 = vmatpush1.msra.mxu0 0.0
        %3869 = vmatprep.subr.mxu0 0.0
        %3870 = vmatpush1.msra.mxu0 0.0
        %3871 = vmatprep.subr.mxu0 0.0
        %3872 = vmatpush1.msra.mxu0 0.0
        %3873 = vmatprep.subr.mxu0 0.0
        %3874 = vmatpush1.msra.mxu0 0.0
        %3875 = vmatprep.subr.mxu0 0.0
        %3876 = vmatpush1.msra.mxu0 0.0
        %3877 = vmatprep.subr.mxu0 0.0
        %3878 = vmatpush1.msra.mxu0 0.0
        %3879 = vmatprep.subr.mxu0 0.0
        %3880 = vmatpush1.msra.mxu0 0.0
        %3881 = vmatprep.subr.mxu0 0.0
        %3882 = vmatpush1.msra.mxu0 0.0
        %3883 = vmatprep.subr.mxu0 0.0
        %3884 = vmatpush1.msra.mxu0 0.0
        %3885 = vmatprep.subr.mxu0 0.0
        %3886 = vmatpush1.msra.mxu0 0.0
        %3887 = vmatprep.subr.mxu0 0.0
        %3888 = vmatpush1.msra.mxu0 0.0
        %3889 = vmatprep.subr.mxu0 0.0
        %3890 = vmatpush1.msra.mxu0 0.0
        %3891 = vmatprep.subr.mxu0 0.0
        %3892 = vmatpush1.msra.mxu0 0.0
        %3893 = vmatprep.subr.mxu0 0.0
        %3894 = vmatpush1.msra.mxu0 0.0
        %3895 = vmatprep.subr.mxu0 0.0
        %3896 = vmatpush1.msra.mxu0 0.0
        %3897 = vmatprep.subr.mxu0 0.0
        %3898 = vmatpush1.msra.mxu0 0.0
        %3899 = vmatprep.subr.mxu0 0.0
        %3900 = vmatpush1.msra.mxu0 0.0
        %3901 = vmatprep.subr.mxu0 0.0
        %3902 = vmatpush1.msra.mxu0 0.0
        %3903 = vmatprep.subr.mxu0 0.0
        %3904 = vmatpush1.msra.mxu0 0.0
        %3905 = vmatprep.subr.mxu0 0.0
        %3906 = vmatpush1.msra.mxu0 0.0
        %3907 = vmatprep.subr.mxu0 0.0
        %3908 = vmatpush1.msra.mxu0 0.0
        %3909 = vmatprep.subr.mxu0 0.0
        %3910 = vmatpush1.msra.mxu0 0.0
        %3911 = vmatprep.mubr.f32.mxu0 0.0
        %3912 = vmatmul.mubr.f32.gmra.mrb[0].mxu0 %v3845
        %v3913 = vpop.f32.mrb[0].mxu0
        %v3914 = vadd.f32 0.0, %v3913
        %v3915 = vpop.f32.mrb[0].mxu0
        %3916 = vdwg.mxu0
        %3918 = vrot.lane.b32.xlu0 %v2906, 8
        %v3919 = vpop.permute.xlu0 %3918
        %3922 = vrot.lane.b32.xlu0 %v3074, 16
        %v3923 = vpop.permute.xlu0 %3922
        %3926 = vrot.lane.b32.xlu0 %v3242, 24
        %v3927 = vpop.permute.xlu0 %3926
        %3930 = vrot.lane.b32.xlu0 %v3410, 32
        %v3931 = vpop.permute.xlu0 %3930
        %3934 = vrot.lane.b32.xlu0 %v3578, 40
        %v3935 = vpop.permute.xlu0 %3934
        %3938 = vrot.lane.b32.xlu0 %v3746, 48
        %v3939 = vpop.permute.xlu0 %3938
        %3942 = vrot.lane.b32.xlu0 %v3914, 56
        %v3943 = vpop.permute.xlu0 %3942
        %v3945 = vsel %vm948, %v2737, %v3919
        %v3946 = vsel %vm2318, %v3945, %v3923
        %v3947 = vsel %vm2320, %v3946, %v3927
        %v3948 = vsel %vm800, %v3947, %v3931
        %v3949 = vsel %vm2323, %v3948, %v3935
        %v3950 = vsel %vm2325, %v3949, %v3939
        %v3951 = vsel %vm2327, %v3950, %v3943
        %v3952 = vpack.c.bf16 %v3951, %v3951
        %v3961 = vunpack.c.l.b16 %v767
        %v3962 = vunpack.c.l.b16 %v768
        %v3963 = vunpack.c.l.b16 %v769
        %v3964 = vunpack.c.l.b16 %v770
        %v3965 = vunpack.c.l.b16 %v771
        %v3966 = vunpack.c.l.b16 %v772
        %v3967 = vunpack.c.l.b16 %v773
        %v3968 = vunpack.c.l.b16 %v774
        %v3969 = vpack.c.b16 %v3962, %v3961
        %v3970 = vpack.c.b16 %v3964, %v3963
        %v3971 = vpack.c.b16 %v3966, %v3965
        %v3972 = vpack.c.b16 %v3968, %v3967
        %v3978 = vsel %vm2354, %v3952, 0
        %3980 = vmatprep.subr.bf16.mxu0 0
        %3981 = vmatpush1.bf16.msra.mxu0 %v3969
        %3982 = vmatprep.subr.bf16.mxu0 0
        %3983 = vmatpush1.bf16.msra.mxu0 %v3970
        %3984 = vmatprep.subr.bf16.mxu0 0
        %3985 = vmatpush1.bf16.msra.mxu0 %v3971
        %3986 = vmatprep.subr.bf16.mxu0 0
        %3987 = vmatpush1.bf16.msra.mxu0 %v3972
        %3988 = vmatprep.subr.bf16.mxu0 0
        %3989 = vmatpush1.bf16.msra.mxu0 0
        %3990 = vmatprep.subr.bf16.mxu0 0
        %3991 = vmatpush1.bf16.msra.mxu0 0
        %3992 = vmatprep.subr.bf16.mxu0 0
        %3993 = vmatpush1.bf16.msra.mxu0 0
        %3994 = vmatprep.subr.bf16.mxu0 0
        %3995 = vmatpush1.bf16.msra.mxu0 0
        %3996 = vmatprep.subr.bf16.mxu0 0
        %3997 = vmatpush1.bf16.msra.mxu0 0
        %3998 = vmatprep.subr.bf16.mxu0 0
        %3999 = vmatpush1.bf16.msra.mxu0 0
        %4000 = vmatprep.subr.bf16.mxu0 0
        %4001 = vmatpush1.bf16.msra.mxu0 0
        %4002 = vmatprep.subr.bf16.mxu0 0
        %4003 = vmatpush1.bf16.msra.mxu0 0
        %4004 = vmatprep.subr.bf16.mxu0 0
        %4005 = vmatpush1.bf16.msra.mxu0 0
        %4006 = vmatprep.subr.bf16.mxu0 0
        %4007 = vmatpush1.bf16.msra.mxu0 0
        %4008 = vmatprep.subr.bf16.mxu0 0
        %4009 = vmatpush1.bf16.msra.mxu0 0
        %4010 = vmatprep.subr.bf16.mxu0 0
        %4011 = vmatpush1.bf16.msra.mxu0 0
        %4012 = vmatprep.mubr.bf16.mxu0 0
        %4013 = vmatmul.mubr.bf16.gmra.mrb[0].mxu0 %v3978
        %v4014 = vpop.f32.mrb[0].mxu0
        %v4015 = vadd.f32 0.0, %v4014
        %v4016 = vpop.f32.mrb[0].mxu0
        %v4017 = vpop.f32.mrb[0].mxu0
        %v4018 = vpop.f32.mrb[0].mxu0
        %4019 = vdwg.mxu0
        %v4020 = vadd.f32 %v2412, %v4015
        %v4021 = vsel %vm800, %v4020, 0.0
        %4022 = vadd.xlane.f32.xlu0 %v4021
        %v4023 = vpop.xlane.xlu0 %4022
        %v4024 = vmul.f32 %v4023, %v2402
        %v4025 = vsub.f32 %v4020, %v4024
        %v4026 = vmul.f32 %v4025, %v4025
        %v4027 = vsel %vm800, %v4026, 0.0
        %4028 = vadd.xlane.f32.xlu0 %v4027
        %v4029 = vpop.xlane.xlu0 %4028
        %v4030 = vmul.f32 %v4029, %v2402
        %v4031 = vadd.f32 %v4030, 1e-05
        %v4032 = vrsqrt.pop %v4031
        %v4033 = vmul.f32 %v4025, %v4032
        %v4034 = vpack.c.bf16 %v4033, %v4033
        %v4039 = vunpack.c.l.b16 %v775
        %v4040 = vunpack.c.l.b16 %v776
        %v4041 = vunpack.c.l.b16 %v777
        %v4042 = vunpack.c.l.b16 %v778
        %v4043 = vpack.c.b16 %v4040, %v4039
        %v4044 = vpack.c.b16 %v4042, %v4041
        %v4048 = vsel %vm800, %v4034, 0
        %4050 = vmatprep.subr.bf16.mxu0 0
        %4051 = vmatpush1.bf16.msra.mxu0 %v4043
        %4052 = vmatprep.subr.bf16.mxu0 0
        %4053 = vmatpush1.bf16.msra.mxu0 %v4044
        %4054 = vmatprep.subr.bf16.mxu0 0
        %4055 = vmatpush1.bf16.msra.mxu0 0
        %4056 = vmatprep.subr.bf16.mxu0 0
        %4057 = vmatpush1.bf16.msra.mxu0 0
        %4058 = vmatprep.subr.bf16.mxu0 0
        %4059 = vmatpush1.bf16.msra.mxu0 0
        %4060 = vmatprep.subr.bf16.mxu0 0
        %4061 = vmatpush1.bf16.msra.mxu0 0
        %4062 = vmatprep.subr.bf16.mxu0 0
        %4063 = vmatpush1.bf16.msra.mxu0 0
        %4064 = vmatprep.subr.bf16.mxu0 0
        %4065 = vmatpush1.bf16.msra.mxu0 0
        %4066 = vmatprep.subr.bf16.mxu0 0
        %4067 = vmatpush1.bf16.msra.mxu0 0
        %4068 = vmatprep.subr.bf16.mxu0 0
        %4069 = vmatpush1.bf16.msra.mxu0 0
        %4070 = vmatprep.subr.bf16.mxu0 0
        %4071 = vmatpush1.bf16.msra.mxu0 0
        %4072 = vmatprep.subr.bf16.mxu0 0
        %4073 = vmatpush1.bf16.msra.mxu0 0
        %4074 = vmatprep.subr.bf16.mxu0 0
        %4075 = vmatpush1.bf16.msra.mxu0 0
        %4076 = vmatprep.subr.bf16.mxu0 0
        %4077 = vmatpush1.bf16.msra.mxu0 0
        %4078 = vmatprep.subr.bf16.mxu0 0
        %4079 = vmatpush1.bf16.msra.mxu0 0
        %4080 = vmatprep.subr.bf16.mxu0 0
        %4081 = vmatpush1.bf16.msra.mxu0 0
        %4082 = vmatprep.mubr.bf16.mxu0 0
        %4083 = vmatmul.mubr.bf16.gmra.mrb[0].mxu0 %v4048
        %v4084 = vpop.f32.mrb[0].mxu0
        %v4085 = vadd.f32 0.0, %v4084
        %v4086 = vpop.f32.mrb[0].mxu0
        %v4087 = vpop.f32.mrb[0].mxu0
        %v4088 = vpop.f32.mrb[0].mxu0
        %4089 = vdwg.mxu0
        %v4090 = vmax.f32 %v4085, 0.0
        %v4091 = vpack.c.bf16 %v4090, %v4090
        %v4100 = vunpack.c.l.b16 %v779
        %v4101 = vunpack.c.l.b16 %v780
        %v4102 = vunpack.c.l.b16 %v781
        %v4103 = vunpack.c.l.b16 %v782
        %v4104 = vunpack.c.l.b16 %v783
        %v4105 = vunpack.c.l.b16 %v784
        %v4106 = vunpack.c.l.b16 %v785
        %v4107 = vunpack.c.l.b16 %v786
        %v4108 = vpack.c.b16 %v4101, %v4100
        %v4109 = vpack.c.b16 %v4103, %v4102
        %v4110 = vpack.c.b16 %v4105, %v4104
        %v4111 = vpack.c.b16 %v4107, %v4106
        %v4117 = vsel %vm2354, %v4091, 0
        %4119 = vmatprep.subr.bf16.mxu0 0
        %4120 = vmatpush1.bf16.msra.mxu0 %v4108
        %4121 = vmatprep.subr.bf16.mxu0 0
        %4122 = vmatpush1.bf16.msra.mxu0 %v4109
        %4123 = vmatprep.subr.bf16.mxu0 0
        %4124 = vmatpush1.bf16.msra.mxu0 %v4110
        %4125 = vmatprep.subr.bf16.mxu0 0
        %4126 = vmatpush1.bf16.msra.mxu0 %v4111
        %4127 = vmatprep.subr.bf16.mxu0 0
        %4128 = vmatpush1.bf16.msra.mxu0 0
        %4129 = vmatprep.subr.bf16.mxu0 0
        %4130 = vmatpush1.bf16.msra.mxu0 0
        %4131 = vmatprep.subr.bf16.mxu0 0
        %4132 = vmatpush1.bf16.msra.mxu0 0
        %4133 = vmatprep.subr.bf16.mxu0 0
        %4134 = vmatpush1.bf16.msra.mxu0 0
        %4135 = vmatprep.subr.bf16.mxu0 0
        %4136 = vmatpush1.bf16.msra.mxu0 0
        %4137 = vmatprep.subr.bf16.mxu0 0
        %4138 = vmatpush1.bf16.msra.mxu0 0
        %4139 = vmatprep.subr.bf16.mxu0 0
        %4140 = vmatpush1.bf16.msra.mxu0 0
        %4141 = vmatprep.subr.bf16.mxu0 0
        %4142 = vmatpush1.bf16.msra.mxu0 0
        %4143 = vmatprep.subr.bf16.mxu0 0
        %4144 = vmatpush1.bf16.msra.mxu0 0
        %4145 = vmatprep.subr.bf16.mxu0 0
        %4146 = vmatpush1.bf16.msra.mxu0 0
        %4147 = vmatprep.subr.bf16.mxu0 0
        %4148 = vmatpush1.bf16.msra.mxu0 0
        %4149 = vmatprep.subr.bf16.mxu0 0
        %4150 = vmatpush1.bf16.msra.mxu0 0
        %4151 = vmatprep.mubr.bf16.mxu0 0
        %4152 = vmatmul.mubr.bf16.gmra.mrb[0].mxu0 %v4117
        %v4153 = vpop.f32.mrb[0].mxu0
        %v4154 = vadd.f32 0.0, %v4153
        %v4155 = vpop.f32.mrb[0].mxu0
        %v4156 = vpop.f32.mrb[0].mxu0
        %v4157 = vpop.f32.mrb[0].mxu0
        %4158 = vdwg.mxu0
        %v4159 = vadd.f32 %v4033, %v4154
        %v4160 = vsel %vm800, %v4159, 0.0
        %4161 = vadd.xlane.f32.xlu0 %v4160
        %v4162 = vpop.xlane.xlu0 %4161
        %v4163 = vmul.f32 %v4162, %v2402
        %v4164 = vsub.f32 %v4159, %v4163
        %v4165 = vmul.f32 %v4164, %v4164
        %v4166 = vsel %vm800, %v4165, 0.0
        %4167 = vadd.xlane.f32.xlu0 %v4166
        %v4168 = vpop.xlane.xlu0 %4167
        %v4169 = vmul.f32 %v4168, %v2402
        %v4170 = vadd.f32 %v4169, 1e-05
        %v4171 = vrsqrt.pop %v4170
        %v4172 = vmul.f32 %v4164, %v4171
        %4173 = vst.msk [vmem:[#allocation9] sm:$0xff] %vm800, %v4172
        %v4174 = vpack.c.bf16 %v700, %v700
        %v4176 = vsel %vm800, %v4174, 0
        %4178 = vmatprep.subr.bf16.mxu0 0
        %4179 = vmatpush1.bf16.msra.mxu0 %v796
        %4180 = vmatprep.subr.bf16.mxu0 0
        %4181 = vmatpush1.bf16.msra.mxu0 %v797
        %4182 = vmatprep.subr.bf16.mxu0 0
        %4183 = vmatpush1.bf16.msra.mxu0 0
        %4184 = vmatprep.subr.bf16.mxu0 0
        %4185 = vmatpush1.bf16.msra.mxu0 0
        %4186 = vmatprep.subr.bf16.mxu0 0
        %4187 = vmatpush1.bf16.msra.mxu0 0
        %4188 = vmatprep.subr.bf16.mxu0 0
        %4189 = vmatpush1.bf16.msra.mxu0 0
        %4190 = vmatprep.subr.bf16.mxu0 0
        %4191 = vmatpush1.bf16.msra.mxu0 0
        %4192 = vmatprep.subr.bf16.mxu0 0
        %4193 = vmatpush1.bf16.msra.mxu0 0
        %4194 = vmatprep.subr.bf16.mxu0 0
        %4195 = vmatpush1.bf16.msra.mxu0 0
        %4196 = vmatprep.subr.bf16.mxu0 0
        %4197 = vmatpush1.bf16.msra.mxu0 0
        %4198 = vmatprep.subr.bf16.mxu0 0
        %4199 = vmatpush1.bf16.msra.mxu0 0
        %4200 = vmatprep.subr.bf16.mxu0 0
        %4201 = vmatpush1.bf16.msra.mxu0 0
        %4202 = vmatprep.subr.bf16.mxu0 0
        %4203 = vmatpush1.bf16.msra.mxu0 0
        %4204 = vmatprep.subr.bf16.mxu0 0
        %4205 = vmatpush1.bf16.msra.mxu0 0
        %4206 = vmatprep.subr.bf16.mxu0 0
        %4207 = vmatpush1.bf16.msra.mxu0 0
        %4208 = vmatprep.subr.bf16.mxu0 0
        %4209 = vmatpush1.bf16.msra.mxu0 0
        %4210 = vmatprep.mubr.bf16.mxu0 0
        %4211 = vmatmul.mubr.bf16.gmra.mrb[0].mxu0 %v4176
        %v4212 = vpop.f32.mrb[0].mxu0
        %v4213 = vadd.f32 0.0, %v4212
        %v4214 = vpop.f32.mrb[0].mxu0
        %v4215 = vpop.f32.mrb[0].mxu0
        %v4216 = vpop.f32.mrb[0].mxu0
        %4217 = vdwg.mxu0
        %4218 = vmatprep.subr.bf16.mxu0 0
        %4219 = vmatpush1.bf16.msra.mxu0 %v852
        %4220 = vmatprep.subr.bf16.mxu0 0
        %4221 = vmatpush1.bf16.msra.mxu0 %v853
        %4222 = vmatprep.subr.bf16.mxu0 0
        %4223 = vmatpush1.bf16.msra.mxu0 0
        %4224 = vmatprep.subr.bf16.mxu0 0
        %4225 = vmatpush1.bf16.msra.mxu0 0
        %4226 = vmatprep.subr.bf16.mxu0 0
        %4227 = vmatpush1.bf16.msra.mxu0 0
        %4228 = vmatprep.subr.bf16.mxu0 0
        %4229 = vmatpush1.bf16.msra.mxu0 0
        %4230 = vmatprep.subr.bf16.mxu0 0
        %4231 = vmatpush1.bf16.msra.mxu0 0
        %4232 = vmatprep.subr.bf16.mxu0 0
        %4233 = vmatpush1.bf16.msra.mxu0 0
        %4234 = vmatprep.subr.bf16.mxu0 0
        %4235 = vmatpush1.bf16.msra.mxu0 0
        %4236 = vmatprep.subr.bf16.mxu0 0
        %4237 = vmatpush1.bf16.msra.mxu0 0
        %4238 = vmatprep.subr.bf16.mxu0 0
        %4239 = vmatpush1.bf16.msra.mxu0 0
        %4240 = vmatprep.subr.bf16.mxu0 0
        %4241 = vmatpush1.bf16.msra.mxu0 0
        %4242 = vmatprep.subr.bf16.mxu0 0
        %4243 = vmatpush1.bf16.msra.mxu0 0
        %4244 = vmatprep.subr.bf16.mxu0 0
        %4245 = vmatpush1.bf16.msra.mxu0 0
        %4246 = vmatprep.subr.bf16.mxu0 0
        %4247 = vmatpush1.bf16.msra.mxu0 0
        %4248 = vmatprep.subr.bf16.mxu0 0
        %4249 = vmatpush1.bf16.msra.mxu0 0
        %4250 = vmatprep.mubr.bf16.mxu0 0
        %4251 = vmatmul.mubr.bf16.gmra.mrb[0].mxu0 %v4176
        %v4252 = vpop.f32.mrb[0].mxu0
        %v4253 = vadd.f32 0.0, %v4252
        %v4254 = vpop.f32.mrb[0].mxu0
        %v4255 = vpop.f32.mrb[0].mxu0
        %v4256 = vpop.f32.mrb[0].mxu0
        %4257 = vdwg.mxu0
        %4258 = vmatprep.subr.bf16.mxu0 0
        %4259 = vmatpush1.bf16.msra.mxu0 %v904
        %4260 = vmatprep.subr.bf16.mxu0 0
        %4261 = vmatpush1.bf16.msra.mxu0 %v905
        %4262 = vmatprep.subr.bf16.mxu0 0
        %4263 = vmatpush1.bf16.msra.mxu0 0
        %4264 = vmatprep.subr.bf16.mxu0 0
        %4265 = vmatpush1.bf16.msra.mxu0 0
        %4266 = vmatprep.subr.bf16.mxu0 0
        %4267 = vmatpush1.bf16.msra.mxu0 0
        %4268 = vmatprep.subr.bf16.mxu0 0
        %4269 = vmatpush1.bf16.msra.mxu0 0
        %4270 = vmatprep.subr.bf16.mxu0 0
        %4271 = vmatpush1.bf16.msra.mxu0 0
        %4272 = vmatprep.subr.bf16.mxu0 0
        %4273 = vmatpush1.bf16.msra.mxu0 0
        %4274 = vmatprep.subr.bf16.mxu0 0
        %4275 = vmatpush1.bf16.msra.mxu0 0
        %4276 = vmatprep.subr.bf16.mxu0 0
        %4277 = vmatpush1.bf16.msra.mxu0 0
        %4278 = vmatprep.subr.bf16.mxu0 0
        %4279 = vmatpush1.bf16.msra.mxu0 0
        %4280 = vmatprep.subr.bf16.mxu0 0
        %4281 = vmatpush1.bf16.msra.mxu0 0
        %4282 = vmatprep.subr.bf16.mxu0 0
        %4283 = vmatpush1.bf16.msra.mxu0 0
        %4284 = vmatprep.subr.bf16.mxu0 0
        %4285 = vmatpush1.bf16.msra.mxu0 0
        %4286 = vmatprep.subr.bf16.mxu0 0
        %4287 = vmatpush1.bf16.msra.mxu0 0
        %4288 = vmatprep.subr.bf16.mxu0 0
        %4289 = vmatpush1.bf16.msra.mxu0 0
        %4290 = vmatprep.mubr.bf16.mxu0 0
        %4291 = vmatmul.mubr.bf16.gmra.mrb[0].mxu0 %v4176
        %v4292 = vpop.f32.mrb[0].mxu0
        %v4293 = vadd.f32 0.0, %v4292
        %v4294 = vpop.f32.mrb[0].mxu0
        %v4295 = vpop.f32.mrb[0].mxu0
        %v4296 = vpop.f32.mrb[0].mxu0
        %4297 = vdwg.mxu0
        %v4299 = vsel %vm948, %v4213, 0
        %v4302 = vsel %vm948, %v4253, 0
        %4304 = vmatprep.subr.mxu0 0.0
        %4305 = vmatpush1.xpose.msra.mxu0 %v4302
        %4306 = vmatprep.subr.mxu0 0.0
        %4307 = vmatpush1.xpose.msra.mxu0 0.0
        %4308 = vmatprep.subr.mxu0 0.0
        %4309 = vmatpush1.xpose.msra.mxu0 0.0
        %4310 = vmatprep.subr.mxu0 0.0
        %4311 = vmatpush1.xpose.msra.mxu0 0.0
        %4312 = vmatprep.subr.mxu0 0.0
        %4313 = vmatpush1.xpose.msra.mxu0 0.0
        %4314 = vmatprep.subr.mxu0 0.0
        %4315 = vmatpush1.xpose.msra.mxu0 0.0
        %4316 = vmatprep.subr.mxu0 0.0
        %4317 = vmatpush1.xpose.msra.mxu0 0.0
        %4318 = vmatprep.subr.mxu0 0.0
        %4319 = vmatpush1.xpose.msra.mxu0 0.0
        %4320 = vmatprep.subr.mxu0 0.0
        %4321 = vmatpush1.xpose.msra.mxu0 0.0
        %4322 = vmatprep.subr.mxu0 0.0
        %4323 = vmatpush1.xpose.msra.mxu0 0.0
        %4324 = vmatprep.subr.mxu0 0.0
        %4325 = vmatpush1.xpose.msra.mxu0 0.0
        %4326 = vmatprep.subr.mxu0 0.0
        %4327 = vmatpush1.xpose.msra.mxu0 0.0
        %4328 = vmatprep.subr.mxu0 0.0
        %4329 = vmatpush1.xpose.msra.mxu0 0.0
        %4330 = vmatprep.subr.mxu0 0.0
        %4331 = vmatpush1.xpose.msra.mxu0 0.0
        %4332 = vmatprep.subr.mxu0 0.0
        %4333 = vmatpush1.xpose.msra.mxu0 0.0
        %4334 = vmatprep.subr.mxu0 0.0
        %4335 = vmatpush1.xpose.msra.mxu0 0.0
        %4336 = vmatprep.subr.mxu0 0.0
        %4337 = vmatpush1.xpose.msra.mxu0 0.0
        %4338 = vmatprep.subr.mxu0 0.0
        %4339 = vmatpush1.xpose.msra.mxu0 0.0
        %4340 = vmatprep.subr.mxu0 0.0
        %4341 = vmatpush1.xpose.msra.mxu0 0.0
        %4342 = vmatprep.subr.mxu0 0.0
        %4343 = vmatpush1.xpose.msra.mxu0 0.0
        %4344 = vmatprep.subr.mxu0 0.0
        %4345 = vmatpush1.xpose.msra.mxu0 0.0
        %4346 = vmatprep.subr.mxu0 0.0
        %4347 = vmatpush1.xpose.msra.mxu0 0.0
        %4348 = vmatprep.subr.mxu0 0.0
        %4349 = vmatpush1.xpose.msra.mxu0 0.0
        %4350 = vmatprep.subr.mxu0 0.0
        %4351 = vmatpush1.xpose.msra.mxu0 0.0
        %4352 = vmatprep.subr.mxu0 0.0
        %4353 = vmatpush1.xpose.msra.mxu0 0.0
        %4354 = vmatprep.subr.mxu0 0.0
        %4355 = vmatpush1.xpose.msra.mxu0 0.0
        %4356 = vmatprep.subr.mxu0 0.0
        %4357 = vmatpush1.xpose.msra.mxu0 0.0
        %4358 = vmatprep.subr.mxu0 0.0
        %4359 = vmatpush1.xpose.msra.mxu0 0.0
        %4360 = vmatprep.subr.mxu0 0.0
        %4361 = vmatpush1.xpose.msra.mxu0 0.0
        %4362 = vmatprep.subr.mxu0 0.0
        %4363 = vmatpush1.xpose.msra.mxu0 0.0
        %4364 = vmatprep.subr.mxu0 0.0
        %4365 = vmatpush1.xpose.msra.mxu0 0.0
        %4366 = vmatprep.subr.mxu0 0.0
        %4367 = vmatpush1.xpose.msra.mxu0 0.0
        %4368 = vmatprep.mubr.f32.mxu0 0.0
        %4369 = vmatmul.mubr.f32.gmra.mrb[0].mxu0 %v4299
        %v4370 = vpop.f32.mrb[0].mxu0
        %v4371 = vadd.f32 0.0, %v4370
        %v4372 = vpop.f32.mrb[0].mxu0
        %4373 = vdwg.mxu0
        %v4374 = vmul.f32 %v4371, 0.35355338
        %vm4375 = vcmp.ne.f32.partialorder %v711, 0.0
        %v4376 = vsel %vm4375, -1e+09, %v4374
        %v4377 = vsel %vm948, %v4376, -inf
        %4378 = vmax.xlane.f32.xlu0 %v4377
        %v4379 = vpop.xlane.xlu0 %4378
        %v4380 = vsub.f32 %v4376, %v4379
        %v4381 = vmul.f32 %v4380, 1.442695
        %v4382 = vpow.pop %v4381
        %v4383 = vsel %vm948, %v4382, 0.0
        %4384 = vadd.xlane.f32.xlu0 %v4383
        %v4385 = vpop.xlane.xlu0 %4384
        %v4386 = vrcp.pop %v4385
        %v4387 = vmul.f32 %v4382, %v4386
        %v4389 = vsel %vm948, %v4387, 0
        %4391 = vmatprep.subr.mxu0 0.0
        %4392 = vmatpush1.msra.mxu0 %v4293
        %4393 = vmatprep.subr.mxu0 0.0
        %4394 = vmatpush1.msra.mxu0 0.0
        %4395 = vmatprep.subr.mxu0 0.0
        %4396 = vmatpush1.msra.mxu0 0.0
        %4397 = vmatprep.subr.mxu0 0.0
        %4398 = vmatpush1.msra.mxu0 0.0
        %4399 = vmatprep.subr.mxu0 0.0
        %4400 = vmatpush1.msra.mxu0 0.0
        %4401 = vmatprep.subr.mxu0 0.0
        %4402 = vmatpush1.msra.mxu0 0.0
        %4403 = vmatprep.subr.mxu0 0.0
        %4404 = vmatpush1.msra.mxu0 0.0
        %4405 = vmatprep.subr.mxu0 0.0
        %4406 = vmatpush1.msra.mxu0 0.0
        %4407 = vmatprep.subr.mxu0 0.0
        %4408 = vmatpush1.msra.mxu0 0.0
        %4409 = vmatprep.subr.mxu0 0.0
        %4410 = vmatpush1.msra.mxu0 0.0
        %4411 = vmatprep.subr.mxu0 0.0
        %4412 = vmatpush1.msra.mxu0 0.0
        %4413 = vmatprep.subr.mxu0 0.0
        %4414 = vmatpush1.msra.mxu0 0.0
        %4415 = vmatprep.subr.mxu0 0.0
        %4416 = vmatpush1.msra.mxu0 0.0
        %4417 = vmatprep.subr.mxu0 0.0
        %4418 = vmatpush1.msra.mxu0 0.0
        %4419 = vmatprep.subr.mxu0 0.0
        %4420 = vmatpush1.msra.mxu0 0.0
        %4421 = vmatprep.subr.mxu0 0.0
        %4422 = vmatpush1.msra.mxu0 0.0
        %4423 = vmatprep.subr.mxu0 0.0
        %4424 = vmatpush1.msra.mxu0 0.0
        %4425 = vmatprep.subr.mxu0 0.0
        %4426 = vmatpush1.msra.mxu0 0.0
        %4427 = vmatprep.subr.mxu0 0.0
        %4428 = vmatpush1.msra.mxu0 0.0
        %4429 = vmatprep.subr.mxu0 0.0
        %4430 = vmatpush1.msra.mxu0 0.0
        %4431 = vmatprep.subr.mxu0 0.0
        %4432 = vmatpush1.msra.mxu0 0.0
        %4433 = vmatprep.subr.mxu0 0.0
        %4434 = vmatpush1.msra.mxu0 0.0
        %4435 = vmatprep.subr.mxu0 0.0
        %4436 = vmatpush1.msra.mxu0 0.0
        %4437 = vmatprep.subr.mxu0 0.0
        %4438 = vmatpush1.msra.mxu0 0.0
        %4439 = vmatprep.subr.mxu0 0.0
        %4440 = vmatpush1.msra.mxu0 0.0
        %4441 = vmatprep.subr.mxu0 0.0
        %4442 = vmatpush1.msra.mxu0 0.0
        %4443 = vmatprep.subr.mxu0 0.0
        %4444 = vmatpush1.msra.mxu0 0.0
        %4445 = vmatprep.subr.mxu0 0.0
        %4446 = vmatpush1.msra.mxu0 0.0
        %4447 = vmatprep.subr.mxu0 0.0
        %4448 = vmatpush1.msra.mxu0 0.0
        %4449 = vmatprep.subr.mxu0 0.0
        %4450 = vmatpush1.msra.mxu0 0.0
        %4451 = vmatprep.subr.mxu0 0.0
        %4452 = vmatpush1.msra.mxu0 0.0
        %4453 = vmatprep.subr.mxu0 0.0
        %4454 = vmatpush1.msra.mxu0 0.0
        %4455 = vmatprep.mubr.f32.mxu0 0.0
        %4456 = vmatmul.mubr.f32.gmra.mrb[0].mxu0 %v4389
        %v4457 = vpop.f32.mrb[0].mxu0
        %v4458 = vadd.f32 0.0, %v4457
        %v4459 = vpop.f32.mrb[0].mxu0
        %4460 = vdwg.mxu0
        %4461 = vrot.lane.b32.xlu0 %v4213, 120
        %v4462 = vpop.permute.xlu0 %4461
        %4463 = vrot.lane.b32.xlu0 %v4253, 120
        %v4464 = vpop.permute.xlu0 %4463
        %v4465 = vsel %vm948, %v4462, 0
        %v4467 = vsel %vm948, %v4464, 0
        %4469 = vmatprep.subr.mxu0 0.0
        %4470 = vmatpush1.xpose.msra.mxu0 %v4467
        %4471 = vmatprep.subr.mxu0 0.0
        %4472 = vmatpush1.xpose.msra.mxu0 0.0
        %4473 = vmatprep.subr.mxu0 0.0
        %4474 = vmatpush1.xpose.msra.mxu0 0.0
        %4475 = vmatprep.subr.mxu0 0.0
        %4476 = vmatpush1.xpose.msra.mxu0 0.0
        %4477 = vmatprep.subr.mxu0 0.0
        %4478 = vmatpush1.xpose.msra.mxu0 0.0
        %4479 = vmatprep.subr.mxu0 0.0
        %4480 = vmatpush1.xpose.msra.mxu0 0.0
        %4481 = vmatprep.subr.mxu0 0.0
        %4482 = vmatpush1.xpose.msra.mxu0 0.0
        %4483 = vmatprep.subr.mxu0 0.0
        %4484 = vmatpush1.xpose.msra.mxu0 0.0
        %4485 = vmatprep.subr.mxu0 0.0
        %4486 = vmatpush1.xpose.msra.mxu0 0.0
        %4487 = vmatprep.subr.mxu0 0.0
        %4488 = vmatpush1.xpose.msra.mxu0 0.0
        %4489 = vmatprep.subr.mxu0 0.0
        %4490 = vmatpush1.xpose.msra.mxu0 0.0
        %4491 = vmatprep.subr.mxu0 0.0
        %4492 = vmatpush1.xpose.msra.mxu0 0.0
        %4493 = vmatprep.subr.mxu0 0.0
        %4494 = vmatpush1.xpose.msra.mxu0 0.0
        %4495 = vmatprep.subr.mxu0 0.0
        %4496 = vmatpush1.xpose.msra.mxu0 0.0
        %4497 = vmatprep.subr.mxu0 0.0
        %4498 = vmatpush1.xpose.msra.mxu0 0.0
        %4499 = vmatprep.subr.mxu0 0.0
        %4500 = vmatpush1.xpose.msra.mxu0 0.0
        %4501 = vmatprep.subr.mxu0 0.0
        %4502 = vmatpush1.xpose.msra.mxu0 0.0
        %4503 = vmatprep.subr.mxu0 0.0
        %4504 = vmatpush1.xpose.msra.mxu0 0.0
        %4505 = vmatprep.subr.mxu0 0.0
        %4506 = vmatpush1.xpose.msra.mxu0 0.0
        %4507 = vmatprep.subr.mxu0 0.0
        %4508 = vmatpush1.xpose.msra.mxu0 0.0
        %4509 = vmatprep.subr.mxu0 0.0
        %4510 = vmatpush1.xpose.msra.mxu0 0.0
        %4511 = vmatprep.subr.mxu0 0.0
        %4512 = vmatpush1.xpose.msra.mxu0 0.0
        %4513 = vmatprep.subr.mxu0 0.0
        %4514 = vmatpush1.xpose.msra.mxu0 0.0
        %4515 = vmatprep.subr.mxu0 0.0
        %4516 = vmatpush1.xpose.msra.mxu0 0.0
        %4517 = vmatprep.subr.mxu0 0.0
        %4518 = vmatpush1.xpose.msra.mxu0 0.0
        %4519 = vmatprep.subr.mxu0 0.0
        %4520 = vmatpush1.xpose.msra.mxu0 0.0
        %4521 = vmatprep.subr.mxu0 0.0
        %4522 = vmatpush1.xpose.msra.mxu0 0.0
        %4523 = vmatprep.subr.mxu0 0.0
        %4524 = vmatpush1.xpose.msra.mxu0 0.0
        %4525 = vmatprep.subr.mxu0 0.0
        %4526 = vmatpush1.xpose.msra.mxu0 0.0
        %4527 = vmatprep.subr.mxu0 0.0
        %4528 = vmatpush1.xpose.msra.mxu0 0.0
        %4529 = vmatprep.subr.mxu0 0.0
        %4530 = vmatpush1.xpose.msra.mxu0 0.0
        %4531 = vmatprep.subr.mxu0 0.0
        %4532 = vmatpush1.xpose.msra.mxu0 0.0
        %4533 = vmatprep.mubr.f32.mxu0 0.0
        %4534 = vmatmul.mubr.f32.gmra.mrb[0].mxu0 %v4465
        %v4535 = vpop.f32.mrb[0].mxu0
        %v4536 = vadd.f32 0.0, %v4535
        %v4537 = vpop.f32.mrb[0].mxu0
        %4538 = vdwg.mxu0
        %v4539 = vmul.f32 %v4536, 0.35355338
        %vm4540 = vcmp.ne.f32.partialorder %v712, 0.0
        %v4541 = vsel %vm4540, -1e+09, %v4539
        %v4542 = vsel %vm948, %v4541, -inf
        %4543 = vmax.xlane.f32.xlu0 %v4542
        %v4544 = vpop.xlane.xlu0 %4543
        %v4545 = vsub.f32 %v4541, %v4544
        %v4546 = vmul.f32 %v4545, 1.442695
        %v4547 = vpow.pop %v4546
        %v4548 = vsel %vm948, %v4547, 0.0
        %4549 = vadd.xlane.f32.xlu0 %v4548
        %v4550 = vpop.xlane.xlu0 %4549
        %v4551 = vrcp.pop %v4550
        %v4552 = vmul.f32 %v4547, %v4551
        %4554 = vrot.lane.b32.xlu0 %v4293, 120
        %v4555 = vpop.permute.xlu0 %4554
        %v4558 = vsel %vm948, %v4552, 0
        %4560 = vmatprep.subr.mxu0 0.0
        %4561 = vmatpush1.msra.mxu0 %v4555
        %4562 = vmatprep.subr.mxu0 0.0
        %4563 = vmatpush1.msra.mxu0 0.0
        %4564 = vmatprep.subr.mxu0 0.0
        %4565 = vmatpush1.msra.mxu0 0.0
        %4566 = vmatprep.subr.mxu0 0.0
        %4567 = vmatpush1.msra.mxu0 0.0
        %4568 = vmatprep.subr.mxu0 0.0
        %4569 = vmatpush1.msra.mxu0 0.0
        %4570 = vmatprep.subr.mxu0 0.0
        %4571 = vmatpush1.msra.mxu0 0.0
        %4572 = vmatprep.subr.mxu0 0.0
        %4573 = vmatpush1.msra.mxu0 0.0
        %4574 = vmatprep.subr.mxu0 0.0
        %4575 = vmatpush1.msra.mxu0 0.0
        %4576 = vmatprep.subr.mxu0 0.0
        %4577 = vmatpush1.msra.mxu0 0.0
        %4578 = vmatprep.subr.mxu0 0.0
        %4579 = vmatpush1.msra.mxu0 0.0
        %4580 = vmatprep.subr.mxu0 0.0
        %4581 = vmatpush1.msra.mxu0 0.0
        %4582 = vmatprep.subr.mxu0 0.0
        %4583 = vmatpush1.msra.mxu0 0.0
        %4584 = vmatprep.subr.mxu0 0.0
        %4585 = vmatpush1.msra.mxu0 0.0
        %4586 = vmatprep.subr.mxu0 0.0
        %4587 = vmatpush1.msra.mxu0 0.0
        %4588 = vmatprep.subr.mxu0 0.0
        %4589 = vmatpush1.msra.mxu0 0.0
        %4590 = vmatprep.subr.mxu0 0.0
        %4591 = vmatpush1.msra.mxu0 0.0
        %4592 = vmatprep.subr.mxu0 0.0
        %4593 = vmatpush1.msra.mxu0 0.0
        %4594 = vmatprep.subr.mxu0 0.0
        %4595 = vmatpush1.msra.mxu0 0.0
        %4596 = vmatprep.subr.mxu0 0.0
        %4597 = vmatpush1.msra.mxu0 0.0
        %4598 = vmatprep.subr.mxu0 0.0
        %4599 = vmatpush1.msra.mxu0 0.0
        %4600 = vmatprep.subr.mxu0 0.0
        %4601 = vmatpush1.msra.mxu0 0.0
        %4602 = vmatprep.subr.mxu0 0.0
        %4603 = vmatpush1.msra.mxu0 0.0
        %4604 = vmatprep.subr.mxu0 0.0
        %4605 = vmatpush1.msra.mxu0 0.0
        %4606 = vmatprep.subr.mxu0 0.0
        %4607 = vmatpush1.msra.mxu0 0.0
        %4608 = vmatprep.subr.mxu0 0.0
        %4609 = vmatpush1.msra.mxu0 0.0
        %4610 = vmatprep.subr.mxu0 0.0
        %4611 = vmatpush1.msra.mxu0 0.0
        %4612 = vmatprep.subr.mxu0 0.0
        %4613 = vmatpush1.msra.mxu0 0.0
        %4614 = vmatprep.subr.mxu0 0.0
        %4615 = vmatpush1.msra.mxu0 0.0
        %4616 = vmatprep.subr.mxu0 0.0
        %4617 = vmatpush1.msra.mxu0 0.0
        %4618 = vmatprep.subr.mxu0 0.0
        %4619 = vmatpush1.msra.mxu0 0.0
        %4620 = vmatprep.subr.mxu0 0.0
        %4621 = vmatpush1.msra.mxu0 0.0
        %4622 = vmatprep.subr.mxu0 0.0
        %4623 = vmatpush1.msra.mxu0 0.0
        %4624 = vmatprep.mubr.f32.mxu0 0.0
        %4625 = vmatmul.mubr.f32.gmra.mrb[0].mxu0 %v4558
        %v4626 = vpop.f32.mrb[0].mxu0
        %v4627 = vadd.f32 0.0, %v4626
        %v4628 = vpop.f32.mrb[0].mxu0
        %4629 = vdwg.mxu0
        %4630 = vrot.lane.b32.xlu0 %v4213, 112
        %v4631 = vpop.permute.xlu0 %4630
        %4632 = vrot.lane.b32.xlu0 %v4253, 112
        %v4633 = vpop.permute.xlu0 %4632
        %v4634 = vsel %vm948, %v4631, 0
        %v4636 = vsel %vm948, %v4633, 0
        %4638 = vmatprep.subr.mxu0 0.0
        %4639 = vmatpush1.xpose.msra.mxu0 %v4636
        %4640 = vmatprep.subr.mxu0 0.0
        %4641 = vmatpush1.xpose.msra.mxu0 0.0
        %4642 = vmatprep.subr.mxu0 0.0
        %4643 = vmatpush1.xpose.msra.mxu0 0.0
        %4644 = vmatprep.subr.mxu0 0.0
        %4645 = vmatpush1.xpose.msra.mxu0 0.0
        %4646 = vmatprep.subr.mxu0 0.0
        %4647 = vmatpush1.xpose.msra.mxu0 0.0
        %4648 = vmatprep.subr.mxu0 0.0
        %4649 = vmatpush1.xpose.msra.mxu0 0.0
        %4650 = vmatprep.subr.mxu0 0.0
        %4651 = vmatpush1.xpose.msra.mxu0 0.0
        %4652 = vmatprep.subr.mxu0 0.0
        %4653 = vmatpush1.xpose.msra.mxu0 0.0
        %4654 = vmatprep.subr.mxu0 0.0
        %4655 = vmatpush1.xpose.msra.mxu0 0.0
        %4656 = vmatprep.subr.mxu0 0.0
        %4657 = vmatpush1.xpose.msra.mxu0 0.0
        %4658 = vmatprep.subr.mxu0 0.0
        %4659 = vmatpush1.xpose.msra.mxu0 0.0
        %4660 = vmatprep.subr.mxu0 0.0
        %4661 = vmatpush1.xpose.msra.mxu0 0.0
        %4662 = vmatprep.subr.mxu0 0.0
        %4663 = vmatpush1.xpose.msra.mxu0 0.0
        %4664 = vmatprep.subr.mxu0 0.0
        %4665 = vmatpush1.xpose.msra.mxu0 0.0
        %4666 = vmatprep.subr.mxu0 0.0
        %4667 = vmatpush1.xpose.msra.mxu0 0.0
        %4668 = vmatprep.subr.mxu0 0.0
        %4669 = vmatpush1.xpose.msra.mxu0 0.0
        %4670 = vmatprep.subr.mxu0 0.0
        %4671 = vmatpush1.xpose.msra.mxu0 0.0
        %4672 = vmatprep.subr.mxu0 0.0
        %4673 = vmatpush1.xpose.msra.mxu0 0.0
        %4674 = vmatprep.subr.mxu0 0.0
        %4675 = vmatpush1.xpose.msra.mxu0 0.0
        %4676 = vmatprep.subr.mxu0 0.0
        %4677 = vmatpush1.xpose.msra.mxu0 0.0
        %4678 = vmatprep.subr.mxu0 0.0
        %4679 = vmatpush1.xpose.msra.mxu0 0.0
        %4680 = vmatprep.subr.mxu0 0.0
        %4681 = vmatpush1.xpose.msra.mxu0 0.0
        %4682 = vmatprep.subr.mxu0 0.0
        %4683 = vmatpush1.xpose.msra.mxu0 0.0
        %4684 = vmatprep.subr.mxu0 0.0
        %4685 = vmatpush1.xpose.msra.mxu0 0.0
        %4686 = vmatprep.subr.mxu0 0.0
        %4687 = vmatpush1.xpose.msra.mxu0 0.0
        %4688 = vmatprep.subr.mxu0 0.0
        %4689 = vmatpush1.xpose.msra.mxu0 0.0
        %4690 = vmatprep.subr.mxu0 0.0
        %4691 = vmatpush1.xpose.msra.mxu0 0.0
        %4692 = vmatprep.subr.mxu0 0.0
        %4693 = vmatpush1.xpose.msra.mxu0 0.0
        %4694 = vmatprep.subr.mxu0 0.0
        %4695 = vmatpush1.xpose.msra.mxu0 0.0
        %4696 = vmatprep.subr.mxu0 0.0
        %4697 = vmatpush1.xpose.msra.mxu0 0.0
        %4698 = vmatprep.subr.mxu0 0.0
        %4699 = vmatpush1.xpose.msra.mxu0 0.0
        %4700 = vmatprep.subr.mxu0 0.0
        %4701 = vmatpush1.xpose.msra.mxu0 0.0
        %4702 = vmatprep.mubr.f32.mxu0 0.0
        %4703 = vmatmul.mubr.f32.gmra.mrb[0].mxu0 %v4634
        %v4704 = vpop.f32.mrb[0].mxu0
        %v4705 = vadd.f32 0.0, %v4704
        %v4706 = vpop.f32.mrb[0].mxu0
        %4707 = vdwg.mxu0
        %v4708 = vmul.f32 %v4705, 0.35355338
        %vm4709 = vcmp.ne.f32.partialorder %v713, 0.0
        %v4710 = vsel %vm4709, -1e+09, %v4708
        %v4711 = vsel %vm948, %v4710, -inf
        %4712 = vmax.xlane.f32.xlu0 %v4711
        %v4713 = vpop.xlane.xlu0 %4712
        %v4714 = vsub.f32 %v4710, %v4713
        %v4715 = vmul.f32 %v4714, 1.442695
        %v4716 = vpow.pop %v4715
        %v4717 = vsel %vm948, %v4716, 0.0
        %4718 = vadd.xlane.f32.xlu0 %v4717
        %v4719 = vpop.xlane.xlu0 %4718
        %v4720 = vrcp.pop %v4719
        %v4721 = vmul.f32 %v4716, %v4720
        %4722 = vrot.lane.b32.xlu0 %v4293, 112
        %v4723 = vpop.permute.xlu0 %4722
        %v4726 = vsel %vm948, %v4721, 0
        %4728 = vmatprep.subr.mxu0 0.0
        %4729 = vmatpush1.msra.mxu0 %v4723
        %4730 = vmatprep.subr.mxu0 0.0
        %4731 = vmatpush1.msra.mxu0 0.0
        %4732 = vmatprep.subr.mxu0 0.0
        %4733 = vmatpush1.msra.mxu0 0.0
        %4734 = vmatprep.subr.mxu0 0.0
        %4735 = vmatpush1.msra.mxu0 0.0
        %4736 = vmatprep.subr.mxu0 0.0
        %4737 = vmatpush1.msra.mxu0 0.0
        %4738 = vmatprep.subr.mxu0 0.0
        %4739 = vmatpush1.msra.mxu0 0.0
        %4740 = vmatprep.subr.mxu0 0.0
        %4741 = vmatpush1.msra.mxu0 0.0
        %4742 = vmatprep.subr.mxu0 0.0
        %4743 = vmatpush1.msra.mxu0 0.0
        %4744 = vmatprep.subr.mxu0 0.0
        %4745 = vmatpush1.msra.mxu0 0.0
        %4746 = vmatprep.subr.mxu0 0.0
        %4747 = vmatpush1.msra.mxu0 0.0
        %4748 = vmatprep.subr.mxu0 0.0
        %4749 = vmatpush1.msra.mxu0 0.0
        %4750 = vmatprep.subr.mxu0 0.0
        %4751 = vmatpush1.msra.mxu0 0.0
        %4752 = vmatprep.subr.mxu0 0.0
        %4753 = vmatpush1.msra.mxu0 0.0
        %4754 = vmatprep.subr.mxu0 0.0
        %4755 = vmatpush1.msra.mxu0 0.0
        %4756 = vmatprep.subr.mxu0 0.0
        %4757 = vmatpush1.msra.mxu0 0.0
        %4758 = vmatprep.subr.mxu0 0.0
        %4759 = vmatpush1.msra.mxu0 0.0
        %4760 = vmatprep.subr.mxu0 0.0
        %4761 = vmatpush1.msra.mxu0 0.0
        %4762 = vmatprep.subr.mxu0 0.0
        %4763 = vmatpush1.msra.mxu0 0.0
        %4764 = vmatprep.subr.mxu0 0.0
        %4765 = vmatpush1.msra.mxu0 0.0
        %4766 = vmatprep.subr.mxu0 0.0
        %4767 = vmatpush1.msra.mxu0 0.0
        %4768 = vmatprep.subr.mxu0 0.0
        %4769 = vmatpush1.msra.mxu0 0.0
        %4770 = vmatprep.subr.mxu0 0.0
        %4771 = vmatpush1.msra.mxu0 0.0
        %4772 = vmatprep.subr.mxu0 0.0
        %4773 = vmatpush1.msra.mxu0 0.0
        %4774 = vmatprep.subr.mxu0 0.0
        %4775 = vmatpush1.msra.mxu0 0.0
        %4776 = vmatprep.subr.mxu0 0.0
        %4777 = vmatpush1.msra.mxu0 0.0
        %4778 = vmatprep.subr.mxu0 0.0
        %4779 = vmatpush1.msra.mxu0 0.0
        %4780 = vmatprep.subr.mxu0 0.0
        %4781 = vmatpush1.msra.mxu0 0.0
        %4782 = vmatprep.subr.mxu0 0.0
        %4783 = vmatpush1.msra.mxu0 0.0
        %4784 = vmatprep.subr.mxu0 0.0
        %4785 = vmatpush1.msra.mxu0 0.0
        %4786 = vmatprep.subr.mxu0 0.0
        %4787 = vmatpush1.msra.mxu0 0.0
        %4788 = vmatprep.subr.mxu0 0.0
        %4789 = vmatpush1.msra.mxu0 0.0
        %4790 = vmatprep.subr.mxu0 0.0
        %4791 = vmatpush1.msra.mxu0 0.0
        %4792 = vmatprep.mubr.f32.mxu0 0.0
        %4793 = vmatmul.mubr.f32.gmra.mrb[0].mxu0 %v4726
        %v4794 = vpop.f32.mrb[0].mxu0
        %v4795 = vadd.f32 0.0, %v4794
        %v4796 = vpop.f32.mrb[0].mxu0
        %4797 = vdwg.mxu0
        %4798 = vrot.lane.b32.xlu0 %v4213, 104
        %v4799 = vpop.permute.xlu0 %4798
        %4800 = vrot.lane.b32.xlu0 %v4253, 104
        %v4801 = vpop.permute.xlu0 %4800
        %v4802 = vsel %vm948, %v4799, 0
        %v4804 = vsel %vm948, %v4801, 0
        %4806 = vmatprep.subr.mxu0 0.0
        %4807 = vmatpush1.xpose.msra.mxu0 %v4804
        %4808 = vmatprep.subr.mxu0 0.0
        %4809 = vmatpush1.xpose.msra.mxu0 0.0
        %4810 = vmatprep.subr.mxu0 0.0
        %4811 = vmatpush1.xpose.msra.mxu0 0.0
        %4812 = vmatprep.subr.mxu0 0.0
        %4813 = vmatpush1.xpose.msra.mxu0 0.0
        %4814 = vmatprep.subr.mxu0 0.0
        %4815 = vmatpush1.xpose.msra.mxu0 0.0
        %4816 = vmatprep.subr.mxu0 0.0
        %4817 = vmatpush1.xpose.msra.mxu0 0.0
        %4818 = vmatprep.subr.mxu0 0.0
        %4819 = vmatpush1.xpose.msra.mxu0 0.0
        %4820 = vmatprep.subr.mxu0 0.0
        %4821 = vmatpush1.xpose.msra.mxu0 0.0
        %4822 = vmatprep.subr.mxu0 0.0
        %4823 = vmatpush1.xpose.msra.mxu0 0.0
        %4824 = vmatprep.subr.mxu0 0.0
        %4825 = vmatpush1.xpose.msra.mxu0 0.0
        %4826 = vmatprep.subr.mxu0 0.0
        %4827 = vmatpush1.xpose.msra.mxu0 0.0
        %4828 = vmatprep.subr.mxu0 0.0
        %4829 = vmatpush1.xpose.msra.mxu0 0.0
        %4830 = vmatprep.subr.mxu0 0.0
        %4831 = vmatpush1.xpose.msra.mxu0 0.0
        %4832 = vmatprep.subr.mxu0 0.0
        %4833 = vmatpush1.xpose.msra.mxu0 0.0
        %4834 = vmatprep.subr.mxu0 0.0
        %4835 = vmatpush1.xpose.msra.mxu0 0.0
        %4836 = vmatprep.subr.mxu0 0.0
        %4837 = vmatpush1.xpose.msra.mxu0 0.0
        %4838 = vmatprep.subr.mxu0 0.0
        %4839 = vmatpush1.xpose.msra.mxu0 0.0
        %4840 = vmatprep.subr.mxu0 0.0
        %4841 = vmatpush1.xpose.msra.mxu0 0.0
        %4842 = vmatprep.subr.mxu0 0.0
        %4843 = vmatpush1.xpose.msra.mxu0 0.0
        %4844 = vmatprep.subr.mxu0 0.0
        %4845 = vmatpush1.xpose.msra.mxu0 0.0
        %4846 = vmatprep.subr.mxu0 0.0
        %4847 = vmatpush1.xpose.msra.mxu0 0.0
        %4848 = vmatprep.subr.mxu0 0.0
        %4849 = vmatpush1.xpose.msra.mxu0 0.0
        %4850 = vmatprep.subr.mxu0 0.0
        %4851 = vmatpush1.xpose.msra.mxu0 0.0
        %4852 = vmatprep.subr.mxu0 0.0
        %4853 = vmatpush1.xpose.msra.mxu0 0.0
        %4854 = vmatprep.subr.mxu0 0.0
        %4855 = vmatpush1.xpose.msra.mxu0 0.0
        %4856 = vmatprep.subr.mxu0 0.0
        %4857 = vmatpush1.xpose.msra.mxu0 0.0
        %4858 = vmatprep.subr.mxu0 0.0
        %4859 = vmatpush1.xpose.msra.mxu0 0.0
        %4860 = vmatprep.subr.mxu0 0.0
        %4861 = vmatpush1.xpose.msra.mxu0 0.0
        %4862 = vmatprep.subr.mxu0 0.0
        %4863 = vmatpush1.xpose.msra.mxu0 0.0
        %4864 = vmatprep.subr.mxu0 0.0
        %4865 = vmatpush1.xpose.msra.mxu0 0.0
        %4866 = vmatprep.subr.mxu0 0.0
        %4867 = vmatpush1.xpose.msra.mxu0 0.0
        %4868 = vmatprep.subr.mxu0 0.0
        %4869 = vmatpush1.xpose.msra.mxu0 0.0
        %4870 = vmatprep.mubr.f32.mxu0 0.0
        %4871 = vmatmul.mubr.f32.gmra.mrb[0].mxu0 %v4802
        %v4872 = vpop.f32.mrb[0].mxu0
        %v4873 = vadd.f32 0.0, %v4872
        %v4874 = vpop.f32.mrb[0].mxu0
        %4875 = vdwg.mxu0
        %v4876 = vmul.f32 %v4873, 0.35355338
        %vm4877 = vcmp.ne.f32.partialorder %v714, 0.0
        %v4878 = vsel %vm4877, -1e+09, %v4876
        %v4879 = vsel %vm948, %v4878, -inf
        %4880 = vmax.xlane.f32.xlu0 %v4879
        %v4881 = vpop.xlane.xlu0 %4880
        %v4882 = vsub.f32 %v4878, %v4881
        %v4883 = vmul.f32 %v4882, 1.442695
        %v4884 = vpow.pop %v4883
        %v4885 = vsel %vm948, %v4884, 0.0
        %4886 = vadd.xlane.f32.xlu0 %v4885
        %v4887 = vpop.xlane.xlu0 %4886
        %v4888 = vrcp.pop %v4887
        %v4889 = vmul.f32 %v4884, %v4888
        %4890 = vrot.lane.b32.xlu0 %v4293, 104
        %v4891 = vpop.permute.xlu0 %4890
        %v4894 = vsel %vm948, %v4889, 0
        %4896 = vmatprep.subr.mxu0 0.0
        %4897 = vmatpush1.msra.mxu0 %v4891
        %4898 = vmatprep.subr.mxu0 0.0
        %4899 = vmatpush1.msra.mxu0 0.0
        %4900 = vmatprep.subr.mxu0 0.0
        %4901 = vmatpush1.msra.mxu0 0.0
        %4902 = vmatprep.subr.mxu0 0.0
        %4903 = vmatpush1.msra.mxu0 0.0
        %4904 = vmatprep.subr.mxu0 0.0
        %4905 = vmatpush1.msra.mxu0 0.0
        %4906 = vmatprep.subr.mxu0 0.0
        %4907 = vmatpush1.msra.mxu0 0.0
        %4908 = vmatprep.subr.mxu0 0.0
        %4909 = vmatpush1.msra.mxu0 0.0
        %4910 = vmatprep.subr.mxu0 0.0
        %4911 = vmatpush1.msra.mxu0 0.0
        %4912 = vmatprep.subr.mxu0 0.0
        %4913 = vmatpush1.msra.mxu0 0.0
        %4914 = vmatprep.subr.mxu0 0.0
        %4915 = vmatpush1.msra.mxu0 0.0
        %4916 = vmatprep.subr.mxu0 0.0
        %4917 = vmatpush1.msra.mxu0 0.0
        %4918 = vmatprep.subr.mxu0 0.0
        %4919 = vmatpush1.msra.mxu0 0.0
        %4920 = vmatprep.subr.mxu0 0.0
        %4921 = vmatpush1.msra.mxu0 0.0
        %4922 = vmatprep.subr.mxu0 0.0
        %4923 = vmatpush1.msra.mxu0 0.0
        %4924 = vmatprep.subr.mxu0 0.0
        %4925 = vmatpush1.msra.mxu0 0.0
        %4926 = vmatprep.subr.mxu0 0.0
        %4927 = vmatpush1.msra.mxu0 0.0
        %4928 = vmatprep.subr.mxu0 0.0
        %4929 = vmatpush1.msra.mxu0 0.0
        %4930 = vmatprep.subr.mxu0 0.0
        %4931 = vmatpush1.msra.mxu0 0.0
        %4932 = vmatprep.subr.mxu0 0.0
        %4933 = vmatpush1.msra.mxu0 0.0
        %4934 = vmatprep.subr.mxu0 0.0
        %4935 = vmatpush1.msra.mxu0 0.0
        %4936 = vmatprep.subr.mxu0 0.0
        %4937 = vmatpush1.msra.mxu0 0.0
        %4938 = vmatprep.subr.mxu0 0.0
        %4939 = vmatpush1.msra.mxu0 0.0
        %4940 = vmatprep.subr.mxu0 0.0
        %4941 = vmatpush1.msra.mxu0 0.0
        %4942 = vmatprep.subr.mxu0 0.0
        %4943 = vmatpush1.msra.mxu0 0.0
        %4944 = vmatprep.subr.mxu0 0.0
        %4945 = vmatpush1.msra.mxu0 0.0
        %4946 = vmatprep.subr.mxu0 0.0
        %4947 = vmatpush1.msra.mxu0 0.0
        %4948 = vmatprep.subr.mxu0 0.0
        %4949 = vmatpush1.msra.mxu0 0.0
        %4950 = vmatprep.subr.mxu0 0.0
        %4951 = vmatpush1.msra.mxu0 0.0
        %4952 = vmatprep.subr.mxu0 0.0
        %4953 = vmatpush1.msra.mxu0 0.0
        %4954 = vmatprep.subr.mxu0 0.0
        %4955 = vmatpush1.msra.mxu0 0.0
        %4956 = vmatprep.subr.mxu0 0.0
        %4957 = vmatpush1.msra.mxu0 0.0
        %4958 = vmatprep.subr.mxu0 0.0
        %4959 = vmatpush1.msra.mxu0 0.0
        %4960 = vmatprep.mubr.f32.mxu0 0.0
        %4961 = vmatmul.mubr.f32.gmra.mrb[0].mxu0 %v4894
        %v4962 = vpop.f32.mrb[0].mxu0
        %v4963 = vadd.f32 0.0, %v4962
        %v4964 = vpop.f32.mrb[0].mxu0
        %4965 = vdwg.mxu0
        %4966 = vrot.lane.b32.xlu0 %v4213, 96
        %v4967 = vpop.permute.xlu0 %4966
        %4968 = vrot.lane.b32.xlu0 %v4253, 96
        %v4969 = vpop.permute.xlu0 %4968
        %v4970 = vsel %vm948, %v4967, 0
        %v4972 = vsel %vm948, %v4969, 0
        %4974 = vmatprep.subr.mxu0 0.0
        %4975 = vmatpush1.xpose.msra.mxu0 %v4972
        %4976 = vmatprep.subr.mxu0 0.0
        %4977 = vmatpush1.xpose.msra.mxu0 0.0
        %4978 = vmatprep.subr.mxu0 0.0
        %4979 = vmatpush1.xpose.msra.mxu0 0.0
        %4980 = vmatprep.subr.mxu0 0.0
        %4981 = vmatpush1.xpose.msra.mxu0 0.0
        %4982 = vmatprep.subr.mxu0 0.0
        %4983 = vmatpush1.xpose.msra.mxu0 0.0
        %4984 = vmatprep.subr.mxu0 0.0
        %4985 = vmatpush1.xpose.msra.mxu0 0.0
        %4986 = vmatprep.subr.mxu0 0.0
        %4987 = vmatpush1.xpose.msra.mxu0 0.0
        %4988 = vmatprep.subr.mxu0 0.0
        %4989 = vmatpush1.xpose.msra.mxu0 0.0
        %4990 = vmatprep.subr.mxu0 0.0
        %4991 = vmatpush1.xpose.msra.mxu0 0.0
        %4992 = vmatprep.subr.mxu0 0.0
        %4993 = vmatpush1.xpose.msra.mxu0 0.0
        %4994 = vmatprep.subr.mxu0 0.0
        %4995 = vmatpush1.xpose.msra.mxu0 0.0
        %4996 = vmatprep.subr.mxu0 0.0
        %4997 = vmatpush1.xpose.msra.mxu0 0.0
        %4998 = vmatprep.subr.mxu0 0.0
        %4999 = vmatpush1.xpose.msra.mxu0 0.0
        %5000 = vmatprep.subr.mxu0 0.0
        %5001 = vmatpush1.xpose.msra.mxu0 0.0
        %5002 = vmatprep.subr.mxu0 0.0
        %5003 = vmatpush1.xpose.msra.mxu0 0.0
        %5004 = vmatprep.subr.mxu0 0.0
        %5005 = vmatpush1.xpose.msra.mxu0 0.0
        %5006 = vmatprep.subr.mxu0 0.0
        %5007 = vmatpush1.xpose.msra.mxu0 0.0
        %5008 = vmatprep.subr.mxu0 0.0
        %5009 = vmatpush1.xpose.msra.mxu0 0.0
        %5010 = vmatprep.subr.mxu0 0.0
        %5011 = vmatpush1.xpose.msra.mxu0 0.0
        %5012 = vmatprep.subr.mxu0 0.0
        %5013 = vmatpush1.xpose.msra.mxu0 0.0
        %5014 = vmatprep.subr.mxu0 0.0
        %5015 = vmatpush1.xpose.msra.mxu0 0.0
        %5016 = vmatprep.subr.mxu0 0.0
        %5017 = vmatpush1.xpose.msra.mxu0 0.0
        %5018 = vmatprep.subr.mxu0 0.0
        %5019 = vmatpush1.xpose.msra.mxu0 0.0
        %5020 = vmatprep.subr.mxu0 0.0
        %5021 = vmatpush1.xpose.msra.mxu0 0.0
        %5022 = vmatprep.subr.mxu0 0.0
        %5023 = vmatpush1.xpose.msra.mxu0 0.0
        %5024 = vmatprep.subr.mxu0 0.0
        %5025 = vmatpush1.xpose.msra.mxu0 0.0
        %5026 = vmatprep.subr.mxu0 0.0
        %5027 = vmatpush1.xpose.msra.mxu0 0.0
        %5028 = vmatprep.subr.mxu0 0.0
        %5029 = vmatpush1.xpose.msra.mxu0 0.0
        %5030 = vmatprep.subr.mxu0 0.0
        %5031 = vmatpush1.xpose.msra.mxu0 0.0
        %5032 = vmatprep.subr.mxu0 0.0
        %5033 = vmatpush1.xpose.msra.mxu0 0.0
        %5034 = vmatprep.subr.mxu0 0.0
        %5035 = vmatpush1.xpose.msra.mxu0 0.0
        %5036 = vmatprep.subr.mxu0 0.0
        %5037 = vmatpush1.xpose.msra.mxu0 0.0
        %5038 = vmatprep.mubr.f32.mxu0 0.0
        %5039 = vmatmul.mubr.f32.gmra.mrb[0].mxu0 %v4970
        %v5040 = vpop.f32.mrb[0].mxu0
        %v5041 = vadd.f32 0.0, %v5040
        %v5042 = vpop.f32.mrb[0].mxu0
        %5043 = vdwg.mxu0
        %v5044 = vmul.f32 %v5041, 0.35355338
        %vm5045 = vcmp.ne.f32.partialorder %v715, 0.0
        %v5046 = vsel %vm5045, -1e+09, %v5044
        %v5047 = vsel %vm948, %v5046, -inf
        %5048 = vmax.xlane.f32.xlu0 %v5047
        %v5049 = vpop.xlane.xlu0 %5048
        %v5050 = vsub.f32 %v5046, %v5049
        %v5051 = vmul.f32 %v5050, 1.442695
        %v5052 = vpow.pop %v5051
        %v5053 = vsel %vm948, %v5052, 0.0
        %5054 = vadd.xlane.f32.xlu0 %v5053
        %v5055 = vpop.xlane.xlu0 %5054
        %v5056 = vrcp.pop %v5055
        %v5057 = vmul.f32 %v5052, %v5056
        %5058 = vrot.lane.b32.xlu0 %v4293, 96
        %v5059 = vpop.permute.xlu0 %5058
        %v5062 = vsel %vm948, %v5057, 0
        %5064 = vmatprep.subr.mxu0 0.0
        %5065 = vmatpush1.msra.mxu0 %v5059
        %5066 = vmatprep.subr.mxu0 0.0
        %5067 = vmatpush1.msra.mxu0 0.0
        %5068 = vmatprep.subr.mxu0 0.0
        %5069 = vmatpush1.msra.mxu0 0.0
        %5070 = vmatprep.subr.mxu0 0.0
        %5071 = vmatpush1.msra.mxu0 0.0
        %5072 = vmatprep.subr.mxu0 0.0
        %5073 = vmatpush1.msra.mxu0 0.0
        %5074 = vmatprep.subr.mxu0 0.0
        %5075 = vmatpush1.msra.mxu0 0.0
        %5076 = vmatprep.subr.mxu0 0.0
        %5077 = vmatpush1.msra.mxu0 0.0
        %5078 = vmatprep.subr.mxu0 0.0
        %5079 = vmatpush1.msra.mxu0 0.0
        %5080 = vmatprep.subr.mxu0 0.0
        %5081 = vmatpush1.msra.mxu0 0.0
        %5082 = vmatprep.subr.mxu0 0.0
        %5083 = vmatpush1.msra.mxu0 0.0
        %5084 = vmatprep.subr.mxu0 0.0
        %5085 = vmatpush1.msra.mxu0 0.0
        %5086 = vmatprep.subr.mxu0 0.0
        %5087 = vmatpush1.msra.mxu0 0.0
        %5088 = vmatprep.subr.mxu0 0.0
        %5089 = vmatpush1.msra.mxu0 0.0
        %5090 = vmatprep.subr.mxu0 0.0
        %5091 = vmatpush1.msra.mxu0 0.0
        %5092 = vmatprep.subr.mxu0 0.0
        %5093 = vmatpush1.msra.mxu0 0.0
        %5094 = vmatprep.subr.mxu0 0.0
        %5095 = vmatpush1.msra.mxu0 0.0
        %5096 = vmatprep.subr.mxu0 0.0
        %5097 = vmatpush1.msra.mxu0 0.0
        %5098 = vmatprep.subr.mxu0 0.0
        %5099 = vmatpush1.msra.mxu0 0.0
        %5100 = vmatprep.subr.mxu0 0.0
        %5101 = vmatpush1.msra.mxu0 0.0
        %5102 = vmatprep.subr.mxu0 0.0
        %5103 = vmatpush1.msra.mxu0 0.0
        %5104 = vmatprep.subr.mxu0 0.0
        %5105 = vmatpush1.msra.mxu0 0.0
        %5106 = vmatprep.subr.mxu0 0.0
        %5107 = vmatpush1.msra.mxu0 0.0
        %5108 = vmatprep.subr.mxu0 0.0
        %5109 = vmatpush1.msra.mxu0 0.0
        %5110 = vmatprep.subr.mxu0 0.0
        %5111 = vmatpush1.msra.mxu0 0.0
        %5112 = vmatprep.subr.mxu0 0.0
        %5113 = vmatpush1.msra.mxu0 0.0
        %5114 = vmatprep.subr.mxu0 0.0
        %5115 = vmatpush1.msra.mxu0 0.0
        %5116 = vmatprep.subr.mxu0 0.0
        %5117 = vmatpush1.msra.mxu0 0.0
        %5118 = vmatprep.subr.mxu0 0.0
        %5119 = vmatpush1.msra.mxu0 0.0
        %5120 = vmatprep.subr.mxu0 0.0
        %5121 = vmatpush1.msra.mxu0 0.0
        %5122 = vmatprep.subr.mxu0 0.0
        %5123 = vmatpush1.msra.mxu0 0.0
        %5124 = vmatprep.subr.mxu0 0.0
        %5125 = vmatpush1.msra.mxu0 0.0
        %5126 = vmatprep.subr.mxu0 0.0
        %5127 = vmatpush1.msra.mxu0 0.0
        %5128 = vmatprep.mubr.f32.mxu0 0.0
        %5129 = vmatmul.mubr.f32.gmra.mrb[0].mxu0 %v5062
        %v5130 = vpop.f32.mrb[0].mxu0
        %v5131 = vadd.f32 0.0, %v5130
        %v5132 = vpop.f32.mrb[0].mxu0
        %5133 = vdwg.mxu0
        %5134 = vrot.lane.b32.xlu0 %v4213, 88
        %v5135 = vpop.permute.xlu0 %5134
        %5136 = vrot.lane.b32.xlu0 %v4253, 88
        %v5137 = vpop.permute.xlu0 %5136
        %v5138 = vsel %vm948, %v5135, 0
        %v5140 = vsel %vm948, %v5137, 0
        %5142 = vmatprep.subr.mxu0 0.0
        %5143 = vmatpush1.xpose.msra.mxu0 %v5140
        %5144 = vmatprep.subr.mxu0 0.0
        %5145 = vmatpush1.xpose.msra.mxu0 0.0
        %5146 = vmatprep.subr.mxu0 0.0
        %5147 = vmatpush1.xpose.msra.mxu0 0.0
        %5148 = vmatprep.subr.mxu0 0.0
        %5149 = vmatpush1.xpose.msra.mxu0 0.0
        %5150 = vmatprep.subr.mxu0 0.0
        %5151 = vmatpush1.xpose.msra.mxu0 0.0
        %5152 = vmatprep.subr.mxu0 0.0
        %5153 = vmatpush1.xpose.msra.mxu0 0.0
        %5154 = vmatprep.subr.mxu0 0.0
        %5155 = vmatpush1.xpose.msra.mxu0 0.0
        %5156 = vmatprep.subr.mxu0 0.0
        %5157 = vmatpush1.xpose.msra.mxu0 0.0
        %5158 = vmatprep.subr.mxu0 0.0
        %5159 = vmatpush1.xpose.msra.mxu0 0.0
        %5160 = vmatprep.subr.mxu0 0.0
        %5161 = vmatpush1.xpose.msra.mxu0 0.0
        %5162 = vmatprep.subr.mxu0 0.0
        %5163 = vmatpush1.xpose.msra.mxu0 0.0
        %5164 = vmatprep.subr.mxu0 0.0
        %5165 = vmatpush1.xpose.msra.mxu0 0.0
        %5166 = vmatprep.subr.mxu0 0.0
        %5167 = vmatpush1.xpose.msra.mxu0 0.0
        %5168 = vmatprep.subr.mxu0 0.0
        %5169 = vmatpush1.xpose.msra.mxu0 0.0
        %5170 = vmatprep.subr.mxu0 0.0
        %5171 = vmatpush1.xpose.msra.mxu0 0.0
        %5172 = vmatprep.subr.mxu0 0.0
        %5173 = vmatpush1.xpose.msra.mxu0 0.0
        %5174 = vmatprep.subr.mxu0 0.0
        %5175 = vmatpush1.xpose.msra.mxu0 0.0
        %5176 = vmatprep.subr.mxu0 0.0
        %5177 = vmatpush1.xpose.msra.mxu0 0.0
        %5178 = vmatprep.subr.mxu0 0.0
        %5179 = vmatpush1.xpose.msra.mxu0 0.0
        %5180 = vmatprep.subr.mxu0 0.0
        %5181 = vmatpush1.xpose.msra.mxu0 0.0
        %5182 = vmatprep.subr.mxu0 0.0
        %5183 = vmatpush1.xpose.msra.mxu0 0.0
        %5184 = vmatprep.subr.mxu0 0.0
        %5185 = vmatpush1.xpose.msra.mxu0 0.0
        %5186 = vmatprep.subr.mxu0 0.0
        %5187 = vmatpush1.xpose.msra.mxu0 0.0
        %5188 = vmatprep.subr.mxu0 0.0
        %5189 = vmatpush1.xpose.msra.mxu0 0.0
        %5190 = vmatprep.subr.mxu0 0.0
        %5191 = vmatpush1.xpose.msra.mxu0 0.0
        %5192 = vmatprep.subr.mxu0 0.0
        %5193 = vmatpush1.xpose.msra.mxu0 0.0
        %5194 = vmatprep.subr.mxu0 0.0
        %5195 = vmatpush1.xpose.msra.mxu0 0.0
        %5196 = vmatprep.subr.mxu0 0.0
        %5197 = vmatpush1.xpose.msra.mxu0 0.0
        %5198 = vmatprep.subr.mxu0 0.0
        %5199 = vmatpush1.xpose.msra.mxu0 0.0
        %5200 = vmatprep.subr.mxu0 0.0
        %5201 = vmatpush1.xpose.msra.mxu0 0.0
        %5202 = vmatprep.subr.mxu0 0.0
        %5203 = vmatpush1.xpose.msra.mxu0 0.0
        %5204 = vmatprep.subr.mxu0 0.0
        %5205 = vmatpush1.xpose.msra.mxu0 0.0
        %5206 = vmatprep.mubr.f32.mxu0 0.0
        %5207 = vmatmul.mubr.f32.gmra.mrb[0].mxu0 %v5138
        %v5208 = vpop.f32.mrb[0].mxu0
        %v5209 = vadd.f32 0.0, %v5208
        %v5210 = vpop.f32.mrb[0].mxu0
        %5211 = vdwg.mxu0
        %v5212 = vmul.f32 %v5209, 0.35355338
        %vm5213 = vcmp.ne.f32.partialorder %v716, 0.0
        %v5214 = vsel %vm5213, -1e+09, %v5212
        %v5215 = vsel %vm948, %v5214, -inf
        %5216 = vmax.xlane.f32.xlu0 %v5215
        %v5217 = vpop.xlane.xlu0 %5216
        %v5218 = vsub.f32 %v5214, %v5217
        %v5219 = vmul.f32 %v5218, 1.442695
        %v5220 = vpow.pop %v5219
        %v5221 = vsel %vm948, %v5220, 0.0
        %5222 = vadd.xlane.f32.xlu0 %v5221
        %v5223 = vpop.xlane.xlu0 %5222
        %v5224 = vrcp.pop %v5223
        %v5225 = vmul.f32 %v5220, %v5224
        %5226 = vrot.lane.b32.xlu0 %v4293, 88
        %v5227 = vpop.permute.xlu0 %5226
        %v5230 = vsel %vm948, %v5225, 0
        %5232 = vmatprep.subr.mxu0 0.0
        %5233 = vmatpush1.msra.mxu0 %v5227
        %5234 = vmatprep.subr.mxu0 0.0
        %5235 = vmatpush1.msra.mxu0 0.0
        %5236 = vmatprep.subr.mxu0 0.0
        %5237 = vmatpush1.msra.mxu0 0.0
        %5238 = vmatprep.subr.mxu0 0.0
        %5239 = vmatpush1.msra.mxu0 0.0
        %5240 = vmatprep.subr.mxu0 0.0
        %5241 = vmatpush1.msra.mxu0 0.0
        %5242 = vmatprep.subr.mxu0 0.0
        %5243 = vmatpush1.msra.mxu0 0.0
        %5244 = vmatprep.subr.mxu0 0.0
        %5245 = vmatpush1.msra.mxu0 0.0
        %5246 = vmatprep.subr.mxu0 0.0
        %5247 = vmatpush1.msra.mxu0 0.0
        %5248 = vmatprep.subr.mxu0 0.0
        %5249 = vmatpush1.msra.mxu0 0.0
        %5250 = vmatprep.subr.mxu0 0.0
        %5251 = vmatpush1.msra.mxu0 0.0
        %5252 = vmatprep.subr.mxu0 0.0
        %5253 = vmatpush1.msra.mxu0 0.0
        %5254 = vmatprep.subr.mxu0 0.0
        %5255 = vmatpush1.msra.mxu0 0.0
        %5256 = vmatprep.subr.mxu0 0.0
        %5257 = vmatpush1.msra.mxu0 0.0
        %5258 = vmatprep.subr.mxu0 0.0
        %5259 = vmatpush1.msra.mxu0 0.0
        %5260 = vmatprep.subr.mxu0 0.0
        %5261 = vmatpush1.msra.mxu0 0.0
        %5262 = vmatprep.subr.mxu0 0.0
        %5263 = vmatpush1.msra.mxu0 0.0
        %5264 = vmatprep.subr.mxu0 0.0
        %5265 = vmatpush1.msra.mxu0 0.0
        %5266 = vmatprep.subr.mxu0 0.0
        %5267 = vmatpush1.msra.mxu0 0.0
        %5268 = vmatprep.subr.mxu0 0.0
        %5269 = vmatpush1.msra.mxu0 0.0
        %5270 = vmatprep.subr.mxu0 0.0
        %5271 = vmatpush1.msra.mxu0 0.0
        %5272 = vmatprep.subr.mxu0 0.0
        %5273 = vmatpush1.msra.mxu0 0.0
        %5274 = vmatprep.subr.mxu0 0.0
        %5275 = vmatpush1.msra.mxu0 0.0
        %5276 = vmatprep.subr.mxu0 0.0
        %5277 = vmatpush1.msra.mxu0 0.0
        %5278 = vmatprep.subr.mxu0 0.0
        %5279 = vmatpush1.msra.mxu0 0.0
        %5280 = vmatprep.subr.mxu0 0.0
        %5281 = vmatpush1.msra.mxu0 0.0
        %5282 = vmatprep.subr.mxu0 0.0
        %5283 = vmatpush1.msra.mxu0 0.0
        %5284 = vmatprep.subr.mxu0 0.0
        %5285 = vmatpush1.msra.mxu0 0.0
        %5286 = vmatprep.subr.mxu0 0.0
        %5287 = vmatpush1.msra.mxu0 0.0
        %5288 = vmatprep.subr.mxu0 0.0
        %5289 = vmatpush1.msra.mxu0 0.0
        %5290 = vmatprep.subr.mxu0 0.0
        %5291 = vmatpush1.msra.mxu0 0.0
        %5292 = vmatprep.subr.mxu0 0.0
        %5293 = vmatpush1.msra.mxu0 0.0
        %5294 = vmatprep.subr.mxu0 0.0
        %5295 = vmatpush1.msra.mxu0 0.0
        %5296 = vmatprep.mubr.f32.mxu0 0.0
        %5297 = vmatmul.mubr.f32.gmra.mrb[0].mxu0 %v5230
        %v5298 = vpop.f32.mrb[0].mxu0
        %v5299 = vadd.f32 0.0, %v5298
        %v5300 = vpop.f32.mrb[0].mxu0
        %5301 = vdwg.mxu0
        %5302 = vrot.lane.b32.xlu0 %v4213, 80
        %v5303 = vpop.permute.xlu0 %5302
        %5304 = vrot.lane.b32.xlu0 %v4253, 80
        %v5305 = vpop.permute.xlu0 %5304
        %v5306 = vsel %vm948, %v5303, 0
        %v5308 = vsel %vm948, %v5305, 0
        %5310 = vmatprep.subr.mxu0 0.0
        %5311 = vmatpush1.xpose.msra.mxu0 %v5308
        %5312 = vmatprep.subr.mxu0 0.0
        %5313 = vmatpush1.xpose.msra.mxu0 0.0
        %5314 = vmatprep.subr.mxu0 0.0
        %5315 = vmatpush1.xpose.msra.mxu0 0.0
        %5316 = vmatprep.subr.mxu0 0.0
        %5317 = vmatpush1.xpose.msra.mxu0 0.0
        %5318 = vmatprep.subr.mxu0 0.0
        %5319 = vmatpush1.xpose.msra.mxu0 0.0
        %5320 = vmatprep.subr.mxu0 0.0
        %5321 = vmatpush1.xpose.msra.mxu0 0.0
        %5322 = vmatprep.subr.mxu0 0.0
        %5323 = vmatpush1.xpose.msra.mxu0 0.0
        %5324 = vmatprep.subr.mxu0 0.0
        %5325 = vmatpush1.xpose.msra.mxu0 0.0
        %5326 = vmatprep.subr.mxu0 0.0
        %5327 = vmatpush1.xpose.msra.mxu0 0.0
        %5328 = vmatprep.subr.mxu0 0.0
        %5329 = vmatpush1.xpose.msra.mxu0 0.0
        %5330 = vmatprep.subr.mxu0 0.0
        %5331 = vmatpush1.xpose.msra.mxu0 0.0
        %5332 = vmatprep.subr.mxu0 0.0
        %5333 = vmatpush1.xpose.msra.mxu0 0.0
        %5334 = vmatprep.subr.mxu0 0.0
        %5335 = vmatpush1.xpose.msra.mxu0 0.0
        %5336 = vmatprep.subr.mxu0 0.0
        %5337 = vmatpush1.xpose.msra.mxu0 0.0
        %5338 = vmatprep.subr.mxu0 0.0
        %5339 = vmatpush1.xpose.msra.mxu0 0.0
        %5340 = vmatprep.subr.mxu0 0.0
        %5341 = vmatpush1.xpose.msra.mxu0 0.0
        %5342 = vmatprep.subr.mxu0 0.0
        %5343 = vmatpush1.xpose.msra.mxu0 0.0
        %5344 = vmatprep.subr.mxu0 0.0
        %5345 = vmatpush1.xpose.msra.mxu0 0.0
        %5346 = vmatprep.subr.mxu0 0.0
        %5347 = vmatpush1.xpose.msra.mxu0 0.0
        %5348 = vmatprep.subr.mxu0 0.0
        %5349 = vmatpush1.xpose.msra.mxu0 0.0
        %5350 = vmatprep.subr.mxu0 0.0
        %5351 = vmatpush1.xpose.msra.mxu0 0.0
        %5352 = vmatprep.subr.mxu0 0.0
        %5353 = vmatpush1.xpose.msra.mxu0 0.0
        %5354 = vmatprep.subr.mxu0 0.0
        %5355 = vmatpush1.xpose.msra.mxu0 0.0
        %5356 = vmatprep.subr.mxu0 0.0
        %5357 = vmatpush1.xpose.msra.mxu0 0.0
        %5358 = vmatprep.subr.mxu0 0.0
        %5359 = vmatpush1.xpose.msra.mxu0 0.0
        %5360 = vmatprep.subr.mxu0 0.0
        %5361 = vmatpush1.xpose.msra.mxu0 0.0
        %5362 = vmatprep.subr.mxu0 0.0
        %5363 = vmatpush1.xpose.msra.mxu0 0.0
        %5364 = vmatprep.subr.mxu0 0.0
        %5365 = vmatpush1.xpose.msra.mxu0 0.0
        %5366 = vmatprep.subr.mxu0 0.0
        %5367 = vmatpush1.xpose.msra.mxu0 0.0
        %5368 = vmatprep.subr.mxu0 0.0
        %5369 = vmatpush1.xpose.msra.mxu0 0.0
        %5370 = vmatprep.subr.mxu0 0.0
        %5371 = vmatpush1.xpose.msra.mxu0 0.0
        %5372 = vmatprep.subr.mxu0 0.0
        %5373 = vmatpush1.xpose.msra.mxu0 0.0
        %5374 = vmatprep.mubr.f32.mxu0 0.0
        %5375 = vmatmul.mubr.f32.gmra.mrb[0].mxu0 %v5306
        %v5376 = vpop.f32.mrb[0].mxu0
        %v5377 = vadd.f32 0.0, %v5376
        %v5378 = vpop.f32.mrb[0].mxu0
        %5379 = vdwg.mxu0
        %v5380 = vmul.f32 %v5377, 0.35355338
        %vm5381 = vcmp.ne.f32.partialorder %v717, 0.0
        %v5382 = vsel %vm5381, -1e+09, %v5380
        %v5383 = vsel %vm948, %v5382, -inf
        %5384 = vmax.xlane.f32.xlu0 %v5383
        %v5385 = vpop.xlane.xlu0 %5384
        %v5386 = vsub.f32 %v5382, %v5385
        %v5387 = vmul.f32 %v5386, 1.442695
        %v5388 = vpow.pop %v5387
        %v5389 = vsel %vm948, %v5388, 0.0
        %5390 = vadd.xlane.f32.xlu0 %v5389
        %v5391 = vpop.xlane.xlu0 %5390
        %v5392 = vrcp.pop %v5391
        %v5393 = vmul.f32 %v5388, %v5392
        %5394 = vrot.lane.b32.xlu0 %v4293, 80
        %v5395 = vpop.permute.xlu0 %5394
        %v5398 = vsel %vm948, %v5393, 0
        %5400 = vmatprep.subr.mxu0 0.0
        %5401 = vmatpush1.msra.mxu0 %v5395
        %5402 = vmatprep.subr.mxu0 0.0
        %5403 = vmatpush1.msra.mxu0 0.0
        %5404 = vmatprep.subr.mxu0 0.0
        %5405 = vmatpush1.msra.mxu0 0.0
        %5406 = vmatprep.subr.mxu0 0.0
        %5407 = vmatpush1.msra.mxu0 0.0
        %5408 = vmatprep.subr.mxu0 0.0
        %5409 = vmatpush1.msra.mxu0 0.0
        %5410 = vmatprep.subr.mxu0 0.0
        %5411 = vmatpush1.msra.mxu0 0.0
        %5412 = vmatprep.subr.mxu0 0.0
        %5413 = vmatpush1.msra.mxu0 0.0
        %5414 = vmatprep.subr.mxu0 0.0
        %5415 = vmatpush1.msra.mxu0 0.0
        %5416 = vmatprep.subr.mxu0 0.0
        %5417 = vmatpush1.msra.mxu0 0.0
        %5418 = vmatprep.subr.mxu0 0.0
        %5419 = vmatpush1.msra.mxu0 0.0
        %5420 = vmatprep.subr.mxu0 0.0
        %5421 = vmatpush1.msra.mxu0 0.0
        %5422 = vmatprep.subr.mxu0 0.0
        %5423 = vmatpush1.msra.mxu0 0.0
        %5424 = vmatprep.subr.mxu0 0.0
        %5425 = vmatpush1.msra.mxu0 0.0
        %5426 = vmatprep.subr.mxu0 0.0
        %5427 = vmatpush1.msra.mxu0 0.0
        %5428 = vmatprep.subr.mxu0 0.0
        %5429 = vmatpush1.msra.mxu0 0.0
        %5430 = vmatprep.subr.mxu0 0.0
        %5431 = vmatpush1.msra.mxu0 0.0
        %5432 = vmatprep.subr.mxu0 0.0
        %5433 = vmatpush1.msra.mxu0 0.0
        %5434 = vmatprep.subr.mxu0 0.0
        %5435 = vmatpush1.msra.mxu0 0.0
        %5436 = vmatprep.subr.mxu0 0.0
        %5437 = vmatpush1.msra.mxu0 0.0
        %5438 = vmatprep.subr.mxu0 0.0
        %5439 = vmatpush1.msra.mxu0 0.0
        %5440 = vmatprep.subr.mxu0 0.0
        %5441 = vmatpush1.msra.mxu0 0.0
        %5442 = vmatprep.subr.mxu0 0.0
        %5443 = vmatpush1.msra.mxu0 0.0
        %5444 = vmatprep.subr.mxu0 0.0
        %5445 = vmatpush1.msra.mxu0 0.0
        %5446 = vmatprep.subr.mxu0 0.0
        %5447 = vmatpush1.msra.mxu0 0.0
        %5448 = vmatprep.subr.mxu0 0.0
        %5449 = vmatpush1.msra.mxu0 0.0
        %5450 = vmatprep.subr.mxu0 0.0
        %5451 = vmatpush1.msra.mxu0 0.0
        %5452 = vmatprep.subr.mxu0 0.0
        %5453 = vmatpush1.msra.mxu0 0.0
        %5454 = vmatprep.subr.mxu0 0.0
        %5455 = vmatpush1.msra.mxu0 0.0
        %5456 = vmatprep.subr.mxu0 0.0
        %5457 = vmatpush1.msra.mxu0 0.0
        %5458 = vmatprep.subr.mxu0 0.0
        %5459 = vmatpush1.msra.mxu0 0.0
        %5460 = vmatprep.subr.mxu0 0.0
        %5461 = vmatpush1.msra.mxu0 0.0
        %5462 = vmatprep.subr.mxu0 0.0
        %5463 = vmatpush1.msra.mxu0 0.0
        %5464 = vmatprep.mubr.f32.mxu0 0.0
        %5465 = vmatmul.mubr.f32.gmra.mrb[0].mxu0 %v5398
        %v5466 = vpop.f32.mrb[0].mxu0
        %v5467 = vadd.f32 0.0, %v5466
        %v5468 = vpop.f32.mrb[0].mxu0
        %5469 = vdwg.mxu0
        %5470 = vrot.lane.b32.xlu0 %v4213, 72
        %v5471 = vpop.permute.xlu0 %5470
        %5472 = vrot.lane.b32.xlu0 %v4253, 72
        %v5473 = vpop.permute.xlu0 %5472
        %v5474 = vsel %vm948, %v5471, 0
        %v5476 = vsel %vm948, %v5473, 0
        %5478 = vmatprep.subr.mxu0 0.0
        %5479 = vmatpush1.xpose.msra.mxu0 %v5476
        %5480 = vmatprep.subr.mxu0 0.0
        %5481 = vmatpush1.xpose.msra.mxu0 0.0
        %5482 = vmatprep.subr.mxu0 0.0
        %5483 = vmatpush1.xpose.msra.mxu0 0.0
        %5484 = vmatprep.subr.mxu0 0.0
        %5485 = vmatpush1.xpose.msra.mxu0 0.0
        %5486 = vmatprep.subr.mxu0 0.0
        %5487 = vmatpush1.xpose.msra.mxu0 0.0
        %5488 = vmatprep.subr.mxu0 0.0
        %5489 = vmatpush1.xpose.msra.mxu0 0.0
        %5490 = vmatprep.subr.mxu0 0.0
        %5491 = vmatpush1.xpose.msra.mxu0 0.0
        %5492 = vmatprep.subr.mxu0 0.0
        %5493 = vmatpush1.xpose.msra.mxu0 0.0
        %5494 = vmatprep.subr.mxu0 0.0
        %5495 = vmatpush1.xpose.msra.mxu0 0.0
        %5496 = vmatprep.subr.mxu0 0.0
        %5497 = vmatpush1.xpose.msra.mxu0 0.0
        %5498 = vmatprep.subr.mxu0 0.0
        %5499 = vmatpush1.xpose.msra.mxu0 0.0
        %5500 = vmatprep.subr.mxu0 0.0
        %5501 = vmatpush1.xpose.msra.mxu0 0.0
        %5502 = vmatprep.subr.mxu0 0.0
        %5503 = vmatpush1.xpose.msra.mxu0 0.0
        %5504 = vmatprep.subr.mxu0 0.0
        %5505 = vmatpush1.xpose.msra.mxu0 0.0
        %5506 = vmatprep.subr.mxu0 0.0
        %5507 = vmatpush1.xpose.msra.mxu0 0.0
        %5508 = vmatprep.subr.mxu0 0.0
        %5509 = vmatpush1.xpose.msra.mxu0 0.0
        %5510 = vmatprep.subr.mxu0 0.0
        %5511 = vmatpush1.xpose.msra.mxu0 0.0
        %5512 = vmatprep.subr.mxu0 0.0
        %5513 = vmatpush1.xpose.msra.mxu0 0.0
        %5514 = vmatprep.subr.mxu0 0.0
        %5515 = vmatpush1.xpose.msra.mxu0 0.0
        %5516 = vmatprep.subr.mxu0 0.0
        %5517 = vmatpush1.xpose.msra.mxu0 0.0
        %5518 = vmatprep.subr.mxu0 0.0
        %5519 = vmatpush1.xpose.msra.mxu0 0.0
        %5520 = vmatprep.subr.mxu0 0.0
        %5521 = vmatpush1.xpose.msra.mxu0 0.0
        %5522 = vmatprep.subr.mxu0 0.0
        %5523 = vmatpush1.xpose.msra.mxu0 0.0
        %5524 = vmatprep.subr.mxu0 0.0
        %5525 = vmatpush1.xpose.msra.mxu0 0.0
        %5526 = vmatprep.subr.mxu0 0.0
        %5527 = vmatpush1.xpose.msra.mxu0 0.0
        %5528 = vmatprep.subr.mxu0 0.0
        %5529 = vmatpush1.xpose.msra.mxu0 0.0
        %5530 = vmatprep.subr.mxu0 0.0
        %5531 = vmatpush1.xpose.msra.mxu0 0.0
        %5532 = vmatprep.subr.mxu0 0.0
        %5533 = vmatpush1.xpose.msra.mxu0 0.0
        %5534 = vmatprep.subr.mxu0 0.0
        %5535 = vmatpush1.xpose.msra.mxu0 0.0
        %5536 = vmatprep.subr.mxu0 0.0
        %5537 = vmatpush1.xpose.msra.mxu0 0.0
        %5538 = vmatprep.subr.mxu0 0.0
        %5539 = vmatpush1.xpose.msra.mxu0 0.0
        %5540 = vmatprep.subr.mxu0 0.0
        %5541 = vmatpush1.xpose.msra.mxu0 0.0
        %5542 = vmatprep.mubr.f32.mxu0 0.0
        %5543 = vmatmul.mubr.f32.gmra.mrb[0].mxu0 %v5474
        %v5544 = vpop.f32.mrb[0].mxu0
        %v5545 = vadd.f32 0.0, %v5544
        %v5546 = vpop.f32.mrb[0].mxu0
        %5547 = vdwg.mxu0
        %v5548 = vmul.f32 %v5545, 0.35355338
        %vm5549 = vcmp.ne.f32.partialorder %v718, 0.0
        %v5550 = vsel %vm5549, -1e+09, %v5548
        %v5551 = vsel %vm948, %v5550, -inf
        %5552 = vmax.xlane.f32.xlu0 %v5551
        %v5553 = vpop.xlane.xlu0 %5552
        %v5554 = vsub.f32 %v5550, %v5553
        %v5555 = vmul.f32 %v5554, 1.442695
        %v5556 = vpow.pop %v5555
        %v5557 = vsel %vm948, %v5556, 0.0
        %5558 = vadd.xlane.f32.xlu0 %v5557
        %v5559 = vpop.xlane.xlu0 %5558
        %v5560 = vrcp.pop %v5559
        %v5561 = vmul.f32 %v5556, %v5560
        %5562 = vrot.lane.b32.xlu0 %v4293, 72
        %v5563 = vpop.permute.xlu0 %5562
        %v5566 = vsel %vm948, %v5561, 0
        %5568 = vmatprep.subr.mxu0 0.0
        %5569 = vmatpush1.msra.mxu0 %v5563
        %5570 = vmatprep.subr.mxu0 0.0
        %5571 = vmatpush1.msra.mxu0 0.0
        %5572 = vmatprep.subr.mxu0 0.0
        %5573 = vmatpush1.msra.mxu0 0.0
        %5574 = vmatprep.subr.mxu0 0.0
        %5575 = vmatpush1.msra.mxu0 0.0
        %5576 = vmatprep.subr.mxu0 0.0
        %5577 = vmatpush1.msra.mxu0 0.0
        %5578 = vmatprep.subr.mxu0 0.0
        %5579 = vmatpush1.msra.mxu0 0.0
        %5580 = vmatprep.subr.mxu0 0.0
        %5581 = vmatpush1.msra.mxu0 0.0
        %5582 = vmatprep.subr.mxu0 0.0
        %5583 = vmatpush1.msra.mxu0 0.0
        %5584 = vmatprep.subr.mxu0 0.0
        %5585 = vmatpush1.msra.mxu0 0.0
        %5586 = vmatprep.subr.mxu0 0.0
        %5587 = vmatpush1.msra.mxu0 0.0
        %5588 = vmatprep.subr.mxu0 0.0
        %5589 = vmatpush1.msra.mxu0 0.0
        %5590 = vmatprep.subr.mxu0 0.0
        %5591 = vmatpush1.msra.mxu0 0.0
        %5592 = vmatprep.subr.mxu0 0.0
        %5593 = vmatpush1.msra.mxu0 0.0
        %5594 = vmatprep.subr.mxu0 0.0
        %5595 = vmatpush1.msra.mxu0 0.0
        %5596 = vmatprep.subr.mxu0 0.0
        %5597 = vmatpush1.msra.mxu0 0.0
        %5598 = vmatprep.subr.mxu0 0.0
        %5599 = vmatpush1.msra.mxu0 0.0
        %5600 = vmatprep.subr.mxu0 0.0
        %5601 = vmatpush1.msra.mxu0 0.0
        %5602 = vmatprep.subr.mxu0 0.0
        %5603 = vmatpush1.msra.mxu0 0.0
        %5604 = vmatprep.subr.mxu0 0.0
        %5605 = vmatpush1.msra.mxu0 0.0
        %5606 = vmatprep.subr.mxu0 0.0
        %5607 = vmatpush1.msra.mxu0 0.0
        %5608 = vmatprep.subr.mxu0 0.0
        %5609 = vmatpush1.msra.mxu0 0.0
        %5610 = vmatprep.subr.mxu0 0.0
        %5611 = vmatpush1.msra.mxu0 0.0
        %5612 = vmatprep.subr.mxu0 0.0
        %5613 = vmatpush1.msra.mxu0 0.0
        %5614 = vmatprep.subr.mxu0 0.0
        %5615 = vmatpush1.msra.mxu0 0.0
        %5616 = vmatprep.subr.mxu0 0.0
        %5617 = vmatpush1.msra.mxu0 0.0
        %5618 = vmatprep.subr.mxu0 0.0
        %5619 = vmatpush1.msra.mxu0 0.0
        %5620 = vmatprep.subr.mxu0 0.0
        %5621 = vmatpush1.msra.mxu0 0.0
        %5622 = vmatprep.subr.mxu0 0.0
        %5623 = vmatpush1.msra.mxu0 0.0
        %5624 = vmatprep.subr.mxu0 0.0
        %5625 = vmatpush1.msra.mxu0 0.0
        %5626 = vmatprep.subr.mxu0 0.0
        %5627 = vmatpush1.msra.mxu0 0.0
        %5628 = vmatprep.subr.mxu0 0.0
        %5629 = vmatpush1.msra.mxu0 0.0
        %5630 = vmatprep.subr.mxu0 0.0
        %5631 = vmatpush1.msra.mxu0 0.0
        %5632 = vmatprep.mubr.f32.mxu0 0.0
        %5633 = vmatmul.mubr.f32.gmra.mrb[0].mxu0 %v5566
        %v5634 = vpop.f32.mrb[0].mxu0
        %v5635 = vadd.f32 0.0, %v5634
        %v5636 = vpop.f32.mrb[0].mxu0
        %5637 = vdwg.mxu0
        %5639 = vrot.lane.b32.xlu0 %v4627, 8
        %v5640 = vpop.permute.xlu0 %5639
        %5643 = vrot.lane.b32.xlu0 %v4795, 16
        %v5644 = vpop.permute.xlu0 %5643
        %5647 = vrot.lane.b32.xlu0 %v4963, 24
        %v5648 = vpop.permute.xlu0 %5647
        %5651 = vrot.lane.b32.xlu0 %v5131, 32
        %v5652 = vpop.permute.xlu0 %5651
        %5655 = vrot.lane.b32.xlu0 %v5299, 40
        %v5656 = vpop.permute.xlu0 %5655
        %5659 = vrot.lane.b32.xlu0 %v5467, 48
        %v5660 = vpop.permute.xlu0 %5659
        %5663 = vrot.lane.b32.xlu0 %v5635, 56
        %v5664 = vpop.permute.xlu0 %5663
        %v5666 = vsel %vm948, %v4458, %v5640
        %v5667 = vsel %vm2318, %v5666, %v5644
        %v5668 = vsel %vm2320, %v5667, %v5648
        %v5669 = vsel %vm800, %v5668, %v5652
        %v5670 = vsel %vm2323, %v5669, %v5656
        %v5671 = vsel %vm2325, %v5670, %v5660
        %v5672 = vsel %vm2327, %v5671, %v5664
        %v5673 = vpack.c.bf16 %v5672, %v5672
        %v5675 = vsel %vm2354, %v5673, 0
        %5677 = vmatprep.subr.bf16.mxu0 0
        %5678 = vmatpush1.bf16.msra.mxu0 %v2346
        %5679 = vmatprep.subr.bf16.mxu0 0
        %5680 = vmatpush1.bf16.msra.mxu0 %v2347
        %5681 = vmatprep.subr.bf16.mxu0 0
        %5682 = vmatpush1.bf16.msra.mxu0 %v2348
        %5683 = vmatprep.subr.bf16.mxu0 0
        %5684 = vmatpush1.bf16.msra.mxu0 %v2349
        %5685 = vmatprep.subr.bf16.mxu0 0
        %5686 = vmatpush1.bf16.msra.mxu0 0
        %5687 = vmatprep.subr.bf16.mxu0 0
        %5688 = vmatpush1.bf16.msra.mxu0 0
        %5689 = vmatprep.subr.bf16.mxu0 0
        %5690 = vmatpush1.bf16.msra.mxu0 0
        %5691 = vmatprep.subr.bf16.mxu0 0
        %5692 = vmatpush1.bf16.msra.mxu0 0
        %5693 = vmatprep.subr.bf16.mxu0 0
        %5694 = vmatpush1.bf16.msra.mxu0 0
        %5695 = vmatprep.subr.bf16.mxu0 0
        %5696 = vmatpush1.bf16.msra.mxu0 0
        %5697 = vmatprep.subr.bf16.mxu0 0
        %5698 = vmatpush1.bf16.msra.mxu0 0
        %5699 = vmatprep.subr.bf16.mxu0 0
        %5700 = vmatpush1.bf16.msra.mxu0 0
        %5701 = vmatprep.subr.bf16.mxu0 0
        %5702 = vmatpush1.bf16.msra.mxu0 0
        %5703 = vmatprep.subr.bf16.mxu0 0
        %5704 = vmatpush1.bf16.msra.mxu0 0
        %5705 = vmatprep.subr.bf16.mxu0 0
        %5706 = vmatpush1.bf16.msra.mxu0 0
        %5707 = vmatprep.subr.bf16.mxu0 0
        %5708 = vmatpush1.bf16.msra.mxu0 0
        %5709 = vmatprep.mubr.bf16.mxu0 0
        %5710 = vmatmul.mubr.bf16.gmra.mrb[0].mxu0 %v5675
        %v5711 = vpop.f32.mrb[0].mxu0
        %v5712 = vadd.f32 0.0, %v5711
        %v5713 = vpop.f32.mrb[0].mxu0
        %v5714 = vpop.f32.mrb[0].mxu0
        %v5715 = vpop.f32.mrb[0].mxu0
        %5716 = vdwg.mxu0
        %v5717 = vadd.f32 %v700, %v5712
        %v5718 = vsel %vm800, %v5717, 0.0
        %5719 = vadd.xlane.f32.xlu0 %v5718
        %v5720 = vpop.xlane.xlu0 %5719
        %v5721 = vmul.f32 %v5720, %v2402
        %v5722 = vsub.f32 %v5717, %v5721
        %v5723 = vmul.f32 %v5722, %v5722
        %v5724 = vsel %vm800, %v5723, 0.0
        %5725 = vadd.xlane.f32.xlu0 %v5724
        %v5726 = vpop.xlane.xlu0 %5725
        %v5727 = vmul.f32 %v5726, %v2402
        %v5728 = vadd.f32 %v5727, 1e-05
        %v5729 = vrsqrt.pop %v5728
        %v5730 = vmul.f32 %v5722, %v5729
        %v5731 = vpack.c.bf16 %v5730, %v5730
        %v5733 = vsel %vm800, %v5731, 0
        %5735 = vmatprep.subr.bf16.mxu0 0
        %5736 = vmatpush1.bf16.msra.mxu0 %v2422
        %5737 = vmatprep.subr.bf16.mxu0 0
        %5738 = vmatpush1.bf16.msra.mxu0 %v2423
        %5739 = vmatprep.subr.bf16.mxu0 0
        %5740 = vmatpush1.bf16.msra.mxu0 0
        %5741 = vmatprep.subr.bf16.mxu0 0
        %5742 = vmatpush1.bf16.msra.mxu0 0
        %5743 = vmatprep.subr.bf16.mxu0 0
        %5744 = vmatpush1.bf16.msra.mxu0 0
        %5745 = vmatprep.subr.bf16.mxu0 0
        %5746 = vmatpush1.bf16.msra.mxu0 0
        %5747 = vmatprep.subr.bf16.mxu0 0
        %5748 = vmatpush1.bf16.msra.mxu0 0
        %5749 = vmatprep.subr.bf16.mxu0 0
        %5750 = vmatpush1.bf16.msra.mxu0 0
        %5751 = vmatprep.subr.bf16.mxu0 0
        %5752 = vmatpush1.bf16.msra.mxu0 0
        %5753 = vmatprep.subr.bf16.mxu0 0
        %5754 = vmatpush1.bf16.msra.mxu0 0
        %5755 = vmatprep.subr.bf16.mxu0 0
        %5756 = vmatpush1.bf16.msra.mxu0 0
        %5757 = vmatprep.subr.bf16.mxu0 0
        %5758 = vmatpush1.bf16.msra.mxu0 0
        %5759 = vmatprep.subr.bf16.mxu0 0
        %5760 = vmatpush1.bf16.msra.mxu0 0
        %5761 = vmatprep.subr.bf16.mxu0 0
        %5762 = vmatpush1.bf16.msra.mxu0 0
        %5763 = vmatprep.subr.bf16.mxu0 0
        %5764 = vmatpush1.bf16.msra.mxu0 0
        %5765 = vmatprep.subr.bf16.mxu0 0
        %5766 = vmatpush1.bf16.msra.mxu0 0
        %5767 = vmatprep.mubr.bf16.mxu0 0
        %5768 = vmatmul.mubr.bf16.gmra.mrb[0].mxu0 %v5733
        %v5769 = vpop.f32.mrb[0].mxu0
        %v5770 = vadd.f32 0.0, %v5769
        %v5771 = vpop.f32.mrb[0].mxu0
        %v5772 = vpop.f32.mrb[0].mxu0
        %v5773 = vpop.f32.mrb[0].mxu0
        %5774 = vdwg.mxu0
        %v5775 = vpack.c.bf16 %v702, %v702
        %v5777 = vsel %vm800, %v5775, 0
        %5779 = vmatprep.subr.bf16.mxu0 0
        %5780 = vmatpush1.bf16.msra.mxu0 %v2478
        %5781 = vmatprep.subr.bf16.mxu0 0
        %5782 = vmatpush1.bf16.msra.mxu0 %v2479
        %5783 = vmatprep.subr.bf16.mxu0 0
        %5784 = vmatpush1.bf16.msra.mxu0 0
        %5785 = vmatprep.subr.bf16.mxu0 0
        %5786 = vmatpush1.bf16.msra.mxu0 0
        %5787 = vmatprep.subr.bf16.mxu0 0
        %5788 = vmatpush1.bf16.msra.mxu0 0
        %5789 = vmatprep.subr.bf16.mxu0 0
        %5790 = vmatpush1.bf16.msra.mxu0 0
        %5791 = vmatprep.subr.bf16.mxu0 0
        %5792 = vmatpush1.bf16.msra.mxu0 0
        %5793 = vmatprep.subr.bf16.mxu0 0
        %5794 = vmatpush1.bf16.msra.mxu0 0
        %5795 = vmatprep.subr.bf16.mxu0 0
        %5796 = vmatpush1.bf16.msra.mxu0 0
        %5797 = vmatprep.subr.bf16.mxu0 0
        %5798 = vmatpush1.bf16.msra.mxu0 0
        %5799 = vmatprep.subr.bf16.mxu0 0
        %5800 = vmatpush1.bf16.msra.mxu0 0
        %5801 = vmatprep.subr.bf16.mxu0 0
        %5802 = vmatpush1.bf16.msra.mxu0 0
        %5803 = vmatprep.subr.bf16.mxu0 0
        %5804 = vmatpush1.bf16.msra.mxu0 0
        %5805 = vmatprep.subr.bf16.mxu0 0
        %5806 = vmatpush1.bf16.msra.mxu0 0
        %5807 = vmatprep.subr.bf16.mxu0 0
        %5808 = vmatpush1.bf16.msra.mxu0 0
        %5809 = vmatprep.subr.bf16.mxu0 0
        %5810 = vmatpush1.bf16.msra.mxu0 0
        %5811 = vmatprep.mubr.bf16.mxu0 0
        %5812 = vmatmul.mubr.bf16.gmra.mrb[0].mxu0 %v5777
        %v5813 = vpop.f32.mrb[0].mxu0
        %v5814 = vadd.f32 0.0, %v5813
        %v5815 = vpop.f32.mrb[0].mxu0
        %v5816 = vpop.f32.mrb[0].mxu0
        %v5817 = vpop.f32.mrb[0].mxu0
        %5818 = vdwg.mxu0
        %5819 = vmatprep.subr.bf16.mxu0 0
        %5820 = vmatpush1.bf16.msra.mxu0 %v2533
        %5821 = vmatprep.subr.bf16.mxu0 0
        %5822 = vmatpush1.bf16.msra.mxu0 %v2534
        %5823 = vmatprep.subr.bf16.mxu0 0
        %5824 = vmatpush1.bf16.msra.mxu0 0
        %5825 = vmatprep.subr.bf16.mxu0 0
        %5826 = vmatpush1.bf16.msra.mxu0 0
        %5827 = vmatprep.subr.bf16.mxu0 0
        %5828 = vmatpush1.bf16.msra.mxu0 0
        %5829 = vmatprep.subr.bf16.mxu0 0
        %5830 = vmatpush1.bf16.msra.mxu0 0
        %5831 = vmatprep.subr.bf16.mxu0 0
        %5832 = vmatpush1.bf16.msra.mxu0 0
        %5833 = vmatprep.subr.bf16.mxu0 0
        %5834 = vmatpush1.bf16.msra.mxu0 0
        %5835 = vmatprep.subr.bf16.mxu0 0
        %5836 = vmatpush1.bf16.msra.mxu0 0
        %5837 = vmatprep.subr.bf16.mxu0 0
        %5838 = vmatpush1.bf16.msra.mxu0 0
        %5839 = vmatprep.subr.bf16.mxu0 0
        %5840 = vmatpush1.bf16.msra.mxu0 0
        %5841 = vmatprep.subr.bf16.mxu0 0
        %5842 = vmatpush1.bf16.msra.mxu0 0
        %5843 = vmatprep.subr.bf16.mxu0 0
        %5844 = vmatpush1.bf16.msra.mxu0 0
        %5845 = vmatprep.subr.bf16.mxu0 0
        %5846 = vmatpush1.bf16.msra.mxu0 0
        %5847 = vmatprep.subr.bf16.mxu0 0
        %5848 = vmatpush1.bf16.msra.mxu0 0
        %5849 = vmatprep.subr.bf16.mxu0 0
        %5850 = vmatpush1.bf16.msra.mxu0 0
        %5851 = vmatprep.mubr.bf16.mxu0 0
        %5852 = vmatmul.mubr.bf16.gmra.mrb[0].mxu0 %v5777
        %v5853 = vpop.f32.mrb[0].mxu0
        %v5854 = vadd.f32 0.0, %v5853
        %v5855 = vpop.f32.mrb[0].mxu0
        %v5856 = vpop.f32.mrb[0].mxu0
        %v5857 = vpop.f32.mrb[0].mxu0
        %5858 = vdwg.mxu0
        %v5860 = vsel %vm948, %v5770, 0
        %v5863 = vsel %vm948, %v5814, 0
        %5865 = vmatprep.subr.mxu0 0.0
        %5866 = vmatpush1.xpose.msra.mxu0 %v5863
        %5867 = vmatprep.subr.mxu0 0.0
        %5868 = vmatpush1.xpose.msra.mxu0 0.0
        %5869 = vmatprep.subr.mxu0 0.0
        %5870 = vmatpush1.xpose.msra.mxu0 0.0
        %5871 = vmatprep.subr.mxu0 0.0
        %5872 = vmatpush1.xpose.msra.mxu0 0.0
        %5873 = vmatprep.subr.mxu0 0.0
        %5874 = vmatpush1.xpose.msra.mxu0 0.0
        %5875 = vmatprep.subr.mxu0 0.0
        %5876 = vmatpush1.xpose.msra.mxu0 0.0
        %5877 = vmatprep.subr.mxu0 0.0
        %5878 = vmatpush1.xpose.msra.mxu0 0.0
        %5879 = vmatprep.subr.mxu0 0.0
        %5880 = vmatpush1.xpose.msra.mxu0 0.0
        %5881 = vmatprep.subr.mxu0 0.0
        %5882 = vmatpush1.xpose.msra.mxu0 0.0
        %5883 = vmatprep.subr.mxu0 0.0
        %5884 = vmatpush1.xpose.msra.mxu0 0.0
        %5885 = vmatprep.subr.mxu0 0.0
        %5886 = vmatpush1.xpose.msra.mxu0 0.0
        %5887 = vmatprep.subr.mxu0 0.0
        %5888 = vmatpush1.xpose.msra.mxu0 0.0
        %5889 = vmatprep.subr.mxu0 0.0
        %5890 = vmatpush1.xpose.msra.mxu0 0.0
        %5891 = vmatprep.subr.mxu0 0.0
        %5892 = vmatpush1.xpose.msra.mxu0 0.0
        %5893 = vmatprep.subr.mxu0 0.0
        %5894 = vmatpush1.xpose.msra.mxu0 0.0
        %5895 = vmatprep.subr.mxu0 0.0
        %5896 = vmatpush1.xpose.msra.mxu0 0.0
        %5897 = vmatprep.subr.mxu0 0.0
        %5898 = vmatpush1.xpose.msra.mxu0 0.0
        %5899 = vmatprep.subr.mxu0 0.0
        %5900 = vmatpush1.xpose.msra.mxu0 0.0
        %5901 = vmatprep.subr.mxu0 0.0
        %5902 = vmatpush1.xpose.msra.mxu0 0.0
        %5903 = vmatprep.subr.mxu0 0.0
        %5904 = vmatpush1.xpose.msra.mxu0 0.0
        %5905 = vmatprep.subr.mxu0 0.0
        %5906 = vmatpush1.xpose.msra.mxu0 0.0
        %5907 = vmatprep.subr.mxu0 0.0
        %5908 = vmatpush1.xpose.msra.mxu0 0.0
        %5909 = vmatprep.subr.mxu0 0.0
        %5910 = vmatpush1.xpose.msra.mxu0 0.0
        %5911 = vmatprep.subr.mxu0 0.0
        %5912 = vmatpush1.xpose.msra.mxu0 0.0
        %5913 = vmatprep.subr.mxu0 0.0
        %5914 = vmatpush1.xpose.msra.mxu0 0.0
        %5915 = vmatprep.subr.mxu0 0.0
        %5916 = vmatpush1.xpose.msra.mxu0 0.0
        %5917 = vmatprep.subr.mxu0 0.0
        %5918 = vmatpush1.xpose.msra.mxu0 0.0
        %5919 = vmatprep.subr.mxu0 0.0
        %5920 = vmatpush1.xpose.msra.mxu0 0.0
        %5921 = vmatprep.subr.mxu0 0.0
        %5922 = vmatpush1.xpose.msra.mxu0 0.0
        %5923 = vmatprep.subr.mxu0 0.0
        %5924 = vmatpush1.xpose.msra.mxu0 0.0
        %5925 = vmatprep.subr.mxu0 0.0
        %5926 = vmatpush1.xpose.msra.mxu0 0.0
        %5927 = vmatprep.subr.mxu0 0.0
        %5928 = vmatpush1.xpose.msra.mxu0 0.0
        %5929 = vmatprep.mubr.f32.mxu0 0.0
        %5930 = vmatmul.mubr.f32.gmra.mrb[0].mxu0 %v5860
        %v5931 = vpop.f32.mrb[0].mxu0
        %v5932 = vadd.f32 0.0, %v5931
        %v5933 = vpop.f32.mrb[0].mxu0
        %5934 = vdwg.mxu0
        %v5935 = vmul.f32 %v5932, 0.35355338
        %vm5936 = vcmp.ne.f32.partialorder %v727, 0.0
        %v5937 = vsel %vm5936, -1e+09, %v5935
        %v5938 = vsel %vm948, %v5937, -inf
        %5939 = vmax.xlane.f32.xlu0 %v5938
        %v5940 = vpop.xlane.xlu0 %5939
        %v5941 = vsub.f32 %v5937, %v5940
        %v5942 = vmul.f32 %v5941, 1.442695
        %v5943 = vpow.pop %v5942
        %v5944 = vsel %vm948, %v5943, 0.0
        %5945 = vadd.xlane.f32.xlu0 %v5944
        %v5946 = vpop.xlane.xlu0 %5945
        %v5947 = vrcp.pop %v5946
        %v5948 = vmul.f32 %v5943, %v5947
        %v5950 = vsel %vm948, %v5948, 0
        %5952 = vmatprep.subr.mxu0 0.0
        %5953 = vmatpush1.msra.mxu0 %v5854
        %5954 = vmatprep.subr.mxu0 0.0
        %5955 = vmatpush1.msra.mxu0 0.0
        %5956 = vmatprep.subr.mxu0 0.0
        %5957 = vmatpush1.msra.mxu0 0.0
        %5958 = vmatprep.subr.mxu0 0.0
        %5959 = vmatpush1.msra.mxu0 0.0
        %5960 = vmatprep.subr.mxu0 0.0
        %5961 = vmatpush1.msra.mxu0 0.0
        %5962 = vmatprep.subr.mxu0 0.0
        %5963 = vmatpush1.msra.mxu0 0.0
        %5964 = vmatprep.subr.mxu0 0.0
        %5965 = vmatpush1.msra.mxu0 0.0
        %5966 = vmatprep.subr.mxu0 0.0
        %5967 = vmatpush1.msra.mxu0 0.0
        %5968 = vmatprep.subr.mxu0 0.0
        %5969 = vmatpush1.msra.mxu0 0.0
        %5970 = vmatprep.subr.mxu0 0.0
        %5971 = vmatpush1.msra.mxu0 0.0
        %5972 = vmatprep.subr.mxu0 0.0
        %5973 = vmatpush1.msra.mxu0 0.0
        %5974 = vmatprep.subr.mxu0 0.0
        %5975 = vmatpush1.msra.mxu0 0.0
        %5976 = vmatprep.subr.mxu0 0.0
        %5977 = vmatpush1.msra.mxu0 0.0
        %5978 = vmatprep.subr.mxu0 0.0
        %5979 = vmatpush1.msra.mxu0 0.0
        %5980 = vmatprep.subr.mxu0 0.0
        %5981 = vmatpush1.msra.mxu0 0.0
        %5982 = vmatprep.subr.mxu0 0.0
        %5983 = vmatpush1.msra.mxu0 0.0
        %5984 = vmatprep.subr.mxu0 0.0
        %5985 = vmatpush1.msra.mxu0 0.0
        %5986 = vmatprep.subr.mxu0 0.0
        %5987 = vmatpush1.msra.mxu0 0.0
        %5988 = vmatprep.subr.mxu0 0.0
        %5989 = vmatpush1.msra.mxu0 0.0
        %5990 = vmatprep.subr.mxu0 0.0
        %5991 = vmatpush1.msra.mxu0 0.0
        %5992 = vmatprep.subr.mxu0 0.0
        %5993 = vmatpush1.msra.mxu0 0.0
        %5994 = vmatprep.subr.mxu0 0.0
        %5995 = vmatpush1.msra.mxu0 0.0
        %5996 = vmatprep.subr.mxu0 0.0
        %5997 = vmatpush1.msra.mxu0 0.0
        %5998 = vmatprep.subr.mxu0 0.0
        %5999 = vmatpush1.msra.mxu0 0.0
        %6000 = vmatprep.subr.mxu0 0.0
        %6001 = vmatpush1.msra.mxu0 0.0
        %6002 = vmatprep.subr.mxu0 0.0
        %6003 = vmatpush1.msra.mxu0 0.0
        %6004 = vmatprep.subr.mxu0 0.0
        %6005 = vmatpush1.msra.mxu0 0.0
        %6006 = vmatprep.subr.mxu0 0.0
        %6007 = vmatpush1.msra.mxu0 0.0
        %6008 = vmatprep.subr.mxu0 0.0
        %6009 = vmatpush1.msra.mxu0 0.0
        %6010 = vmatprep.subr.mxu0 0.0
        %6011 = vmatpush1.msra.mxu0 0.0
        %6012 = vmatprep.subr.mxu0 0.0
        %6013 = vmatpush1.msra.mxu0 0.0
        %6014 = vmatprep.subr.mxu0 0.0
        %6015 = vmatpush1.msra.mxu0 0.0
        %6016 = vmatprep.mubr.f32.mxu0 0.0
        %6017 = vmatmul.mubr.f32.gmra.mrb[0].mxu0 %v5950
        %v6018 = vpop.f32.mrb[0].mxu0
        %v6019 = vadd.f32 0.0, %v6018
        %v6020 = vpop.f32.mrb[0].mxu0
        %6021 = vdwg.mxu0
        %6022 = vrot.lane.b32.xlu0 %v5770, 120
        %v6023 = vpop.permute.xlu0 %6022
        %6024 = vrot.lane.b32.xlu0 %v5814, 120
        %v6025 = vpop.permute.xlu0 %6024
        %v6026 = vsel %vm948, %v6023, 0
        %v6028 = vsel %vm948, %v6025, 0
        %6030 = vmatprep.subr.mxu0 0.0
        %6031 = vmatpush1.xpose.msra.mxu0 %v6028
        %6032 = vmatprep.subr.mxu0 0.0
        %6033 = vmatpush1.xpose.msra.mxu0 0.0
        %6034 = vmatprep.subr.mxu0 0.0
        %6035 = vmatpush1.xpose.msra.mxu0 0.0
        %6036 = vmatprep.subr.mxu0 0.0
        %6037 = vmatpush1.xpose.msra.mxu0 0.0
        %6038 = vmatprep.subr.mxu0 0.0
        %6039 = vmatpush1.xpose.msra.mxu0 0.0
        %6040 = vmatprep.subr.mxu0 0.0
        %6041 = vmatpush1.xpose.msra.mxu0 0.0
        %6042 = vmatprep.subr.mxu0 0.0
        %6043 = vmatpush1.xpose.msra.mxu0 0.0
        %6044 = vmatprep.subr.mxu0 0.0
        %6045 = vmatpush1.xpose.msra.mxu0 0.0
        %6046 = vmatprep.subr.mxu0 0.0
        %6047 = vmatpush1.xpose.msra.mxu0 0.0
        %6048 = vmatprep.subr.mxu0 0.0
        %6049 = vmatpush1.xpose.msra.mxu0 0.0
        %6050 = vmatprep.subr.mxu0 0.0
        %6051 = vmatpush1.xpose.msra.mxu0 0.0
        %6052 = vmatprep.subr.mxu0 0.0
        %6053 = vmatpush1.xpose.msra.mxu0 0.0
        %6054 = vmatprep.subr.mxu0 0.0
        %6055 = vmatpush1.xpose.msra.mxu0 0.0
        %6056 = vmatprep.subr.mxu0 0.0
        %6057 = vmatpush1.xpose.msra.mxu0 0.0
        %6058 = vmatprep.subr.mxu0 0.0
        %6059 = vmatpush1.xpose.msra.mxu0 0.0
        %6060 = vmatprep.subr.mxu0 0.0
        %6061 = vmatpush1.xpose.msra.mxu0 0.0
        %6062 = vmatprep.subr.mxu0 0.0
        %6063 = vmatpush1.xpose.msra.mxu0 0.0
        %6064 = vmatprep.subr.mxu0 0.0
        %6065 = vmatpush1.xpose.msra.mxu0 0.0
        %6066 = vmatprep.subr.mxu0 0.0
        %6067 = vmatpush1.xpose.msra.mxu0 0.0
        %6068 = vmatprep.subr.mxu0 0.0
        %6069 = vmatpush1.xpose.msra.mxu0 0.0
        %6070 = vmatprep.subr.mxu0 0.0
        %6071 = vmatpush1.xpose.msra.mxu0 0.0
        %6072 = vmatprep.subr.mxu0 0.0
        %6073 = vmatpush1.xpose.msra.mxu0 0.0
        %6074 = vmatprep.subr.mxu0 0.0
        %6075 = vmatpush1.xpose.msra.mxu0 0.0
        %6076 = vmatprep.subr.mxu0 0.0
        %6077 = vmatpush1.xpose.msra.mxu0 0.0
        %6078 = vmatprep.subr.mxu0 0.0
        %6079 = vmatpush1.xpose.msra.mxu0 0.0
        %6080 = vmatprep.subr.mxu0 0.0
        %6081 = vmatpush1.xpose.msra.mxu0 0.0
        %6082 = vmatprep.subr.mxu0 0.0
        %6083 = vmatpush1.xpose.msra.mxu0 0.0
        %6084 = vmatprep.subr.mxu0 0.0
        %6085 = vmatpush1.xpose.msra.mxu0 0.0
        %6086 = vmatprep.subr.mxu0 0.0
        %6087 = vmatpush1.xpose.msra.mxu0 0.0
        %6088 = vmatprep.subr.mxu0 0.0
        %6089 = vmatpush1.xpose.msra.mxu0 0.0
        %6090 = vmatprep.subr.mxu0 0.0
        %6091 = vmatpush1.xpose.msra.mxu0 0.0
        %6092 = vmatprep.subr.mxu0 0.0
        %6093 = vmatpush1.xpose.msra.mxu0 0.0
        %6094 = vmatprep.mubr.f32.mxu0 0.0
        %6095 = vmatmul.mubr.f32.gmra.mrb[0].mxu0 %v6026
        %v6096 = vpop.f32.mrb[0].mxu0
        %v6097 = vadd.f32 0.0, %v6096
        %v6098 = vpop.f32.mrb[0].mxu0
        %6099 = vdwg.mxu0
        %v6100 = vmul.f32 %v6097, 0.35355338
        %vm6101 = vcmp.ne.f32.partialorder %v728, 0.0
        %v6102 = vsel %vm6101, -1e+09, %v6100
        %v6103 = vsel %vm948, %v6102, -inf
        %6104 = vmax.xlane.f32.xlu0 %v6103
        %v6105 = vpop.xlane.xlu0 %6104
        %v6106 = vsub.f32 %v6102, %v6105
        %v6107 = vmul.f32 %v6106, 1.442695
        %v6108 = vpow.pop %v6107
        %v6109 = vsel %vm948, %v6108, 0.0
        %6110 = vadd.xlane.f32.xlu0 %v6109
        %v6111 = vpop.xlane.xlu0 %6110
        %v6112 = vrcp.pop %v6111
        %v6113 = vmul.f32 %v6108, %v6112
        %6115 = vrot.lane.b32.xlu0 %v5854, 120
        %v6116 = vpop.permute.xlu0 %6115
        %v6119 = vsel %vm948, %v6113, 0
        %6121 = vmatprep.subr.mxu0 0.0
        %6122 = vmatpush1.msra.mxu0 %v6116
        %6123 = vmatprep.subr.mxu0 0.0
        %6124 = vmatpush1.msra.mxu0 0.0
        %6125 = vmatprep.subr.mxu0 0.0
        %6126 = vmatpush1.msra.mxu0 0.0
        %6127 = vmatprep.subr.mxu0 0.0
        %6128 = vmatpush1.msra.mxu0 0.0
        %6129 = vmatprep.subr.mxu0 0.0
        %6130 = vmatpush1.msra.mxu0 0.0
        %6131 = vmatprep.subr.mxu0 0.0
        %6132 = vmatpush1.msra.mxu0 0.0
        %6133 = vmatprep.subr.mxu0 0.0
        %6134 = vmatpush1.msra.mxu0 0.0
        %6135 = vmatprep.subr.mxu0 0.0
        %6136 = vmatpush1.msra.mxu0 0.0
        %6137 = vmatprep.subr.mxu0 0.0
        %6138 = vmatpush1.msra.mxu0 0.0
        %6139 = vmatprep.subr.mxu0 0.0
        %6140 = vmatpush1.msra.mxu0 0.0
        %6141 = vmatprep.subr.mxu0 0.0
        %6142 = vmatpush1.msra.mxu0 0.0
        %6143 = vmatprep.subr.mxu0 0.0
        %6144 = vmatpush1.msra.mxu0 0.0
        %6145 = vmatprep.subr.mxu0 0.0
        %6146 = vmatpush1.msra.mxu0 0.0
        %6147 = vmatprep.subr.mxu0 0.0
        %6148 = vmatpush1.msra.mxu0 0.0
        %6149 = vmatprep.subr.mxu0 0.0
        %6150 = vmatpush1.msra.mxu0 0.0
        %6151 = vmatprep.subr.mxu0 0.0
        %6152 = vmatpush1.msra.mxu0 0.0
        %6153 = vmatprep.subr.mxu0 0.0
        %6154 = vmatpush1.msra.mxu0 0.0
        %6155 = vmatprep.subr.mxu0 0.0
        %6156 = vmatpush1.msra.mxu0 0.0
        %6157 = vmatprep.subr.mxu0 0.0
        %6158 = vmatpush1.msra.mxu0 0.0
        %6159 = vmatprep.subr.mxu0 0.0
        %6160 = vmatpush1.msra.mxu0 0.0
        %6161 = vmatprep.subr.mxu0 0.0
        %6162 = vmatpush1.msra.mxu0 0.0
        %6163 = vmatprep.subr.mxu0 0.0
        %6164 = vmatpush1.msra.mxu0 0.0
        %6165 = vmatprep.subr.mxu0 0.0
        %6166 = vmatpush1.msra.mxu0 0.0
        %6167 = vmatprep.subr.mxu0 0.0
        %6168 = vmatpush1.msra.mxu0 0.0
        %6169 = vmatprep.subr.mxu0 0.0
        %6170 = vmatpush1.msra.mxu0 0.0
        %6171 = vmatprep.subr.mxu0 0.0
        %6172 = vmatpush1.msra.mxu0 0.0
        %6173 = vmatprep.subr.mxu0 0.0
        %6174 = vmatpush1.msra.mxu0 0.0
        %6175 = vmatprep.subr.mxu0 0.0
        %6176 = vmatpush1.msra.mxu0 0.0
        %6177 = vmatprep.subr.mxu0 0.0
        %6178 = vmatpush1.msra.mxu0 0.0
        %6179 = vmatprep.subr.mxu0 0.0
        %6180 = vmatpush1.msra.mxu0 0.0
        %6181 = vmatprep.subr.mxu0 0.0
        %6182 = vmatpush1.msra.mxu0 0.0
        %6183 = vmatprep.subr.mxu0 0.0
        %6184 = vmatpush1.msra.mxu0 0.0
        %6185 = vmatprep.mubr.f32.mxu0 0.0
        %6186 = vmatmul.mubr.f32.gmra.mrb[0].mxu0 %v6119
        %v6187 = vpop.f32.mrb[0].mxu0
        %v6188 = vadd.f32 0.0, %v6187
        %v6189 = vpop.f32.mrb[0].mxu0
        %6190 = vdwg.mxu0
        %6191 = vrot.lane.b32.xlu0 %v5770, 112
        %v6192 = vpop.permute.xlu0 %6191
        %6193 = vrot.lane.b32.xlu0 %v5814, 112
        %v6194 = vpop.permute.xlu0 %6193
        %v6195 = vsel %vm948, %v6192, 0
        %v6197 = vsel %vm948, %v6194, 0
        %6199 = vmatprep.subr.mxu0 0.0
        %6200 = vmatpush1.xpose.msra.mxu0 %v6197
        %6201 = vmatprep.subr.mxu0 0.0
        %6202 = vmatpush1.xpose.msra.mxu0 0.0
        %6203 = vmatprep.subr.mxu0 0.0
        %6204 = vmatpush1.xpose.msra.mxu0 0.0
        %6205 = vmatprep.subr.mxu0 0.0
        %6206 = vmatpush1.xpose.msra.mxu0 0.0
        %6207 = vmatprep.subr.mxu0 0.0
        %6208 = vmatpush1.xpose.msra.mxu0 0.0
        %6209 = vmatprep.subr.mxu0 0.0
        %6210 = vmatpush1.xpose.msra.mxu0 0.0
        %6211 = vmatprep.subr.mxu0 0.0
        %6212 = vmatpush1.xpose.msra.mxu0 0.0
        %6213 = vmatprep.subr.mxu0 0.0
        %6214 = vmatpush1.xpose.msra.mxu0 0.0
        %6215 = vmatprep.subr.mxu0 0.0
        %6216 = vmatpush1.xpose.msra.mxu0 0.0
        %6217 = vmatprep.subr.mxu0 0.0
        %6218 = vmatpush1.xpose.msra.mxu0 0.0
        %6219 = vmatprep.subr.mxu0 0.0
        %6220 = vmatpush1.xpose.msra.mxu0 0.0
        %6221 = vmatprep.subr.mxu0 0.0
        %6222 = vmatpush1.xpose.msra.mxu0 0.0
        %6223 = vmatprep.subr.mxu0 0.0
        %6224 = vmatpush1.xpose.msra.mxu0 0.0
        %6225 = vmatprep.subr.mxu0 0.0
        %6226 = vmatpush1.xpose.msra.mxu0 0.0
        %6227 = vmatprep.subr.mxu0 0.0
        %6228 = vmatpush1.xpose.msra.mxu0 0.0
        %6229 = vmatprep.subr.mxu0 0.0
        %6230 = vmatpush1.xpose.msra.mxu0 0.0
        %6231 = vmatprep.subr.mxu0 0.0
        %6232 = vmatpush1.xpose.msra.mxu0 0.0
        %6233 = vmatprep.subr.mxu0 0.0
        %6234 = vmatpush1.xpose.msra.mxu0 0.0
        %6235 = vmatprep.subr.mxu0 0.0
        %6236 = vmatpush1.xpose.msra.mxu0 0.0
        %6237 = vmatprep.subr.mxu0 0.0
        %6238 = vmatpush1.xpose.msra.mxu0 0.0
        %6239 = vmatprep.subr.mxu0 0.0
        %6240 = vmatpush1.xpose.msra.mxu0 0.0
        %6241 = vmatprep.subr.mxu0 0.0
        %6242 = vmatpush1.xpose.msra.mxu0 0.0
        %6243 = vmatprep.subr.mxu0 0.0
        %6244 = vmatpush1.xpose.msra.mxu0 0.0
        %6245 = vmatprep.subr.mxu0 0.0
        %6246 = vmatpush1.xpose.msra.mxu0 0.0
        %6247 = vmatprep.subr.mxu0 0.0
        %6248 = vmatpush1.xpose.msra.mxu0 0.0
        %6249 = vmatprep.subr.mxu0 0.0
        %6250 = vmatpush1.xpose.msra.mxu0 0.0
        %6251 = vmatprep.subr.mxu0 0.0
        %6252 = vmatpush1.xpose.msra.mxu0 0.0
        %6253 = vmatprep.subr.mxu0 0.0
        %6254 = vmatpush1.xpose.msra.mxu0 0.0
        %6255 = vmatprep.subr.mxu0 0.0
        %6256 = vmatpush1.xpose.msra.mxu0 0.0
        %6257 = vmatprep.subr.mxu0 0.0
        %6258 = vmatpush1.xpose.msra.mxu0 0.0
        %6259 = vmatprep.subr.mxu0 0.0
        %6260 = vmatpush1.xpose.msra.mxu0 0.0
        %6261 = vmatprep.subr.mxu0 0.0
        %6262 = vmatpush1.xpose.msra.mxu0 0.0
        %6263 = vmatprep.mubr.f32.mxu0 0.0
        %6264 = vmatmul.mubr.f32.gmra.mrb[0].mxu0 %v6195
        %v6265 = vpop.f32.mrb[0].mxu0
        %v6266 = vadd.f32 0.0, %v6265
        %v6267 = vpop.f32.mrb[0].mxu0
        %6268 = vdwg.mxu0
        %v6269 = vmul.f32 %v6266, 0.35355338
        %vm6270 = vcmp.ne.f32.partialorder %v729, 0.0
        %v6271 = vsel %vm6270, -1e+09, %v6269
        %v6272 = vsel %vm948, %v6271, -inf
        %6273 = vmax.xlane.f32.xlu0 %v6272
        %v6274 = vpop.xlane.xlu0 %6273
        %v6275 = vsub.f32 %v6271, %v6274
        %v6276 = vmul.f32 %v6275, 1.442695
        %v6277 = vpow.pop %v6276
        %v6278 = vsel %vm948, %v6277, 0.0
        %6279 = vadd.xlane.f32.xlu0 %v6278
        %v6280 = vpop.xlane.xlu0 %6279
        %v6281 = vrcp.pop %v6280
        %v6282 = vmul.f32 %v6277, %v6281
        %6283 = vrot.lane.b32.xlu0 %v5854, 112
        %v6284 = vpop.permute.xlu0 %6283
        %v6287 = vsel %vm948, %v6282, 0
        %6289 = vmatprep.subr.mxu0 0.0
        %6290 = vmatpush1.msra.mxu0 %v6284
        %6291 = vmatprep.subr.mxu0 0.0
        %6292 = vmatpush1.msra.mxu0 0.0
        %6293 = vmatprep.subr.mxu0 0.0
        %6294 = vmatpush1.msra.mxu0 0.0
        %6295 = vmatprep.subr.mxu0 0.0
        %6296 = vmatpush1.msra.mxu0 0.0
        %6297 = vmatprep.subr.mxu0 0.0
        %6298 = vmatpush1.msra.mxu0 0.0
        %6299 = vmatprep.subr.mxu0 0.0
        %6300 = vmatpush1.msra.mxu0 0.0
        %6301 = vmatprep.subr.mxu0 0.0
        %6302 = vmatpush1.msra.mxu0 0.0
        %6303 = vmatprep.subr.mxu0 0.0
        %6304 = vmatpush1.msra.mxu0 0.0
        %6305 = vmatprep.subr.mxu0 0.0
        %6306 = vmatpush1.msra.mxu0 0.0
        %6307 = vmatprep.subr.mxu0 0.0
        %6308 = vmatpush1.msra.mxu0 0.0
        %6309 = vmatprep.subr.mxu0 0.0
        %6310 = vmatpush1.msra.mxu0 0.0
        %6311 = vmatprep.subr.mxu0 0.0
        %6312 = vmatpush1.msra.mxu0 0.0
        %6313 = vmatprep.subr.mxu0 0.0
        %6314 = vmatpush1.msra.mxu0 0.0
        %6315 = vmatprep.subr.mxu0 0.0
        %6316 = vmatpush1.msra.mxu0 0.0
        %6317 = vmatprep.subr.mxu0 0.0
        %6318 = vmatpush1.msra.mxu0 0.0
        %6319 = vmatprep.subr.mxu0 0.0
        %6320 = vmatpush1.msra.mxu0 0.0
        %6321 = vmatprep.subr.mxu0 0.0
        %6322 = vmatpush1.msra.mxu0 0.0
        %6323 = vmatprep.subr.mxu0 0.0
        %6324 = vmatpush1.msra.mxu0 0.0
        %6325 = vmatprep.subr.mxu0 0.0
        %6326 = vmatpush1.msra.mxu0 0.0
        %6327 = vmatprep.subr.mxu0 0.0
        %6328 = vmatpush1.msra.mxu0 0.0
        %6329 = vmatprep.subr.mxu0 0.0
        %6330 = vmatpush1.msra.mxu0 0.0
        %6331 = vmatprep.subr.mxu0 0.0
        %6332 = vmatpush1.msra.mxu0 0.0
        %6333 = vmatprep.subr.mxu0 0.0
        %6334 = vmatpush1.msra.mxu0 0.0
        %6335 = vmatprep.subr.mxu0 0.0
        %6336 = vmatpush1.msra.mxu0 0.0
        %6337 = vmatprep.subr.mxu0 0.0
        %6338 = vmatpush1.msra.mxu0 0.0
        %6339 = vmatprep.subr.mxu0 0.0
        %6340 = vmatpush1.msra.mxu0 0.0
        %6341 = vmatprep.subr.mxu0 0.0
        %6342 = vmatpush1.msra.mxu0 0.0
        %6343 = vmatprep.subr.mxu0 0.0
        %6344 = vmatpush1.msra.mxu0 0.0
        %6345 = vmatprep.subr.mxu0 0.0
        %6346 = vmatpush1.msra.mxu0 0.0
        %6347 = vmatprep.subr.mxu0 0.0
        %6348 = vmatpush1.msra.mxu0 0.0
        %6349 = vmatprep.subr.mxu0 0.0
        %6350 = vmatpush1.msra.mxu0 0.0
        %6351 = vmatprep.subr.mxu0 0.0
        %6352 = vmatpush1.msra.mxu0 0.0
        %6353 = vmatprep.mubr.f32.mxu0 0.0
        %6354 = vmatmul.mubr.f32.gmra.mrb[0].mxu0 %v6287
        %v6355 = vpop.f32.mrb[0].mxu0
        %v6356 = vadd.f32 0.0, %v6355
        %v6357 = vpop.f32.mrb[0].mxu0
        %6358 = vdwg.mxu0
        %6359 = vrot.lane.b32.xlu0 %v5770, 104
        %v6360 = vpop.permute.xlu0 %6359
        %6361 = vrot.lane.b32.xlu0 %v5814, 104
        %v6362 = vpop.permute.xlu0 %6361
        %v6363 = vsel %vm948, %v6360, 0
        %v6365 = vsel %vm948, %v6362, 0
        %6367 = vmatprep.subr.mxu0 0.0
        %6368 = vmatpush1.xpose.msra.mxu0 %v6365
        %6369 = vmatprep.subr.mxu0 0.0
        %6370 = vmatpush1.xpose.msra.mxu0 0.0
        %6371 = vmatprep.subr.mxu0 0.0
        %6372 = vmatpush1.xpose.msra.mxu0 0.0
        %6373 = vmatprep.subr.mxu0 0.0
        %6374 = vmatpush1.xpose.msra.mxu0 0.0
        %6375 = vmatprep.subr.mxu0 0.0
        %6376 = vmatpush1.xpose.msra.mxu0 0.0
        %6377 = vmatprep.subr.mxu0 0.0
        %6378 = vmatpush1.xpose.msra.mxu0 0.0
        %6379 = vmatprep.subr.mxu0 0.0
        %6380 = vmatpush1.xpose.msra.mxu0 0.0
        %6381 = vmatprep.subr.mxu0 0.0
        %6382 = vmatpush1.xpose.msra.mxu0 0.0
        %6383 = vmatprep.subr.mxu0 0.0
        %6384 = vmatpush1.xpose.msra.mxu0 0.0
        %6385 = vmatprep.subr.mxu0 0.0
        %6386 = vmatpush1.xpose.msra.mxu0 0.0
        %6387 = vmatprep.subr.mxu0 0.0
        %6388 = vmatpush1.xpose.msra.mxu0 0.0
        %6389 = vmatprep.subr.mxu0 0.0
        %6390 = vmatpush1.xpose.msra.mxu0 0.0
        %6391 = vmatprep.subr.mxu0 0.0
        %6392 = vmatpush1.xpose.msra.mxu0 0.0
        %6393 = vmatprep.subr.mxu0 0.0
        %6394 = vmatpush1.xpose.msra.mxu0 0.0
        %6395 = vmatprep.subr.mxu0 0.0
        %6396 = vmatpush1.xpose.msra.mxu0 0.0
        %6397 = vmatprep.subr.mxu0 0.0
        %6398 = vmatpush1.xpose.msra.mxu0 0.0
        %6399 = vmatprep.subr.mxu0 0.0
        %6400 = vmatpush1.xpose.msra.mxu0 0.0
        %6401 = vmatprep.subr.mxu0 0.0
        %6402 = vmatpush1.xpose.msra.mxu0 0.0
        %6403 = vmatprep.subr.mxu0 0.0
        %6404 = vmatpush1.xpose.msra.mxu0 0.0
        %6405 = vmatprep.subr.mxu0 0.0
        %6406 = vmatpush1.xpose.msra.mxu0 0.0
        %6407 = vmatprep.subr.mxu0 0.0
        %6408 = vmatpush1.xpose.msra.mxu0 0.0
        %6409 = vmatprep.subr.mxu0 0.0
        %6410 = vmatpush1.xpose.msra.mxu0 0.0
        %6411 = vmatprep.subr.mxu0 0.0
        %6412 = vmatpush1.xpose.msra.mxu0 0.0
        %6413 = vmatprep.subr.mxu0 0.0
        %6414 = vmatpush1.xpose.msra.mxu0 0.0
        %6415 = vmatprep.subr.mxu0 0.0
        %6416 = vmatpush1.xpose.msra.mxu0 0.0
        %6417 = vmatprep.subr.mxu0 0.0
        %6418 = vmatpush1.xpose.msra.mxu0 0.0
        %6419 = vmatprep.subr.mxu0 0.0
        %6420 = vmatpush1.xpose.msra.mxu0 0.0
        %6421 = vmatprep.subr.mxu0 0.0
        %6422 = vmatpush1.xpose.msra.mxu0 0.0
        %6423 = vmatprep.subr.mxu0 0.0
        %6424 = vmatpush1.xpose.msra.mxu0 0.0
        %6425 = vmatprep.subr.mxu0 0.0
        %6426 = vmatpush1.xpose.msra.mxu0 0.0
        %6427 = vmatprep.subr.mxu0 0.0
        %6428 = vmatpush1.xpose.msra.mxu0 0.0
        %6429 = vmatprep.subr.mxu0 0.0
        %6430 = vmatpush1.xpose.msra.mxu0 0.0
        %6431 = vmatprep.mubr.f32.mxu0 0.0
        %6432 = vmatmul.mubr.f32.gmra.mrb[0].mxu0 %v6363
        %v6433 = vpop.f32.mrb[0].mxu0
        %v6434 = vadd.f32 0.0, %v6433
        %v6435 = vpop.f32.mrb[0].mxu0
        %6436 = vdwg.mxu0
        %v6437 = vmul.f32 %v6434, 0.35355338
        %vm6438 = vcmp.ne.f32.partialorder %v730, 0.0
        %v6439 = vsel %vm6438, -1e+09, %v6437
        %v6440 = vsel %vm948, %v6439, -inf
        %6441 = vmax.xlane.f32.xlu0 %v6440
        %v6442 = vpop.xlane.xlu0 %6441
        %v6443 = vsub.f32 %v6439, %v6442
        %v6444 = vmul.f32 %v6443, 1.442695
        %v6445 = vpow.pop %v6444
        %v6446 = vsel %vm948, %v6445, 0.0
        %6447 = vadd.xlane.f32.xlu0 %v6446
        %v6448 = vpop.xlane.xlu0 %6447
        %v6449 = vrcp.pop %v6448
        %v6450 = vmul.f32 %v6445, %v6449
        %6451 = vrot.lane.b32.xlu0 %v5854, 104
        %v6452 = vpop.permute.xlu0 %6451
        %v6455 = vsel %vm948, %v6450, 0
        %6457 = vmatprep.subr.mxu0 0.0
        %6458 = vmatpush1.msra.mxu0 %v6452
        %6459 = vmatprep.subr.mxu0 0.0
        %6460 = vmatpush1.msra.mxu0 0.0
        %6461 = vmatprep.subr.mxu0 0.0
        %6462 = vmatpush1.msra.mxu0 0.0
        %6463 = vmatprep.subr.mxu0 0.0
        %6464 = vmatpush1.msra.mxu0 0.0
        %6465 = vmatprep.subr.mxu0 0.0
        %6466 = vmatpush1.msra.mxu0 0.0
        %6467 = vmatprep.subr.mxu0 0.0
        %6468 = vmatpush1.msra.mxu0 0.0
        %6469 = vmatprep.subr.mxu0 0.0
        %6470 = vmatpush1.msra.mxu0 0.0
        %6471 = vmatprep.subr.mxu0 0.0
        %6472 = vmatpush1.msra.mxu0 0.0
        %6473 = vmatprep.subr.mxu0 0.0
        %6474 = vmatpush1.msra.mxu0 0.0
        %6475 = vmatprep.subr.mxu0 0.0
        %6476 = vmatpush1.msra.mxu0 0.0
        %6477 = vmatprep.subr.mxu0 0.0
        %6478 = vmatpush1.msra.mxu0 0.0
        %6479 = vmatprep.subr.mxu0 0.0
        %6480 = vmatpush1.msra.mxu0 0.0
        %6481 = vmatprep.subr.mxu0 0.0
        %6482 = vmatpush1.msra.mxu0 0.0
        %6483 = vmatprep.subr.mxu0 0.0
        %6484 = vmatpush1.msra.mxu0 0.0
        %6485 = vmatprep.subr.mxu0 0.0
        %6486 = vmatpush1.msra.mxu0 0.0
        %6487 = vmatprep.subr.mxu0 0.0
        %6488 = vmatpush1.msra.mxu0 0.0
        %6489 = vmatprep.subr.mxu0 0.0
        %6490 = vmatpush1.msra.mxu0 0.0
        %6491 = vmatprep.subr.mxu0 0.0
        %6492 = vmatpush1.msra.mxu0 0.0
        %6493 = vmatprep.subr.mxu0 0.0
        %6494 = vmatpush1.msra.mxu0 0.0
        %6495 = vmatprep.subr.mxu0 0.0
        %6496 = vmatpush1.msra.mxu0 0.0
        %6497 = vmatprep.subr.mxu0 0.0
        %6498 = vmatpush1.msra.mxu0 0.0
        %6499 = vmatprep.subr.mxu0 0.0
        %6500 = vmatpush1.msra.mxu0 0.0
        %6501 = vmatprep.subr.mxu0 0.0
        %6502 = vmatpush1.msra.mxu0 0.0
        %6503 = vmatprep.subr.mxu0 0.0
        %6504 = vmatpush1.msra.mxu0 0.0
        %6505 = vmatprep.subr.mxu0 0.0
        %6506 = vmatpush1.msra.mxu0 0.0
        %6507 = vmatprep.subr.mxu0 0.0
        %6508 = vmatpush1.msra.mxu0 0.0
        %6509 = vmatprep.subr.mxu0 0.0
        %6510 = vmatpush1.msra.mxu0 0.0
        %6511 = vmatprep.subr.mxu0 0.0
        %6512 = vmatpush1.msra.mxu0 0.0
        %6513 = vmatprep.subr.mxu0 0.0
        %6514 = vmatpush1.msra.mxu0 0.0
        %6515 = vmatprep.subr.mxu0 0.0
        %6516 = vmatpush1.msra.mxu0 0.0
        %6517 = vmatprep.subr.mxu0 0.0
        %6518 = vmatpush1.msra.mxu0 0.0
        %6519 = vmatprep.subr.mxu0 0.0
        %6520 = vmatpush1.msra.mxu0 0.0
        %6521 = vmatprep.mubr.f32.mxu0 0.0
        %6522 = vmatmul.mubr.f32.gmra.mrb[0].mxu0 %v6455
        %v6523 = vpop.f32.mrb[0].mxu0
        %v6524 = vadd.f32 0.0, %v6523
        %v6525 = vpop.f32.mrb[0].mxu0
        %6526 = vdwg.mxu0
        %6527 = vrot.lane.b32.xlu0 %v5770, 96
        %v6528 = vpop.permute.xlu0 %6527
        %6529 = vrot.lane.b32.xlu0 %v5814, 96
        %v6530 = vpop.permute.xlu0 %6529
        %v6531 = vsel %vm948, %v6528, 0
        %v6533 = vsel %vm948, %v6530, 0
        %6535 = vmatprep.subr.mxu0 0.0
        %6536 = vmatpush1.xpose.msra.mxu0 %v6533
        %6537 = vmatprep.subr.mxu0 0.0
        %6538 = vmatpush1.xpose.msra.mxu0 0.0
        %6539 = vmatprep.subr.mxu0 0.0
        %6540 = vmatpush1.xpose.msra.mxu0 0.0
        %6541 = vmatprep.subr.mxu0 0.0
        %6542 = vmatpush1.xpose.msra.mxu0 0.0
        %6543 = vmatprep.subr.mxu0 0.0
        %6544 = vmatpush1.xpose.msra.mxu0 0.0
        %6545 = vmatprep.subr.mxu0 0.0
        %6546 = vmatpush1.xpose.msra.mxu0 0.0
        %6547 = vmatprep.subr.mxu0 0.0
        %6548 = vmatpush1.xpose.msra.mxu0 0.0
        %6549 = vmatprep.subr.mxu0 0.0
        %6550 = vmatpush1.xpose.msra.mxu0 0.0
        %6551 = vmatprep.subr.mxu0 0.0
        %6552 = vmatpush1.xpose.msra.mxu0 0.0
        %6553 = vmatprep.subr.mxu0 0.0
        %6554 = vmatpush1.xpose.msra.mxu0 0.0
        %6555 = vmatprep.subr.mxu0 0.0
        %6556 = vmatpush1.xpose.msra.mxu0 0.0
        %6557 = vmatprep.subr.mxu0 0.0
        %6558 = vmatpush1.xpose.msra.mxu0 0.0
        %6559 = vmatprep.subr.mxu0 0.0
        %6560 = vmatpush1.xpose.msra.mxu0 0.0
        %6561 = vmatprep.subr.mxu0 0.0
        %6562 = vmatpush1.xpose.msra.mxu0 0.0
        %6563 = vmatprep.subr.mxu0 0.0
        %6564 = vmatpush1.xpose.msra.mxu0 0.0
        %6565 = vmatprep.subr.mxu0 0.0
        %6566 = vmatpush1.xpose.msra.mxu0 0.0
        %6567 = vmatprep.subr.mxu0 0.0
        %6568 = vmatpush1.xpose.msra.mxu0 0.0
        %6569 = vmatprep.subr.mxu0 0.0
        %6570 = vmatpush1.xpose.msra.mxu0 0.0
        %6571 = vmatprep.subr.mxu0 0.0
        %6572 = vmatpush1.xpose.msra.mxu0 0.0
        %6573 = vmatprep.subr.mxu0 0.0
        %6574 = vmatpush1.xpose.msra.mxu0 0.0
        %6575 = vmatprep.subr.mxu0 0.0
        %6576 = vmatpush1.xpose.msra.mxu0 0.0
        %6577 = vmatprep.subr.mxu0 0.0
        %6578 = vmatpush1.xpose.msra.mxu0 0.0
        %6579 = vmatprep.subr.mxu0 0.0
        %6580 = vmatpush1.xpose.msra.mxu0 0.0
        %6581 = vmatprep.subr.mxu0 0.0
        %6582 = vmatpush1.xpose.msra.mxu0 0.0
        %6583 = vmatprep.subr.mxu0 0.0
        %6584 = vmatpush1.xpose.msra.mxu0 0.0
        %6585 = vmatprep.subr.mxu0 0.0
        %6586 = vmatpush1.xpose.msra.mxu0 0.0
        %6587 = vmatprep.subr.mxu0 0.0
        %6588 = vmatpush1.xpose.msra.mxu0 0.0
        %6589 = vmatprep.subr.mxu0 0.0
        %6590 = vmatpush1.xpose.msra.mxu0 0.0
        %6591 = vmatprep.subr.mxu0 0.0
        %6592 = vmatpush1.xpose.msra.mxu0 0.0
        %6593 = vmatprep.subr.mxu0 0.0
        %6594 = vmatpush1.xpose.msra.mxu0 0.0
        %6595 = vmatprep.subr.mxu0 0.0
        %6596 = vmatpush1.xpose.msra.mxu0 0.0
        %6597 = vmatprep.subr.mxu0 0.0
        %6598 = vmatpush1.xpose.msra.mxu0 0.0
        %6599 = vmatprep.mubr.f32.mxu0 0.0
        %6600 = vmatmul.mubr.f32.gmra.mrb[0].mxu0 %v6531
        %v6601 = vpop.f32.mrb[0].mxu0
        %v6602 = vadd.f32 0.0, %v6601
        %v6603 = vpop.f32.mrb[0].mxu0
        %6604 = vdwg.mxu0
        %v6605 = vmul.f32 %v6602, 0.35355338
        %vm6606 = vcmp.ne.f32.partialorder %v731, 0.0
        %v6607 = vsel %vm6606, -1e+09, %v6605
        %v6608 = vsel %vm948, %v6607, -inf
        %6609 = vmax.xlane.f32.xlu0 %v6608
        %v6610 = vpop.xlane.xlu0 %6609
        %v6611 = vsub.f32 %v6607, %v6610
        %v6612 = vmul.f32 %v6611, 1.442695
        %v6613 = vpow.pop %v6612
        %v6614 = vsel %vm948, %v6613, 0.0
        %6615 = vadd.xlane.f32.xlu0 %v6614
        %v6616 = vpop.xlane.xlu0 %6615
        %v6617 = vrcp.pop %v6616
        %v6618 = vmul.f32 %v6613, %v6617
        %6619 = vrot.lane.b32.xlu0 %v5854, 96
        %v6620 = vpop.permute.xlu0 %6619
        %v6623 = vsel %vm948, %v6618, 0
        %6625 = vmatprep.subr.mxu0 0.0
        %6626 = vmatpush1.msra.mxu0 %v6620
        %6627 = vmatprep.subr.mxu0 0.0
        %6628 = vmatpush1.msra.mxu0 0.0
        %6629 = vmatprep.subr.mxu0 0.0
        %6630 = vmatpush1.msra.mxu0 0.0
        %6631 = vmatprep.subr.mxu0 0.0
        %6632 = vmatpush1.msra.mxu0 0.0
        %6633 = vmatprep.subr.mxu0 0.0
        %6634 = vmatpush1.msra.mxu0 0.0
        %6635 = vmatprep.subr.mxu0 0.0
        %6636 = vmatpush1.msra.mxu0 0.0
        %6637 = vmatprep.subr.mxu0 0.0
        %6638 = vmatpush1.msra.mxu0 0.0
        %6639 = vmatprep.subr.mxu0 0.0
        %6640 = vmatpush1.msra.mxu0 0.0
        %6641 = vmatprep.subr.mxu0 0.0
        %6642 = vmatpush1.msra.mxu0 0.0
        %6643 = vmatprep.subr.mxu0 0.0
        %6644 = vmatpush1.msra.mxu0 0.0
        %6645 = vmatprep.subr.mxu0 0.0
        %6646 = vmatpush1.msra.mxu0 0.0
        %6647 = vmatprep.subr.mxu0 0.0
        %6648 = vmatpush1.msra.mxu0 0.0
        %6649 = vmatprep.subr.mxu0 0.0
        %6650 = vmatpush1.msra.mxu0 0.0
        %6651 = vmatprep.subr.mxu0 0.0
        %6652 = vmatpush1.msra.mxu0 0.0
        %6653 = vmatprep.subr.mxu0 0.0
        %6654 = vmatpush1.msra.mxu0 0.0
        %6655 = vmatprep.subr.mxu0 0.0
        %6656 = vmatpush1.msra.mxu0 0.0
        %6657 = vmatprep.subr.mxu0 0.0
        %6658 = vmatpush1.msra.mxu0 0.0
        %6659 = vmatprep.subr.mxu0 0.0
        %6660 = vmatpush1.msra.mxu0 0.0
        %6661 = vmatprep.subr.mxu0 0.0
        %6662 = vmatpush1.msra.mxu0 0.0
        %6663 = vmatprep.subr.mxu0 0.0
        %6664 = vmatpush1.msra.mxu0 0.0
        %6665 = vmatprep.subr.mxu0 0.0
        %6666 = vmatpush1.msra.mxu0 0.0
        %6667 = vmatprep.subr.mxu0 0.0
        %6668 = vmatpush1.msra.mxu0 0.0
        %6669 = vmatprep.subr.mxu0 0.0
        %6670 = vmatpush1.msra.mxu0 0.0
        %6671 = vmatprep.subr.mxu0 0.0
        %6672 = vmatpush1.msra.mxu0 0.0
        %6673 = vmatprep.subr.mxu0 0.0
        %6674 = vmatpush1.msra.mxu0 0.0
        %6675 = vmatprep.subr.mxu0 0.0
        %6676 = vmatpush1.msra.mxu0 0.0
        %6677 = vmatprep.subr.mxu0 0.0
        %6678 = vmatpush1.msra.mxu0 0.0
        %6679 = vmatprep.subr.mxu0 0.0
        %6680 = vmatpush1.msra.mxu0 0.0
        %6681 = vmatprep.subr.mxu0 0.0
        %6682 = vmatpush1.msra.mxu0 0.0
        %6683 = vmatprep.subr.mxu0 0.0
        %6684 = vmatpush1.msra.mxu0 0.0
        %6685 = vmatprep.subr.mxu0 0.0
        %6686 = vmatpush1.msra.mxu0 0.0
        %6687 = vmatprep.subr.mxu0 0.0
        %6688 = vmatpush1.msra.mxu0 0.0
        %6689 = vmatprep.mubr.f32.mxu0 0.0
        %6690 = vmatmul.mubr.f32.gmra.mrb[0].mxu0 %v6623
        %v6691 = vpop.f32.mrb[0].mxu0
        %v6692 = vadd.f32 0.0, %v6691
        %v6693 = vpop.f32.mrb[0].mxu0
        %6694 = vdwg.mxu0
        %6695 = vrot.lane.b32.xlu0 %v5770, 88
        %v6696 = vpop.permute.xlu0 %6695
        %6697 = vrot.lane.b32.xlu0 %v5814, 88
        %v6698 = vpop.permute.xlu0 %6697
        %v6699 = vsel %vm948, %v6696, 0
        %v6701 = vsel %vm948, %v6698, 0
        %6703 = vmatprep.subr.mxu0 0.0
        %6704 = vmatpush1.xpose.msra.mxu0 %v6701
        %6705 = vmatprep.subr.mxu0 0.0
        %6706 = vmatpush1.xpose.msra.mxu0 0.0
        %6707 = vmatprep.subr.mxu0 0.0
        %6708 = vmatpush1.xpose.msra.mxu0 0.0
        %6709 = vmatprep.subr.mxu0 0.0
        %6710 = vmatpush1.xpose.msra.mxu0 0.0
        %6711 = vmatprep.subr.mxu0 0.0
        %6712 = vmatpush1.xpose.msra.mxu0 0.0
        %6713 = vmatprep.subr.mxu0 0.0
        %6714 = vmatpush1.xpose.msra.mxu0 0.0
        %6715 = vmatprep.subr.mxu0 0.0
        %6716 = vmatpush1.xpose.msra.mxu0 0.0
        %6717 = vmatprep.subr.mxu0 0.0
        %6718 = vmatpush1.xpose.msra.mxu0 0.0
        %6719 = vmatprep.subr.mxu0 0.0
        %6720 = vmatpush1.xpose.msra.mxu0 0.0
        %6721 = vmatprep.subr.mxu0 0.0
        %6722 = vmatpush1.xpose.msra.mxu0 0.0
        %6723 = vmatprep.subr.mxu0 0.0
        %6724 = vmatpush1.xpose.msra.mxu0 0.0
        %6725 = vmatprep.subr.mxu0 0.0
        %6726 = vmatpush1.xpose.msra.mxu0 0.0
        %6727 = vmatprep.subr.mxu0 0.0
        %6728 = vmatpush1.xpose.msra.mxu0 0.0
        %6729 = vmatprep.subr.mxu0 0.0
        %6730 = vmatpush1.xpose.msra.mxu0 0.0
        %6731 = vmatprep.subr.mxu0 0.0
        %6732 = vmatpush1.xpose.msra.mxu0 0.0
        %6733 = vmatprep.subr.mxu0 0.0
        %6734 = vmatpush1.xpose.msra.mxu0 0.0
        %6735 = vmatprep.subr.mxu0 0.0
        %6736 = vmatpush1.xpose.msra.mxu0 0.0
        %6737 = vmatprep.subr.mxu0 0.0
        %6738 = vmatpush1.xpose.msra.mxu0 0.0
        %6739 = vmatprep.subr.mxu0 0.0
        %6740 = vmatpush1.xpose.msra.mxu0 0.0
        %6741 = vmatprep.subr.mxu0 0.0
        %6742 = vmatpush1.xpose.msra.mxu0 0.0
        %6743 = vmatprep.subr.mxu0 0.0
        %6744 = vmatpush1.xpose.msra.mxu0 0.0
        %6745 = vmatprep.subr.mxu0 0.0
        %6746 = vmatpush1.xpose.msra.mxu0 0.0
        %6747 = vmatprep.subr.mxu0 0.0
        %6748 = vmatpush1.xpose.msra.mxu0 0.0
        %6749 = vmatprep.subr.mxu0 0.0
        %6750 = vmatpush1.xpose.msra.mxu0 0.0
        %6751 = vmatprep.subr.mxu0 0.0
        %6752 = vmatpush1.xpose.msra.mxu0 0.0
        %6753 = vmatprep.subr.mxu0 0.0
        %6754 = vmatpush1.xpose.msra.mxu0 0.0
        %6755 = vmatprep.subr.mxu0 0.0
        %6756 = vmatpush1.xpose.msra.mxu0 0.0
        %6757 = vmatprep.subr.mxu0 0.0
        %6758 = vmatpush1.xpose.msra.mxu0 0.0
        %6759 = vmatprep.subr.mxu0 0.0
        %6760 = vmatpush1.xpose.msra.mxu0 0.0
        %6761 = vmatprep.subr.mxu0 0.0
        %6762 = vmatpush1.xpose.msra.mxu0 0.0
        %6763 = vmatprep.subr.mxu0 0.0
        %6764 = vmatpush1.xpose.msra.mxu0 0.0
        %6765 = vmatprep.subr.mxu0 0.0
        %6766 = vmatpush1.xpose.msra.mxu0 0.0
        %6767 = vmatprep.mubr.f32.mxu0 0.0
        %6768 = vmatmul.mubr.f32.gmra.mrb[0].mxu0 %v6699
        %v6769 = vpop.f32.mrb[0].mxu0
        %v6770 = vadd.f32 0.0, %v6769
        %v6771 = vpop.f32.mrb[0].mxu0
        %6772 = vdwg.mxu0
        %v6773 = vmul.f32 %v6770, 0.35355338
        %vm6774 = vcmp.ne.f32.partialorder %v732, 0.0
        %v6775 = vsel %vm6774, -1e+09, %v6773
        %v6776 = vsel %vm948, %v6775, -inf
        %6777 = vmax.xlane.f32.xlu0 %v6776
        %v6778 = vpop.xlane.xlu0 %6777
        %v6779 = vsub.f32 %v6775, %v6778
        %v6780 = vmul.f32 %v6779, 1.442695
        %v6781 = vpow.pop %v6780
        %v6782 = vsel %vm948, %v6781, 0.0
        %6783 = vadd.xlane.f32.xlu0 %v6782
        %v6784 = vpop.xlane.xlu0 %6783
        %v6785 = vrcp.pop %v6784
        %v6786 = vmul.f32 %v6781, %v6785
        %6787 = vrot.lane.b32.xlu0 %v5854, 88
        %v6788 = vpop.permute.xlu0 %6787
        %v6791 = vsel %vm948, %v6786, 0
        %6793 = vmatprep.subr.mxu0 0.0
        %6794 = vmatpush1.msra.mxu0 %v6788
        %6795 = vmatprep.subr.mxu0 0.0
        %6796 = vmatpush1.msra.mxu0 0.0
        %6797 = vmatprep.subr.mxu0 0.0
        %6798 = vmatpush1.msra.mxu0 0.0
        %6799 = vmatprep.subr.mxu0 0.0
        %6800 = vmatpush1.msra.mxu0 0.0
        %6801 = vmatprep.subr.mxu0 0.0
        %6802 = vmatpush1.msra.mxu0 0.0
        %6803 = vmatprep.subr.mxu0 0.0
        %6804 = vmatpush1.msra.mxu0 0.0
        %6805 = vmatprep.subr.mxu0 0.0
        %6806 = vmatpush1.msra.mxu0 0.0
        %6807 = vmatprep.subr.mxu0 0.0
        %6808 = vmatpush1.msra.mxu0 0.0
        %6809 = vmatprep.subr.mxu0 0.0
        %6810 = vmatpush1.msra.mxu0 0.0
        %6811 = vmatprep.subr.mxu0 0.0
        %6812 = vmatpush1.msra.mxu0 0.0
        %6813 = vmatprep.subr.mxu0 0.0
        %6814 = vmatpush1.msra.mxu0 0.0
        %6815 = vmatprep.subr.mxu0 0.0
        %6816 = vmatpush1.msra.mxu0 0.0
        %6817 = vmatprep.subr.mxu0 0.0
        %6818 = vmatpush1.msra.mxu0 0.0
        %6819 = vmatprep.subr.mxu0 0.0
        %6820 = vmatpush1.msra.mxu0 0.0
        %6821 = vmatprep.subr.mxu0 0.0
        %6822 = vmatpush1.msra.mxu0 0.0
        %6823 = vmatprep.subr.mxu0 0.0
        %6824 = vmatpush1.msra.mxu0 0.0
        %6825 = vmatprep.subr.mxu0 0.0
        %6826 = vmatpush1.msra.mxu0 0.0
        %6827 = vmatprep.subr.mxu0 0.0
        %6828 = vmatpush1.msra.mxu0 0.0
        %6829 = vmatprep.subr.mxu0 0.0
        %6830 = vmatpush1.msra.mxu0 0.0
        %6831 = vmatprep.subr.mxu0 0.0
        %6832 = vmatpush1.msra.mxu0 0.0
        %6833 = vmatprep.subr.mxu0 0.0
        %6834 = vmatpush1.msra.mxu0 0.0
        %6835 = vmatprep.subr.mxu0 0.0
        %6836 = vmatpush1.msra.mxu0 0.0
        %6837 = vmatprep.subr.mxu0 0.0
        %6838 = vmatpush1.msra.mxu0 0.0
        %6839 = vmatprep.subr.mxu0 0.0
        %6840 = vmatpush1.msra.mxu0 0.0
        %6841 = vmatprep.subr.mxu0 0.0
        %6842 = vmatpush1.msra.mxu0 0.0
        %6843 = vmatprep.subr.mxu0 0.0
        %6844 = vmatpush1.msra.mxu0 0.0
        %6845 = vmatprep.subr.mxu0 0.0
        %6846 = vmatpush1.msra.mxu0 0.0
        %6847 = vmatprep.subr.mxu0 0.0
        %6848 = vmatpush1.msra.mxu0 0.0
        %6849 = vmatprep.subr.mxu0 0.0
        %6850 = vmatpush1.msra.mxu0 0.0
        %6851 = vmatprep.subr.mxu0 0.0
        %6852 = vmatpush1.msra.mxu0 0.0
        %6853 = vmatprep.subr.mxu0 0.0
        %6854 = vmatpush1.msra.mxu0 0.0
        %6855 = vmatprep.subr.mxu0 0.0
        %6856 = vmatpush1.msra.mxu0 0.0
        %6857 = vmatprep.mubr.f32.mxu0 0.0
        %6858 = vmatmul.mubr.f32.gmra.mrb[0].mxu0 %v6791
        %v6859 = vpop.f32.mrb[0].mxu0
        %v6860 = vadd.f32 0.0, %v6859
        %v6861 = vpop.f32.mrb[0].mxu0
        %6862 = vdwg.mxu0
        %6863 = vrot.lane.b32.xlu0 %v5770, 80
        %v6864 = vpop.permute.xlu0 %6863
        %6865 = vrot.lane.b32.xlu0 %v5814, 80
        %v6866 = vpop.permute.xlu0 %6865
        %v6867 = vsel %vm948, %v6864, 0
        %v6869 = vsel %vm948, %v6866, 0
        %6871 = vmatprep.subr.mxu0 0.0
        %6872 = vmatpush1.xpose.msra.mxu0 %v6869
        %6873 = vmatprep.subr.mxu0 0.0
        %6874 = vmatpush1.xpose.msra.mxu0 0.0
        %6875 = vmatprep.subr.mxu0 0.0
        %6876 = vmatpush1.xpose.msra.mxu0 0.0
        %6877 = vmatprep.subr.mxu0 0.0
        %6878 = vmatpush1.xpose.msra.mxu0 0.0
        %6879 = vmatprep.subr.mxu0 0.0
        %6880 = vmatpush1.xpose.msra.mxu0 0.0
        %6881 = vmatprep.subr.mxu0 0.0
        %6882 = vmatpush1.xpose.msra.mxu0 0.0
        %6883 = vmatprep.subr.mxu0 0.0
        %6884 = vmatpush1.xpose.msra.mxu0 0.0
        %6885 = vmatprep.subr.mxu0 0.0
        %6886 = vmatpush1.xpose.msra.mxu0 0.0
        %6887 = vmatprep.subr.mxu0 0.0
        %6888 = vmatpush1.xpose.msra.mxu0 0.0
        %6889 = vmatprep.subr.mxu0 0.0
        %6890 = vmatpush1.xpose.msra.mxu0 0.0
        %6891 = vmatprep.subr.mxu0 0.0
        %6892 = vmatpush1.xpose.msra.mxu0 0.0
        %6893 = vmatprep.subr.mxu0 0.0
        %6894 = vmatpush1.xpose.msra.mxu0 0.0
        %6895 = vmatprep.subr.mxu0 0.0
        %6896 = vmatpush1.xpose.msra.mxu0 0.0
        %6897 = vmatprep.subr.mxu0 0.0
        %6898 = vmatpush1.xpose.msra.mxu0 0.0
        %6899 = vmatprep.subr.mxu0 0.0
        %6900 = vmatpush1.xpose.msra.mxu0 0.0
        %6901 = vmatprep.subr.mxu0 0.0
        %6902 = vmatpush1.xpose.msra.mxu0 0.0
        %6903 = vmatprep.subr.mxu0 0.0
        %6904 = vmatpush1.xpose.msra.mxu0 0.0
        %6905 = vmatprep.subr.mxu0 0.0
        %6906 = vmatpush1.xpose.msra.mxu0 0.0
        %6907 = vmatprep.subr.mxu0 0.0
        %6908 = vmatpush1.xpose.msra.mxu0 0.0
        %6909 = vmatprep.subr.mxu0 0.0
        %6910 = vmatpush1.xpose.msra.mxu0 0.0
        %6911 = vmatprep.subr.mxu0 0.0
        %6912 = vmatpush1.xpose.msra.mxu0 0.0
        %6913 = vmatprep.subr.mxu0 0.0
        %6914 = vmatpush1.xpose.msra.mxu0 0.0
        %6915 = vmatprep.subr.mxu0 0.0
        %6916 = vmatpush1.xpose.msra.mxu0 0.0
        %6917 = vmatprep.subr.mxu0 0.0
        %6918 = vmatpush1.xpose.msra.mxu0 0.0
        %6919 = vmatprep.subr.mxu0 0.0
        %6920 = vmatpush1.xpose.msra.mxu0 0.0
        %6921 = vmatprep.subr.mxu0 0.0
        %6922 = vmatpush1.xpose.msra.mxu0 0.0
        %6923 = vmatprep.subr.mxu0 0.0
        %6924 = vmatpush1.xpose.msra.mxu0 0.0
        %6925 = vmatprep.subr.mxu0 0.0
        %6926 = vmatpush1.xpose.msra.mxu0 0.0
        %6927 = vmatprep.subr.mxu0 0.0
        %6928 = vmatpush1.xpose.msra.mxu0 0.0
        %6929 = vmatprep.subr.mxu0 0.0
        %6930 = vmatpush1.xpose.msra.mxu0 0.0
        %6931 = vmatprep.subr.mxu0 0.0
        %6932 = vmatpush1.xpose.msra.mxu0 0.0
        %6933 = vmatprep.subr.mxu0 0.0
        %6934 = vmatpush1.xpose.msra.mxu0 0.0
        %6935 = vmatprep.mubr.f32.mxu0 0.0
        %6936 = vmatmul.mubr.f32.gmra.mrb[0].mxu0 %v6867
        %v6937 = vpop.f32.mrb[0].mxu0
        %v6938 = vadd.f32 0.0, %v6937
        %v6939 = vpop.f32.mrb[0].mxu0
        %6940 = vdwg.mxu0
        %v6941 = vmul.f32 %v6938, 0.35355338
        %vm6942 = vcmp.ne.f32.partialorder %v733, 0.0
        %v6943 = vsel %vm6942, -1e+09, %v6941
        %v6944 = vsel %vm948, %v6943, -inf
        %6945 = vmax.xlane.f32.xlu0 %v6944
        %v6946 = vpop.xlane.xlu0 %6945
        %v6947 = vsub.f32 %v6943, %v6946
        %v6948 = vmul.f32 %v6947, 1.442695
        %v6949 = vpow.pop %v6948
        %v6950 = vsel %vm948, %v6949, 0.0
        %6951 = vadd.xlane.f32.xlu0 %v6950
        %v6952 = vpop.xlane.xlu0 %6951
        %v6953 = vrcp.pop %v6952
        %v6954 = vmul.f32 %v6949, %v6953
        %6955 = vrot.lane.b32.xlu0 %v5854, 80
        %v6956 = vpop.permute.xlu0 %6955
        %v6959 = vsel %vm948, %v6954, 0
        %6961 = vmatprep.subr.mxu0 0.0
        %6962 = vmatpush1.msra.mxu0 %v6956
        %6963 = vmatprep.subr.mxu0 0.0
        %6964 = vmatpush1.msra.mxu0 0.0
        %6965 = vmatprep.subr.mxu0 0.0
        %6966 = vmatpush1.msra.mxu0 0.0
        %6967 = vmatprep.subr.mxu0 0.0
        %6968 = vmatpush1.msra.mxu0 0.0
        %6969 = vmatprep.subr.mxu0 0.0
        %6970 = vmatpush1.msra.mxu0 0.0
        %6971 = vmatprep.subr.mxu0 0.0
        %6972 = vmatpush1.msra.mxu0 0.0
        %6973 = vmatprep.subr.mxu0 0.0
        %6974 = vmatpush1.msra.mxu0 0.0
        %6975 = vmatprep.subr.mxu0 0.0
        %6976 = vmatpush1.msra.mxu0 0.0
        %6977 = vmatprep.subr.mxu0 0.0
        %6978 = vmatpush1.msra.mxu0 0.0
        %6979 = vmatprep.subr.mxu0 0.0
        %6980 = vmatpush1.msra.mxu0 0.0
        %6981 = vmatprep.subr.mxu0 0.0
        %6982 = vmatpush1.msra.mxu0 0.0
        %6983 = vmatprep.subr.mxu0 0.0
        %6984 = vmatpush1.msra.mxu0 0.0
        %6985 = vmatprep.subr.mxu0 0.0
        %6986 = vmatpush1.msra.mxu0 0.0
        %6987 = vmatprep.subr.mxu0 0.0
        %6988 = vmatpush1.msra.mxu0 0.0
        %6989 = vmatprep.subr.mxu0 0.0
        %6990 = vmatpush1.msra.mxu0 0.0
        %6991 = vmatprep.subr.mxu0 0.0
        %6992 = vmatpush1.msra.mxu0 0.0
        %6993 = vmatprep.subr.mxu0 0.0
        %6994 = vmatpush1.msra.mxu0 0.0
        %6995 = vmatprep.subr.mxu0 0.0
        %6996 = vmatpush1.msra.mxu0 0.0
        %6997 = vmatprep.subr.mxu0 0.0
        %6998 = vmatpush1.msra.mxu0 0.0
        %6999 = vmatprep.subr.mxu0 0.0
        %7000 = vmatpush1.msra.mxu0 0.0
        %7001 = vmatprep.subr.mxu0 0.0
        %7002 = vmatpush1.msra.mxu0 0.0
        %7003 = vmatprep.subr.mxu0 0.0
        %7004 = vmatpush1.msra.mxu0 0.0
        %7005 = vmatprep.subr.mxu0 0.0
        %7006 = vmatpush1.msra.mxu0 0.0
        %7007 = vmatprep.subr.mxu0 0.0
        %7008 = vmatpush1.msra.mxu0 0.0
        %7009 = vmatprep.subr.mxu0 0.0
        %7010 = vmatpush1.msra.mxu0 0.0
        %7011 = vmatprep.subr.mxu0 0.0
        %7012 = vmatpush1.msra.mxu0 0.0
        %7013 = vmatprep.subr.mxu0 0.0
        %7014 = vmatpush1.msra.mxu0 0.0
        %7015 = vmatprep.subr.mxu0 0.0
        %7016 = vmatpush1.msra.mxu0 0.0
        %7017 = vmatprep.subr.mxu0 0.0
        %7018 = vmatpush1.msra.mxu0 0.0
        %7019 = vmatprep.subr.mxu0 0.0
        %7020 = vmatpush1.msra.mxu0 0.0
        %7021 = vmatprep.subr.mxu0 0.0
        %7022 = vmatpush1.msra.mxu0 0.0
        %7023 = vmatprep.subr.mxu0 0.0
        %7024 = vmatpush1.msra.mxu0 0.0
        %7025 = vmatprep.mubr.f32.mxu0 0.0
        %7026 = vmatmul.mubr.f32.gmra.mrb[0].mxu0 %v6959
        %v7027 = vpop.f32.mrb[0].mxu0
        %v7028 = vadd.f32 0.0, %v7027
        %v7029 = vpop.f32.mrb[0].mxu0
        %7030 = vdwg.mxu0
        %7031 = vrot.lane.b32.xlu0 %v5770, 72
        %v7032 = vpop.permute.xlu0 %7031
        %7033 = vrot.lane.b32.xlu0 %v5814, 72
        %v7034 = vpop.permute.xlu0 %7033
        %v7035 = vsel %vm948, %v7032, 0
        %v7037 = vsel %vm948, %v7034, 0
        %7039 = vmatprep.subr.mxu0 0.0
        %7040 = vmatpush1.xpose.msra.mxu0 %v7037
        %7041 = vmatprep.subr.mxu0 0.0
        %7042 = vmatpush1.xpose.msra.mxu0 0.0
        %7043 = vmatprep.subr.mxu0 0.0
        %7044 = vmatpush1.xpose.msra.mxu0 0.0
        %7045 = vmatprep.subr.mxu0 0.0
        %7046 = vmatpush1.xpose.msra.mxu0 0.0
        %7047 = vmatprep.subr.mxu0 0.0
        %7048 = vmatpush1.xpose.msra.mxu0 0.0
        %7049 = vmatprep.subr.mxu0 0.0
        %7050 = vmatpush1.xpose.msra.mxu0 0.0
        %7051 = vmatprep.subr.mxu0 0.0
        %7052 = vmatpush1.xpose.msra.mxu0 0.0
        %7053 = vmatprep.subr.mxu0 0.0
        %7054 = vmatpush1.xpose.msra.mxu0 0.0
        %7055 = vmatprep.subr.mxu0 0.0
        %7056 = vmatpush1.xpose.msra.mxu0 0.0
        %7057 = vmatprep.subr.mxu0 0.0
        %7058 = vmatpush1.xpose.msra.mxu0 0.0
        %7059 = vmatprep.subr.mxu0 0.0
        %7060 = vmatpush1.xpose.msra.mxu0 0.0
        %7061 = vmatprep.subr.mxu0 0.0
        %7062 = vmatpush1.xpose.msra.mxu0 0.0
        %7063 = vmatprep.subr.mxu0 0.0
        %7064 = vmatpush1.xpose.msra.mxu0 0.0
        %7065 = vmatprep.subr.mxu0 0.0
        %7066 = vmatpush1.xpose.msra.mxu0 0.0
        %7067 = vmatprep.subr.mxu0 0.0
        %7068 = vmatpush1.xpose.msra.mxu0 0.0
        %7069 = vmatprep.subr.mxu0 0.0
        %7070 = vmatpush1.xpose.msra.mxu0 0.0
        %7071 = vmatprep.subr.mxu0 0.0
        %7072 = vmatpush1.xpose.msra.mxu0 0.0
        %7073 = vmatprep.subr.mxu0 0.0
        %7074 = vmatpush1.xpose.msra.mxu0 0.0
        %7075 = vmatprep.subr.mxu0 0.0
        %7076 = vmatpush1.xpose.msra.mxu0 0.0
        %7077 = vmatprep.subr.mxu0 0.0
        %7078 = vmatpush1.xpose.msra.mxu0 0.0
        %7079 = vmatprep.subr.mxu0 0.0
        %7080 = vmatpush1.xpose.msra.mxu0 0.0
        %7081 = vmatprep.subr.mxu0 0.0
        %7082 = vmatpush1.xpose.msra.mxu0 0.0
        %7083 = vmatprep.subr.mxu0 0.0
        %7084 = vmatpush1.xpose.msra.mxu0 0.0
        %7085 = vmatprep.subr.mxu0 0.0
        %7086 = vmatpush1.xpose.msra.mxu0 0.0
        %7087 = vmatprep.subr.mxu0 0.0
        %7088 = vmatpush1.xpose.msra.mxu0 0.0
        %7089 = vmatprep.subr.mxu0 0.0
        %7090 = vmatpush1.xpose.msra.mxu0 0.0
        %7091 = vmatprep.subr.mxu0 0.0
        %7092 = vmatpush1.xpose.msra.mxu0 0.0
        %7093 = vmatprep.subr.mxu0 0.0
        %7094 = vmatpush1.xpose.msra.mxu0 0.0
        %7095 = vmatprep.subr.mxu0 0.0
        %7096 = vmatpush1.xpose.msra.mxu0 0.0
        %7097 = vmatprep.subr.mxu0 0.0
        %7098 = vmatpush1.xpose.msra.mxu0 0.0
        %7099 = vmatprep.subr.mxu0 0.0
        %7100 = vmatpush1.xpose.msra.mxu0 0.0
        %7101 = vmatprep.subr.mxu0 0.0
        %7102 = vmatpush1.xpose.msra.mxu0 0.0
        %7103 = vmatprep.mubr.f32.mxu0 0.0
        %7104 = vmatmul.mubr.f32.gmra.mrb[0].mxu0 %v7035
        %v7105 = vpop.f32.mrb[0].mxu0
        %v7106 = vadd.f32 0.0, %v7105
        %v7107 = vpop.f32.mrb[0].mxu0
        %7108 = vdwg.mxu0
        %v7109 = vmul.f32 %v7106, 0.35355338
        %vm7110 = vcmp.ne.f32.partialorder %v734, 0.0
        %v7111 = vsel %vm7110, -1e+09, %v7109
        %v7112 = vsel %vm948, %v7111, -inf
        %7113 = vmax.xlane.f32.xlu0 %v7112
        %v7114 = vpop.xlane.xlu0 %7113
        %v7115 = vsub.f32 %v7111, %v7114
        %v7116 = vmul.f32 %v7115, 1.442695
        %v7117 = vpow.pop %v7116
        %v7118 = vsel %vm948, %v7117, 0.0
        %7119 = vadd.xlane.f32.xlu0 %v7118
        %v7120 = vpop.xlane.xlu0 %7119
        %v7121 = vrcp.pop %v7120
        %v7122 = vmul.f32 %v7117, %v7121
        %7123 = vrot.lane.b32.xlu0 %v5854, 72
        %v7124 = vpop.permute.xlu0 %7123
        %v7127 = vsel %vm948, %v7122, 0
        %7129 = vmatprep.subr.mxu0 0.0
        %7130 = vmatpush1.msra.mxu0 %v7124
        %7131 = vmatprep.subr.mxu0 0.0
        %7132 = vmatpush1.msra.mxu0 0.0
        %7133 = vmatprep.subr.mxu0 0.0
        %7134 = vmatpush1.msra.mxu0 0.0
        %7135 = vmatprep.subr.mxu0 0.0
        %7136 = vmatpush1.msra.mxu0 0.0
        %7137 = vmatprep.subr.mxu0 0.0
        %7138 = vmatpush1.msra.mxu0 0.0
        %7139 = vmatprep.subr.mxu0 0.0
        %7140 = vmatpush1.msra.mxu0 0.0
        %7141 = vmatprep.subr.mxu0 0.0
        %7142 = vmatpush1.msra.mxu0 0.0
        %7143 = vmatprep.subr.mxu0 0.0
        %7144 = vmatpush1.msra.mxu0 0.0
        %7145 = vmatprep.subr.mxu0 0.0
        %7146 = vmatpush1.msra.mxu0 0.0
        %7147 = vmatprep.subr.mxu0 0.0
        %7148 = vmatpush1.msra.mxu0 0.0
        %7149 = vmatprep.subr.mxu0 0.0
        %7150 = vmatpush1.msra.mxu0 0.0
        %7151 = vmatprep.subr.mxu0 0.0
        %7152 = vmatpush1.msra.mxu0 0.0
        %7153 = vmatprep.subr.mxu0 0.0
        %7154 = vmatpush1.msra.mxu0 0.0
        %7155 = vmatprep.subr.mxu0 0.0
        %7156 = vmatpush1.msra.mxu0 0.0
        %7157 = vmatprep.subr.mxu0 0.0
        %7158 = vmatpush1.msra.mxu0 0.0
        %7159 = vmatprep.subr.mxu0 0.0
        %7160 = vmatpush1.msra.mxu0 0.0
        %7161 = vmatprep.subr.mxu0 0.0
        %7162 = vmatpush1.msra.mxu0 0.0
        %7163 = vmatprep.subr.mxu0 0.0
        %7164 = vmatpush1.msra.mxu0 0.0
        %7165 = vmatprep.subr.mxu0 0.0
        %7166 = vmatpush1.msra.mxu0 0.0
        %7167 = vmatprep.subr.mxu0 0.0
        %7168 = vmatpush1.msra.mxu0 0.0
        %7169 = vmatprep.subr.mxu0 0.0
        %7170 = vmatpush1.msra.mxu0 0.0
        %7171 = vmatprep.subr.mxu0 0.0
        %7172 = vmatpush1.msra.mxu0 0.0
        %7173 = vmatprep.subr.mxu0 0.0
        %7174 = vmatpush1.msra.mxu0 0.0
        %7175 = vmatprep.subr.mxu0 0.0
        %7176 = vmatpush1.msra.mxu0 0.0
        %7177 = vmatprep.subr.mxu0 0.0
        %7178 = vmatpush1.msra.mxu0 0.0
        %7179 = vmatprep.subr.mxu0 0.0
        %7180 = vmatpush1.msra.mxu0 0.0
        %7181 = vmatprep.subr.mxu0 0.0
        %7182 = vmatpush1.msra.mxu0 0.0
        %7183 = vmatprep.subr.mxu0 0.0
        %7184 = vmatpush1.msra.mxu0 0.0
        %7185 = vmatprep.subr.mxu0 0.0
        %7186 = vmatpush1.msra.mxu0 0.0
        %7187 = vmatprep.subr.mxu0 0.0
        %7188 = vmatpush1.msra.mxu0 0.0
        %7189 = vmatprep.subr.mxu0 0.0
        %7190 = vmatpush1.msra.mxu0 0.0
        %7191 = vmatprep.subr.mxu0 0.0
        %7192 = vmatpush1.msra.mxu0 0.0
        %7193 = vmatprep.mubr.f32.mxu0 0.0
        %7194 = vmatmul.mubr.f32.gmra.mrb[0].mxu0 %v7127
        %v7195 = vpop.f32.mrb[0].mxu0
        %v7196 = vadd.f32 0.0, %v7195
        %v7197 = vpop.f32.mrb[0].mxu0
        %7198 = vdwg.mxu0
        %7200 = vrot.lane.b32.xlu0 %v6188, 8
        %v7201 = vpop.permute.xlu0 %7200
        %7204 = vrot.lane.b32.xlu0 %v6356, 16
        %v7205 = vpop.permute.xlu0 %7204
        %7208 = vrot.lane.b32.xlu0 %v6524, 24
        %v7209 = vpop.permute.xlu0 %7208
        %7212 = vrot.lane.b32.xlu0 %v6692, 32
        %v7213 = vpop.permute.xlu0 %7212
        %7216 = vrot.lane.b32.xlu0 %v6860, 40
        %v7217 = vpop.permute.xlu0 %7216
        %7220 = vrot.lane.b32.xlu0 %v7028, 48
        %v7221 = vpop.permute.xlu0 %7220
        %7224 = vrot.lane.b32.xlu0 %v7196, 56
        %v7225 = vpop.permute.xlu0 %7224
        %v7227 = vsel %vm948, %v6019, %v7201
        %v7228 = vsel %vm2318, %v7227, %v7205
        %v7229 = vsel %vm2320, %v7228, %v7209
        %v7230 = vsel %vm800, %v7229, %v7213
        %v7231 = vsel %vm2323, %v7230, %v7217
        %v7232 = vsel %vm2325, %v7231, %v7221
        %v7233 = vsel %vm2327, %v7232, %v7225
        %v7234 = vpack.c.bf16 %v7233, %v7233
        %v7236 = vsel %vm2354, %v7234, 0
        %7238 = vmatprep.subr.bf16.mxu0 0
        %7239 = vmatpush1.bf16.msra.mxu0 %v3969
        %7240 = vmatprep.subr.bf16.mxu0 0
        %7241 = vmatpush1.bf16.msra.mxu0 %v3970
        %7242 = vmatprep.subr.bf16.mxu0 0
        %7243 = vmatpush1.bf16.msra.mxu0 %v3971
        %7244 = vmatprep.subr.bf16.mxu0 0
        %7245 = vmatpush1.bf16.msra.mxu0 %v3972
        %7246 = vmatprep.subr.bf16.mxu0 0
        %7247 = vmatpush1.bf16.msra.mxu0 0
        %7248 = vmatprep.subr.bf16.mxu0 0
        %7249 = vmatpush1.bf16.msra.mxu0 0
        %7250 = vmatprep.subr.bf16.mxu0 0
        %7251 = vmatpush1.bf16.msra.mxu0 0
        %7252 = vmatprep.subr.bf16.mxu0 0
        %7253 = vmatpush1.bf16.msra.mxu0 0
        %7254 = vmatprep.subr.bf16.mxu0 0
        %7255 = vmatpush1.bf16.msra.mxu0 0
        %7256 = vmatprep.subr.bf16.mxu0 0
        %7257 = vmatpush1.bf16.msra.mxu0 0
        %7258 = vmatprep.subr.bf16.mxu0 0
        %7259 = vmatpush1.bf16.msra.mxu0 0
        %7260 = vmatprep.subr.bf16.mxu0 0
        %7261 = vmatpush1.bf16.msra.mxu0 0
        %7262 = vmatprep.subr.bf16.mxu0 0
        %7263 = vmatpush1.bf16.msra.mxu0 0
        %7264 = vmatprep.subr.bf16.mxu0 0
        %7265 = vmatpush1.bf16.msra.mxu0 0
        %7266 = vmatprep.subr.bf16.mxu0 0
        %7267 = vmatpush1.bf16.msra.mxu0 0
        %7268 = vmatprep.subr.bf16.mxu0 0
        %7269 = vmatpush1.bf16.msra.mxu0 0
        %7270 = vmatprep.mubr.bf16.mxu0 0
        %7271 = vmatmul.mubr.bf16.gmra.mrb[0].mxu0 %v7236
        %v7272 = vpop.f32.mrb[0].mxu0
        %v7273 = vadd.f32 0.0, %v7272
        %v7274 = vpop.f32.mrb[0].mxu0
        %v7275 = vpop.f32.mrb[0].mxu0
        %v7276 = vpop.f32.mrb[0].mxu0
        %7277 = vdwg.mxu0
        %v7278 = vadd.f32 %v5730, %v7273
        %v7279 = vsel %vm800, %v7278, 0.0
        %7280 = vadd.xlane.f32.xlu0 %v7279
        %v7281 = vpop.xlane.xlu0 %7280
        %v7282 = vmul.f32 %v7281, %v2402
        %v7283 = vsub.f32 %v7278, %v7282
        %v7284 = vmul.f32 %v7283, %v7283
        %v7285 = vsel %vm800, %v7284, 0.0
        %7286 = vadd.xlane.f32.xlu0 %v7285
        %v7287 = vpop.xlane.xlu0 %7286
        %v7288 = vmul.f32 %v7287, %v2402
        %v7289 = vadd.f32 %v7288, 1e-05
        %v7290 = vrsqrt.pop %v7289
        %v7291 = vmul.f32 %v7283, %v7290
        %v7292 = vpack.c.bf16 %v7291, %v7291
        %v7294 = vsel %vm800, %v7292, 0
        %7296 = vmatprep.subr.bf16.mxu0 0
        %7297 = vmatpush1.bf16.msra.mxu0 %v4043
        %7298 = vmatprep.subr.bf16.mxu0 0
        %7299 = vmatpush1.bf16.msra.mxu0 %v4044
        %7300 = vmatprep.subr.bf16.mxu0 0
        %7301 = vmatpush1.bf16.msra.mxu0 0
        %7302 = vmatprep.subr.bf16.mxu0 0
        %7303 = vmatpush1.bf16.msra.mxu0 0
        %7304 = vmatprep.subr.bf16.mxu0 0
        %7305 = vmatpush1.bf16.msra.mxu0 0
        %7306 = vmatprep.subr.bf16.mxu0 0
        %7307 = vmatpush1.bf16.msra.mxu0 0
        %7308 = vmatprep.subr.bf16.mxu0 0
        %7309 = vmatpush1.bf16.msra.mxu0 0
        %7310 = vmatprep.subr.bf16.mxu0 0
        %7311 = vmatpush1.bf16.msra.mxu0 0
        %7312 = vmatprep.subr.bf16.mxu0 0
        %7313 = vmatpush1.bf16.msra.mxu0 0
        %7314 = vmatprep.subr.bf16.mxu0 0
        %7315 = vmatpush1.bf16.msra.mxu0 0
        %7316 = vmatprep.subr.bf16.mxu0 0
        %7317 = vmatpush1.bf16.msra.mxu0 0
        %7318 = vmatprep.subr.bf16.mxu0 0
        %7319 = vmatpush1.bf16.msra.mxu0 0
        %7320 = vmatprep.subr.bf16.mxu0 0
        %7321 = vmatpush1.bf16.msra.mxu0 0
        %7322 = vmatprep.subr.bf16.mxu0 0
        %7323 = vmatpush1.bf16.msra.mxu0 0
        %7324 = vmatprep.subr.bf16.mxu0 0
        %7325 = vmatpush1.bf16.msra.mxu0 0
        %7326 = vmatprep.subr.bf16.mxu0 0
        %7327 = vmatpush1.bf16.msra.mxu0 0
        %7328 = vmatprep.mubr.bf16.mxu0 0
        %7329 = vmatmul.mubr.bf16.gmra.mrb[0].mxu0 %v7294
        %v7330 = vpop.f32.mrb[0].mxu0
        %v7331 = vadd.f32 0.0, %v7330
        %v7332 = vpop.f32.mrb[0].mxu0
        %v7333 = vpop.f32.mrb[0].mxu0
        %v7334 = vpop.f32.mrb[0].mxu0
        %7335 = vdwg.mxu0
        %v7336 = vmax.f32 %v7331, 0.0
        %v7337 = vpack.c.bf16 %v7336, %v7336
        %v7339 = vsel %vm2354, %v7337, 0
        %7341 = vmatprep.subr.bf16.mxu0 0
        %7342 = vmatpush1.bf16.msra.mxu0 %v4108
        %7343 = vmatprep.subr.bf16.mxu0 0
        %7344 = vmatpush1.bf16.msra.mxu0 %v4109
        %7345 = vmatprep.subr.bf16.mxu0 0
        %7346 = vmatpush1.bf16.msra.mxu0 %v4110
        %7347 = vmatprep.subr.bf16.mxu0 0
        %7348 = vmatpush1.bf16.msra.mxu0 %v4111
        %7349 = vmatprep.subr.bf16.mxu0 0
        %7350 = vmatpush1.bf16.msra.mxu0 0
        %7351 = vmatprep.subr.bf16.mxu0 0
        %7352 = vmatpush1.bf16.msra.mxu0 0
        %7353 = vmatprep.subr.bf16.mxu0 0
        %7354 = vmatpush1.bf16.msra.mxu0 0
        %7355 = vmatprep.subr.bf16.mxu0 0
        %7356 = vmatpush1.bf16.msra.mxu0 0
        %7357 = vmatprep.subr.bf16.mxu0 0
        %7358 = vmatpush1.bf16.msra.mxu0 0
        %7359 = vmatprep.subr.bf16.mxu0 0
        %7360 = vmatpush1.bf16.msra.mxu0 0
        %7361 = vmatprep.subr.bf16.mxu0 0
        %7362 = vmatpush1.bf16.msra.mxu0 0
        %7363 = vmatprep.subr.bf16.mxu0 0
        %7364 = vmatpush1.bf16.msra.mxu0 0
        %7365 = vmatprep.subr.bf16.mxu0 0
        %7366 = vmatpush1.bf16.msra.mxu0 0
        %7367 = vmatprep.subr.bf16.mxu0 0
        %7368 = vmatpush1.bf16.msra.mxu0 0
        %7369 = vmatprep.subr.bf16.mxu0 0
        %7370 = vmatpush1.bf16.msra.mxu0 0
        %7371 = vmatprep.subr.bf16.mxu0 0
        %7372 = vmatpush1.bf16.msra.mxu0 0
        %7373 = vmatprep.mubr.bf16.mxu0 0
        %7374 = vmatmul.mubr.bf16.gmra.mrb[0].mxu0 %v7339
        %v7375 = vpop.f32.mrb[0].mxu0
        %v7376 = vadd.f32 0.0, %v7375
        %v7377 = vpop.f32.mrb[0].mxu0
        %v7378 = vpop.f32.mrb[0].mxu0
        %v7379 = vpop.f32.mrb[0].mxu0
        %7380 = vdwg.mxu0
        %v7381 = vadd.f32 %v7291, %v7376
        %v7382 = vsel %vm800, %v7381, 0.0
        %7383 = vadd.xlane.f32.xlu0 %v7382
        %v7384 = vpop.xlane.xlu0 %7383
        %v7385 = vmul.f32 %v7384, %v2402
        %v7386 = vsub.f32 %v7381, %v7385
        %v7387 = vmul.f32 %v7386, %v7386
        %v7388 = vsel %vm800, %v7387, 0.0
        %7389 = vadd.xlane.f32.xlu0 %v7388
        %v7390 = vpop.xlane.xlu0 %7389
        %v7391 = vmul.f32 %v7390, %v2402
        %v7392 = vadd.f32 %v7391, 1e-05
        %v7393 = vrsqrt.pop %v7392
        %v7394 = vmul.f32 %v7386, %v7393
        %s7395 = scalar_lea.vmem [#allocation9], 8
        %7396 = vst.msk [vmem:[%s7395] sm:$0xff] %vm800, %v7394
        // Predicated region
        $region93: #{tpu_custom_call.1} parent=75 // pred_check
          %p7397 = pneg %p385
        $region94: #{tpu_custom_call.1} parent=75 // pred_check_branch
          %7399 = sbr.rel (%p7397) target = $region96
        $region95: #{tpu_custom_call.1} parent=75 // pred_region
          %s7401 = ssub.s32 256, 256
          %7402 = vsyncadd [#allocation4], %s7401
          %s7403 = sshll.u32 [#allocation9], 4
          %s7404 = int_to_ptr.vmem [resolvable:$true] %s7403
          %7409 = dma.vmem_to_hbm [thread:$0]  %s7404, 256, %s14, [#allocation4], 128, 128, 8
        $region96: #{tpu_custom_call.1} parent=75 // pred_fallthru
          _
        // Predicated region
        $region97: #{tpu_custom_call.1} parent=75 // pred_check
          %p7410 = pneg %p385
        $region98: #{tpu_custom_call.1} parent=75 // pred_check_branch
          %7412 = sbr.rel (%p7410) target = $region100
        $region99: #{tpu_custom_call.1} parent=75 // pred_region
          %7413 = dma.done [#allocation4], 256
        $region100: #{tpu_custom_call.1} parent=75 // pred_fallthru
          _
      $region76: #{tpu_custom_call.1} parent=5 // pred_fallthru
        _
      %p7414 = scmp.le.s32.totalorder 2, %s23
      // Predicated region
      $region101: #{tpu_custom_call.1} parent=5 // pred_check
        %p7415 = pneg %p7414
      $region102: #{tpu_custom_call.1} parent=5 // pred_check_branch
        %7417 = sbr.rel (%p7415) target = $region104
      $region103: #{tpu_custom_call.1} parent=5 // pred_region
        %s7418 = ssub.s32 %s23, 2
      $region104: #{tpu_custom_call.1} parent=5 // pred_fallthru
        _
    $region6: #{tpu_custom_call.1} parent=1 // loop_footer
      %s27 = sadd.s32 1, %s23
    $region7: #{tpu_custom_call.1} parent=1 // loop_footer_branch
      %22 = sbr.rel target = $region3
    $region8: #{tpu_custom_call.1} parent=1 // loop_exit
      _
    %7419 = vsyncpa [#allocation3], 1
    %s7420 = scalar_lea.sflag [#allocation3], 1
    %7421 = vsyncpa %s7420, 1
    %7422 = vsyncpa [#allocation6], 1
    %7423 = vsyncpa [#allocation4], 1
    %s7424 = scalar_lea.sflag [#allocation4], 1
    %7425 = vsyncpa %s7424, 1

</llo_original>
